<compile_context>
chip_gen: v7x
topology: tpu7x:2x2x1
jax: 0.10.0
libtpu: 0.0.40
codegen_flags: <defaults>
</compile_context>

<pallas_src>
import math

import jax
import jax.numpy as jnp
from jax import lax
from jax.experimental import pallas as pl
from jax.experimental.pallas import tpu as pltpu

# ------------------------- small test configuration -------------------------
BATCH = 2
EMB_SIZE = 16          # sequence length of e
EMB_DIM = 64           # feature dim of e
N_STEPS = 8
N_LOGITS = 32
N_FEAT = 16            # (PyTorch default 64, scaled down)
N_HEADS = 8            # (PyTorch default 32, scaled down)
D_MODEL = N_FEAT * N_HEADS   # 128
N_LAYERS = 2
ATTN_HEADS = 4
HEAD_DIM = D_MODEL // ATTN_HEADS
LN_EPS = 1e-5
N_LOGITS_PAD = 128     # lane-dense output slab width


# ----------------------------- in-kernel helpers ----------------------------
def _layer_norm(h, g, b):
    mu = jnp.mean(h, axis=-1, keepdims=True)
    var = jnp.mean((h - mu) ** 2, axis=-1, keepdims=True)
    return (h - mu) * lax.rsqrt(var + LN_EPS) * g + b


def _attention(q, k, v, mask, scratch_ref):
    """Multi-head attention over batch-folded rows.

    q: (M, D), k/v: (Mk, D), mask: (M, Mk) additive (-1e30 on disallowed pairs).
    Per-head PV results are written directly into scratch_ref's 32-lane slots
    (no lane concat); returns the assembled (M, D) tile.
    """
    scale = 1.0 / math.sqrt(HEAD_DIM)
    for h in range(ATTN_HEADS):                 # static loop over heads
        lo = h * HEAD_DIM
        qh = q[:, lo:lo + HEAD_DIM]
        kh = k[:, lo:lo + HEAD_DIM]
        vh = v[:, lo:lo + HEAD_DIM]
        s = lax.dot_general(qh, kh, (((1,), (1,)), ((), ())),
                            preferred_element_type=jnp.float32) * scale + mask
        s = s - jnp.max(s, axis=-1, keepdims=True)
        p = jnp.exp(s)
        p = p * pl.reciprocal(jnp.sum(p, axis=-1, keepdims=True), approx=True)
        scratch_ref[:, lo:lo + HEAD_DIM] = jnp.dot(
            p, vh, preferred_element_type=jnp.float32)
    return scratch_ref[...]


# ------------------------ single fused forward kernel ------------------------
def _policy_head_kernel(x_ref, e_ref, smask_ref, cmask_ref,
                        ln1_ref, wqkv1_ref, bqkv1_ref, wo1_ref, bo1_ref,
                        ln2_ref, wq2_ref, bq2_ref, wkv2_ref, bkv2_ref,
                        wo2_ref, bo2_ref,
                        w_out_ref, b_out_ref,
                        o_ref, z_ref,
                        head_scratch):
    D = D_MODEL
    x = x_ref[...]                 # (M, D)   M = BATCH * N_STEPS
    e = e_ref[...]                 # (Me, De) Me = BATCH * EMB_SIZE
    self_mask = smask_ref[...]     # (M, M)  causal + batch-block additive mask
    cross_mask = cmask_ref[...]    # (M, Me) batch-block additive mask

    for l in range(N_LAYERS):      # static loop over layers (weights resident)
        # ---- self-attention block ----
        ln1 = ln1_ref[l]                                   # (2, D)
        h1 = _layer_norm(x, ln1[0:1, :], ln1[1:2, :])
        qkv = jnp.dot(h1, wqkv1_ref[l],
                      preferred_element_type=jnp.float32) + bqkv1_ref[l]
        a1 = _attention(qkv[:, 0:D], qkv[:, D:2 * D], qkv[:, 2 * D:3 * D],
                        self_mask, head_scratch)
        c1 = jnp.dot(a1, wo1_ref[l],
                     preferred_element_type=jnp.float32) + bo1_ref[l]
        x1 = h1 + c1                                       # dropout == identity

        # ---- cross-attention block ----
        ln2 = ln2_ref[l]
        h2 = _layer_norm(x1, ln2[0:1, :], ln2[1:2, :])
        q2 = jnp.dot(h2, wq2_ref[l],
                     preferred_element_type=jnp.float32) + bq2_ref[l]
        kv2 = jnp.dot(e, wkv2_ref[l],
                      preferred_element_type=jnp.float32) + bkv2_ref[l]
        a2 = _attention(q2, kv2[:, 0:D], kv2[:, D:2 * D],
                        cross_mask, head_scratch)
        c2 = jnp.dot(a2, wo2_ref[l],
                     preferred_element_type=jnp.float32) + bo2_ref[l]
        x = h2 + c2

    # ---- output head: o = linear2(relu(x)), lane-dense padded store ----
    z_ref[...] = x
    o_ref[...] = jnp.dot(jnp.maximum(x, 0.0), w_out_ref[...],
                         preferred_element_type=jnp.float32) + b_out_ref[...]


# ------------------------------ parameters ----------------------------------
def init_params(key):
    keys = jax.random.split(key, 64)
    kit = iter(keys)
    D = D_MODEL

    def w(shape, scale=0.02):
        return (scale * jax.random.normal(next(kit), shape)).astype(jnp.float32)

    def stack(fn):
        return jnp.stack([fn() for _ in range(N_LAYERS)])

    ln_init = lambda: jnp.stack([jnp.ones((D,), jnp.float32),
                                 jnp.zeros((D,), jnp.float32)])

    params = {"embedding": w((N_LOGITS, D), scale=1.0)}
    params["ln1"] = stack(ln_init)                                # (L, 2, D)
    params["wqkv1"] = stack(lambda: w((D, 3 * D)))                # fused Wq|Wk|Wv
    params["bqkv1"] = stack(lambda: jnp.zeros((1, 3 * D), jnp.float32))
    params["wo1"] = stack(lambda: w((D, D)))
    params["bo1"] = stack(lambda: jnp.zeros((1, D), jnp.float32))
    params["ln2"] = stack(ln_init)
    params["wq2"] = stack(lambda: w((D, D)))
    params["bq2"] = stack(lambda: jnp.zeros((1, D), jnp.float32))
    params["wkv2"] = stack(lambda: w((EMB_DIM, 2 * D)))           # fused Wk|Wv
    params["bkv2"] = stack(lambda: jnp.zeros((1, 2 * D), jnp.float32))
    params["wo2"] = stack(lambda: w((D, D)))
    params["bo2"] = stack(lambda: jnp.zeros((1, D), jnp.float32))

    w2 = w((D, N_LOGITS))
    b2 = jnp.zeros((N_LOGITS,), jnp.float32)
    params["w_out_pad"] = jnp.pad(w2, ((0, 0), (0, N_LOGITS_PAD - N_LOGITS)))
    params["b_out_pad"] = jnp.pad(b2, (0, N_LOGITS_PAD - N_LOGITS)).reshape(1, N_LOGITS_PAD)
    return params


def position_encoding_table(max_len, d_model):
    position = jnp.arange(max_len, dtype=jnp.float32)[:, None]
    div_term = jnp.exp(jnp.arange(0, d_model, 2, dtype=jnp.float32)
                       * (-math.log(10000.0) / d_model))
    args = position * div_term                          # (max_len, d_model // 2)
    pe = jnp.stack([jnp.sin(args), jnp.cos(args)], axis=-1).reshape(max_len, d_model)
    return pe  # equals torch buffer pe[:, 0, :]


def _attention_masks(bs):
    """Additive masks for batch-folded attention (built once, passed as constants)."""
    M = bs * N_STEPS
    Me = bs * EMB_SIZE
    r = jnp.arange(M)[:, None]
    c = jnp.arange(M)[None, :]
    self_ok = ((r // N_STEPS) == (c // N_STEPS)) & ((c % N_STEPS) <= (r % N_STEPS))
    self_mask = jnp.where(self_ok, 0.0, -1e30).astype(jnp.float32)
    rc = jnp.arange(M)[:, None]
    cc = jnp.arange(Me)[None, :]
    cross_mask = jnp.where((rc // N_STEPS) == (cc // EMB_SIZE),
                           0.0, -1e30).astype(jnp.float32)
    return self_mask, cross_mask


# ------------------------------ full forward --------------------------------
def policy_head_train_forward(params, e, g):
    bs, S = g.shape
    # _train_forward: g = torch.roll(g, shifts=-1, dims=1)
    g = jnp.roll(g, shift=-1, axis=1)

    # PolicyHeadCore: embedding + position encoding (glue, plain JAX)
    x = jnp.take(params["embedding"], g, axis=0)                  # (bs, S, D)
    pe = position_encoding_table(max(bs, 8), D_MODEL)
    # pe[:x.size(0)] is (bs, 1, D) in torch -> broadcasts over the seq axis
    x = x + pe[:bs][:, None, :]

    # batch folded into the matmul M dimension
    x_flat = x.reshape(bs * S, D_MODEL)
    e_flat = e.reshape(bs * EMB_SIZE, EMB_DIM)
    self_mask, cross_mask = _attention_masks(bs)

    M = bs * S

    inputs = [x_flat, e_flat, self_mask, cross_mask,
              params["ln1"], params["wqkv1"], params["bqkv1"],
              params["wo1"], params["bo1"],
              params["ln2"], params["wq2"], params["bq2"],
              params["wkv2"], params["bkv2"],
              params["wo2"], params["bo2"],
              params["w_out_pad"], params["b_out_pad"]]

    def full_spec(a):
        nd = a.ndim
        return pl.BlockSpec(a.shape, lambda i, _nd=nd: (0,) * _nd)

    o_pad, z = pl.pallas_call(
        _policy_head_kernel,
        out_shape=(jax.ShapeDtypeStruct((M, N_LOGITS_PAD), jnp.float32),
                   jax.ShapeDtypeStruct((M, D_MODEL), jnp.float32)),
        grid_spec=pltpu.PrefetchScalarGridSpec(
            num_scalar_prefetch=0,
            grid=(1,),
            in_specs=[full_spec(a) for a in inputs],
            out_specs=[pl.BlockSpec((M, N_LOGITS_PAD), lambda i: (0, 0)),
                       pl.BlockSpec((M, D_MODEL), lambda i: (0, 0))],
            scratch_shapes=[pltpu.VMEM((M, D_MODEL), jnp.float32)],
        ),
        compiler_params=pltpu.CompilerParams(
            dimension_semantics=("arbitrary",)),
    )(*inputs)

    o = o_pad[:, :N_LOGITS].reshape(bs, S, N_LOGITS)
    z = z.reshape(bs, S, D_MODEL)

    # _train_forward returns (o, z[:, 0])
    return o, z[:, 0]


# ---------------------------------- main -------------------------------------
if __name__ == "__main__":
    key = jax.random.PRNGKey(0)
    k_param, k_e, k_g = jax.random.split(key, 3)

    params = init_params(k_param)
    e = jax.random.normal(k_e, (BATCH, EMB_SIZE, EMB_DIM), dtype=jnp.float32)
    g = jax.random.randint(k_g, (BATCH, N_STEPS), 0, N_LOGITS, dtype=jnp.int32)

    fwd = jax.jit(policy_head_train_forward)
    o, z0 = fwd(params, e, g)
    jax.block_until_ready((o, z0))

    assert o.shape == (BATCH, N_STEPS, N_LOGITS), o.shape
    assert z0.shape == (BATCH, D_MODEL), z0.shape
    assert bool(jnp.all(jnp.isfinite(o))) and bool(jnp.all(jnp.isfinite(z0)))
    print("KERNEL_OK")
</pallas_src>

<mosaic_0001>
module attributes {stable_mosaic.version = 11 : i64} {
  func.func @_policy_head_kernel(%arg0: i32, %arg1: memref<16x128xf32, #tpu.memory_space<vmem>>, %arg2: memref<32x64xf32, #tpu.memory_space<vmem>>, %arg3: memref<16x16xf32, #tpu.memory_space<vmem>>, %arg4: memref<16x32xf32, #tpu.memory_space<vmem>>, %arg5: memref<2x2x128xf32, #tpu.memory_space<vmem>>, %arg6: memref<2x128x384xf32, #tpu.memory_space<vmem>>, %arg7: memref<2x1x384xf32, #tpu.memory_space<vmem>>, %arg8: memref<2x128x128xf32, #tpu.memory_space<vmem>>, %arg9: memref<2x1x128xf32, #tpu.memory_space<vmem>>, %arg10: memref<2x2x128xf32, #tpu.memory_space<vmem>>, %arg11: memref<2x128x128xf32, #tpu.memory_space<vmem>>, %arg12: memref<2x1x128xf32, #tpu.memory_space<vmem>>, %arg13: memref<2x64x256xf32, #tpu.memory_space<vmem>>, %arg14: memref<2x1x256xf32, #tpu.memory_space<vmem>>, %arg15: memref<2x128x128xf32, #tpu.memory_space<vmem>>, %arg16: memref<2x1x128xf32, #tpu.memory_space<vmem>>, %arg17: memref<128x128xf32, #tpu.memory_space<vmem>>, %arg18: memref<1x128xf32, #tpu.memory_space<vmem>>, %arg19: memref<16x128xf32, #tpu.memory_space<vmem>>, %arg20: memref<16x128xf32, #tpu.memory_space<vmem>>, %arg21: memref<16x128xf32, #tpu.memory_space<vmem>>) attributes {dimension_semantics = [#tpu.dimension_semantics<arbitrary>], iteration_bounds = array<i64: 1>, scalar_prefetch = 0 : i64, scratch_operands = 1 : i64, tpu.core_type = #tpu.core_type<tc>, window_params = [{pipeline_mode = #tpu.pipeline_mode<synchronous>, transform_indices = @transform_0, window_bounds = array<i64: 16, 128>}, {pipeline_mode = #tpu.pipeline_mode<synchronous>, transform_indices = @transform_1, window_bounds = array<i64: 32, 64>}, {pipeline_mode = #tpu.pipeline_mode<synchronous>, transform_indices = @transform_2, window_bounds = array<i64: 16, 16>}, {pipeline_mode = #tpu.pipeline_mode<synchronous>, transform_indices = @transform_3, window_bounds = array<i64: 16, 32>}, {pipeline_mode = #tpu.pipeline_mode<synchronous>, transform_indices = @transform_4, window_bounds = array<i64: 2, 2, 128>}, {pipeline_mode = #tpu.pipeline_mode<synchronous>, transform_indices = @transform_5, window_bounds = array<i64: 2, 128, 384>}, {pipeline_mode = #tpu.pipeline_mode<synchronous>, transform_indices = @transform_6, window_bounds = array<i64: 2, 1, 384>}, {pipeline_mode = #tpu.pipeline_mode<synchronous>, transform_indices = @transform_7, window_bounds = array<i64: 2, 128, 128>}, {pipeline_mode = #tpu.pipeline_mode<synchronous>, transform_indices = @transform_8, window_bounds = array<i64: 2, 1, 128>}, {pipeline_mode = #tpu.pipeline_mode<synchronous>, transform_indices = @transform_9, window_bounds = array<i64: 2, 2, 128>}, {pipeline_mode = #tpu.pipeline_mode<synchronous>, transform_indices = @transform_10, window_bounds = array<i64: 2, 128, 128>}, {pipeline_mode = #tpu.pipeline_mode<synchronous>, transform_indices = @transform_11, window_bounds = array<i64: 2, 1, 128>}, {pipeline_mode = #tpu.pipeline_mode<synchronous>, transform_indices = @transform_12, window_bounds = array<i64: 2, 64, 256>}, {pipeline_mode = #tpu.pipeline_mode<synchronous>, transform_indices = @transform_13, window_bounds = array<i64: 2, 1, 256>}, {pipeline_mode = #tpu.pipeline_mode<synchronous>, transform_indices = @transform_14, window_bounds = array<i64: 2, 128, 128>}, {pipeline_mode = #tpu.pipeline_mode<synchronous>, transform_indices = @transform_15, window_bounds = array<i64: 2, 1, 128>}, {pipeline_mode = #tpu.pipeline_mode<synchronous>, transform_indices = @transform_16, window_bounds = array<i64: 128, 128>}, {pipeline_mode = #tpu.pipeline_mode<synchronous>, transform_indices = @transform_17, window_bounds = array<i64: 1, 128>}, {pipeline_mode = #tpu.pipeline_mode<synchronous>, transform_indices = @transform_18, window_bounds = array<i64: 16, 128>}, {pipeline_mode = #tpu.pipeline_mode<synchronous>, transform_indices = @transform_19, window_bounds = array<i64: 16, 128>}]} {
    %c0 = arith.constant 0 : index
    %c0_0 = arith.constant 0 : index
    %0 = vector.load %arg1[%c0, %c0_0] : memref<16x128xf32, #tpu.memory_space<vmem>>, vector<16x128xf32>
    %c0_1 = arith.constant 0 : index
    %c0_2 = arith.constant 0 : index
    %1 = vector.load %arg2[%c0_1, %c0_2] : memref<32x64xf32, #tpu.memory_space<vmem>>, vector<32x64xf32>
    %c0_3 = arith.constant 0 : index
    %c0_4 = arith.constant 0 : index
    %2 = vector.load %arg3[%c0_3, %c0_4] : memref<16x16xf32, #tpu.memory_space<vmem>>, vector<16x16xf32>
    %c0_5 = arith.constant 0 : index
    %c0_6 = arith.constant 0 : index
    %3 = vector.load %arg4[%c0_5, %c0_6] : memref<16x32xf32, #tpu.memory_space<vmem>>, vector<16x32xf32>
    %c0_7 = arith.constant 0 : index
    %c0_8 = arith.constant 0 : index
    %c0_9 = arith.constant 0 : index
    %4 = vector.load %arg5[%c0_7, %c0_8, %c0_9] : memref<2x2x128xf32, #tpu.memory_space<vmem>>, vector<1x2x128xf32>
    %5 = vector.shape_cast %4 : vector<1x2x128xf32> to vector<2x128xf32>
    %6 = vector.extract_strided_slice %5 {offsets = [0, 0], sizes = [1, 128], strides = [1, 1]} : vector<2x128xf32> to vector<1x128xf32>
    %7 = vector.extract_strided_slice %5 {offsets = [1, 0], sizes = [1, 128], strides = [1, 1]} : vector<2x128xf32> to vector<1x128xf32>
    %cst = arith.constant dense<0.000000e+00> : vector<16xf32>
    %8 = vector.multi_reduction <add>, %0, %cst [1] : vector<16x128xf32> to vector<16xf32>
    %9 = vector.shape_cast %8 : vector<16xf32> to vector<16x1xf32>
    %cst_10 = arith.constant 1.280000e+02 : f32
    %10 = vector.broadcast %cst_10 : f32 to vector<16x1xf32>
    %11 = arith.divf %9, %10 : vector<16x1xf32>
    %12 = vector.broadcast %11 : vector<16x1xf32> to vector<16x128xf32>
    %13 = arith.subf %0, %12 : vector<16x128xf32>
    %14 = arith.mulf %13, %13 : vector<16x128xf32>
    %cst_11 = arith.constant dense<0.000000e+00> : vector<16xf32>
    %15 = vector.multi_reduction <add>, %14, %cst_11 [1] : vector<16x128xf32> to vector<16xf32>
    %16 = vector.shape_cast %15 : vector<16xf32> to vector<16x1xf32>
    %cst_12 = arith.constant 1.280000e+02 : f32
    %17 = vector.broadcast %cst_12 : f32 to vector<16x1xf32>
    %18 = arith.divf %16, %17 : vector<16x1xf32>
    %19 = vector.broadcast %11 : vector<16x1xf32> to vector<16x128xf32>
    %20 = arith.subf %0, %19 : vector<16x128xf32>
    %cst_13 = arith.constant 9.99999974E-6 : f32
    %21 = vector.broadcast %cst_13 : f32 to vector<16x1xf32>
    %22 = arith.addf %18, %21 : vector<16x1xf32>
    %23 = math.rsqrt %22 : vector<16x1xf32>
    %24 = vector.broadcast %23 : vector<16x1xf32> to vector<16x128xf32>
    %25 = arith.mulf %20, %24 : vector<16x128xf32>
    %26 = vector.broadcast %6 : vector<1x128xf32> to vector<16x128xf32>
    %27 = arith.mulf %25, %26 : vector<16x128xf32>
    %28 = vector.broadcast %7 : vector<1x128xf32> to vector<16x128xf32>
    %29 = arith.addf %27, %28 : vector<16x128xf32>
    %c0_14 = arith.constant 0 : index
    %c0_15 = arith.constant 0 : index
    %c0_16 = arith.constant 0 : index
    %30 = vector.load %arg6[%c0_14, %c0_15, %c0_16] : memref<2x128x384xf32, #tpu.memory_space<vmem>>, vector<1x128x384xf32>
    %31 = vector.shape_cast %30 : vector<1x128x384xf32> to vector<128x384xf32>
    %cst_17 = arith.constant dense<0.000000e+00> : vector<16x384xf32>
    %32 = tpu.matmul %29, %31, %cst_17 {dimension_numbers = #tpu.dot_dimension_numbers<[1], [0], [0], [1], [0, 0, 1, 1], [], []>} : vector<16x128xf32>, vector<128x384xf32>, vector<16x384xf32> -> vector<16x384xf32>
    %c0_18 = arith.constant 0 : index
    %c0_19 = arith.constant 0 : index
    %c0_20 = arith.constant 0 : index
    %33 = vector.load %arg7[%c0_18, %c0_19, %c0_20] : memref<2x1x384xf32, #tpu.memory_space<vmem>>, vector<1x1x384xf32>
    %34 = vector.shape_cast %33 : vector<1x1x384xf32> to vector<1x384xf32>
    %35 = vector.broadcast %34 : vector<1x384xf32> to vector<16x384xf32>
    %36 = arith.addf %32, %35 : vector<16x384xf32>
    %37 = vector.extract_strided_slice %36 {offsets = [0, 0], sizes = [16, 128], strides = [1, 1]} : vector<16x384xf32> to vector<16x128xf32>
    %38 = vector.extract_strided_slice %36 {offsets = [0, 128], sizes = [16, 128], strides = [1, 1]} : vector<16x384xf32> to vector<16x128xf32>
    %39 = vector.extract_strided_slice %36 {offsets = [0, 256], sizes = [16, 128], strides = [1, 1]} : vector<16x384xf32> to vector<16x128xf32>
    %40 = vector.extract_strided_slice %37 {offsets = [0, 0], sizes = [16, 32], strides = [1, 1]} : vector<16x128xf32> to vector<16x32xf32>
    %41 = vector.extract_strided_slice %38 {offsets = [0, 0], sizes = [16, 32], strides = [1, 1]} : vector<16x128xf32> to vector<16x32xf32>
    %42 = vector.extract_strided_slice %39 {offsets = [0, 0], sizes = [16, 32], strides = [1, 1]} : vector<16x128xf32> to vector<16x32xf32>
    %cst_21 = arith.constant dense<0.000000e+00> : vector<16x16xf32>
    %43 = tpu.matmul %40, %41, %cst_21 {dimension_numbers = #tpu.dot_dimension_numbers<[1], [1], [0], [0], [0, 0, 1, 0], [], []>} : vector<16x32xf32>, vector<16x32xf32>, vector<16x16xf32> -> vector<16x16xf32>
    %cst_22 = arith.constant 0.176776692 : f32
    %44 = vector.broadcast %cst_22 : f32 to vector<16x16xf32>
    %45 = arith.mulf %43, %44 : vector<16x16xf32>
    %46 = arith.addf %45, %2 : vector<16x16xf32>
    %cst_23 = arith.constant dense<0xFF800000> : vector<16xf32>
    %47 = vector.multi_reduction <maximumf>, %46, %cst_23 [1] : vector<16x16xf32> to vector<16xf32>
    %48 = vector.shape_cast %47 : vector<16xf32> to vector<16x1xf32>
    %49 = vector.broadcast %48 : vector<16x1xf32> to vector<16x16xf32>
    %50 = arith.subf %46, %49 : vector<16x16xf32>
    %51 = math.exp %50 : vector<16x16xf32>
    %cst_24 = arith.constant dense<0.000000e+00> : vector<16xf32>
    %52 = vector.multi_reduction <add>, %51, %cst_24 [1] : vector<16x16xf32> to vector<16xf32>
    %53 = vector.shape_cast %52 : vector<16xf32> to vector<16x1xf32>
    %54 = tpu.reciprocal %53 {approx = true} : vector<16x1xf32> -> vector<16x1xf32>
    %55 = vector.broadcast %54 : vector<16x1xf32> to vector<16x16xf32>
    %56 = arith.mulf %51, %55 : vector<16x16xf32>
    %cst_25 = arith.constant dense<0.000000e+00> : vector<16x32xf32>
    %57 = tpu.matmul %56, %42, %cst_25 {dimension_numbers = #tpu.dot_dimension_numbers<[1], [0], [0], [1], [0, 0, 1, 1], [], []>} : vector<16x16xf32>, vector<16x32xf32>, vector<16x32xf32> -> vector<16x32xf32>
    %c0_26 = arith.constant 0 : index
    %c0_27 = arith.constant 0 : index
    %58 = vector.load %arg21[%c0_26, %c0_27] : memref<16x128xf32, #tpu.memory_space<vmem>>, vector<16x32xf32>
    tpu.vector_store %arg21[%c0_26, %c0_27], %57 {strides = array<i32>} : memref<16x128xf32, #tpu.memory_space<vmem>>, vector<16x32xf32>,
    %59 = vector.extract_strided_slice %37 {offsets = [0, 32], sizes = [16, 32], strides = [1, 1]} : vector<16x128xf32> to vector<16x32xf32>
    %60 = vector.extract_strided_slice %38 {offsets = [0, 32], sizes = [16, 32], strides = [1, 1]} : vector<16x128xf32> to vector<16x32xf32>
    %61 = vector.extract_strided_slice %39 {offsets = [0, 32], sizes = [16, 32], strides = [1, 1]} : vector<16x128xf32> to vector<16x32xf32>
    %cst_28 = arith.constant dense<0.000000e+00> : vector<16x16xf32>
    %62 = tpu.matmul %59, %60, %cst_28 {dimension_numbers = #tpu.dot_dimension_numbers<[1], [1], [0], [0], [0, 0, 1, 0], [], []>} : vector<16x32xf32>, vector<16x32xf32>, vector<16x16xf32> -> vector<16x16xf32>
    %cst_29 = arith.constant 0.176776692 : f32
    %63 = vector.broadcast %cst_29 : f32 to vector<16x16xf32>
    %64 = arith.mulf %62, %63 : vector<16x16xf32>
    %65 = arith.addf %64, %2 : vector<16x16xf32>
    %cst_30 = arith.constant dense<0xFF800000> : vector<16xf32>
    %66 = vector.multi_reduction <maximumf>, %65, %cst_30 [1] : vector<16x16xf32> to vector<16xf32>
    %67 = vector.shape_cast %66 : vector<16xf32> to vector<16x1xf32>
    %68 = vector.broadcast %67 : vector<16x1xf32> to vector<16x16xf32>
    %69 = arith.subf %65, %68 : vector<16x16xf32>
    %70 = math.exp %69 : vector<16x16xf32>
    %cst_31 = arith.constant dense<0.000000e+00> : vector<16xf32>
    %71 = vector.multi_reduction <add>, %70, %cst_31 [1] : vector<16x16xf32> to vector<16xf32>
    %72 = vector.shape_cast %71 : vector<16xf32> to vector<16x1xf32>
    %73 = tpu.reciprocal %72 {approx = true} : vector<16x1xf32> -> vector<16x1xf32>
    %74 = vector.broadcast %73 : vector<16x1xf32> to vector<16x16xf32>
    %75 = arith.mulf %70, %74 : vector<16x16xf32>
    %cst_32 = arith.constant dense<0.000000e+00> : vector<16x32xf32>
    %76 = tpu.matmul %75, %61, %cst_32 {dimension_numbers = #tpu.dot_dimension_numbers<[1], [0], [0], [1], [0, 0, 1, 1], [], []>} : vector<16x16xf32>, vector<16x32xf32>, vector<16x32xf32> -> vector<16x32xf32>
    %c0_33 = arith.constant 0 : index
    %c32 = arith.constant 32 : index
    %77 = vector.load %arg21[%c0_33, %c32] : memref<16x128xf32, #tpu.memory_space<vmem>>, vector<16x32xf32>
    tpu.vector_store %arg21[%c0_33, %c32], %76 {strides = array<i32>} : memref<16x128xf32, #tpu.memory_space<vmem>>, vector<16x32xf32>,
    %78 = vector.extract_strided_slice %37 {offsets = [0, 64], sizes = [16, 32], strides = [1, 1]} : vector<16x128xf32> to vector<16x32xf32>
    %79 = vector.extract_strided_slice %38 {offsets = [0, 64], sizes = [16, 32], strides = [1, 1]} : vector<16x128xf32> to vector<16x32xf32>
    %80 = vector.extract_strided_slice %39 {offsets = [0, 64], sizes = [16, 32], strides = [1, 1]} : vector<16x128xf32> to vector<16x32xf32>
    %cst_34 = arith.constant dense<0.000000e+00> : vector<16x16xf32>
    %81 = tpu.matmul %78, %79, %cst_34 {dimension_numbers = #tpu.dot_dimension_numbers<[1], [1], [0], [0], [0, 0, 1, 0], [], []>} : vector<16x32xf32>, vector<16x32xf32>, vector<16x16xf32> -> vector<16x16xf32>
    %cst_35 = arith.constant 0.176776692 : f32
    %82 = vector.broadcast %cst_35 : f32 to vector<16x16xf32>
    %83 = arith.mulf %81, %82 : vector<16x16xf32>
    %84 = arith.addf %83, %2 : vector<16x16xf32>
    %cst_36 = arith.constant dense<0xFF800000> : vector<16xf32>
    %85 = vector.multi_reduction <maximumf>, %84, %cst_36 [1] : vector<16x16xf32> to vector<16xf32>
    %86 = vector.shape_cast %85 : vector<16xf32> to vector<16x1xf32>
    %87 = vector.broadcast %86 : vector<16x1xf32> to vector<16x16xf32>
    %88 = arith.subf %84, %87 : vector<16x16xf32>
    %89 = math.exp %88 : vector<16x16xf32>
    %cst_37 = arith.constant dense<0.000000e+00> : vector<16xf32>
    %90 = vector.multi_reduction <add>, %89, %cst_37 [1] : vector<16x16xf32> to vector<16xf32>
    %91 = vector.shape_cast %90 : vector<16xf32> to vector<16x1xf32>
    %92 = tpu.reciprocal %91 {approx = true} : vector<16x1xf32> -> vector<16x1xf32>
    %93 = vector.broadcast %92 : vector<16x1xf32> to vector<16x16xf32>
    %94 = arith.mulf %89, %93 : vector<16x16xf32>
    %cst_38 = arith.constant dense<0.000000e+00> : vector<16x32xf32>
    %95 = tpu.matmul %94, %80, %cst_38 {dimension_numbers = #tpu.dot_dimension_numbers<[1], [0], [0], [1], [0, 0, 1, 1], [], []>} : vector<16x16xf32>, vector<16x32xf32>, vector<16x32xf32> -> vector<16x32xf32>
    %c0_39 = arith.constant 0 : index
    %c64 = arith.constant 64 : index
    %96 = vector.load %arg21[%c0_39, %c64] : memref<16x128xf32, #tpu.memory_space<vmem>>, vector<16x32xf32>
    tpu.vector_store %arg21[%c0_39, %c64], %95 {strides = array<i32>} : memref<16x128xf32, #tpu.memory_space<vmem>>, vector<16x32xf32>,
    %97 = vector.extract_strided_slice %37 {offsets = [0, 96], sizes = [16, 32], strides = [1, 1]} : vector<16x128xf32> to vector<16x32xf32>
    %98 = vector.extract_strided_slice %38 {offsets = [0, 96], sizes = [16, 32], strides = [1, 1]} : vector<16x128xf32> to vector<16x32xf32>
    %99 = vector.extract_strided_slice %39 {offsets = [0, 96], sizes = [16, 32], strides = [1, 1]} : vector<16x128xf32> to vector<16x32xf32>
    %cst_40 = arith.constant dense<0.000000e+00> : vector<16x16xf32>
    %100 = tpu.matmul %97, %98, %cst_40 {dimension_numbers = #tpu.dot_dimension_numbers<[1], [1], [0], [0], [0, 0, 1, 0], [], []>} : vector<16x32xf32>, vector<16x32xf32>, vector<16x16xf32> -> vector<16x16xf32>
    %cst_41 = arith.constant 0.176776692 : f32
    %101 = vector.broadcast %cst_41 : f32 to vector<16x16xf32>
    %102 = arith.mulf %100, %101 : vector<16x16xf32>
    %103 = arith.addf %102, %2 : vector<16x16xf32>
    %cst_42 = arith.constant dense<0xFF800000> : vector<16xf32>
    %104 = vector.multi_reduction <maximumf>, %103, %cst_42 [1] : vector<16x16xf32> to vector<16xf32>
    %105 = vector.shape_cast %104 : vector<16xf32> to vector<16x1xf32>
    %106 = vector.broadcast %105 : vector<16x1xf32> to vector<16x16xf32>
    %107 = arith.subf %103, %106 : vector<16x16xf32>
    %108 = math.exp %107 : vector<16x16xf32>
    %cst_43 = arith.constant dense<0.000000e+00> : vector<16xf32>
    %109 = vector.multi_reduction <add>, %108, %cst_43 [1] : vector<16x16xf32> to vector<16xf32>
    %110 = vector.shape_cast %109 : vector<16xf32> to vector<16x1xf32>
    %111 = tpu.reciprocal %110 {approx = true} : vector<16x1xf32> -> vector<16x1xf32>
    %112 = vector.broadcast %111 : vector<16x1xf32> to vector<16x16xf32>
    %113 = arith.mulf %108, %112 : vector<16x16xf32>
    %cst_44 = arith.constant dense<0.000000e+00> : vector<16x32xf32>
    %114 = tpu.matmul %113, %99, %cst_44 {dimension_numbers = #tpu.dot_dimension_numbers<[1], [0], [0], [1], [0, 0, 1, 1], [], []>} : vector<16x16xf32>, vector<16x32xf32>, vector<16x32xf32> -> vector<16x32xf32>
    %c0_45 = arith.constant 0 : index
    %c96 = arith.constant 96 : index
    %115 = vector.load %arg21[%c0_45, %c96] : memref<16x128xf32, #tpu.memory_space<vmem>>, vector<16x32xf32>
    tpu.vector_store %arg21[%c0_45, %c96], %114 {strides = array<i32>} : memref<16x128xf32, #tpu.memory_space<vmem>>, vector<16x32xf32>,
    %c0_46 = arith.constant 0 : index
    %c0_47 = arith.constant 0 : index
    %116 = vector.load %arg21[%c0_46, %c0_47] : memref<16x128xf32, #tpu.memory_space<vmem>>, vector<16x128xf32>
    %c0_48 = arith.constant 0 : index
    %c0_49 = arith.constant 0 : index
    %c0_50 = arith.constant 0 : index
    %117 = vector.load %arg8[%c0_48, %c0_49, %c0_50] : memref<2x128x128xf32, #tpu.memory_space<vmem>>, vector<1x128x128xf32>
    %118 = vector.shape_cast %117 : vector<1x128x128xf32> to vector<128x128xf32>
    %cst_51 = arith.constant dense<0.000000e+00> : vector<16x128xf32>
    %119 = tpu.matmul %116, %118, %cst_51 {dimension_numbers = #tpu.dot_dimension_numbers<[1], [0], [0], [1], [0, 0, 1, 1], [], []>} : vector<16x128xf32>, vector<128x128xf32>, vector<16x128xf32> -> vector<16x128xf32>
    %c0_52 = arith.constant 0 : index
    %c0_53 = arith.constant 0 : index
    %c0_54 = arith.constant 0 : index
    %120 = vector.load %arg9[%c0_52, %c0_53, %c0_54] : memref<2x1x128xf32, #tpu.memory_space<vmem>>, vector<1x1x128xf32>
    %121 = vector.shape_cast %120 : vector<1x1x128xf32> to vector<1x128xf32>
    %122 = vector.broadcast %121 : vector<1x128xf32> to vector<16x128xf32>
    %123 = arith.addf %119, %122 : vector<16x128xf32>
    %124 = arith.addf %29, %123 : vector<16x128xf32>
    %c0_55 = arith.constant 0 : index
    %c0_56 = arith.constant 0 : index
    %c0_57 = arith.constant 0 : index
    %125 = vector.load %arg10[%c0_55, %c0_56, %c0_57] : memref<2x2x128xf32, #tpu.memory_space<vmem>>, vector<1x2x128xf32>
    %126 = vector.shape_cast %125 : vector<1x2x128xf32> to vector<2x128xf32>
    %127 = vector.extract_strided_slice %126 {offsets = [0, 0], sizes = [1, 128], strides = [1, 1]} : vector<2x128xf32> to vector<1x128xf32>
    %128 = vector.extract_strided_slice %126 {offsets = [1, 0], sizes = [1, 128], strides = [1, 1]} : vector<2x128xf32> to vector<1x128xf32>
    %cst_58 = arith.constant dense<0.000000e+00> : vector<16xf32>
    %129 = vector.multi_reduction <add>, %124, %cst_58 [1] : vector<16x128xf32> to vector<16xf32>
    %130 = vector.shape_cast %129 : vector<16xf32> to vector<16x1xf32>
    %cst_59 = arith.constant 1.280000e+02 : f32
    %131 = vector.broadcast %cst_59 : f32 to vector<16x1xf32>
    %132 = arith.divf %130, %131 : vector<16x1xf32>
    %133 = vector.broadcast %132 : vector<16x1xf32> to vector<16x128xf32>
    %134 = arith.subf %124, %133 : vector<16x128xf32>
    %135 = arith.mulf %134, %134 : vector<16x128xf32>
    %cst_60 = arith.constant dense<0.000000e+00> : vector<16xf32>
    %136 = vector.multi_reduction <add>, %135, %cst_60 [1] : vector<16x128xf32> to vector<16xf32>
    %137 = vector.shape_cast %136 : vector<16xf32> to vector<16x1xf32>
    %cst_61 = arith.constant 1.280000e+02 : f32
    %138 = vector.broadcast %cst_61 : f32 to vector<16x1xf32>
    %139 = arith.divf %137, %138 : vector<16x1xf32>
    %140 = vector.broadcast %132 : vector<16x1xf32> to vector<16x128xf32>
    %141 = arith.subf %124, %140 : vector<16x128xf32>
    %cst_62 = arith.constant 9.99999974E-6 : f32
    %142 = vector.broadcast %cst_62 : f32 to vector<16x1xf32>
    %143 = arith.addf %139, %142 : vector<16x1xf32>
    %144 = math.rsqrt %143 : vector<16x1xf32>
    %145 = vector.broadcast %144 : vector<16x1xf32> to vector<16x128xf32>
    %146 = arith.mulf %141, %145 : vector<16x128xf32>
    %147 = vector.broadcast %127 : vector<1x128xf32> to vector<16x128xf32>
    %148 = arith.mulf %146, %147 : vector<16x128xf32>
    %149 = vector.broadcast %128 : vector<1x128xf32> to vector<16x128xf32>
    %150 = arith.addf %148, %149 : vector<16x128xf32>
    %c0_63 = arith.constant 0 : index
    %c0_64 = arith.constant 0 : index
    %c0_65 = arith.constant 0 : index
    %151 = vector.load %arg11[%c0_63, %c0_64, %c0_65] : memref<2x128x128xf32, #tpu.memory_space<vmem>>, vector<1x128x128xf32>
    %152 = vector.shape_cast %151 : vector<1x128x128xf32> to vector<128x128xf32>
    %cst_66 = arith.constant dense<0.000000e+00> : vector<16x128xf32>
    %153 = tpu.matmul %150, %152, %cst_66 {dimension_numbers = #tpu.dot_dimension_numbers<[1], [0], [0], [1], [0, 0, 1, 1], [], []>} : vector<16x128xf32>, vector<128x128xf32>, vector<16x128xf32> -> vector<16x128xf32>
    %c0_67 = arith.constant 0 : index
    %c0_68 = arith.constant 0 : index
    %c0_69 = arith.constant 0 : index
    %154 = vector.load %arg12[%c0_67, %c0_68, %c0_69] : memref<2x1x128xf32, #tpu.memory_space<vmem>>, vector<1x1x128xf32>
    %155 = vector.shape_cast %154 : vector<1x1x128xf32> to vector<1x128xf32>
    %156 = vector.broadcast %155 : vector<1x128xf32> to vector<16x128xf32>
    %157 = arith.addf %153, %156 : vector<16x128xf32>
    %c0_70 = arith.constant 0 : index
    %c0_71 = arith.constant 0 : index
    %c0_72 = arith.constant 0 : index
    %158 = vector.load %arg13[%c0_70, %c0_71, %c0_72] : memref<2x64x256xf32, #tpu.memory_space<vmem>>, vector<1x64x256xf32>
    %159 = vector.shape_cast %158 : vector<1x64x256xf32> to vector<64x256xf32>
    %cst_73 = arith.constant dense<0.000000e+00> : vector<32x256xf32>
    %160 = tpu.matmul %1, %159, %cst_73 {dimension_numbers = #tpu.dot_dimension_numbers<[1], [0], [0], [1], [0, 0, 1, 1], [], []>} : vector<32x64xf32>, vector<64x256xf32>, vector<32x256xf32> -> vector<32x256xf32>
    %c0_74 = arith.constant 0 : index
    %c0_75 = arith.constant 0 : index
    %c0_76 = arith.constant 0 : index
    %161 = vector.load %arg14[%c0_74, %c0_75, %c0_76] : memref<2x1x256xf32, #tpu.memory_space<vmem>>, vector<1x1x256xf32>
    %162 = vector.shape_cast %161 : vector<1x1x256xf32> to vector<1x256xf32>
    %163 = vector.broadcast %162 : vector<1x256xf32> to vector<32x256xf32>
    %164 = arith.addf %160, %163 : vector<32x256xf32>
    %165 = vector.extract_strided_slice %164 {offsets = [0, 0], sizes = [32, 128], strides = [1, 1]} : vector<32x256xf32> to vector<32x128xf32>
    %166 = vector.extract_strided_slice %164 {offsets = [0, 128], sizes = [32, 128], strides = [1, 1]} : vector<32x256xf32> to vector<32x128xf32>
    %167 = vector.extract_strided_slice %157 {offsets = [0, 0], sizes = [16, 32], strides = [1, 1]} : vector<16x128xf32> to vector<16x32xf32>
    %168 = vector.extract_strided_slice %165 {offsets = [0, 0], sizes = [32, 32], strides = [1, 1]} : vector<32x128xf32> to vector<32x32xf32>
    %169 = vector.extract_strided_slice %166 {offsets = [0, 0], sizes = [32, 32], strides = [1, 1]} : vector<32x128xf32> to vector<32x32xf32>
    %cst_77 = arith.constant dense<0.000000e+00> : vector<16x32xf32>
    %170 = tpu.matmul %167, %168, %cst_77 {dimension_numbers = #tpu.dot_dimension_numbers<[1], [1], [0], [0], [0, 0, 1, 0], [], []>} : vector<16x32xf32>, vector<32x32xf32>, vector<16x32xf32> -> vector<16x32xf32>
    %cst_78 = arith.constant 0.176776692 : f32
    %171 = vector.broadcast %cst_78 : f32 to vector<16x32xf32>
    %172 = arith.mulf %170, %171 : vector<16x32xf32>
    %173 = arith.addf %172, %3 : vector<16x32xf32>
    %cst_79 = arith.constant dense<0xFF800000> : vector<16xf32>
    %174 = vector.multi_reduction <maximumf>, %173, %cst_79 [1] : vector<16x32xf32> to vector<16xf32>
    %175 = vector.shape_cast %174 : vector<16xf32> to vector<16x1xf32>
    %176 = vector.broadcast %175 : vector<16x1xf32> to vector<16x32xf32>
    %177 = arith.subf %173, %176 : vector<16x32xf32>
    %178 = math.exp %177 : vector<16x32xf32>
    %cst_80 = arith.constant dense<0.000000e+00> : vector<16xf32>
    %179 = vector.multi_reduction <add>, %178, %cst_80 [1] : vector<16x32xf32> to vector<16xf32>
    %180 = vector.shape_cast %179 : vector<16xf32> to vector<16x1xf32>
    %181 = tpu.reciprocal %180 {approx = true} : vector<16x1xf32> -> vector<16x1xf32>
    %182 = vector.broadcast %181 : vector<16x1xf32> to vector<16x32xf32>
    %183 = arith.mulf %178, %182 : vector<16x32xf32>
    %cst_81 = arith.constant dense<0.000000e+00> : vector<16x32xf32>
    %184 = tpu.matmul %183, %169, %cst_81 {dimension_numbers = #tpu.dot_dimension_numbers<[1], [0], [0], [1], [0, 0, 1, 1], [], []>} : vector<16x32xf32>, vector<32x32xf32>, vector<16x32xf32> -> vector<16x32xf32>
    %c0_82 = arith.constant 0 : index
    %c0_83 = arith.constant 0 : index
    %185 = vector.load %arg21[%c0_82, %c0_83] : memref<16x128xf32, #tpu.memory_space<vmem>>, vector<16x32xf32>
    tpu.vector_store %arg21[%c0_82, %c0_83], %184 {strides = array<i32>} : memref<16x128xf32, #tpu.memory_space<vmem>>, vector<16x32xf32>,
    %186 = vector.extract_strided_slice %157 {offsets = [0, 32], sizes = [16, 32], strides = [1, 1]} : vector<16x128xf32> to vector<16x32xf32>
    %187 = vector.extract_strided_slice %165 {offsets = [0, 32], sizes = [32, 32], strides = [1, 1]} : vector<32x128xf32> to vector<32x32xf32>
    %188 = vector.extract_strided_slice %166 {offsets = [0, 32], sizes = [32, 32], strides = [1, 1]} : vector<32x128xf32> to vector<32x32xf32>
    %cst_84 = arith.constant dense<0.000000e+00> : vector<16x32xf32>
    %189 = tpu.matmul %186, %187, %cst_84 {dimension_numbers = #tpu.dot_dimension_numbers<[1], [1], [0], [0], [0, 0, 1, 0], [], []>} : vector<16x32xf32>, vector<32x32xf32>, vector<16x32xf32> -> vector<16x32xf32>
    %cst_85 = arith.constant 0.176776692 : f32
    %190 = vector.broadcast %cst_85 : f32 to vector<16x32xf32>
    %191 = arith.mulf %189, %190 : vector<16x32xf32>
    %192 = arith.addf %191, %3 : vector<16x32xf32>
    %cst_86 = arith.constant dense<0xFF800000> : vector<16xf32>
    %193 = vector.multi_reduction <maximumf>, %192, %cst_86 [1] : vector<16x32xf32> to vector<16xf32>
    %194 = vector.shape_cast %193 : vector<16xf32> to vector<16x1xf32>
    %195 = vector.broadcast %194 : vector<16x1xf32> to vector<16x32xf32>
    %196 = arith.subf %192, %195 : vector<16x32xf32>
    %197 = math.exp %196 : vector<16x32xf32>
    %cst_87 = arith.constant dense<0.000000e+00> : vector<16xf32>
    %198 = vector.multi_reduction <add>, %197, %cst_87 [1] : vector<16x32xf32> to vector<16xf32>
    %199 = vector.shape_cast %198 : vector<16xf32> to vector<16x1xf32>
    %200 = tpu.reciprocal %199 {approx = true} : vector<16x1xf32> -> vector<16x1xf32>
    %201 = vector.broadcast %200 : vector<16x1xf32> to vector<16x32xf32>
    %202 = arith.mulf %197, %201 : vector<16x32xf32>
    %cst_88 = arith.constant dense<0.000000e+00> : vector<16x32xf32>
    %203 = tpu.matmul %202, %188, %cst_88 {dimension_numbers = #tpu.dot_dimension_numbers<[1], [0], [0], [1], [0, 0, 1, 1], [], []>} : vector<16x32xf32>, vector<32x32xf32>, vector<16x32xf32> -> vector<16x32xf32>
    %c0_89 = arith.constant 0 : index
    %c32_90 = arith.constant 32 : index
    %204 = vector.load %arg21[%c0_89, %c32_90] : memref<16x128xf32, #tpu.memory_space<vmem>>, vector<16x32xf32>
    tpu.vector_store %arg21[%c0_89, %c32_90], %203 {strides = array<i32>} : memref<16x128xf32, #tpu.memory_space<vmem>>, vector<16x32xf32>,
    %205 = vector.extract_strided_slice %157 {offsets = [0, 64], sizes = [16, 32], strides = [1, 1]} : vector<16x128xf32> to vector<16x32xf32>
    %206 = vector.extract_strided_slice %165 {offsets = [0, 64], sizes = [32, 32], strides = [1, 1]} : vector<32x128xf32> to vector<32x32xf32>
    %207 = vector.extract_strided_slice %166 {offsets = [0, 64], sizes = [32, 32], strides = [1, 1]} : vector<32x128xf32> to vector<32x32xf32>
    %cst_91 = arith.constant dense<0.000000e+00> : vector<16x32xf32>
    %208 = tpu.matmul %205, %206, %cst_91 {dimension_numbers = #tpu.dot_dimension_numbers<[1], [1], [0], [0], [0, 0, 1, 0], [], []>} : vector<16x32xf32>, vector<32x32xf32>, vector<16x32xf32> -> vector<16x32xf32>
    %cst_92 = arith.constant 0.176776692 : f32
    %209 = vector.broadcast %cst_92 : f32 to vector<16x32xf32>
    %210 = arith.mulf %208, %209 : vector<16x32xf32>
    %211 = arith.addf %210, %3 : vector<16x32xf32>
    %cst_93 = arith.constant dense<0xFF800000> : vector<16xf32>
    %212 = vector.multi_reduction <maximumf>, %211, %cst_93 [1] : vector<16x32xf32> to vector<16xf32>
    %213 = vector.shape_cast %212 : vector<16xf32> to vector<16x1xf32>
    %214 = vector.broadcast %213 : vector<16x1xf32> to vector<16x32xf32>
    %215 = arith.subf %211, %214 : vector<16x32xf32>
    %216 = math.exp %215 : vector<16x32xf32>
    %cst_94 = arith.constant dense<0.000000e+00> : vector<16xf32>
    %217 = vector.multi_reduction <add>, %216, %cst_94 [1] : vector<16x32xf32> to vector<16xf32>
    %218 = vector.shape_cast %217 : vector<16xf32> to vector<16x1xf32>
    %219 = tpu.reciprocal %218 {approx = true} : vector<16x1xf32> -> vector<16x1xf32>
    %220 = vector.broadcast %219 : vector<16x1xf32> to vector<16x32xf32>
    %221 = arith.mulf %216, %220 : vector<16x32xf32>
    %cst_95 = arith.constant dense<0.000000e+00> : vector<16x32xf32>
    %222 = tpu.matmul %221, %207, %cst_95 {dimension_numbers = #tpu.dot_dimension_numbers<[1], [0], [0], [1], [0, 0, 1, 1], [], []>} : vector<16x32xf32>, vector<32x32xf32>, vector<16x32xf32> -> vector<16x32xf32>
    %c0_96 = arith.constant 0 : index
    %c64_97 = arith.constant 64 : index
    %223 = vector.load %arg21[%c0_96, %c64_97] : memref<16x128xf32, #tpu.memory_space<vmem>>, vector<16x32xf32>
    tpu.vector_store %arg21[%c0_96, %c64_97], %222 {strides = array<i32>} : memref<16x128xf32, #tpu.memory_space<vmem>>, vector<16x32xf32>,
    %224 = vector.extract_strided_slice %157 {offsets = [0, 96], sizes = [16, 32], strides = [1, 1]} : vector<16x128xf32> to vector<16x32xf32>
    %225 = vector.extract_strided_slice %165 {offsets = [0, 96], sizes = [32, 32], strides = [1, 1]} : vector<32x128xf32> to vector<32x32xf32>
    %226 = vector.extract_strided_slice %166 {offsets = [0, 96], sizes = [32, 32], strides = [1, 1]} : vector<32x128xf32> to vector<32x32xf32>
    %cst_98 = arith.constant dense<0.000000e+00> : vector<16x32xf32>
    %227 = tpu.matmul %224, %225, %cst_98 {dimension_numbers = #tpu.dot_dimension_numbers<[1], [1], [0], [0], [0, 0, 1, 0], [], []>} : vector<16x32xf32>, vector<32x32xf32>, vector<16x32xf32> -> vector<16x32xf32>
    %cst_99 = arith.constant 0.176776692 : f32
    %228 = vector.broadcast %cst_99 : f32 to vector<16x32xf32>
    %229 = arith.mulf %227, %228 : vector<16x32xf32>
    %230 = arith.addf %229, %3 : vector<16x32xf32>
    %cst_100 = arith.constant dense<0xFF800000> : vector<16xf32>
    %231 = vector.multi_reduction <maximumf>, %230, %cst_100 [1] : vector<16x32xf32> to vector<16xf32>
    %232 = vector.shape_cast %231 : vector<16xf32> to vector<16x1xf32>
    %233 = vector.broadcast %232 : vector<16x1xf32> to vector<16x32xf32>
    %234 = arith.subf %230, %233 : vector<16x32xf32>
    %235 = math.exp %234 : vector<16x32xf32>
    %cst_101 = arith.constant dense<0.000000e+00> : vector<16xf32>
    %236 = vector.multi_reduction <add>, %235, %cst_101 [1] : vector<16x32xf32> to vector<16xf32>
    %237 = vector.shape_cast %236 : vector<16xf32> to vector<16x1xf32>
    %238 = tpu.reciprocal %237 {approx = true} : vector<16x1xf32> -> vector<16x1xf32>
    %239 = vector.broadcast %238 : vector<16x1xf32> to vector<16x32xf32>
    %240 = arith.mulf %235, %239 : vector<16x32xf32>
    %cst_102 = arith.constant dense<0.000000e+00> : vector<16x32xf32>
    %241 = tpu.matmul %240, %226, %cst_102 {dimension_numbers = #tpu.dot_dimension_numbers<[1], [0], [0], [1], [0, 0, 1, 1], [], []>} : vector<16x32xf32>, vector<32x32xf32>, vector<16x32xf32> -> vector<16x32xf32>
    %c0_103 = arith.constant 0 : index
    %c96_104 = arith.constant 96 : index
    %242 = vector.load %arg21[%c0_103, %c96_104] : memref<16x128xf32, #tpu.memory_space<vmem>>, vector<16x32xf32>
    tpu.vector_store %arg21[%c0_103, %c96_104], %241 {strides = array<i32>} : memref<16x128xf32, #tpu.memory_space<vmem>>, vector<16x32xf32>,
    %c0_105 = arith.constant 0 : index
    %c0_106 = arith.constant 0 : index
    %243 = vector.load %arg21[%c0_105, %c0_106] : memref<16x128xf32, #tpu.memory_space<vmem>>, vector<16x128xf32>
    %c0_107 = arith.constant 0 : index
    %c0_108 = arith.constant 0 : index
    %c0_109 = arith.constant 0 : index
    %244 = vector.load %arg15[%c0_107, %c0_108, %c0_109] : memref<2x128x128xf32, #tpu.memory_space<vmem>>, vector<1x128x128xf32>
    %245 = vector.shape_cast %244 : vector<1x128x128xf32> to vector<128x128xf32>
    %cst_110 = arith.constant dense<0.000000e+00> : vector<16x128xf32>
    %246 = tpu.matmul %243, %245, %cst_110 {dimension_numbers = #tpu.dot_dimension_numbers<[1], [0], [0], [1], [0, 0, 1, 1], [], []>} : vector<16x128xf32>, vector<128x128xf32>, vector<16x128xf32> -> vector<16x128xf32>
    %c0_111 = arith.constant 0 : index
    %c0_112 = arith.constant 0 : index
    %c0_113 = arith.constant 0 : index
    %247 = vector.load %arg16[%c0_111, %c0_112, %c0_113] : memref<2x1x128xf32, #tpu.memory_space<vmem>>, vector<1x1x128xf32>
    %248 = vector.shape_cast %247 : vector<1x1x128xf32> to vector<1x128xf32>
    %249 = vector.broadcast %248 : vector<1x128xf32> to vector<16x128xf32>
    %250 = arith.addf %246, %249 : vector<16x128xf32>
    %251 = arith.addf %150, %250 : vector<16x128xf32>
    %c1 = arith.constant 1 : index
    %c0_114 = arith.constant 0 : index
    %c0_115 = arith.constant 0 : index
    %252 = vector.load %arg5[%c1, %c0_114, %c0_115] : memref<2x2x128xf32, #tpu.memory_space<vmem>>, vector<1x2x128xf32>
    %253 = vector.shape_cast %252 : vector<1x2x128xf32> to vector<2x128xf32>
    %254 = vector.extract_strided_slice %253 {offsets = [0, 0], sizes = [1, 128], strides = [1, 1]} : vector<2x128xf32> to vector<1x128xf32>
    %255 = vector.extract_strided_slice %253 {offsets = [1, 0], sizes = [1, 128], strides = [1, 1]} : vector<2x128xf32> to vector<1x128xf32>
    %cst_116 = arith.constant dense<0.000000e+00> : vector<16xf32>
    %256 = vector.multi_reduction <add>, %251, %cst_116 [1] : vector<16x128xf32> to vector<16xf32>
    %257 = vector.shape_cast %256 : vector<16xf32> to vector<16x1xf32>
    %cst_117 = arith.constant 1.280000e+02 : f32
    %258 = vector.broadcast %cst_117 : f32 to vector<16x1xf32>
    %259 = arith.divf %257, %258 : vector<16x1xf32>
    %260 = vector.broadcast %259 : vector<16x1xf32> to vector<16x128xf32>
    %261 = arith.subf %251, %260 : vector<16x128xf32>
    %262 = arith.mulf %261, %261 : vector<16x128xf32>
    %cst_118 = arith.constant dense<0.000000e+00> : vector<16xf32>
    %263 = vector.multi_reduction <add>, %262, %cst_118 [1] : vector<16x128xf32> to vector<16xf32>
    %264 = vector.shape_cast %263 : vector<16xf32> to vector<16x1xf32>
    %cst_119 = arith.constant 1.280000e+02 : f32
    %265 = vector.broadcast %cst_119 : f32 to vector<16x1xf32>
    %266 = arith.divf %264, %265 : vector<16x1xf32>
    %267 = vector.broadcast %259 : vector<16x1xf32> to vector<16x128xf32>
    %268 = arith.subf %251, %267 : vector<16x128xf32>
    %cst_120 = arith.constant 9.99999974E-6 : f32
    %269 = vector.broadcast %cst_120 : f32 to vector<16x1xf32>
    %270 = arith.addf %266, %269 : vector<16x1xf32>
    %271 = math.rsqrt %270 : vector<16x1xf32>
    %272 = vector.broadcast %271 : vector<16x1xf32> to vector<16x128xf32>
    %273 = arith.mulf %268, %272 : vector<16x128xf32>
    %274 = vector.broadcast %254 : vector<1x128xf32> to vector<16x128xf32>
    %275 = arith.mulf %273, %274 : vector<16x128xf32>
    %276 = vector.broadcast %255 : vector<1x128xf32> to vector<16x128xf32>
    %277 = arith.addf %275, %276 : vector<16x128xf32>
    %c1_121 = arith.constant 1 : index
    %c0_122 = arith.constant 0 : index
    %c0_123 = arith.constant 0 : index
    %278 = vector.load %arg6[%c1_121, %c0_122, %c0_123] : memref<2x128x384xf32, #tpu.memory_space<vmem>>, vector<1x128x384xf32>
    %279 = vector.shape_cast %278 : vector<1x128x384xf32> to vector<128x384xf32>
    %cst_124 = arith.constant dense<0.000000e+00> : vector<16x384xf32>
    %280 = tpu.matmul %277, %279, %cst_124 {dimension_numbers = #tpu.dot_dimension_numbers<[1], [0], [0], [1], [0, 0, 1, 1], [], []>} : vector<16x128xf32>, vector<128x384xf32>, vector<16x384xf32> -> vector<16x384xf32>
    %c1_125 = arith.constant 1 : index
    %c0_126 = arith.constant 0 : index
    %c0_127 = arith.constant 0 : index
    %281 = vector.load %arg7[%c1_125, %c0_126, %c0_127] : memref<2x1x384xf32, #tpu.memory_space<vmem>>, vector<1x1x384xf32>
    %282 = vector.shape_cast %281 : vector<1x1x384xf32> to vector<1x384xf32>
    %283 = vector.broadcast %282 : vector<1x384xf32> to vector<16x384xf32>
    %284 = arith.addf %280, %283 : vector<16x384xf32>
    %285 = vector.extract_strided_slice %284 {offsets = [0, 0], sizes = [16, 128], strides = [1, 1]} : vector<16x384xf32> to vector<16x128xf32>
    %286 = vector.extract_strided_slice %284 {offsets = [0, 128], sizes = [16, 128], strides = [1, 1]} : vector<16x384xf32> to vector<16x128xf32>
    %287 = vector.extract_strided_slice %284 {offsets = [0, 256], sizes = [16, 128], strides = [1, 1]} : vector<16x384xf32> to vector<16x128xf32>
    %288 = vector.extract_strided_slice %285 {offsets = [0, 0], sizes = [16, 32], strides = [1, 1]} : vector<16x128xf32> to vector<16x32xf32>
    %289 = vector.extract_strided_slice %286 {offsets = [0, 0], sizes = [16, 32], strides = [1, 1]} : vector<16x128xf32> to vector<16x32xf32>
    %290 = vector.extract_strided_slice %287 {offsets = [0, 0], sizes = [16, 32], strides = [1, 1]} : vector<16x128xf32> to vector<16x32xf32>
    %cst_128 = arith.constant dense<0.000000e+00> : vector<16x16xf32>
    %291 = tpu.matmul %288, %289, %cst_128 {dimension_numbers = #tpu.dot_dimension_numbers<[1], [1], [0], [0], [0, 0, 1, 0], [], []>} : vector<16x32xf32>, vector<16x32xf32>, vector<16x16xf32> -> vector<16x16xf32>
    %cst_129 = arith.constant 0.176776692 : f32
    %292 = vector.broadcast %cst_129 : f32 to vector<16x16xf32>
    %293 = arith.mulf %291, %292 : vector<16x16xf32>
    %294 = arith.addf %293, %2 : vector<16x16xf32>
    %cst_130 = arith.constant dense<0xFF800000> : vector<16xf32>
    %295 = vector.multi_reduction <maximumf>, %294, %cst_130 [1] : vector<16x16xf32> to vector<16xf32>
    %296 = vector.shape_cast %295 : vector<16xf32> to vector<16x1xf32>
    %297 = vector.broadcast %296 : vector<16x1xf32> to vector<16x16xf32>
    %298 = arith.subf %294, %297 : vector<16x16xf32>
    %299 = math.exp %298 : vector<16x16xf32>
    %cst_131 = arith.constant dense<0.000000e+00> : vector<16xf32>
    %300 = vector.multi_reduction <add>, %299, %cst_131 [1] : vector<16x16xf32> to vector<16xf32>
    %301 = vector.shape_cast %300 : vector<16xf32> to vector<16x1xf32>
    %302 = tpu.reciprocal %301 {approx = true} : vector<16x1xf32> -> vector<16x1xf32>
    %303 = vector.broadcast %302 : vector<16x1xf32> to vector<16x16xf32>
    %304 = arith.mulf %299, %303 : vector<16x16xf32>
    %cst_132 = arith.constant dense<0.000000e+00> : vector<16x32xf32>
    %305 = tpu.matmul %304, %290, %cst_132 {dimension_numbers = #tpu.dot_dimension_numbers<[1], [0], [0], [1], [0, 0, 1, 1], [], []>} : vector<16x16xf32>, vector<16x32xf32>, vector<16x32xf32> -> vector<16x32xf32>
    %c0_133 = arith.constant 0 : index
    %c0_134 = arith.constant 0 : index
    %306 = vector.load %arg21[%c0_133, %c0_134] : memref<16x128xf32, #tpu.memory_space<vmem>>, vector<16x32xf32>
    tpu.vector_store %arg21[%c0_133, %c0_134], %305 {strides = array<i32>} : memref<16x128xf32, #tpu.memory_space<vmem>>, vector<16x32xf32>,
    %307 = vector.extract_strided_slice %285 {offsets = [0, 32], sizes = [16, 32], strides = [1, 1]} : vector<16x128xf32> to vector<16x32xf32>
    %308 = vector.extract_strided_slice %286 {offsets = [0, 32], sizes = [16, 32], strides = [1, 1]} : vector<16x128xf32> to vector<16x32xf32>
    %309 = vector.extract_strided_slice %287 {offsets = [0, 32], sizes = [16, 32], strides = [1, 1]} : vector<16x128xf32> to vector<16x32xf32>
    %cst_135 = arith.constant dense<0.000000e+00> : vector<16x16xf32>
    %310 = tpu.matmul %307, %308, %cst_135 {dimension_numbers = #tpu.dot_dimension_numbers<[1], [1], [0], [0], [0, 0, 1, 0], [], []>} : vector<16x32xf32>, vector<16x32xf32>, vector<16x16xf32> -> vector<16x16xf32>
    %cst_136 = arith.constant 0.176776692 : f32
    %311 = vector.broadcast %cst_136 : f32 to vector<16x16xf32>
    %312 = arith.mulf %310, %311 : vector<16x16xf32>
    %313 = arith.addf %312, %2 : vector<16x16xf32>
    %cst_137 = arith.constant dense<0xFF800000> : vector<16xf32>
    %314 = vector.multi_reduction <maximumf>, %313, %cst_137 [1] : vector<16x16xf32> to vector<16xf32>
    %315 = vector.shape_cast %314 : vector<16xf32> to vector<16x1xf32>
    %316 = vector.broadcast %315 : vector<16x1xf32> to vector<16x16xf32>
    %317 = arith.subf %313, %316 : vector<16x16xf32>
    %318 = math.exp %317 : vector<16x16xf32>
    %cst_138 = arith.constant dense<0.000000e+00> : vector<16xf32>
    %319 = vector.multi_reduction <add>, %318, %cst_138 [1] : vector<16x16xf32> to vector<16xf32>
    %320 = vector.shape_cast %319 : vector<16xf32> to vector<16x1xf32>
    %321 = tpu.reciprocal %320 {approx = true} : vector<16x1xf32> -> vector<16x1xf32>
    %322 = vector.broadcast %321 : vector<16x1xf32> to vector<16x16xf32>
    %323 = arith.mulf %318, %322 : vector<16x16xf32>
    %cst_139 = arith.constant dense<0.000000e+00> : vector<16x32xf32>
    %324 = tpu.matmul %323, %309, %cst_139 {dimension_numbers = #tpu.dot_dimension_numbers<[1], [0], [0], [1], [0, 0, 1, 1], [], []>} : vector<16x16xf32>, vector<16x32xf32>, vector<16x32xf32> -> vector<16x32xf32>
    %c0_140 = arith.constant 0 : index
    %c32_141 = arith.constant 32 : index
    %325 = vector.load %arg21[%c0_140, %c32_141] : memref<16x128xf32, #tpu.memory_space<vmem>>, vector<16x32xf32>
    tpu.vector_store %arg21[%c0_140, %c32_141], %324 {strides = array<i32>} : memref<16x128xf32, #tpu.memory_space<vmem>>, vector<16x32xf32>,
    %326 = vector.extract_strided_slice %285 {offsets = [0, 64], sizes = [16, 32], strides = [1, 1]} : vector<16x128xf32> to vector<16x32xf32>
    %327 = vector.extract_strided_slice %286 {offsets = [0, 64], sizes = [16, 32], strides = [1, 1]} : vector<16x128xf32> to vector<16x32xf32>
    %328 = vector.extract_strided_slice %287 {offsets = [0, 64], sizes = [16, 32], strides = [1, 1]} : vector<16x128xf32> to vector<16x32xf32>
    %cst_142 = arith.constant dense<0.000000e+00> : vector<16x16xf32>
    %329 = tpu.matmul %326, %327, %cst_142 {dimension_numbers = #tpu.dot_dimension_numbers<[1], [1], [0], [0], [0, 0, 1, 0], [], []>} : vector<16x32xf32>, vector<16x32xf32>, vector<16x16xf32> -> vector<16x16xf32>
    %cst_143 = arith.constant 0.176776692 : f32
    %330 = vector.broadcast %cst_143 : f32 to vector<16x16xf32>
    %331 = arith.mulf %329, %330 : vector<16x16xf32>
    %332 = arith.addf %331, %2 : vector<16x16xf32>
    %cst_144 = arith.constant dense<0xFF800000> : vector<16xf32>
    %333 = vector.multi_reduction <maximumf>, %332, %cst_144 [1] : vector<16x16xf32> to vector<16xf32>
    %334 = vector.shape_cast %333 : vector<16xf32> to vector<16x1xf32>
    %335 = vector.broadcast %334 : vector<16x1xf32> to vector<16x16xf32>
    %336 = arith.subf %332, %335 : vector<16x16xf32>
    %337 = math.exp %336 : vector<16x16xf32>
    %cst_145 = arith.constant dense<0.000000e+00> : vector<16xf32>
    %338 = vector.multi_reduction <add>, %337, %cst_145 [1] : vector<16x16xf32> to vector<16xf32>
    %339 = vector.shape_cast %338 : vector<16xf32> to vector<16x1xf32>
    %340 = tpu.reciprocal %339 {approx = true} : vector<16x1xf32> -> vector<16x1xf32>
    %341 = vector.broadcast %340 : vector<16x1xf32> to vector<16x16xf32>
    %342 = arith.mulf %337, %341 : vector<16x16xf32>
    %cst_146 = arith.constant dense<0.000000e+00> : vector<16x32xf32>
    %343 = tpu.matmul %342, %328, %cst_146 {dimension_numbers = #tpu.dot_dimension_numbers<[1], [0], [0], [1], [0, 0, 1, 1], [], []>} : vector<16x16xf32>, vector<16x32xf32>, vector<16x32xf32> -> vector<16x32xf32>
    %c0_147 = arith.constant 0 : index
    %c64_148 = arith.constant 64 : index
    %344 = vector.load %arg21[%c0_147, %c64_148] : memref<16x128xf32, #tpu.memory_space<vmem>>, vector<16x32xf32>
    tpu.vector_store %arg21[%c0_147, %c64_148], %343 {strides = array<i32>} : memref<16x128xf32, #tpu.memory_space<vmem>>, vector<16x32xf32>,
    %345 = vector.extract_strided_slice %285 {offsets = [0, 96], sizes = [16, 32], strides = [1, 1]} : vector<16x128xf32> to vector<16x32xf32>
    %346 = vector.extract_strided_slice %286 {offsets = [0, 96], sizes = [16, 32], strides = [1, 1]} : vector<16x128xf32> to vector<16x32xf32>
    %347 = vector.extract_strided_slice %287 {offsets = [0, 96], sizes = [16, 32], strides = [1, 1]} : vector<16x128xf32> to vector<16x32xf32>
    %cst_149 = arith.constant dense<0.000000e+00> : vector<16x16xf32>
    %348 = tpu.matmul %345, %346, %cst_149 {dimension_numbers = #tpu.dot_dimension_numbers<[1], [1], [0], [0], [0, 0, 1, 0], [], []>} : vector<16x32xf32>, vector<16x32xf32>, vector<16x16xf32> -> vector<16x16xf32>
    %cst_150 = arith.constant 0.176776692 : f32
    %349 = vector.broadcast %cst_150 : f32 to vector<16x16xf32>
    %350 = arith.mulf %348, %349 : vector<16x16xf32>
    %351 = arith.addf %350, %2 : vector<16x16xf32>
    %cst_151 = arith.constant dense<0xFF800000> : vector<16xf32>
    %352 = vector.multi_reduction <maximumf>, %351, %cst_151 [1] : vector<16x16xf32> to vector<16xf32>
    %353 = vector.shape_cast %352 : vector<16xf32> to vector<16x1xf32>
    %354 = vector.broadcast %353 : vector<16x1xf32> to vector<16x16xf32>
    %355 = arith.subf %351, %354 : vector<16x16xf32>
    %356 = math.exp %355 : vector<16x16xf32>
    %cst_152 = arith.constant dense<0.000000e+00> : vector<16xf32>
    %357 = vector.multi_reduction <add>, %356, %cst_152 [1] : vector<16x16xf32> to vector<16xf32>
    %358 = vector.shape_cast %357 : vector<16xf32> to vector<16x1xf32>
    %359 = tpu.reciprocal %358 {approx = true} : vector<16x1xf32> -> vector<16x1xf32>
    %360 = vector.broadcast %359 : vector<16x1xf32> to vector<16x16xf32>
    %361 = arith.mulf %356, %360 : vector<16x16xf32>
    %cst_153 = arith.constant dense<0.000000e+00> : vector<16x32xf32>
    %362 = tpu.matmul %361, %347, %cst_153 {dimension_numbers = #tpu.dot_dimension_numbers<[1], [0], [0], [1], [0, 0, 1, 1], [], []>} : vector<16x16xf32>, vector<16x32xf32>, vector<16x32xf32> -> vector<16x32xf32>
    %c0_154 = arith.constant 0 : index
    %c96_155 = arith.constant 96 : index
    %363 = vector.load %arg21[%c0_154, %c96_155] : memref<16x128xf32, #tpu.memory_space<vmem>>, vector<16x32xf32>
    tpu.vector_store %arg21[%c0_154, %c96_155], %362 {strides = array<i32>} : memref<16x128xf32, #tpu.memory_space<vmem>>, vector<16x32xf32>,
    %c0_156 = arith.constant 0 : index
    %c0_157 = arith.constant 0 : index
    %364 = vector.load %arg21[%c0_156, %c0_157] : memref<16x128xf32, #tpu.memory_space<vmem>>, vector<16x128xf32>
    %c1_158 = arith.constant 1 : index
    %c0_159 = arith.constant 0 : index
    %c0_160 = arith.constant 0 : index
    %365 = vector.load %arg8[%c1_158, %c0_159, %c0_160] : memref<2x128x128xf32, #tpu.memory_space<vmem>>, vector<1x128x128xf32>
    %366 = vector.shape_cast %365 : vector<1x128x128xf32> to vector<128x128xf32>
    %cst_161 = arith.constant dense<0.000000e+00> : vector<16x128xf32>
    %367 = tpu.matmul %364, %366, %cst_161 {dimension_numbers = #tpu.dot_dimension_numbers<[1], [0], [0], [1], [0, 0, 1, 1], [], []>} : vector<16x128xf32>, vector<128x128xf32>, vector<16x128xf32> -> vector<16x128xf32>
    %c1_162 = arith.constant 1 : index
    %c0_163 = arith.constant 0 : index
    %c0_164 = arith.constant 0 : index
    %368 = vector.load %arg9[%c1_162, %c0_163, %c0_164] : memref<2x1x128xf32, #tpu.memory_space<vmem>>, vector<1x1x128xf32>
    %369 = vector.shape_cast %368 : vector<1x1x128xf32> to vector<1x128xf32>
    %370 = vector.broadcast %369 : vector<1x128xf32> to vector<16x128xf32>
    %371 = arith.addf %367, %370 : vector<16x128xf32>
    %372 = arith.addf %277, %371 : vector<16x128xf32>
    %c1_165 = arith.constant 1 : index
    %c0_166 = arith.constant 0 : index
    %c0_167 = arith.constant 0 : index
    %373 = vector.load %arg10[%c1_165, %c0_166, %c0_167] : memref<2x2x128xf32, #tpu.memory_space<vmem>>, vector<1x2x128xf32>
    %374 = vector.shape_cast %373 : vector<1x2x128xf32> to vector<2x128xf32>
    %375 = vector.extract_strided_slice %374 {offsets = [0, 0], sizes = [1, 128], strides = [1, 1]} : vector<2x128xf32> to vector<1x128xf32>
    %376 = vector.extract_strided_slice %374 {offsets = [1, 0], sizes = [1, 128], strides = [1, 1]} : vector<2x128xf32> to vector<1x128xf32>
    %cst_168 = arith.constant dense<0.000000e+00> : vector<16xf32>
    %377 = vector.multi_reduction <add>, %372, %cst_168 [1] : vector<16x128xf32> to vector<16xf32>
    %378 = vector.shape_cast %377 : vector<16xf32> to vector<16x1xf32>
    %cst_169 = arith.constant 1.280000e+02 : f32
    %379 = vector.broadcast %cst_169 : f32 to vector<16x1xf32>
    %380 = arith.divf %378, %379 : vector<16x1xf32>
    %381 = vector.broadcast %380 : vector<16x1xf32> to vector<16x128xf32>
    %382 = arith.subf %372, %381 : vector<16x128xf32>
    %383 = arith.mulf %382, %382 : vector<16x128xf32>
    %cst_170 = arith.constant dense<0.000000e+00> : vector<16xf32>
    %384 = vector.multi_reduction <add>, %383, %cst_170 [1] : vector<16x128xf32> to vector<16xf32>
    %385 = vector.shape_cast %384 : vector<16xf32> to vector<16x1xf32>
    %cst_171 = arith.constant 1.280000e+02 : f32
    %386 = vector.broadcast %cst_171 : f32 to vector<16x1xf32>
    %387 = arith.divf %385, %386 : vector<16x1xf32>
    %388 = vector.broadcast %380 : vector<16x1xf32> to vector<16x128xf32>
    %389 = arith.subf %372, %388 : vector<16x128xf32>
    %cst_172 = arith.constant 9.99999974E-6 : f32
    %390 = vector.broadcast %cst_172 : f32 to vector<16x1xf32>
    %391 = arith.addf %387, %390 : vector<16x1xf32>
    %392 = math.rsqrt %391 : vector<16x1xf32>
    %393 = vector.broadcast %392 : vector<16x1xf32> to vector<16x128xf32>
    %394 = arith.mulf %389, %393 : vector<16x128xf32>
    %395 = vector.broadcast %375 : vector<1x128xf32> to vector<16x128xf32>
    %396 = arith.mulf %394, %395 : vector<16x128xf32>
    %397 = vector.broadcast %376 : vector<1x128xf32> to vector<16x128xf32>
    %398 = arith.addf %396, %397 : vector<16x128xf32>
    %c1_173 = arith.constant 1 : index
    %c0_174 = arith.constant 0 : index
    %c0_175 = arith.constant 0 : index
    %399 = vector.load %arg11[%c1_173, %c0_174, %c0_175] : memref<2x128x128xf32, #tpu.memory_space<vmem>>, vector<1x128x128xf32>
    %400 = vector.shape_cast %399 : vector<1x128x128xf32> to vector<128x128xf32>
    %cst_176 = arith.constant dense<0.000000e+00> : vector<16x128xf32>
    %401 = tpu.matmul %398, %400, %cst_176 {dimension_numbers = #tpu.dot_dimension_numbers<[1], [0], [0], [1], [0, 0, 1, 1], [], []>} : vector<16x128xf32>, vector<128x128xf32>, vector<16x128xf32> -> vector<16x128xf32>
    %c1_177 = arith.constant 1 : index
    %c0_178 = arith.constant 0 : index
    %c0_179 = arith.constant 0 : index
    %402 = vector.load %arg12[%c1_177, %c0_178, %c0_179] : memref<2x1x128xf32, #tpu.memory_space<vmem>>, vector<1x1x128xf32>
    %403 = vector.shape_cast %402 : vector<1x1x128xf32> to vector<1x128xf32>
    %404 = vector.broadcast %403 : vector<1x128xf32> to vector<16x128xf32>
    %405 = arith.addf %401, %404 : vector<16x128xf32>
    %c1_180 = arith.constant 1 : index
    %c0_181 = arith.constant 0 : index
    %c0_182 = arith.constant 0 : index
    %406 = vector.load %arg13[%c1_180, %c0_181, %c0_182] : memref<2x64x256xf32, #tpu.memory_space<vmem>>, vector<1x64x256xf32>
    %407 = vector.shape_cast %406 : vector<1x64x256xf32> to vector<64x256xf32>
    %cst_183 = arith.constant dense<0.000000e+00> : vector<32x256xf32>
    %408 = tpu.matmul %1, %407, %cst_183 {dimension_numbers = #tpu.dot_dimension_numbers<[1], [0], [0], [1], [0, 0, 1, 1], [], []>} : vector<32x64xf32>, vector<64x256xf32>, vector<32x256xf32> -> vector<32x256xf32>
    %c1_184 = arith.constant 1 : index
    %c0_185 = arith.constant 0 : index
    %c0_186 = arith.constant 0 : index
    %409 = vector.load %arg14[%c1_184, %c0_185, %c0_186] : memref<2x1x256xf32, #tpu.memory_space<vmem>>, vector<1x1x256xf32>
    %410 = vector.shape_cast %409 : vector<1x1x256xf32> to vector<1x256xf32>
    %411 = vector.broadcast %410 : vector<1x256xf32> to vector<32x256xf32>
    %412 = arith.addf %408, %411 : vector<32x256xf32>
    %413 = vector.extract_strided_slice %412 {offsets = [0, 0], sizes = [32, 128], strides = [1, 1]} : vector<32x256xf32> to vector<32x128xf32>
    %414 = vector.extract_strided_slice %412 {offsets = [0, 128], sizes = [32, 128], strides = [1, 1]} : vector<32x256xf32> to vector<32x128xf32>
    %415 = vector.extract_strided_slice %405 {offsets = [0, 0], sizes = [16, 32], strides = [1, 1]} : vector<16x128xf32> to vector<16x32xf32>
    %416 = vector.extract_strided_slice %413 {offsets = [0, 0], sizes = [32, 32], strides = [1, 1]} : vector<32x128xf32> to vector<32x32xf32>
    %417 = vector.extract_strided_slice %414 {offsets = [0, 0], sizes = [32, 32], strides = [1, 1]} : vector<32x128xf32> to vector<32x32xf32>
    %cst_187 = arith.constant dense<0.000000e+00> : vector<16x32xf32>
    %418 = tpu.matmul %415, %416, %cst_187 {dimension_numbers = #tpu.dot_dimension_numbers<[1], [1], [0], [0], [0, 0, 1, 0], [], []>} : vector<16x32xf32>, vector<32x32xf32>, vector<16x32xf32> -> vector<16x32xf32>
    %cst_188 = arith.constant 0.176776692 : f32
    %419 = vector.broadcast %cst_188 : f32 to vector<16x32xf32>
    %420 = arith.mulf %418, %419 : vector<16x32xf32>
    %421 = arith.addf %420, %3 : vector<16x32xf32>
    %cst_189 = arith.constant dense<0xFF800000> : vector<16xf32>
    %422 = vector.multi_reduction <maximumf>, %421, %cst_189 [1] : vector<16x32xf32> to vector<16xf32>
    %423 = vector.shape_cast %422 : vector<16xf32> to vector<16x1xf32>
    %424 = vector.broadcast %423 : vector<16x1xf32> to vector<16x32xf32>
    %425 = arith.subf %421, %424 : vector<16x32xf32>
    %426 = math.exp %425 : vector<16x32xf32>
    %cst_190 = arith.constant dense<0.000000e+00> : vector<16xf32>
    %427 = vector.multi_reduction <add>, %426, %cst_190 [1] : vector<16x32xf32> to vector<16xf32>
    %428 = vector.shape_cast %427 : vector<16xf32> to vector<16x1xf32>
    %429 = tpu.reciprocal %428 {approx = true} : vector<16x1xf32> -> vector<16x1xf32>
    %430 = vector.broadcast %429 : vector<16x1xf32> to vector<16x32xf32>
    %431 = arith.mulf %426, %430 : vector<16x32xf32>
    %cst_191 = arith.constant dense<0.000000e+00> : vector<16x32xf32>
    %432 = tpu.matmul %431, %417, %cst_191 {dimension_numbers = #tpu.dot_dimension_numbers<[1], [0], [0], [1], [0, 0, 1, 1], [], []>} : vector<16x32xf32>, vector<32x32xf32>, vector<16x32xf32> -> vector<16x32xf32>
    %c0_192 = arith.constant 0 : index
    %c0_193 = arith.constant 0 : index
    %433 = vector.load %arg21[%c0_192, %c0_193] : memref<16x128xf32, #tpu.memory_space<vmem>>, vector<16x32xf32>
    tpu.vector_store %arg21[%c0_192, %c0_193], %432 {strides = array<i32>} : memref<16x128xf32, #tpu.memory_space<vmem>>, vector<16x32xf32>,
    %434 = vector.extract_strided_slice %405 {offsets = [0, 32], sizes = [16, 32], strides = [1, 1]} : vector<16x128xf32> to vector<16x32xf32>
    %435 = vector.extract_strided_slice %413 {offsets = [0, 32], sizes = [32, 32], strides = [1, 1]} : vector<32x128xf32> to vector<32x32xf32>
    %436 = vector.extract_strided_slice %414 {offsets = [0, 32], sizes = [32, 32], strides = [1, 1]} : vector<32x128xf32> to vector<32x32xf32>
    %cst_194 = arith.constant dense<0.000000e+00> : vector<16x32xf32>
    %437 = tpu.matmul %434, %435, %cst_194 {dimension_numbers = #tpu.dot_dimension_numbers<[1], [1], [0], [0], [0, 0, 1, 0], [], []>} : vector<16x32xf32>, vector<32x32xf32>, vector<16x32xf32> -> vector<16x32xf32>
    %cst_195 = arith.constant 0.176776692 : f32
    %438 = vector.broadcast %cst_195 : f32 to vector<16x32xf32>
    %439 = arith.mulf %437, %438 : vector<16x32xf32>
    %440 = arith.addf %439, %3 : vector<16x32xf32>
    %cst_196 = arith.constant dense<0xFF800000> : vector<16xf32>
    %441 = vector.multi_reduction <maximumf>, %440, %cst_196 [1] : vector<16x32xf32> to vector<16xf32>
    %442 = vector.shape_cast %441 : vector<16xf32> to vector<16x1xf32>
    %443 = vector.broadcast %442 : vector<16x1xf32> to vector<16x32xf32>
    %444 = arith.subf %440, %443 : vector<16x32xf32>
    %445 = math.exp %444 : vector<16x32xf32>
    %cst_197 = arith.constant dense<0.000000e+00> : vector<16xf32>
    %446 = vector.multi_reduction <add>, %445, %cst_197 [1] : vector<16x32xf32> to vector<16xf32>
    %447 = vector.shape_cast %446 : vector<16xf32> to vector<16x1xf32>
    %448 = tpu.reciprocal %447 {approx = true} : vector<16x1xf32> -> vector<16x1xf32>
    %449 = vector.broadcast %448 : vector<16x1xf32> to vector<16x32xf32>
    %450 = arith.mulf %445, %449 : vector<16x32xf32>
    %cst_198 = arith.constant dense<0.000000e+00> : vector<16x32xf32>
    %451 = tpu.matmul %450, %436, %cst_198 {dimension_numbers = #tpu.dot_dimension_numbers<[1], [0], [0], [1], [0, 0, 1, 1], [], []>} : vector<16x32xf32>, vector<32x32xf32>, vector<16x32xf32> -> vector<16x32xf32>
    %c0_199 = arith.constant 0 : index
    %c32_200 = arith.constant 32 : index
    %452 = vector.load %arg21[%c0_199, %c32_200] : memref<16x128xf32, #tpu.memory_space<vmem>>, vector<16x32xf32>
    tpu.vector_store %arg21[%c0_199, %c32_200], %451 {strides = array<i32>} : memref<16x128xf32, #tpu.memory_space<vmem>>, vector<16x32xf32>,
    %453 = vector.extract_strided_slice %405 {offsets = [0, 64], sizes = [16, 32], strides = [1, 1]} : vector<16x128xf32> to vector<16x32xf32>
    %454 = vector.extract_strided_slice %413 {offsets = [0, 64], sizes = [32, 32], strides = [1, 1]} : vector<32x128xf32> to vector<32x32xf32>
    %455 = vector.extract_strided_slice %414 {offsets = [0, 64], sizes = [32, 32], strides = [1, 1]} : vector<32x128xf32> to vector<32x32xf32>
    %cst_201 = arith.constant dense<0.000000e+00> : vector<16x32xf32>
    %456 = tpu.matmul %453, %454, %cst_201 {dimension_numbers = #tpu.dot_dimension_numbers<[1], [1], [0], [0], [0, 0, 1, 0], [], []>} : vector<16x32xf32>, vector<32x32xf32>, vector<16x32xf32> -> vector<16x32xf32>
    %cst_202 = arith.constant 0.176776692 : f32
    %457 = vector.broadcast %cst_202 : f32 to vector<16x32xf32>
    %458 = arith.mulf %456, %457 : vector<16x32xf32>
    %459 = arith.addf %458, %3 : vector<16x32xf32>
    %cst_203 = arith.constant dense<0xFF800000> : vector<16xf32>
    %460 = vector.multi_reduction <maximumf>, %459, %cst_203 [1] : vector<16x32xf32> to vector<16xf32>
    %461 = vector.shape_cast %460 : vector<16xf32> to vector<16x1xf32>
    %462 = vector.broadcast %461 : vector<16x1xf32> to vector<16x32xf32>
    %463 = arith.subf %459, %462 : vector<16x32xf32>
    %464 = math.exp %463 : vector<16x32xf32>
    %cst_204 = arith.constant dense<0.000000e+00> : vector<16xf32>
    %465 = vector.multi_reduction <add>, %464, %cst_204 [1] : vector<16x32xf32> to vector<16xf32>
    %466 = vector.shape_cast %465 : vector<16xf32> to vector<16x1xf32>
    %467 = tpu.reciprocal %466 {approx = true} : vector<16x1xf32> -> vector<16x1xf32>
    %468 = vector.broadcast %467 : vector<16x1xf32> to vector<16x32xf32>
    %469 = arith.mulf %464, %468 : vector<16x32xf32>
    %cst_205 = arith.constant dense<0.000000e+00> : vector<16x32xf32>
    %470 = tpu.matmul %469, %455, %cst_205 {dimension_numbers = #tpu.dot_dimension_numbers<[1], [0], [0], [1], [0, 0, 1, 1], [], []>} : vector<16x32xf32>, vector<32x32xf32>, vector<16x32xf32> -> vector<16x32xf32>
    %c0_206 = arith.constant 0 : index
    %c64_207 = arith.constant 64 : index
    %471 = vector.load %arg21[%c0_206, %c64_207] : memref<16x128xf32, #tpu.memory_space<vmem>>, vector<16x32xf32>
    tpu.vector_store %arg21[%c0_206, %c64_207], %470 {strides = array<i32>} : memref<16x128xf32, #tpu.memory_space<vmem>>, vector<16x32xf32>,
    %472 = vector.extract_strided_slice %405 {offsets = [0, 96], sizes = [16, 32], strides = [1, 1]} : vector<16x128xf32> to vector<16x32xf32>
    %473 = vector.extract_strided_slice %413 {offsets = [0, 96], sizes = [32, 32], strides = [1, 1]} : vector<32x128xf32> to vector<32x32xf32>
    %474 = vector.extract_strided_slice %414 {offsets = [0, 96], sizes = [32, 32], strides = [1, 1]} : vector<32x128xf32> to vector<32x32xf32>
    %cst_208 = arith.constant dense<0.000000e+00> : vector<16x32xf32>
    %475 = tpu.matmul %472, %473, %cst_208 {dimension_numbers = #tpu.dot_dimension_numbers<[1], [1], [0], [0], [0, 0, 1, 0], [], []>} : vector<16x32xf32>, vector<32x32xf32>, vector<16x32xf32> -> vector<16x32xf32>
    %cst_209 = arith.constant 0.176776692 : f32
    %476 = vector.broadcast %cst_209 : f32 to vector<16x32xf32>
    %477 = arith.mulf %475, %476 : vector<16x32xf32>
    %478 = arith.addf %477, %3 : vector<16x32xf32>
    %cst_210 = arith.constant dense<0xFF800000> : vector<16xf32>
    %479 = vector.multi_reduction <maximumf>, %478, %cst_210 [1] : vector<16x32xf32> to vector<16xf32>
    %480 = vector.shape_cast %479 : vector<16xf32> to vector<16x1xf32>
    %481 = vector.broadcast %480 : vector<16x1xf32> to vector<16x32xf32>
    %482 = arith.subf %478, %481 : vector<16x32xf32>
    %483 = math.exp %482 : vector<16x32xf32>
    %cst_211 = arith.constant dense<0.000000e+00> : vector<16xf32>
    %484 = vector.multi_reduction <add>, %483, %cst_211 [1] : vector<16x32xf32> to vector<16xf32>
    %485 = vector.shape_cast %484 : vector<16xf32> to vector<16x1xf32>
    %486 = tpu.reciprocal %485 {approx = true} : vector<16x1xf32> -> vector<16x1xf32>
    %487 = vector.broadcast %486 : vector<16x1xf32> to vector<16x32xf32>
    %488 = arith.mulf %483, %487 : vector<16x32xf32>
    %cst_212 = arith.constant dense<0.000000e+00> : vector<16x32xf32>
    %489 = tpu.matmul %488, %474, %cst_212 {dimension_numbers = #tpu.dot_dimension_numbers<[1], [0], [0], [1], [0, 0, 1, 1], [], []>} : vector<16x32xf32>, vector<32x32xf32>, vector<16x32xf32> -> vector<16x32xf32>
    %c0_213 = arith.constant 0 : index
    %c96_214 = arith.constant 96 : index
    %490 = vector.load %arg21[%c0_213, %c96_214] : memref<16x128xf32, #tpu.memory_space<vmem>>, vector<16x32xf32>
    tpu.vector_store %arg21[%c0_213, %c96_214], %489 {strides = array<i32>} : memref<16x128xf32, #tpu.memory_space<vmem>>, vector<16x32xf32>,
    %c0_215 = arith.constant 0 : index
    %c0_216 = arith.constant 0 : index
    %491 = vector.load %arg21[%c0_215, %c0_216] : memref<16x128xf32, #tpu.memory_space<vmem>>, vector<16x128xf32>
    %c1_217 = arith.constant 1 : index
    %c0_218 = arith.constant 0 : index
    %c0_219 = arith.constant 0 : index
    %492 = vector.load %arg15[%c1_217, %c0_218, %c0_219] : memref<2x128x128xf32, #tpu.memory_space<vmem>>, vector<1x128x128xf32>
    %493 = vector.shape_cast %492 : vector<1x128x128xf32> to vector<128x128xf32>
    %cst_220 = arith.constant dense<0.000000e+00> : vector<16x128xf32>
    %494 = tpu.matmul %491, %493, %cst_220 {dimension_numbers = #tpu.dot_dimension_numbers<[1], [0], [0], [1], [0, 0, 1, 1], [], []>} : vector<16x128xf32>, vector<128x128xf32>, vector<16x128xf32> -> vector<16x128xf32>
    %c1_221 = arith.constant 1 : index
    %c0_222 = arith.constant 0 : index
    %c0_223 = arith.constant 0 : index
    %495 = vector.load %arg16[%c1_221, %c0_222, %c0_223] : memref<2x1x128xf32, #tpu.memory_space<vmem>>, vector<1x1x128xf32>
    %496 = vector.shape_cast %495 : vector<1x1x128xf32> to vector<1x128xf32>
    %497 = vector.broadcast %496 : vector<1x128xf32> to vector<16x128xf32>
    %498 = arith.addf %494, %497 : vector<16x128xf32>
    %499 = arith.addf %398, %498 : vector<16x128xf32>
    %c0_224 = arith.constant 0 : index
    %c0_225 = arith.constant 0 : index
    %500 = vector.load %arg20[%c0_224, %c0_225] : memref<16x128xf32, #tpu.memory_space<vmem>>, vector<16x128xf32>
    tpu.vector_store %arg20[%c0_224, %c0_225], %499 {strides = array<i32>} : memref<16x128xf32, #tpu.memory_space<vmem>>, vector<16x128xf32>,
    %cst_226 = arith.constant 0.000000e+00 : f32
    %501 = vector.broadcast %cst_226 : f32 to vector<16x128xf32>
    %502 = arith.maximumf %499, %501 : vector<16x128xf32>
    %c0_227 = arith.constant 0 : index
    %c0_228 = arith.constant 0 : index
    %503 = vector.load %arg17[%c0_227, %c0_228] : memref<128x128xf32, #tpu.memory_space<vmem>>, vector<128x128xf32>
    %cst_229 = arith.constant dense<0.000000e+00> : vector<16x128xf32>
    %504 = tpu.matmul %502, %503, %cst_229 {dimension_numbers = #tpu.dot_dimension_numbers<[1], [0], [0], [1], [0, 0, 1, 1], [], []>} : vector<16x128xf32>, vector<128x128xf32>, vector<16x128xf32> -> vector<16x128xf32>
    %c0_230 = arith.constant 0 : index
    %c0_231 = arith.constant 0 : index
    %505 = vector.load %arg18[%c0_230, %c0_231] : memref<1x128xf32, #tpu.memory_space<vmem>>, vector<1x128xf32>
    %506 = vector.broadcast %505 : vector<1x128xf32> to vector<16x128xf32>
    %507 = arith.addf %504, %506 : vector<16x128xf32>
    %c0_232 = arith.constant 0 : index
    %c0_233 = arith.constant 0 : index
    %508 = vector.load %arg19[%c0_232, %c0_233] : memref<16x128xf32, #tpu.memory_space<vmem>>, vector<16x128xf32>
    tpu.vector_store %arg19[%c0_232, %c0_233], %507 {strides = array<i32>} : memref<16x128xf32, #tpu.memory_space<vmem>>, vector<16x128xf32>,
    return
  }
  func.func @transform_0(%arg0: i32) -> (i32, i32) {
    %c0_i32 = arith.constant 0 : i32
    %c0_i32_0 = arith.constant 0 : i32
    %c0_i32_1 = arith.constant 0 : i32
    return %c0_i32, %c0_i32_0 : i32, i32
  }
  func.func @transform_1(%arg0: i32) -> (i32, i32) {
    %c0_i32 = arith.constant 0 : i32
    %c0_i32_0 = arith.constant 0 : i32
    %c0_i32_1 = arith.constant 0 : i32
    return %c0_i32, %c0_i32_0 : i32, i32
  }
  func.func @transform_2(%arg0: i32) -> (i32, i32) {
    %c0_i32 = arith.constant 0 : i32
    %c0_i32_0 = arith.constant 0 : i32
    %c0_i32_1 = arith.constant 0 : i32
    return %c0_i32, %c0_i32_0 : i32, i32
  }
  func.func @transform_3(%arg0: i32) -> (i32, i32) {
    %c0_i32 = arith.constant 0 : i32
    %c0_i32_0 = arith.constant 0 : i32
    %c0_i32_1 = arith.constant 0 : i32
    return %c0_i32, %c0_i32_0 : i32, i32
  }
  func.func @transform_4(%arg0: i32) -> (i32, i32, i32) {
    %c0_i32 = arith.constant 0 : i32
    %c0_i32_0 = arith.constant 0 : i32
    %c0_i32_1 = arith.constant 0 : i32
    %c0_i32_2 = arith.constant 0 : i32
    return %c0_i32, %c0_i32_0, %c0_i32_1 : i32, i32, i32
  }
  func.func @transform_5(%arg0: i32) -> (i32, i32, i32) {
    %c0_i32 = arith.constant 0 : i32
    %c0_i32_0 = arith.constant 0 : i32
    %c0_i32_1 = arith.constant 0 : i32
    %c0_i32_2 = arith.constant 0 : i32
    return %c0_i32, %c0_i32_0, %c0_i32_1 : i32, i32, i32
  }
  func.func @transform_6(%arg0: i32) -> (i32, i32, i32) {
    %c0_i32 = arith.constant 0 : i32
    %c0_i32_0 = arith.constant 0 : i32
    %c0_i32_1 = arith.constant 0 : i32
    %c0_i32_2 = arith.constant 0 : i32
    return %c0_i32, %c0_i32_0, %c0_i32_1 : i32, i32, i32
  }
  func.func @transform_7(%arg0: i32) -> (i32, i32, i32) {
    %c0_i32 = arith.constant 0 : i32
    %c0_i32_0 = arith.constant 0 : i32
    %c0_i32_1 = arith.constant 0 : i32
    %c0_i32_2 = arith.constant 0 : i32
    return %c0_i32, %c0_i32_0, %c0_i32_1 : i32, i32, i32
  }
  func.func @transform_8(%arg0: i32) -> (i32, i32, i32) {
    %c0_i32 = arith.constant 0 : i32
    %c0_i32_0 = arith.constant 0 : i32
    %c0_i32_1 = arith.constant 0 : i32
    %c0_i32_2 = arith.constant 0 : i32
    return %c0_i32, %c0_i32_0, %c0_i32_1 : i32, i32, i32
  }
  func.func @transform_9(%arg0: i32) -> (i32, i32, i32) {
    %c0_i32 = arith.constant 0 : i32
    %c0_i32_0 = arith.constant 0 : i32
    %c0_i32_1 = arith.constant 0 : i32
    %c0_i32_2 = arith.constant 0 : i32
    return %c0_i32, %c0_i32_0, %c0_i32_1 : i32, i32, i32
  }
  func.func @transform_10(%arg0: i32) -> (i32, i32, i32) {
    %c0_i32 = arith.constant 0 : i32
    %c0_i32_0 = arith.constant 0 : i32
    %c0_i32_1 = arith.constant 0 : i32
    %c0_i32_2 = arith.constant 0 : i32
    return %c0_i32, %c0_i32_0, %c0_i32_1 : i32, i32, i32
  }
  func.func @transform_11(%arg0: i32) -> (i32, i32, i32) {
    %c0_i32 = arith.constant 0 : i32
    %c0_i32_0 = arith.constant 0 : i32
    %c0_i32_1 = arith.constant 0 : i32
    %c0_i32_2 = arith.constant 0 : i32
    return %c0_i32, %c0_i32_0, %c0_i32_1 : i32, i32, i32
  }
  func.func @transform_12(%arg0: i32) -> (i32, i32, i32) {
    %c0_i32 = arith.constant 0 : i32
    %c0_i32_0 = arith.constant 0 : i32
    %c0_i32_1 = arith.constant 0 : i32
    %c0_i32_2 = arith.constant 0 : i32
    return %c0_i32, %c0_i32_0, %c0_i32_1 : i32, i32, i32
  }
  func.func @transform_13(%arg0: i32) -> (i32, i32, i32) {
    %c0_i32 = arith.constant 0 : i32
    %c0_i32_0 = arith.constant 0 : i32
    %c0_i32_1 = arith.constant 0 : i32
    %c0_i32_2 = arith.constant 0 : i32
    return %c0_i32, %c0_i32_0, %c0_i32_1 : i32, i32, i32
  }
  func.func @transform_14(%arg0: i32) -> (i32, i32, i32) {
    %c0_i32 = arith.constant 0 : i32
    %c0_i32_0 = arith.constant 0 : i32
    %c0_i32_1 = arith.constant 0 : i32
    %c0_i32_2 = arith.constant 0 : i32
    return %c0_i32, %c0_i32_0, %c0_i32_1 : i32, i32, i32
  }
  func.func @transform_15(%arg0: i32) -> (i32, i32, i32) {
    %c0_i32 = arith.constant 0 : i32
    %c0_i32_0 = arith.constant 0 : i32
    %c0_i32_1 = arith.constant 0 : i32
    %c0_i32_2 = arith.constant 0 : i32
    return %c0_i32, %c0_i32_0, %c0_i32_1 : i32, i32, i32
  }
  func.func @transform_16(%arg0: i32) -> (i32, i32) {
    %c0_i32 = arith.constant 0 : i32
    %c0_i32_0 = arith.constant 0 : i32
    %c0_i32_1 = arith.constant 0 : i32
    return %c0_i32, %c0_i32_0 : i32, i32
  }
  func.func @transform_17(%arg0: i32) -> (i32, i32) {
    %c0_i32 = arith.constant 0 : i32
    %c0_i32_0 = arith.constant 0 : i32
    %c0_i32_1 = arith.constant 0 : i32
    return %c0_i32, %c0_i32_0 : i32, i32
  }
  func.func @transform_18(%arg0: i32) -> (i32, i32) {
    %c0_i32 = arith.constant 0 : i32
    %c0_i32_0 = arith.constant 0 : i32
    %c0_i32_1 = arith.constant 0 : i32
    return %c0_i32, %c0_i32_0 : i32, i32
  }
  func.func @transform_19(%arg0: i32) -> (i32, i32) {
    %c0_i32 = arith.constant 0 : i32
    %c0_i32_0 = arith.constant 0 : i32
    %c0_i32_1 = arith.constant 0 : i32
    return %c0_i32, %c0_i32_0 : i32, i32
  }
}

</mosaic_0001>

<llo_original>
// kernel: policy_head_train_forward.1
$region0: #{policy_head_train_forward.1}
  #allocation0 [shape = 'u32[]', space=smem, size = 0x4, offset = 0x4, fixed_abs, tag = 'smem constant byte address 0x4 - core index']
  #allocation1 [shape = 'u32[144,128]{1,0:T(1,128)}', space=vmem, size = 0x12000, scoped, tag = 'internal scratch']
  #allocation2 [shape = 'f32[16,128]{1,0:T(8,128)}', space=vmem, size = 0x2000, scoped, tag = 'scratch operand']
  %s0 = inlined_call_operand.vmem [shape: f32[16,128], index: 0, kind: input, shape index: {}]
  %s1 = inlined_call_operand.vmem [shape: f32[32,64], index: 1, kind: input, shape index: {}]
  %s2 = inlined_call_operand.vmem [shape: f32[16,16], index: 2, kind: input, shape index: {}]
  %s3 = inlined_call_operand.vmem [shape: f32[16,32], index: 3, kind: input, shape index: {}]
  %s4 = inlined_call_operand.vmem [shape: f32[2,2,128], index: 4, kind: input, shape index: {}]
  %s5 = inlined_call_operand.hbm [shape: f32[2,128,384], index: 5, kind: input, shape index: {}]
  %s6 = inlined_call_operand.vmem [shape: f32[2,1,384], index: 6, kind: input, shape index: {}]
  %s7 = inlined_call_operand.vmem [shape: f32[2,128,128], index: 7, kind: input, shape index: {}]
  %s8 = inlined_call_operand.vmem [shape: f32[2,1,128], index: 8, kind: input, shape index: {}]
  %s9 = inlined_call_operand.vmem [shape: f32[2,2,128], index: 9, kind: input, shape index: {}]
  %s10 = inlined_call_operand.vmem [shape: f32[2,128,128], index: 10, kind: input, shape index: {}]
  %s11 = inlined_call_operand.vmem [shape: f32[2,1,128], index: 11, kind: input, shape index: {}]
  %s12 = inlined_call_operand.hbm [shape: f32[2,64,256], index: 12, kind: input, shape index: {}]
  %s13 = inlined_call_operand.vmem [shape: f32[2,1,256], index: 13, kind: input, shape index: {}]
  %s14 = inlined_call_operand.hbm [shape: f32[2,128,128], index: 14, kind: input, shape index: {}]
  %s15 = inlined_call_operand.vmem [shape: f32[2,1,128], index: 15, kind: input, shape index: {}]
  %s16 = inlined_call_operand.hbm [shape: f32[128,128], index: 16, kind: input, shape index: {}]
  %s17 = inlined_call_operand.vmem [shape: f32[1,128], index: 17, kind: input, shape index: {}]
  %s18 = inlined_call_operand.vmem [shape: f32[16,128], index: 18, kind: output, shape index: {0}]
  %s19 = inlined_call_operand.vmem [shape: f32[16,128], index: 19, kind: output, shape index: {1}]
  %20 = xla_tuple %s18, %s19
  %s21 = sld [smem:[#allocation0]]
  $region106: #{policy_head_train_forward.1} parent=0
    _
  %s23 = ssub.s32 1, %s21
  %s24 = scalar_select 0, %s23, %s21
  $region1: #{policy_head_train_forward.1} parent=0
    #allocation3 [shape = 'u8[393216]{0}', space=vmem, size = 0x60000, scoped, tag = 'input window, operand 5, single buffered']
    #allocation4 [shape = 's32[1]{0}', space=sflag, size = 0x4, scoped, tag = 'scoped memory for policy_head_train_forward.1']
    #allocation5 [shape = 'u8[131072]{0}', space=vmem, size = 0x20000, scoped, tag = 'input window, operand 12, single buffered']
    #allocation6 [shape = 's32[1]{0}', space=sflag, size = 0x4, scoped, tag = 'scoped memory for policy_head_train_forward.1']
    #allocation7 [shape = 'u8[131072]{0}', space=vmem, size = 0x20000, scoped, tag = 'input window, operand 14, single buffered']
    #allocation8 [shape = 'u8[65536]{0}', space=vmem, size = 0x10000, scoped, tag = 'input window, operand 16, single buffered']
    #allocation9 [shape = 's32[1]{0}', space=sflag, size = 0x4, scoped, tag = 'scoped memory for policy_head_train_forward.1']
    %25 = vsyncpa [#allocation4], 0
    %26 = vsyncpa [#allocation6], 0
    %27 = vsyncpa [#allocation9], 0
    // Predicated region
    $region2: #{policy_head_train_forward.1} parent=1 // pred_check
      _
    $region3: #{policy_head_train_forward.1} parent=1 // pred_check_branch
      %29 = sbr.rel (0) target = $region5
    $region4: #{policy_head_train_forward.1} parent=1 // pred_region
      _
    $region5: #{policy_head_train_forward.1} parent=1 // pred_fallthru
      _
    // Predicated region
    $region6: #{policy_head_train_forward.1} parent=1 // pred_check
      _
    $region7: #{policy_head_train_forward.1} parent=1 // pred_check_branch
      %31 = sbr.rel (0) target = $region9
    $region8: #{policy_head_train_forward.1} parent=1 // pred_region
      _
    $region9: #{policy_head_train_forward.1} parent=1 // pred_fallthru
      _
    // Predicated region
    $region10: #{policy_head_train_forward.1} parent=1 // pred_check
      _
    $region11: #{policy_head_train_forward.1} parent=1 // pred_check_branch
      %33 = sbr.rel (0) target = $region13
    $region12: #{policy_head_train_forward.1} parent=1 // pred_region
      _
    $region13: #{policy_head_train_forward.1} parent=1 // pred_fallthru
      _
    // Predicated region
    $region14: #{policy_head_train_forward.1} parent=1 // pred_check
      _
    $region15: #{policy_head_train_forward.1} parent=1 // pred_check_branch
      %35 = sbr.rel (0) target = $region17
    $region16: #{policy_head_train_forward.1} parent=1 // pred_region
      _
    $region17: #{policy_head_train_forward.1} parent=1 // pred_fallthru
      _
    // Predicated region
    $region18: #{policy_head_train_forward.1} parent=1 // pred_check
      _
    $region19: #{policy_head_train_forward.1} parent=1 // pred_check_branch
      %37 = sbr.rel (0) target = $region21
    $region20: #{policy_head_train_forward.1} parent=1 // pred_region
      _
    $region21: #{policy_head_train_forward.1} parent=1 // pred_fallthru
      _
    // Predicated region
    $region22: #{policy_head_train_forward.1} parent=1 // pred_check
      _
    $region23: #{policy_head_train_forward.1} parent=1 // pred_check_branch
      %39 = sbr.rel (0) target = $region25
    $region24: #{policy_head_train_forward.1} parent=1 // pred_region
      %s41 = ssub.s32 12288, 12288
      %42 = vsyncadd [#allocation4], %s41
      %s43 = sshll.u32 [#allocation3], 4
      %s44 = int_to_ptr.vmem [resolvable:$true] %s43
      %49 = dma.hbm_to_vmem [thread:$0]  %s5, 12288, %s44, [#allocation4], 384, 384, 24
    $region25: #{policy_head_train_forward.1} parent=1 // pred_fallthru
      _
    // Predicated region
    $region26: #{policy_head_train_forward.1} parent=1 // pred_check
      _
    $region27: #{policy_head_train_forward.1} parent=1 // pred_check_branch
      %51 = sbr.rel (0) target = $region29
    $region28: #{policy_head_train_forward.1} parent=1 // pred_region
      _
    $region29: #{policy_head_train_forward.1} parent=1 // pred_fallthru
      _
    // Predicated region
    $region30: #{policy_head_train_forward.1} parent=1 // pred_check
      _
    $region31: #{policy_head_train_forward.1} parent=1 // pred_check_branch
      %53 = sbr.rel (0) target = $region33
    $region32: #{policy_head_train_forward.1} parent=1 // pred_region
      _
    $region33: #{policy_head_train_forward.1} parent=1 // pred_fallthru
      _
    // Predicated region
    $region34: #{policy_head_train_forward.1} parent=1 // pred_check
      _
    $region35: #{policy_head_train_forward.1} parent=1 // pred_check_branch
      %55 = sbr.rel (0) target = $region37
    $region36: #{policy_head_train_forward.1} parent=1 // pred_region
      _
    $region37: #{policy_head_train_forward.1} parent=1 // pred_fallthru
      _
    // Predicated region
    $region38: #{policy_head_train_forward.1} parent=1 // pred_check
      _
    $region39: #{policy_head_train_forward.1} parent=1 // pred_check_branch
      %57 = sbr.rel (0) target = $region41
    $region40: #{policy_head_train_forward.1} parent=1 // pred_region
      _
    $region41: #{policy_head_train_forward.1} parent=1 // pred_fallthru
      _
    // Predicated region
    $region42: #{policy_head_train_forward.1} parent=1 // pred_check
      _
    $region43: #{policy_head_train_forward.1} parent=1 // pred_check_branch
      %59 = sbr.rel (0) target = $region45
    $region44: #{policy_head_train_forward.1} parent=1 // pred_region
      _
    $region45: #{policy_head_train_forward.1} parent=1 // pred_fallthru
      _
    // Predicated region
    $region46: #{policy_head_train_forward.1} parent=1 // pred_check
      _
    $region47: #{policy_head_train_forward.1} parent=1 // pred_check_branch
      %61 = sbr.rel (0) target = $region49
    $region48: #{policy_head_train_forward.1} parent=1 // pred_region
      _
    $region49: #{policy_head_train_forward.1} parent=1 // pred_fallthru
      _
    // Predicated region
    $region50: #{policy_head_train_forward.1} parent=1 // pred_check
      _
    $region51: #{policy_head_train_forward.1} parent=1 // pred_check_branch
      %63 = sbr.rel (0) target = $region53
    $region52: #{policy_head_train_forward.1} parent=1 // pred_region
      %s65 = ssub.s32 4096, 4096
      %66 = vsyncadd [#allocation6], %s65
      %s67 = sshll.u32 [#allocation5], 4
      %s68 = int_to_ptr.vmem [resolvable:$true] %s67
      %73 = dma.hbm_to_vmem [thread:$0]  %s12, 4096, %s68, [#allocation6], 256, 256, 16
    $region53: #{policy_head_train_forward.1} parent=1 // pred_fallthru
      _
    // Predicated region
    $region54: #{policy_head_train_forward.1} parent=1 // pred_check
      _
    $region55: #{policy_head_train_forward.1} parent=1 // pred_check_branch
      %75 = sbr.rel (0) target = $region57
    $region56: #{policy_head_train_forward.1} parent=1 // pred_region
      _
    $region57: #{policy_head_train_forward.1} parent=1 // pred_fallthru
      _
    // Predicated region
    $region58: #{policy_head_train_forward.1} parent=1 // pred_check
      _
    $region59: #{policy_head_train_forward.1} parent=1 // pred_check_branch
      %77 = sbr.rel (0) target = $region61
    $region60: #{policy_head_train_forward.1} parent=1 // pred_region
      %s79 = ssub.s32 4096, 4096
      %80 = vsyncadd [#allocation6], %s79
      %s81 = sshll.u32 [#allocation7], 4
      %s82 = int_to_ptr.vmem [resolvable:$true] %s81
      %87 = dma.hbm_to_vmem [thread:$0]  %s14, 4096, %s82, [#allocation6], 128, 128, 8
    $region61: #{policy_head_train_forward.1} parent=1 // pred_fallthru
      _
    // Predicated region
    $region62: #{policy_head_train_forward.1} parent=1 // pred_check
      _
    $region63: #{policy_head_train_forward.1} parent=1 // pred_check_branch
      %89 = sbr.rel (0) target = $region65
    $region64: #{policy_head_train_forward.1} parent=1 // pred_region
      _
    $region65: #{policy_head_train_forward.1} parent=1 // pred_fallthru
      _
    // Predicated region
    $region66: #{policy_head_train_forward.1} parent=1 // pred_check
      _
    $region67: #{policy_head_train_forward.1} parent=1 // pred_check_branch
      %91 = sbr.rel (0) target = $region69
    $region68: #{policy_head_train_forward.1} parent=1 // pred_region
      %s93 = ssub.s32 2048, 2048
      %94 = vsyncadd [#allocation9], %s93
      %s95 = sshll.u32 [#allocation8], 4
      %s96 = int_to_ptr.vmem [resolvable:$true] %s95
      %101 = dma.hbm_to_vmem [thread:$0]  %s16, 2048, %s96, [#allocation9], 128, 128, 8
    $region69: #{policy_head_train_forward.1} parent=1 // pred_fallthru
      _
    // Predicated region
    $region70: #{policy_head_train_forward.1} parent=1 // pred_check
      _
    $region71: #{policy_head_train_forward.1} parent=1 // pred_check_branch
      %103 = sbr.rel (0) target = $region73
    $region72: #{policy_head_train_forward.1} parent=1 // pred_region
      _
    $region73: #{policy_head_train_forward.1} parent=1 // pred_fallthru
      _
    // Predicated region
    $region74: #{policy_head_train_forward.1} parent=1 // pred_check
      _
    $region75: #{policy_head_train_forward.1} parent=1 // pred_check_branch
      %105 = sbr.rel (0) target = $region77
    $region76: #{policy_head_train_forward.1} parent=1 // pred_region
      %106 = dma.done [#allocation4], 12288
    $region77: #{policy_head_train_forward.1} parent=1 // pred_fallthru
      _
    // Predicated region
    $region78: #{policy_head_train_forward.1} parent=1 // pred_check
      _
    $region79: #{policy_head_train_forward.1} parent=1 // pred_check_branch
      %108 = sbr.rel (0) target = $region81
    $region80: #{policy_head_train_forward.1} parent=1 // pred_region
      %109 = dma.done [#allocation6], 4096
    $region81: #{policy_head_train_forward.1} parent=1 // pred_fallthru
      _
    // Predicated region
    $region82: #{policy_head_train_forward.1} parent=1 // pred_check
      _
    $region83: #{policy_head_train_forward.1} parent=1 // pred_check_branch
      %111 = sbr.rel (0) target = $region85
    $region84: #{policy_head_train_forward.1} parent=1 // pred_region
      %112 = dma.done [#allocation6], 4096
    $region85: #{policy_head_train_forward.1} parent=1 // pred_fallthru
      _
    // Predicated region
    $region86: #{policy_head_train_forward.1} parent=1 // pred_check
      _
    $region87: #{policy_head_train_forward.1} parent=1 // pred_check_branch
      %114 = sbr.rel (0) target = $region89
    $region88: #{policy_head_train_forward.1} parent=1 // pred_region
      %115 = dma.done [#allocation9], 2048
    $region89: #{policy_head_train_forward.1} parent=1 // pred_fallthru
      _
    %v116 = vld [vmem:[%s0] sm:$0xff]
    %v117 = vld [vmem:[%s0 + $0x8] sm:$0xff]
    %v118 = vld [vmem:[%s1] sm:$0xff]
    %v119 = vld [vmem:[%s1 + $0x8] sm:$0xff]
    %v120 = vld [vmem:[%s1 + $0x10] sm:$0xff]
    %v121 = vld [vmem:[%s1 + $0x18] sm:$0xff]
    %v122 = vld [vmem:[%s2] sm:$0xff]
    %v123 = vld [vmem:[%s2 + $0x8] sm:$0xff]
    %v124 = vld [vmem:[%s3] sm:$0xff]
    %v125 = vld [vmem:[%s3 + $0x8] sm:$0xff]
    %v126 = vld [vmem:[%s4] sm:$0x3]
    %127 = vadd.xlane.f32.xlu0 %v116
    %v128 = vpop.xlane.xlu0 %127
    %129 = vadd.xlane.f32.xlu0 %v117
    %v130 = vpop.xlane.xlu0 %129
    %v131 = vrcp.pop 128.0
    %v132 = vmul.f32 %v128, %v131
    %v133 = vmul.f32 %v130, %v131
    %v134 = vsub.f32 %v116, %v132
    %v135 = vsub.f32 %v117, %v133
    %v136 = vmul.f32 %v134, %v134
    %v137 = vmul.f32 %v135, %v135
    %138 = vadd.xlane.f32.xlu0 %v136
    %v139 = vpop.xlane.xlu0 %138
    %140 = vadd.xlane.f32.xlu0 %v137
    %v141 = vpop.xlane.xlu0 %140
    %v142 = vmul.f32 %v139, %v131
    %v143 = vmul.f32 %v141, %v131
    %v144 = vadd.f32 %v142, 1e-05
    %v145 = vadd.f32 %v143, 1e-05
    %v146 = vrsqrt.pop %v144
    %v147 = vrsqrt.pop %v145
    %v148 = vmul.f32 %v134, %v146
    %v149 = vmul.f32 %v135, %v147
    %v150 = vlaneseq
    %v151 = vshrl.u32 %v150, 7
    %v152 = vsub.s32 0, %v151
    %v153 = vrot.slane %v126, %v152
    %v154 = vmul.f32 %v148, %v153
    %v155 = vmul.f32 %v149, %v153
    %v156 = vlaneseq
    %v157 = vshrl.u32 %v156, 7
    %v158 = vsub.s32 1, %v157
    %v159 = vrot.slane %v126, %v158
    %v160 = vadd.f32 %v154, %v159
    %v161 = vadd.f32 %v155, %v159
    %v162 = vld [vmem:[#allocation3] sm:$0xff]
    %v163 = vld [vmem:[#allocation3 + $0x8] sm:$0xff]
    %v164 = vld [vmem:[#allocation3 + $0x10] sm:$0xff]
    %v165 = vld [vmem:[#allocation3 + $0x18] sm:$0xff]
    %v166 = vld [vmem:[#allocation3 + $0x20] sm:$0xff]
    %v167 = vld [vmem:[#allocation3 + $0x28] sm:$0xff]
    %v168 = vld [vmem:[#allocation3 + $0x30] sm:$0xff]
    %v169 = vld [vmem:[#allocation3 + $0x38] sm:$0xff]
    %v170 = vld [vmem:[#allocation3 + $0x40] sm:$0xff]
    %v171 = vld [vmem:[#allocation3 + $0x48] sm:$0xff]
    %v172 = vld [vmem:[#allocation3 + $0x50] sm:$0xff]
    %v173 = vld [vmem:[#allocation3 + $0x58] sm:$0xff]
    %v174 = vld [vmem:[#allocation3 + $0x60] sm:$0xff]
    %v175 = vld [vmem:[#allocation3 + $0x68] sm:$0xff]
    %v176 = vld [vmem:[#allocation3 + $0x70] sm:$0xff]
    %v177 = vld [vmem:[#allocation3 + $0x78] sm:$0xff]
    %v178 = vld [vmem:[#allocation3 + $0x80] sm:$0xff]
    %v179 = vld [vmem:[#allocation3 + $0x88] sm:$0xff]
    %v180 = vld [vmem:[#allocation3 + $0x90] sm:$0xff]
    %v181 = vld [vmem:[#allocation3 + $0x98] sm:$0xff]
    %v182 = vld [vmem:[#allocation3 + $0xa0] sm:$0xff]
    %v183 = vld [vmem:[#allocation3 + $0xa8] sm:$0xff]
    %v184 = vld [vmem:[#allocation3 + $0xb0] sm:$0xff]
    %v185 = vld [vmem:[#allocation3 + $0xb8] sm:$0xff]
    %v186 = vld [vmem:[#allocation3 + $0xc0] sm:$0xff]
    %v187 = vld [vmem:[#allocation3 + $0xc8] sm:$0xff]
    %v188 = vld [vmem:[#allocation3 + $0xd0] sm:$0xff]
    %v189 = vld [vmem:[#allocation3 + $0xd8] sm:$0xff]
    %v190 = vld [vmem:[#allocation3 + $0xe0] sm:$0xff]
    %v191 = vld [vmem:[#allocation3 + $0xe8] sm:$0xff]
    %v192 = vld [vmem:[#allocation3 + $0xf0] sm:$0xff]
    %v193 = vld [vmem:[#allocation3 + $0xf8] sm:$0xff]
    %v194 = vld [vmem:[#allocation3 + $0x100] sm:$0xff]
    %v195 = vld [vmem:[#allocation3 + $0x108] sm:$0xff]
    %v196 = vld [vmem:[#allocation3 + $0x110] sm:$0xff]
    %v197 = vld [vmem:[#allocation3 + $0x118] sm:$0xff]
    %v198 = vld [vmem:[#allocation3 + $0x120] sm:$0xff]
    %v199 = vld [vmem:[#allocation3 + $0x128] sm:$0xff]
    %v200 = vld [vmem:[#allocation3 + $0x130] sm:$0xff]
    %v201 = vld [vmem:[#allocation3 + $0x138] sm:$0xff]
    %v202 = vld [vmem:[#allocation3 + $0x140] sm:$0xff]
    %v203 = vld [vmem:[#allocation3 + $0x148] sm:$0xff]
    %v204 = vld [vmem:[#allocation3 + $0x150] sm:$0xff]
    %v205 = vld [vmem:[#allocation3 + $0x158] sm:$0xff]
    %v206 = vld [vmem:[#allocation3 + $0x160] sm:$0xff]
    %v207 = vld [vmem:[#allocation3 + $0x168] sm:$0xff]
    %v208 = vld [vmem:[#allocation3 + $0x170] sm:$0xff]
    %v209 = vld [vmem:[#allocation3 + $0x178] sm:$0xff]
    %v210 = vld [vmem:[%s6] sm:$0x7]
    %v212 = vlaneseq
    %v213 = vshrl.u32 %v212, 7
    %v214 = vsub.s32 0, %v213
    %v215 = vrot.slane %v210, %v214
    %v216 = vlaneseq
    %v217 = vshrl.u32 %v216, 7
    %v218 = vsub.s32 1, %v217
    %v219 = vrot.slane %v210, %v218
    %v220 = vlaneseq
    %v221 = vshrl.u32 %v220, 7
    %v222 = vsub.s32 2, %v221
    %v223 = vrot.slane %v210, %v222
    %227 = vmatprep.subr.mxu0 %v163
    %228 = vmatpush1.msra.mxu0 %v162
    %229 = vmatprep.subr.mxu0 %v166
    %230 = vmatpush1.msra.mxu0 %v165
    %231 = vmatprep.subr.mxu0 %v169
    %232 = vmatpush1.msra.mxu0 %v168
    %233 = vmatprep.subr.mxu0 %v172
    %234 = vmatpush1.msra.mxu0 %v171
    %235 = vmatprep.subr.mxu0 %v175
    %236 = vmatpush1.msra.mxu0 %v174
    %237 = vmatprep.subr.mxu0 %v178
    %238 = vmatpush1.msra.mxu0 %v177
    %239 = vmatprep.subr.mxu0 %v181
    %240 = vmatpush1.msra.mxu0 %v180
    %241 = vmatprep.subr.mxu0 %v184
    %242 = vmatpush1.msra.mxu0 %v183
    %243 = vmatprep.subr.mxu0 %v187
    %244 = vmatpush1.msra.mxu0 %v186
    %245 = vmatprep.subr.mxu0 %v190
    %246 = vmatpush1.msra.mxu0 %v189
    %247 = vmatprep.subr.mxu0 %v193
    %248 = vmatpush1.msra.mxu0 %v192
    %249 = vmatprep.subr.mxu0 %v196
    %250 = vmatpush1.msra.mxu0 %v195
    %251 = vmatprep.subr.mxu0 %v199
    %252 = vmatpush1.msra.mxu0 %v198
    %253 = vmatprep.subr.mxu0 %v202
    %254 = vmatpush1.msra.mxu0 %v201
    %255 = vmatprep.subr.mxu0 %v205
    %256 = vmatpush1.msra.mxu0 %v204
    %257 = vmatprep.subr.mxu0 %v208
    %258 = vmatpush1.msra.mxu0 %v207
    %259 = vmatprep.subr.mxu0 0.0
    %260 = vmatpush1.msra.mxu0 0.0
    %261 = vmatprep.subr.mxu0 0.0
    %262 = vmatpush1.msra.mxu0 0.0
    %263 = vmatprep.subr.mxu0 0.0
    %264 = vmatpush1.msra.mxu0 0.0
    %265 = vmatprep.subr.mxu0 0.0
    %266 = vmatpush1.msra.mxu0 0.0
    %267 = vmatprep.subr.mxu0 0.0
    %268 = vmatpush1.msra.mxu0 0.0
    %269 = vmatprep.subr.mxu0 0.0
    %270 = vmatpush1.msra.mxu0 0.0
    %271 = vmatprep.subr.mxu0 0.0
    %272 = vmatpush1.msra.mxu0 0.0
    %273 = vmatprep.subr.mxu0 0.0
    %274 = vmatpush1.msra.mxu0 0.0
    %275 = vmatprep.subr.mxu0 0.0
    %276 = vmatpush1.msra.mxu0 0.0
    %277 = vmatprep.subr.mxu0 0.0
    %278 = vmatpush1.msra.mxu0 0.0
    %279 = vmatprep.subr.mxu0 0.0
    %280 = vmatpush1.msra.mxu0 0.0
    %281 = vmatprep.subr.mxu0 0.0
    %282 = vmatpush1.msra.mxu0 0.0
    %283 = vmatprep.subr.mxu0 0.0
    %284 = vmatpush1.msra.mxu0 0.0
    %285 = vmatprep.subr.mxu0 0.0
    %286 = vmatpush1.msra.mxu0 0.0
    %287 = vmatprep.subr.mxu0 0.0
    %288 = vmatpush1.msra.mxu0 0.0
    %289 = vmatprep.subr.mxu0 0.0
    %290 = vmatpush1.msra.mxu0 0.0
    %291 = vmatprep.mubr.f32.mxu0 0.0
    %292 = vmatmul.mubr.f32.gmra.mrb[0].mxu0 %v160
    %v293 = vpop.f32.mrb[0].mxu0
    %v294 = vadd.f32 %v215, %v293
    %v295 = vpop.f32.mrb[0].mxu0
    %v296 = vadd.f32 %v219, %v295
    %297 = vmatprep.mubr.f32.mxu0 0.0
    %298 = vmatmul.mubr.f32.gmra.mrb[0].mxu0 %v161
    %v299 = vpop.f32.mrb[0].mxu0
    %v300 = vadd.f32 %v215, %v299
    %v301 = vpop.f32.mrb[0].mxu0
    %v302 = vadd.f32 %v219, %v301
    %303 = vdwg.mxu0
    %304 = vmatprep.subr.mxu0 0.0
    %305 = vmatpush1.msra.mxu0 %v164
    %306 = vmatprep.subr.mxu0 0.0
    %307 = vmatpush1.msra.mxu0 %v167
    %308 = vmatprep.subr.mxu0 0.0
    %309 = vmatpush1.msra.mxu0 %v170
    %310 = vmatprep.subr.mxu0 0.0
    %311 = vmatpush1.msra.mxu0 %v173
    %312 = vmatprep.subr.mxu0 0.0
    %313 = vmatpush1.msra.mxu0 %v176
    %314 = vmatprep.subr.mxu0 0.0
    %315 = vmatpush1.msra.mxu0 %v179
    %316 = vmatprep.subr.mxu0 0.0
    %317 = vmatpush1.msra.mxu0 %v182
    %318 = vmatprep.subr.mxu0 0.0
    %319 = vmatpush1.msra.mxu0 %v185
    %320 = vmatprep.subr.mxu0 0.0
    %321 = vmatpush1.msra.mxu0 %v188
    %322 = vmatprep.subr.mxu0 0.0
    %323 = vmatpush1.msra.mxu0 %v191
    %324 = vmatprep.subr.mxu0 0.0
    %325 = vmatpush1.msra.mxu0 %v194
    %326 = vmatprep.subr.mxu0 0.0
    %327 = vmatpush1.msra.mxu0 %v197
    %328 = vmatprep.subr.mxu0 0.0
    %329 = vmatpush1.msra.mxu0 %v200
    %330 = vmatprep.subr.mxu0 0.0
    %331 = vmatpush1.msra.mxu0 %v203
    %332 = vmatprep.subr.mxu0 0.0
    %333 = vmatpush1.msra.mxu0 %v206
    %334 = vmatprep.subr.mxu0 0.0
    %335 = vmatpush1.msra.mxu0 %v209
    %336 = vmatprep.subr.mxu0 0.0
    %337 = vmatpush1.msra.mxu0 0.0
    %338 = vmatprep.subr.mxu0 0.0
    %339 = vmatpush1.msra.mxu0 0.0
    %340 = vmatprep.subr.mxu0 0.0
    %341 = vmatpush1.msra.mxu0 0.0
    %342 = vmatprep.subr.mxu0 0.0
    %343 = vmatpush1.msra.mxu0 0.0
    %344 = vmatprep.subr.mxu0 0.0
    %345 = vmatpush1.msra.mxu0 0.0
    %346 = vmatprep.subr.mxu0 0.0
    %347 = vmatpush1.msra.mxu0 0.0
    %348 = vmatprep.subr.mxu0 0.0
    %349 = vmatpush1.msra.mxu0 0.0
    %350 = vmatprep.subr.mxu0 0.0
    %351 = vmatpush1.msra.mxu0 0.0
    %352 = vmatprep.subr.mxu0 0.0
    %353 = vmatpush1.msra.mxu0 0.0
    %354 = vmatprep.subr.mxu0 0.0
    %355 = vmatpush1.msra.mxu0 0.0
    %356 = vmatprep.subr.mxu0 0.0
    %357 = vmatpush1.msra.mxu0 0.0
    %358 = vmatprep.subr.mxu0 0.0
    %359 = vmatpush1.msra.mxu0 0.0
    %360 = vmatprep.subr.mxu0 0.0
    %361 = vmatpush1.msra.mxu0 0.0
    %362 = vmatprep.subr.mxu0 0.0
    %363 = vmatpush1.msra.mxu0 0.0
    %364 = vmatprep.subr.mxu0 0.0
    %365 = vmatpush1.msra.mxu0 0.0
    %366 = vmatprep.subr.mxu0 0.0
    %367 = vmatpush1.msra.mxu0 0.0
    %368 = vmatprep.mubr.f32.mxu0 0.0
    %369 = vmatmul.mubr.f32.gmra.mrb[0].mxu0 %v160
    %v370 = vpop.f32.mrb[0].mxu0
    %v371 = vadd.f32 %v223, %v370
    %v372 = vpop.f32.mrb[0].mxu0
    %373 = vmatprep.mubr.f32.mxu0 0.0
    %374 = vmatmul.mubr.f32.gmra.mrb[0].mxu0 %v161
    %v375 = vpop.f32.mrb[0].mxu0
    %v376 = vadd.f32 %v223, %v375
    %v377 = vpop.f32.mrb[0].mxu0
    %378 = vdwg.mxu0
    %vm379 = vcmask 261120
    %v381 = vsel %vm379, %v294, 0
    %v384 = vsel %vm379, %v300, 0
    %v387 = vsel %vm379, %v296, 0
    %v390 = vsel %vm379, %v302, 0
    %392 = vmatprep.subr.mxu0 0.0
    %393 = vmatpush1.xpose.msra.mxu0 %v387
    %394 = vmatprep.subr.mxu0 0.0
    %395 = vmatpush1.xpose.msra.mxu0 %v390
    %396 = vmatprep.subr.mxu0 0.0
    %397 = vmatpush1.xpose.msra.mxu0 0.0
    %398 = vmatprep.subr.mxu0 0.0
    %399 = vmatpush1.xpose.msra.mxu0 0.0
    %400 = vmatprep.subr.mxu0 0.0
    %401 = vmatpush1.xpose.msra.mxu0 0.0
    %402 = vmatprep.subr.mxu0 0.0
    %403 = vmatpush1.xpose.msra.mxu0 0.0
    %404 = vmatprep.subr.mxu0 0.0
    %405 = vmatpush1.xpose.msra.mxu0 0.0
    %406 = vmatprep.subr.mxu0 0.0
    %407 = vmatpush1.xpose.msra.mxu0 0.0
    %408 = vmatprep.subr.mxu0 0.0
    %409 = vmatpush1.xpose.msra.mxu0 0.0
    %410 = vmatprep.subr.mxu0 0.0
    %411 = vmatpush1.xpose.msra.mxu0 0.0
    %412 = vmatprep.subr.mxu0 0.0
    %413 = vmatpush1.xpose.msra.mxu0 0.0
    %414 = vmatprep.subr.mxu0 0.0
    %415 = vmatpush1.xpose.msra.mxu0 0.0
    %416 = vmatprep.subr.mxu0 0.0
    %417 = vmatpush1.xpose.msra.mxu0 0.0
    %418 = vmatprep.subr.mxu0 0.0
    %419 = vmatpush1.xpose.msra.mxu0 0.0
    %420 = vmatprep.subr.mxu0 0.0
    %421 = vmatpush1.xpose.msra.mxu0 0.0
    %422 = vmatprep.subr.mxu0 0.0
    %423 = vmatpush1.xpose.msra.mxu0 0.0
    %424 = vmatprep.subr.mxu0 0.0
    %425 = vmatpush1.xpose.msra.mxu0 0.0
    %426 = vmatprep.subr.mxu0 0.0
    %427 = vmatpush1.xpose.msra.mxu0 0.0
    %428 = vmatprep.subr.mxu0 0.0
    %429 = vmatpush1.xpose.msra.mxu0 0.0
    %430 = vmatprep.subr.mxu0 0.0
    %431 = vmatpush1.xpose.msra.mxu0 0.0
    %432 = vmatprep.subr.mxu0 0.0
    %433 = vmatpush1.xpose.msra.mxu0 0.0
    %434 = vmatprep.subr.mxu0 0.0
    %435 = vmatpush1.xpose.msra.mxu0 0.0
    %436 = vmatprep.subr.mxu0 0.0
    %437 = vmatpush1.xpose.msra.mxu0 0.0
    %438 = vmatprep.subr.mxu0 0.0
    %439 = vmatpush1.xpose.msra.mxu0 0.0
    %440 = vmatprep.subr.mxu0 0.0
    %441 = vmatpush1.xpose.msra.mxu0 0.0
    %442 = vmatprep.subr.mxu0 0.0
    %443 = vmatpush1.xpose.msra.mxu0 0.0
    %444 = vmatprep.subr.mxu0 0.0
    %445 = vmatpush1.xpose.msra.mxu0 0.0
    %446 = vmatprep.subr.mxu0 0.0
    %447 = vmatpush1.xpose.msra.mxu0 0.0
    %448 = vmatprep.subr.mxu0 0.0
    %449 = vmatpush1.xpose.msra.mxu0 0.0
    %450 = vmatprep.subr.mxu0 0.0
    %451 = vmatpush1.xpose.msra.mxu0 0.0
    %452 = vmatprep.subr.mxu0 0.0
    %453 = vmatpush1.xpose.msra.mxu0 0.0
    %454 = vmatprep.subr.mxu0 0.0
    %455 = vmatpush1.xpose.msra.mxu0 0.0
    %456 = vmatprep.mubr.f32.mxu0 0.0
    %457 = vmatmul.mubr.f32.gmra.mrb[0].mxu0 %v381
    %v458 = vpop.f32.mrb[0].mxu0
    %v459 = vadd.f32 0.0, %v458
    %v460 = vpop.f32.mrb[0].mxu0
    %461 = vmatprep.mubr.f32.mxu0 0.0
    %462 = vmatmul.mubr.f32.gmra.mrb[0].mxu0 %v384
    %v463 = vpop.f32.mrb[0].mxu0
    %v464 = vadd.f32 0.0, %v463
    %v465 = vpop.f32.mrb[0].mxu0
    %466 = vdwg.mxu0
    %v467 = vmul.f32 %v459, 0.17677669
    %v468 = vmul.f32 %v464, 0.17677669
    %v469 = vadd.f32 %v467, %v122
    %v470 = vadd.f32 %v468, %v123
    %vm471 = vcmask 130048
    %v472 = vsel %vm471, %v469, -inf
    %473 = vmax.xlane.f32.xlu0 %v472
    %v474 = vpop.xlane.xlu0 %473
    %v475 = vsel %vm471, %v470, -inf
    %476 = vmax.xlane.f32.xlu0 %v475
    %v477 = vpop.xlane.xlu0 %476
    %v478 = vsub.f32 %v469, %v474
    %v479 = vsub.f32 %v470, %v477
    %v480 = vmul.f32 %v478, 1.442695
    %v481 = vpow.pop %v480
    %v482 = vmul.f32 %v479, 1.442695
    %v483 = vpow.pop %v482
    %v484 = vsel %vm471, %v481, 0.0
    %485 = vadd.xlane.f32.xlu0 %v484
    %v486 = vpop.xlane.xlu0 %485
    %v487 = vsel %vm471, %v483, 0.0
    %488 = vadd.xlane.f32.xlu0 %v487
    %v489 = vpop.xlane.xlu0 %488
    %v490 = vrcp.pop %v486
    %v491 = vrcp.pop %v489
    %v492 = vmul.f32 %v481, %v490
    %v493 = vmul.f32 %v483, %v491
    %v495 = vsel %vm471, %v492, 0
    %v498 = vsel %vm471, %v493, 0
    %500 = vmatprep.subr.mxu0 0.0
    %501 = vmatpush1.msra.mxu0 %v371
    %502 = vmatprep.subr.mxu0 0.0
    %503 = vmatpush1.msra.mxu0 %v376
    %504 = vmatprep.subr.mxu0 0.0
    %505 = vmatpush1.msra.mxu0 0.0
    %506 = vmatprep.subr.mxu0 0.0
    %507 = vmatpush1.msra.mxu0 0.0
    %508 = vmatprep.subr.mxu0 0.0
    %509 = vmatpush1.msra.mxu0 0.0
    %510 = vmatprep.subr.mxu0 0.0
    %511 = vmatpush1.msra.mxu0 0.0
    %512 = vmatprep.subr.mxu0 0.0
    %513 = vmatpush1.msra.mxu0 0.0
    %514 = vmatprep.subr.mxu0 0.0
    %515 = vmatpush1.msra.mxu0 0.0
    %516 = vmatprep.subr.mxu0 0.0
    %517 = vmatpush1.msra.mxu0 0.0
    %518 = vmatprep.subr.mxu0 0.0
    %519 = vmatpush1.msra.mxu0 0.0
    %520 = vmatprep.subr.mxu0 0.0
    %521 = vmatpush1.msra.mxu0 0.0
    %522 = vmatprep.subr.mxu0 0.0
    %523 = vmatpush1.msra.mxu0 0.0
    %524 = vmatprep.subr.mxu0 0.0
    %525 = vmatpush1.msra.mxu0 0.0
    %526 = vmatprep.subr.mxu0 0.0
    %527 = vmatpush1.msra.mxu0 0.0
    %528 = vmatprep.subr.mxu0 0.0
    %529 = vmatpush1.msra.mxu0 0.0
    %530 = vmatprep.subr.mxu0 0.0
    %531 = vmatpush1.msra.mxu0 0.0
    %532 = vmatprep.subr.mxu0 0.0
    %533 = vmatpush1.msra.mxu0 0.0
    %534 = vmatprep.subr.mxu0 0.0
    %535 = vmatpush1.msra.mxu0 0.0
    %536 = vmatprep.subr.mxu0 0.0
    %537 = vmatpush1.msra.mxu0 0.0
    %538 = vmatprep.subr.mxu0 0.0
    %539 = vmatpush1.msra.mxu0 0.0
    %540 = vmatprep.subr.mxu0 0.0
    %541 = vmatpush1.msra.mxu0 0.0
    %542 = vmatprep.subr.mxu0 0.0
    %543 = vmatpush1.msra.mxu0 0.0
    %544 = vmatprep.subr.mxu0 0.0
    %545 = vmatpush1.msra.mxu0 0.0
    %546 = vmatprep.subr.mxu0 0.0
    %547 = vmatpush1.msra.mxu0 0.0
    %548 = vmatprep.subr.mxu0 0.0
    %549 = vmatpush1.msra.mxu0 0.0
    %550 = vmatprep.subr.mxu0 0.0
    %551 = vmatpush1.msra.mxu0 0.0
    %552 = vmatprep.subr.mxu0 0.0
    %553 = vmatpush1.msra.mxu0 0.0
    %554 = vmatprep.subr.mxu0 0.0
    %555 = vmatpush1.msra.mxu0 0.0
    %556 = vmatprep.subr.mxu0 0.0
    %557 = vmatpush1.msra.mxu0 0.0
    %558 = vmatprep.subr.mxu0 0.0
    %559 = vmatpush1.msra.mxu0 0.0
    %560 = vmatprep.subr.mxu0 0.0
    %561 = vmatpush1.msra.mxu0 0.0
    %562 = vmatprep.subr.mxu0 0.0
    %563 = vmatpush1.msra.mxu0 0.0
    %564 = vmatprep.mubr.f32.mxu0 0.0
    %565 = vmatmul.mubr.f32.gmra.mrb[0].mxu0 %v495
    %v566 = vpop.f32.mrb[0].mxu0
    %v567 = vadd.f32 0.0, %v566
    %v568 = vpop.f32.mrb[0].mxu0
    %569 = vmatprep.mubr.f32.mxu0 0.0
    %570 = vmatmul.mubr.f32.gmra.mrb[0].mxu0 %v498
    %v571 = vpop.f32.mrb[0].mxu0
    %v572 = vadd.f32 0.0, %v571
    %v573 = vpop.f32.mrb[0].mxu0
    %574 = vdwg.mxu0
    %575 = vst.msk [vmem:[#allocation2] sm:$0xff] %vm379, %v567
    %576 = vst.msk [vmem:[#allocation2 + $0x8] sm:$0xff] %vm379, %v572
    %577 = vrot.lane.b32.xlu0 %v294, 96
    %v578 = vpop.permute.xlu0 %577
    %579 = vrot.lane.b32.xlu0 %v300, 96
    %v580 = vpop.permute.xlu0 %579
    %581 = vrot.lane.b32.xlu0 %v296, 96
    %v582 = vpop.permute.xlu0 %581
    %583 = vrot.lane.b32.xlu0 %v302, 96
    %v584 = vpop.permute.xlu0 %583
    %v585 = vsel %vm379, %v578, 0
    %v587 = vsel %vm379, %v580, 0
    %v589 = vsel %vm379, %v582, 0
    %v591 = vsel %vm379, %v584, 0
    %593 = vmatprep.subr.mxu0 0.0
    %594 = vmatpush1.xpose.msra.mxu0 %v589
    %595 = vmatprep.subr.mxu0 0.0
    %596 = vmatpush1.xpose.msra.mxu0 %v591
    %597 = vmatprep.subr.mxu0 0.0
    %598 = vmatpush1.xpose.msra.mxu0 0.0
    %599 = vmatprep.subr.mxu0 0.0
    %600 = vmatpush1.xpose.msra.mxu0 0.0
    %601 = vmatprep.subr.mxu0 0.0
    %602 = vmatpush1.xpose.msra.mxu0 0.0
    %603 = vmatprep.subr.mxu0 0.0
    %604 = vmatpush1.xpose.msra.mxu0 0.0
    %605 = vmatprep.subr.mxu0 0.0
    %606 = vmatpush1.xpose.msra.mxu0 0.0
    %607 = vmatprep.subr.mxu0 0.0
    %608 = vmatpush1.xpose.msra.mxu0 0.0
    %609 = vmatprep.subr.mxu0 0.0
    %610 = vmatpush1.xpose.msra.mxu0 0.0
    %611 = vmatprep.subr.mxu0 0.0
    %612 = vmatpush1.xpose.msra.mxu0 0.0
    %613 = vmatprep.subr.mxu0 0.0
    %614 = vmatpush1.xpose.msra.mxu0 0.0
    %615 = vmatprep.subr.mxu0 0.0
    %616 = vmatpush1.xpose.msra.mxu0 0.0
    %617 = vmatprep.subr.mxu0 0.0
    %618 = vmatpush1.xpose.msra.mxu0 0.0
    %619 = vmatprep.subr.mxu0 0.0
    %620 = vmatpush1.xpose.msra.mxu0 0.0
    %621 = vmatprep.subr.mxu0 0.0
    %622 = vmatpush1.xpose.msra.mxu0 0.0
    %623 = vmatprep.subr.mxu0 0.0
    %624 = vmatpush1.xpose.msra.mxu0 0.0
    %625 = vmatprep.subr.mxu0 0.0
    %626 = vmatpush1.xpose.msra.mxu0 0.0
    %627 = vmatprep.subr.mxu0 0.0
    %628 = vmatpush1.xpose.msra.mxu0 0.0
    %629 = vmatprep.subr.mxu0 0.0
    %630 = vmatpush1.xpose.msra.mxu0 0.0
    %631 = vmatprep.subr.mxu0 0.0
    %632 = vmatpush1.xpose.msra.mxu0 0.0
    %633 = vmatprep.subr.mxu0 0.0
    %634 = vmatpush1.xpose.msra.mxu0 0.0
    %635 = vmatprep.subr.mxu0 0.0
    %636 = vmatpush1.xpose.msra.mxu0 0.0
    %637 = vmatprep.subr.mxu0 0.0
    %638 = vmatpush1.xpose.msra.mxu0 0.0
    %639 = vmatprep.subr.mxu0 0.0
    %640 = vmatpush1.xpose.msra.mxu0 0.0
    %641 = vmatprep.subr.mxu0 0.0
    %642 = vmatpush1.xpose.msra.mxu0 0.0
    %643 = vmatprep.subr.mxu0 0.0
    %644 = vmatpush1.xpose.msra.mxu0 0.0
    %645 = vmatprep.subr.mxu0 0.0
    %646 = vmatpush1.xpose.msra.mxu0 0.0
    %647 = vmatprep.subr.mxu0 0.0
    %648 = vmatpush1.xpose.msra.mxu0 0.0
    %649 = vmatprep.subr.mxu0 0.0
    %650 = vmatpush1.xpose.msra.mxu0 0.0
    %651 = vmatprep.subr.mxu0 0.0
    %652 = vmatpush1.xpose.msra.mxu0 0.0
    %653 = vmatprep.subr.mxu0 0.0
    %654 = vmatpush1.xpose.msra.mxu0 0.0
    %655 = vmatprep.subr.mxu0 0.0
    %656 = vmatpush1.xpose.msra.mxu0 0.0
    %657 = vmatprep.mubr.f32.mxu0 0.0
    %658 = vmatmul.mubr.f32.gmra.mrb[0].mxu0 %v585
    %v659 = vpop.f32.mrb[0].mxu0
    %v660 = vadd.f32 0.0, %v659
    %v661 = vpop.f32.mrb[0].mxu0
    %662 = vmatprep.mubr.f32.mxu0 0.0
    %663 = vmatmul.mubr.f32.gmra.mrb[0].mxu0 %v587
    %v664 = vpop.f32.mrb[0].mxu0
    %v665 = vadd.f32 0.0, %v664
    %v666 = vpop.f32.mrb[0].mxu0
    %667 = vdwg.mxu0
    %v668 = vmul.f32 %v660, 0.17677669
    %v669 = vmul.f32 %v665, 0.17677669
    %v670 = vadd.f32 %v668, %v122
    %v671 = vadd.f32 %v669, %v123
    %v672 = vsel %vm471, %v670, -inf
    %673 = vmax.xlane.f32.xlu0 %v672
    %v674 = vpop.xlane.xlu0 %673
    %v675 = vsel %vm471, %v671, -inf
    %676 = vmax.xlane.f32.xlu0 %v675
    %v677 = vpop.xlane.xlu0 %676
    %v678 = vsub.f32 %v670, %v674
    %v679 = vsub.f32 %v671, %v677
    %v680 = vmul.f32 %v678, 1.442695
    %v681 = vpow.pop %v680
    %v682 = vmul.f32 %v679, 1.442695
    %v683 = vpow.pop %v682
    %v684 = vsel %vm471, %v681, 0.0
    %685 = vadd.xlane.f32.xlu0 %v684
    %v686 = vpop.xlane.xlu0 %685
    %v687 = vsel %vm471, %v683, 0.0
    %688 = vadd.xlane.f32.xlu0 %v687
    %v689 = vpop.xlane.xlu0 %688
    %v690 = vrcp.pop %v686
    %v691 = vrcp.pop %v689
    %v692 = vmul.f32 %v681, %v690
    %v693 = vmul.f32 %v683, %v691
    %696 = vrot.lane.b32.xlu0 %v371, 96
    %v697 = vpop.permute.xlu0 %696
    %698 = vrot.lane.b32.xlu0 %v376, 96
    %v699 = vpop.permute.xlu0 %698
    %v703 = vsel %vm471, %v692, 0
    %v706 = vsel %vm471, %v693, 0
    %708 = vmatprep.subr.mxu0 0.0
    %709 = vmatpush1.msra.mxu0 %v697
    %710 = vmatprep.subr.mxu0 0.0
    %711 = vmatpush1.msra.mxu0 %v699
    %712 = vmatprep.subr.mxu0 0.0
    %713 = vmatpush1.msra.mxu0 0.0
    %714 = vmatprep.subr.mxu0 0.0
    %715 = vmatpush1.msra.mxu0 0.0
    %716 = vmatprep.subr.mxu0 0.0
    %717 = vmatpush1.msra.mxu0 0.0
    %718 = vmatprep.subr.mxu0 0.0
    %719 = vmatpush1.msra.mxu0 0.0
    %720 = vmatprep.subr.mxu0 0.0
    %721 = vmatpush1.msra.mxu0 0.0
    %722 = vmatprep.subr.mxu0 0.0
    %723 = vmatpush1.msra.mxu0 0.0
    %724 = vmatprep.subr.mxu0 0.0
    %725 = vmatpush1.msra.mxu0 0.0
    %726 = vmatprep.subr.mxu0 0.0
    %727 = vmatpush1.msra.mxu0 0.0
    %728 = vmatprep.subr.mxu0 0.0
    %729 = vmatpush1.msra.mxu0 0.0
    %730 = vmatprep.subr.mxu0 0.0
    %731 = vmatpush1.msra.mxu0 0.0
    %732 = vmatprep.subr.mxu0 0.0
    %733 = vmatpush1.msra.mxu0 0.0
    %734 = vmatprep.subr.mxu0 0.0
    %735 = vmatpush1.msra.mxu0 0.0
    %736 = vmatprep.subr.mxu0 0.0
    %737 = vmatpush1.msra.mxu0 0.0
    %738 = vmatprep.subr.mxu0 0.0
    %739 = vmatpush1.msra.mxu0 0.0
    %740 = vmatprep.subr.mxu0 0.0
    %741 = vmatpush1.msra.mxu0 0.0
    %742 = vmatprep.subr.mxu0 0.0
    %743 = vmatpush1.msra.mxu0 0.0
    %744 = vmatprep.subr.mxu0 0.0
    %745 = vmatpush1.msra.mxu0 0.0
    %746 = vmatprep.subr.mxu0 0.0
    %747 = vmatpush1.msra.mxu0 0.0
    %748 = vmatprep.subr.mxu0 0.0
    %749 = vmatpush1.msra.mxu0 0.0
    %750 = vmatprep.subr.mxu0 0.0
    %751 = vmatpush1.msra.mxu0 0.0
    %752 = vmatprep.subr.mxu0 0.0
    %753 = vmatpush1.msra.mxu0 0.0
    %754 = vmatprep.subr.mxu0 0.0
    %755 = vmatpush1.msra.mxu0 0.0
    %756 = vmatprep.subr.mxu0 0.0
    %757 = vmatpush1.msra.mxu0 0.0
    %758 = vmatprep.subr.mxu0 0.0
    %759 = vmatpush1.msra.mxu0 0.0
    %760 = vmatprep.subr.mxu0 0.0
    %761 = vmatpush1.msra.mxu0 0.0
    %762 = vmatprep.subr.mxu0 0.0
    %763 = vmatpush1.msra.mxu0 0.0
    %764 = vmatprep.subr.mxu0 0.0
    %765 = vmatpush1.msra.mxu0 0.0
    %766 = vmatprep.subr.mxu0 0.0
    %767 = vmatpush1.msra.mxu0 0.0
    %768 = vmatprep.subr.mxu0 0.0
    %769 = vmatpush1.msra.mxu0 0.0
    %770 = vmatprep.subr.mxu0 0.0
    %771 = vmatpush1.msra.mxu0 0.0
    %772 = vmatprep.mubr.f32.mxu0 0.0
    %773 = vmatmul.mubr.f32.gmra.mrb[0].mxu0 %v703
    %v774 = vpop.f32.mrb[0].mxu0
    %v775 = vadd.f32 0.0, %v774
    %v776 = vpop.f32.mrb[0].mxu0
    %777 = vmatprep.mubr.f32.mxu0 0.0
    %778 = vmatmul.mubr.f32.gmra.mrb[0].mxu0 %v706
    %v779 = vpop.f32.mrb[0].mxu0
    %v780 = vadd.f32 0.0, %v779
    %v781 = vpop.f32.mrb[0].mxu0
    %782 = vdwg.mxu0
    %785 = vrot.lane.b32.xlu0 %v775, 32
    %v786 = vpop.permute.xlu0 %785
    %787 = vrot.lane.b32.xlu0 %v780, 32
    %v788 = vpop.permute.xlu0 %787
    %vm791 = vcmask 523520
    %792 = vst.msk [vmem:[#allocation2] sm:$0xff] %vm791, %v786
    %793 = vst.msk [vmem:[#allocation2 + $0x8] sm:$0xff] %vm791, %v788
    %794 = vrot.lane.b32.xlu0 %v294, 64
    %v795 = vpop.permute.xlu0 %794
    %796 = vrot.lane.b32.xlu0 %v300, 64
    %v797 = vpop.permute.xlu0 %796
    %798 = vrot.lane.b32.xlu0 %v296, 64
    %v799 = vpop.permute.xlu0 %798
    %800 = vrot.lane.b32.xlu0 %v302, 64
    %v801 = vpop.permute.xlu0 %800
    %v802 = vsel %vm379, %v795, 0
    %v804 = vsel %vm379, %v797, 0
    %v806 = vsel %vm379, %v799, 0
    %v808 = vsel %vm379, %v801, 0
    %810 = vmatprep.subr.mxu0 0.0
    %811 = vmatpush1.xpose.msra.mxu0 %v806
    %812 = vmatprep.subr.mxu0 0.0
    %813 = vmatpush1.xpose.msra.mxu0 %v808
    %814 = vmatprep.subr.mxu0 0.0
    %815 = vmatpush1.xpose.msra.mxu0 0.0
    %816 = vmatprep.subr.mxu0 0.0
    %817 = vmatpush1.xpose.msra.mxu0 0.0
    %818 = vmatprep.subr.mxu0 0.0
    %819 = vmatpush1.xpose.msra.mxu0 0.0
    %820 = vmatprep.subr.mxu0 0.0
    %821 = vmatpush1.xpose.msra.mxu0 0.0
    %822 = vmatprep.subr.mxu0 0.0
    %823 = vmatpush1.xpose.msra.mxu0 0.0
    %824 = vmatprep.subr.mxu0 0.0
    %825 = vmatpush1.xpose.msra.mxu0 0.0
    %826 = vmatprep.subr.mxu0 0.0
    %827 = vmatpush1.xpose.msra.mxu0 0.0
    %828 = vmatprep.subr.mxu0 0.0
    %829 = vmatpush1.xpose.msra.mxu0 0.0
    %830 = vmatprep.subr.mxu0 0.0
    %831 = vmatpush1.xpose.msra.mxu0 0.0
    %832 = vmatprep.subr.mxu0 0.0
    %833 = vmatpush1.xpose.msra.mxu0 0.0
    %834 = vmatprep.subr.mxu0 0.0
    %835 = vmatpush1.xpose.msra.mxu0 0.0
    %836 = vmatprep.subr.mxu0 0.0
    %837 = vmatpush1.xpose.msra.mxu0 0.0
    %838 = vmatprep.subr.mxu0 0.0
    %839 = vmatpush1.xpose.msra.mxu0 0.0
    %840 = vmatprep.subr.mxu0 0.0
    %841 = vmatpush1.xpose.msra.mxu0 0.0
    %842 = vmatprep.subr.mxu0 0.0
    %843 = vmatpush1.xpose.msra.mxu0 0.0
    %844 = vmatprep.subr.mxu0 0.0
    %845 = vmatpush1.xpose.msra.mxu0 0.0
    %846 = vmatprep.subr.mxu0 0.0
    %847 = vmatpush1.xpose.msra.mxu0 0.0
    %848 = vmatprep.subr.mxu0 0.0
    %849 = vmatpush1.xpose.msra.mxu0 0.0
    %850 = vmatprep.subr.mxu0 0.0
    %851 = vmatpush1.xpose.msra.mxu0 0.0
    %852 = vmatprep.subr.mxu0 0.0
    %853 = vmatpush1.xpose.msra.mxu0 0.0
    %854 = vmatprep.subr.mxu0 0.0
    %855 = vmatpush1.xpose.msra.mxu0 0.0
    %856 = vmatprep.subr.mxu0 0.0
    %857 = vmatpush1.xpose.msra.mxu0 0.0
    %858 = vmatprep.subr.mxu0 0.0
    %859 = vmatpush1.xpose.msra.mxu0 0.0
    %860 = vmatprep.subr.mxu0 0.0
    %861 = vmatpush1.xpose.msra.mxu0 0.0
    %862 = vmatprep.subr.mxu0 0.0
    %863 = vmatpush1.xpose.msra.mxu0 0.0
    %864 = vmatprep.subr.mxu0 0.0
    %865 = vmatpush1.xpose.msra.mxu0 0.0
    %866 = vmatprep.subr.mxu0 0.0
    %867 = vmatpush1.xpose.msra.mxu0 0.0
    %868 = vmatprep.subr.mxu0 0.0
    %869 = vmatpush1.xpose.msra.mxu0 0.0
    %870 = vmatprep.subr.mxu0 0.0
    %871 = vmatpush1.xpose.msra.mxu0 0.0
    %872 = vmatprep.subr.mxu0 0.0
    %873 = vmatpush1.xpose.msra.mxu0 0.0
    %874 = vmatprep.mubr.f32.mxu0 0.0
    %875 = vmatmul.mubr.f32.gmra.mrb[0].mxu0 %v802
    %v876 = vpop.f32.mrb[0].mxu0
    %v877 = vadd.f32 0.0, %v876
    %v878 = vpop.f32.mrb[0].mxu0
    %879 = vmatprep.mubr.f32.mxu0 0.0
    %880 = vmatmul.mubr.f32.gmra.mrb[0].mxu0 %v804
    %v881 = vpop.f32.mrb[0].mxu0
    %v882 = vadd.f32 0.0, %v881
    %v883 = vpop.f32.mrb[0].mxu0
    %884 = vdwg.mxu0
    %v885 = vmul.f32 %v877, 0.17677669
    %v886 = vmul.f32 %v882, 0.17677669
    %v887 = vadd.f32 %v885, %v122
    %v888 = vadd.f32 %v886, %v123
    %v889 = vsel %vm471, %v887, -inf
    %890 = vmax.xlane.f32.xlu0 %v889
    %v891 = vpop.xlane.xlu0 %890
    %v892 = vsel %vm471, %v888, -inf
    %893 = vmax.xlane.f32.xlu0 %v892
    %v894 = vpop.xlane.xlu0 %893
    %v895 = vsub.f32 %v887, %v891
    %v896 = vsub.f32 %v888, %v894
    %v897 = vmul.f32 %v895, 1.442695
    %v898 = vpow.pop %v897
    %v899 = vmul.f32 %v896, 1.442695
    %v900 = vpow.pop %v899
    %v901 = vsel %vm471, %v898, 0.0
    %902 = vadd.xlane.f32.xlu0 %v901
    %v903 = vpop.xlane.xlu0 %902
    %v904 = vsel %vm471, %v900, 0.0
    %905 = vadd.xlane.f32.xlu0 %v904
    %v906 = vpop.xlane.xlu0 %905
    %v907 = vrcp.pop %v903
    %v908 = vrcp.pop %v906
    %v909 = vmul.f32 %v898, %v907
    %v910 = vmul.f32 %v900, %v908
    %911 = vrot.lane.b32.xlu0 %v371, 64
    %v912 = vpop.permute.xlu0 %911
    %913 = vrot.lane.b32.xlu0 %v376, 64
    %v914 = vpop.permute.xlu0 %913
    %v918 = vsel %vm471, %v909, 0
    %v921 = vsel %vm471, %v910, 0
    %923 = vmatprep.subr.mxu0 0.0
    %924 = vmatpush1.msra.mxu0 %v912
    %925 = vmatprep.subr.mxu0 0.0
    %926 = vmatpush1.msra.mxu0 %v914
    %927 = vmatprep.subr.mxu0 0.0
    %928 = vmatpush1.msra.mxu0 0.0
    %929 = vmatprep.subr.mxu0 0.0
    %930 = vmatpush1.msra.mxu0 0.0
    %931 = vmatprep.subr.mxu0 0.0
    %932 = vmatpush1.msra.mxu0 0.0
    %933 = vmatprep.subr.mxu0 0.0
    %934 = vmatpush1.msra.mxu0 0.0
    %935 = vmatprep.subr.mxu0 0.0
    %936 = vmatpush1.msra.mxu0 0.0
    %937 = vmatprep.subr.mxu0 0.0
    %938 = vmatpush1.msra.mxu0 0.0
    %939 = vmatprep.subr.mxu0 0.0
    %940 = vmatpush1.msra.mxu0 0.0
    %941 = vmatprep.subr.mxu0 0.0
    %942 = vmatpush1.msra.mxu0 0.0
    %943 = vmatprep.subr.mxu0 0.0
    %944 = vmatpush1.msra.mxu0 0.0
    %945 = vmatprep.subr.mxu0 0.0
    %946 = vmatpush1.msra.mxu0 0.0
    %947 = vmatprep.subr.mxu0 0.0
    %948 = vmatpush1.msra.mxu0 0.0
    %949 = vmatprep.subr.mxu0 0.0
    %950 = vmatpush1.msra.mxu0 0.0
    %951 = vmatprep.subr.mxu0 0.0
    %952 = vmatpush1.msra.mxu0 0.0
    %953 = vmatprep.subr.mxu0 0.0
    %954 = vmatpush1.msra.mxu0 0.0
    %955 = vmatprep.subr.mxu0 0.0
    %956 = vmatpush1.msra.mxu0 0.0
    %957 = vmatprep.subr.mxu0 0.0
    %958 = vmatpush1.msra.mxu0 0.0
    %959 = vmatprep.subr.mxu0 0.0
    %960 = vmatpush1.msra.mxu0 0.0
    %961 = vmatprep.subr.mxu0 0.0
    %962 = vmatpush1.msra.mxu0 0.0
    %963 = vmatprep.subr.mxu0 0.0
    %964 = vmatpush1.msra.mxu0 0.0
    %965 = vmatprep.subr.mxu0 0.0
    %966 = vmatpush1.msra.mxu0 0.0
    %967 = vmatprep.subr.mxu0 0.0
    %968 = vmatpush1.msra.mxu0 0.0
    %969 = vmatprep.subr.mxu0 0.0
    %970 = vmatpush1.msra.mxu0 0.0
    %971 = vmatprep.subr.mxu0 0.0
    %972 = vmatpush1.msra.mxu0 0.0
    %973 = vmatprep.subr.mxu0 0.0
    %974 = vmatpush1.msra.mxu0 0.0
    %975 = vmatprep.subr.mxu0 0.0
    %976 = vmatpush1.msra.mxu0 0.0
    %977 = vmatprep.subr.mxu0 0.0
    %978 = vmatpush1.msra.mxu0 0.0
    %979 = vmatprep.subr.mxu0 0.0
    %980 = vmatpush1.msra.mxu0 0.0
    %981 = vmatprep.subr.mxu0 0.0
    %982 = vmatpush1.msra.mxu0 0.0
    %983 = vmatprep.subr.mxu0 0.0
    %984 = vmatpush1.msra.mxu0 0.0
    %985 = vmatprep.subr.mxu0 0.0
    %986 = vmatpush1.msra.mxu0 0.0
    %987 = vmatprep.mubr.f32.mxu0 0.0
    %988 = vmatmul.mubr.f32.gmra.mrb[0].mxu0 %v918
    %v989 = vpop.f32.mrb[0].mxu0
    %v990 = vadd.f32 0.0, %v989
    %v991 = vpop.f32.mrb[0].mxu0
    %992 = vmatprep.mubr.f32.mxu0 0.0
    %993 = vmatmul.mubr.f32.gmra.mrb[0].mxu0 %v921
    %v994 = vpop.f32.mrb[0].mxu0
    %v995 = vadd.f32 0.0, %v994
    %v996 = vpop.f32.mrb[0].mxu0
    %997 = vdwg.mxu0
    %1000 = vrot.lane.b32.xlu0 %v990, 64
    %v1001 = vpop.permute.xlu0 %1000
    %1002 = vrot.lane.b32.xlu0 %v995, 64
    %v1003 = vpop.permute.xlu0 %1002
    %vm1006 = vcmask 785920
    %1007 = vst.msk [vmem:[#allocation2] sm:$0xff] %vm1006, %v1001
    %1008 = vst.msk [vmem:[#allocation2 + $0x8] sm:$0xff] %vm1006, %v1003
    %1009 = vrot.lane.b32.xlu0 %v294, 32
    %v1010 = vpop.permute.xlu0 %1009
    %1011 = vrot.lane.b32.xlu0 %v300, 32
    %v1012 = vpop.permute.xlu0 %1011
    %1013 = vrot.lane.b32.xlu0 %v296, 32
    %v1014 = vpop.permute.xlu0 %1013
    %1015 = vrot.lane.b32.xlu0 %v302, 32
    %v1016 = vpop.permute.xlu0 %1015
    %v1017 = vsel %vm379, %v1010, 0
    %v1019 = vsel %vm379, %v1012, 0
    %v1021 = vsel %vm379, %v1014, 0
    %v1023 = vsel %vm379, %v1016, 0
    %1025 = vmatprep.subr.mxu0 0.0
    %1026 = vmatpush1.xpose.msra.mxu0 %v1021
    %1027 = vmatprep.subr.mxu0 0.0
    %1028 = vmatpush1.xpose.msra.mxu0 %v1023
    %1029 = vmatprep.subr.mxu0 0.0
    %1030 = vmatpush1.xpose.msra.mxu0 0.0
    %1031 = vmatprep.subr.mxu0 0.0
    %1032 = vmatpush1.xpose.msra.mxu0 0.0
    %1033 = vmatprep.subr.mxu0 0.0
    %1034 = vmatpush1.xpose.msra.mxu0 0.0
    %1035 = vmatprep.subr.mxu0 0.0
    %1036 = vmatpush1.xpose.msra.mxu0 0.0
    %1037 = vmatprep.subr.mxu0 0.0
    %1038 = vmatpush1.xpose.msra.mxu0 0.0
    %1039 = vmatprep.subr.mxu0 0.0
    %1040 = vmatpush1.xpose.msra.mxu0 0.0
    %1041 = vmatprep.subr.mxu0 0.0
    %1042 = vmatpush1.xpose.msra.mxu0 0.0
    %1043 = vmatprep.subr.mxu0 0.0
    %1044 = vmatpush1.xpose.msra.mxu0 0.0
    %1045 = vmatprep.subr.mxu0 0.0
    %1046 = vmatpush1.xpose.msra.mxu0 0.0
    %1047 = vmatprep.subr.mxu0 0.0
    %1048 = vmatpush1.xpose.msra.mxu0 0.0
    %1049 = vmatprep.subr.mxu0 0.0
    %1050 = vmatpush1.xpose.msra.mxu0 0.0
    %1051 = vmatprep.subr.mxu0 0.0
    %1052 = vmatpush1.xpose.msra.mxu0 0.0
    %1053 = vmatprep.subr.mxu0 0.0
    %1054 = vmatpush1.xpose.msra.mxu0 0.0
    %1055 = vmatprep.subr.mxu0 0.0
    %1056 = vmatpush1.xpose.msra.mxu0 0.0
    %1057 = vmatprep.subr.mxu0 0.0
    %1058 = vmatpush1.xpose.msra.mxu0 0.0
    %1059 = vmatprep.subr.mxu0 0.0
    %1060 = vmatpush1.xpose.msra.mxu0 0.0
    %1061 = vmatprep.subr.mxu0 0.0
    %1062 = vmatpush1.xpose.msra.mxu0 0.0
    %1063 = vmatprep.subr.mxu0 0.0
    %1064 = vmatpush1.xpose.msra.mxu0 0.0
    %1065 = vmatprep.subr.mxu0 0.0
    %1066 = vmatpush1.xpose.msra.mxu0 0.0
    %1067 = vmatprep.subr.mxu0 0.0
    %1068 = vmatpush1.xpose.msra.mxu0 0.0
    %1069 = vmatprep.subr.mxu0 0.0
    %1070 = vmatpush1.xpose.msra.mxu0 0.0
    %1071 = vmatprep.subr.mxu0 0.0
    %1072 = vmatpush1.xpose.msra.mxu0 0.0
    %1073 = vmatprep.subr.mxu0 0.0
    %1074 = vmatpush1.xpose.msra.mxu0 0.0
    %1075 = vmatprep.subr.mxu0 0.0
    %1076 = vmatpush1.xpose.msra.mxu0 0.0
    %1077 = vmatprep.subr.mxu0 0.0
    %1078 = vmatpush1.xpose.msra.mxu0 0.0
    %1079 = vmatprep.subr.mxu0 0.0
    %1080 = vmatpush1.xpose.msra.mxu0 0.0
    %1081 = vmatprep.subr.mxu0 0.0
    %1082 = vmatpush1.xpose.msra.mxu0 0.0
    %1083 = vmatprep.subr.mxu0 0.0
    %1084 = vmatpush1.xpose.msra.mxu0 0.0
    %1085 = vmatprep.subr.mxu0 0.0
    %1086 = vmatpush1.xpose.msra.mxu0 0.0
    %1087 = vmatprep.subr.mxu0 0.0
    %1088 = vmatpush1.xpose.msra.mxu0 0.0
    %1089 = vmatprep.mubr.f32.mxu0 0.0
    %1090 = vmatmul.mubr.f32.gmra.mrb[0].mxu0 %v1017
    %v1091 = vpop.f32.mrb[0].mxu0
    %v1092 = vadd.f32 0.0, %v1091
    %v1093 = vpop.f32.mrb[0].mxu0
    %1094 = vmatprep.mubr.f32.mxu0 0.0
    %1095 = vmatmul.mubr.f32.gmra.mrb[0].mxu0 %v1019
    %v1096 = vpop.f32.mrb[0].mxu0
    %v1097 = vadd.f32 0.0, %v1096
    %v1098 = vpop.f32.mrb[0].mxu0
    %1099 = vdwg.mxu0
    %v1100 = vmul.f32 %v1092, 0.17677669
    %v1101 = vmul.f32 %v1097, 0.17677669
    %v1102 = vadd.f32 %v1100, %v122
    %v1103 = vadd.f32 %v1101, %v123
    %v1104 = vsel %vm471, %v1102, -inf
    %1105 = vmax.xlane.f32.xlu0 %v1104
    %v1106 = vpop.xlane.xlu0 %1105
    %v1107 = vsel %vm471, %v1103, -inf
    %1108 = vmax.xlane.f32.xlu0 %v1107
    %v1109 = vpop.xlane.xlu0 %1108
    %v1110 = vsub.f32 %v1102, %v1106
    %v1111 = vsub.f32 %v1103, %v1109
    %v1112 = vmul.f32 %v1110, 1.442695
    %v1113 = vpow.pop %v1112
    %v1114 = vmul.f32 %v1111, 1.442695
    %v1115 = vpow.pop %v1114
    %v1116 = vsel %vm471, %v1113, 0.0
    %1117 = vadd.xlane.f32.xlu0 %v1116
    %v1118 = vpop.xlane.xlu0 %1117
    %v1119 = vsel %vm471, %v1115, 0.0
    %1120 = vadd.xlane.f32.xlu0 %v1119
    %v1121 = vpop.xlane.xlu0 %1120
    %v1122 = vrcp.pop %v1118
    %v1123 = vrcp.pop %v1121
    %v1124 = vmul.f32 %v1113, %v1122
    %v1125 = vmul.f32 %v1115, %v1123
    %1126 = vrot.lane.b32.xlu0 %v371, 32
    %v1127 = vpop.permute.xlu0 %1126
    %1128 = vrot.lane.b32.xlu0 %v376, 32
    %v1129 = vpop.permute.xlu0 %1128
    %v1133 = vsel %vm471, %v1124, 0
    %v1136 = vsel %vm471, %v1125, 0
    %1138 = vmatprep.subr.mxu0 0.0
    %1139 = vmatpush1.msra.mxu0 %v1127
    %1140 = vmatprep.subr.mxu0 0.0
    %1141 = vmatpush1.msra.mxu0 %v1129
    %1142 = vmatprep.subr.mxu0 0.0
    %1143 = vmatpush1.msra.mxu0 0.0
    %1144 = vmatprep.subr.mxu0 0.0
    %1145 = vmatpush1.msra.mxu0 0.0
    %1146 = vmatprep.subr.mxu0 0.0
    %1147 = vmatpush1.msra.mxu0 0.0
    %1148 = vmatprep.subr.mxu0 0.0
    %1149 = vmatpush1.msra.mxu0 0.0
    %1150 = vmatprep.subr.mxu0 0.0
    %1151 = vmatpush1.msra.mxu0 0.0
    %1152 = vmatprep.subr.mxu0 0.0
    %1153 = vmatpush1.msra.mxu0 0.0
    %1154 = vmatprep.subr.mxu0 0.0
    %1155 = vmatpush1.msra.mxu0 0.0
    %1156 = vmatprep.subr.mxu0 0.0
    %1157 = vmatpush1.msra.mxu0 0.0
    %1158 = vmatprep.subr.mxu0 0.0
    %1159 = vmatpush1.msra.mxu0 0.0
    %1160 = vmatprep.subr.mxu0 0.0
    %1161 = vmatpush1.msra.mxu0 0.0
    %1162 = vmatprep.subr.mxu0 0.0
    %1163 = vmatpush1.msra.mxu0 0.0
    %1164 = vmatprep.subr.mxu0 0.0
    %1165 = vmatpush1.msra.mxu0 0.0
    %1166 = vmatprep.subr.mxu0 0.0
    %1167 = vmatpush1.msra.mxu0 0.0
    %1168 = vmatprep.subr.mxu0 0.0
    %1169 = vmatpush1.msra.mxu0 0.0
    %1170 = vmatprep.subr.mxu0 0.0
    %1171 = vmatpush1.msra.mxu0 0.0
    %1172 = vmatprep.subr.mxu0 0.0
    %1173 = vmatpush1.msra.mxu0 0.0
    %1174 = vmatprep.subr.mxu0 0.0
    %1175 = vmatpush1.msra.mxu0 0.0
    %1176 = vmatprep.subr.mxu0 0.0
    %1177 = vmatpush1.msra.mxu0 0.0
    %1178 = vmatprep.subr.mxu0 0.0
    %1179 = vmatpush1.msra.mxu0 0.0
    %1180 = vmatprep.subr.mxu0 0.0
    %1181 = vmatpush1.msra.mxu0 0.0
    %1182 = vmatprep.subr.mxu0 0.0
    %1183 = vmatpush1.msra.mxu0 0.0
    %1184 = vmatprep.subr.mxu0 0.0
    %1185 = vmatpush1.msra.mxu0 0.0
    %1186 = vmatprep.subr.mxu0 0.0
    %1187 = vmatpush1.msra.mxu0 0.0
    %1188 = vmatprep.subr.mxu0 0.0
    %1189 = vmatpush1.msra.mxu0 0.0
    %1190 = vmatprep.subr.mxu0 0.0
    %1191 = vmatpush1.msra.mxu0 0.0
    %1192 = vmatprep.subr.mxu0 0.0
    %1193 = vmatpush1.msra.mxu0 0.0
    %1194 = vmatprep.subr.mxu0 0.0
    %1195 = vmatpush1.msra.mxu0 0.0
    %1196 = vmatprep.subr.mxu0 0.0
    %1197 = vmatpush1.msra.mxu0 0.0
    %1198 = vmatprep.subr.mxu0 0.0
    %1199 = vmatpush1.msra.mxu0 0.0
    %1200 = vmatprep.subr.mxu0 0.0
    %1201 = vmatpush1.msra.mxu0 0.0
    %1202 = vmatprep.mubr.f32.mxu0 0.0
    %1203 = vmatmul.mubr.f32.gmra.mrb[0].mxu0 %v1133
    %v1204 = vpop.f32.mrb[0].mxu0
    %v1205 = vadd.f32 0.0, %v1204
    %v1206 = vpop.f32.mrb[0].mxu0
    %1207 = vmatprep.mubr.f32.mxu0 0.0
    %1208 = vmatmul.mubr.f32.gmra.mrb[0].mxu0 %v1136
    %v1209 = vpop.f32.mrb[0].mxu0
    %v1210 = vadd.f32 0.0, %v1209
    %v1211 = vpop.f32.mrb[0].mxu0
    %1212 = vdwg.mxu0
    %1215 = vrot.lane.b32.xlu0 %v1205, 96
    %v1216 = vpop.permute.xlu0 %1215
    %1217 = vrot.lane.b32.xlu0 %v1210, 96
    %v1218 = vpop.permute.xlu0 %1217
    %vm1221 = vcmask 1048320
    %1222 = vst.msk [vmem:[#allocation2] sm:$0xff] %vm1221, %v1216
    %1223 = vst.msk [vmem:[#allocation2 + $0x8] sm:$0xff] %vm1221, %v1218
    %v1224 = vld [vmem:[#allocation2] sm:$0xff]
    %v1225 = vld [vmem:[#allocation2 + $0x8] sm:$0xff]
    %v1226 = vld [vmem:[%s7] sm:$0xff]
    %v1227 = vld [vmem:[%s7 + $0x8] sm:$0xff]
    %v1228 = vld [vmem:[%s7 + $0x10] sm:$0xff]
    %v1229 = vld [vmem:[%s7 + $0x18] sm:$0xff]
    %v1230 = vld [vmem:[%s7 + $0x20] sm:$0xff]
    %v1231 = vld [vmem:[%s7 + $0x28] sm:$0xff]
    %v1232 = vld [vmem:[%s7 + $0x30] sm:$0xff]
    %v1233 = vld [vmem:[%s7 + $0x38] sm:$0xff]
    %v1234 = vld [vmem:[%s7 + $0x40] sm:$0xff]
    %v1235 = vld [vmem:[%s7 + $0x48] sm:$0xff]
    %v1236 = vld [vmem:[%s7 + $0x50] sm:$0xff]
    %v1237 = vld [vmem:[%s7 + $0x58] sm:$0xff]
    %v1238 = vld [vmem:[%s7 + $0x60] sm:$0xff]
    %v1239 = vld [vmem:[%s7 + $0x68] sm:$0xff]
    %v1240 = vld [vmem:[%s7 + $0x70] sm:$0xff]
    %v1241 = vld [vmem:[%s7 + $0x78] sm:$0xff]
    %v1242 = vld [vmem:[%s8] sm:$0x1]
    %v1244 = vlaneseq
    %v1245 = vshrl.u32 %v1244, 7
    %v1246 = vsub.s32 0, %v1245
    %v1247 = vrot.slane %v1242, %v1246
    %1249 = vmatprep.subr.mxu0 0.0
    %1250 = vmatpush1.msra.mxu0 %v1226
    %1251 = vmatprep.subr.mxu0 0.0
    %1252 = vmatpush1.msra.mxu0 %v1227
    %1253 = vmatprep.subr.mxu0 0.0
    %1254 = vmatpush1.msra.mxu0 %v1228
    %1255 = vmatprep.subr.mxu0 0.0
    %1256 = vmatpush1.msra.mxu0 %v1229
    %1257 = vmatprep.subr.mxu0 0.0
    %1258 = vmatpush1.msra.mxu0 %v1230
    %1259 = vmatprep.subr.mxu0 0.0
    %1260 = vmatpush1.msra.mxu0 %v1231
    %1261 = vmatprep.subr.mxu0 0.0
    %1262 = vmatpush1.msra.mxu0 %v1232
    %1263 = vmatprep.subr.mxu0 0.0
    %1264 = vmatpush1.msra.mxu0 %v1233
    %1265 = vmatprep.subr.mxu0 0.0
    %1266 = vmatpush1.msra.mxu0 %v1234
    %1267 = vmatprep.subr.mxu0 0.0
    %1268 = vmatpush1.msra.mxu0 %v1235
    %1269 = vmatprep.subr.mxu0 0.0
    %1270 = vmatpush1.msra.mxu0 %v1236
    %1271 = vmatprep.subr.mxu0 0.0
    %1272 = vmatpush1.msra.mxu0 %v1237
    %1273 = vmatprep.subr.mxu0 0.0
    %1274 = vmatpush1.msra.mxu0 %v1238
    %1275 = vmatprep.subr.mxu0 0.0
    %1276 = vmatpush1.msra.mxu0 %v1239
    %1277 = vmatprep.subr.mxu0 0.0
    %1278 = vmatpush1.msra.mxu0 %v1240
    %1279 = vmatprep.subr.mxu0 0.0
    %1280 = vmatpush1.msra.mxu0 %v1241
    %1281 = vmatprep.subr.mxu0 0.0
    %1282 = vmatpush1.msra.mxu0 0.0
    %1283 = vmatprep.subr.mxu0 0.0
    %1284 = vmatpush1.msra.mxu0 0.0
    %1285 = vmatprep.subr.mxu0 0.0
    %1286 = vmatpush1.msra.mxu0 0.0
    %1287 = vmatprep.subr.mxu0 0.0
    %1288 = vmatpush1.msra.mxu0 0.0
    %1289 = vmatprep.subr.mxu0 0.0
    %1290 = vmatpush1.msra.mxu0 0.0
    %1291 = vmatprep.subr.mxu0 0.0
    %1292 = vmatpush1.msra.mxu0 0.0
    %1293 = vmatprep.subr.mxu0 0.0
    %1294 = vmatpush1.msra.mxu0 0.0
    %1295 = vmatprep.subr.mxu0 0.0
    %1296 = vmatpush1.msra.mxu0 0.0
    %1297 = vmatprep.subr.mxu0 0.0
    %1298 = vmatpush1.msra.mxu0 0.0
    %1299 = vmatprep.subr.mxu0 0.0
    %1300 = vmatpush1.msra.mxu0 0.0
    %1301 = vmatprep.subr.mxu0 0.0
    %1302 = vmatpush1.msra.mxu0 0.0
    %1303 = vmatprep.subr.mxu0 0.0
    %1304 = vmatpush1.msra.mxu0 0.0
    %1305 = vmatprep.subr.mxu0 0.0
    %1306 = vmatpush1.msra.mxu0 0.0
    %1307 = vmatprep.subr.mxu0 0.0
    %1308 = vmatpush1.msra.mxu0 0.0
    %1309 = vmatprep.subr.mxu0 0.0
    %1310 = vmatpush1.msra.mxu0 0.0
    %1311 = vmatprep.subr.mxu0 0.0
    %1312 = vmatpush1.msra.mxu0 0.0
    %1313 = vmatprep.mubr.f32.mxu0 0.0
    %1314 = vmatmul.mubr.f32.gmra.mrb[0].mxu0 %v1224
    %v1315 = vpop.f32.mrb[0].mxu0
    %v1316 = vadd.f32 %v1247, %v1315
    %v1317 = vpop.f32.mrb[0].mxu0
    %1318 = vmatprep.mubr.f32.mxu0 0.0
    %1319 = vmatmul.mubr.f32.gmra.mrb[0].mxu0 %v1225
    %v1320 = vpop.f32.mrb[0].mxu0
    %v1321 = vadd.f32 %v1247, %v1320
    %v1322 = vpop.f32.mrb[0].mxu0
    %1323 = vdwg.mxu0
    %v1324 = vadd.f32 %v160, %v1316
    %v1325 = vadd.f32 %v161, %v1321
    %v1326 = vld [vmem:[%s9] sm:$0x3]
    %1327 = vadd.xlane.f32.xlu0 %v1324
    %v1328 = vpop.xlane.xlu0 %1327
    %1329 = vadd.xlane.f32.xlu0 %v1325
    %v1330 = vpop.xlane.xlu0 %1329
    %v1331 = vmul.f32 %v1328, %v131
    %v1332 = vmul.f32 %v1330, %v131
    %v1333 = vsub.f32 %v1324, %v1331
    %v1334 = vsub.f32 %v1325, %v1332
    %v1335 = vmul.f32 %v1333, %v1333
    %v1336 = vmul.f32 %v1334, %v1334
    %1337 = vadd.xlane.f32.xlu0 %v1335
    %v1338 = vpop.xlane.xlu0 %1337
    %1339 = vadd.xlane.f32.xlu0 %v1336
    %v1340 = vpop.xlane.xlu0 %1339
    %v1341 = vmul.f32 %v1338, %v131
    %v1342 = vmul.f32 %v1340, %v131
    %v1343 = vadd.f32 %v1341, 1e-05
    %v1344 = vadd.f32 %v1342, 1e-05
    %v1345 = vrsqrt.pop %v1343
    %v1346 = vrsqrt.pop %v1344
    %v1347 = vmul.f32 %v1333, %v1345
    %v1348 = vmul.f32 %v1334, %v1346
    %v1349 = vlaneseq
    %v1350 = vshrl.u32 %v1349, 7
    %v1351 = vsub.s32 0, %v1350
    %v1352 = vrot.slane %v1326, %v1351
    %v1353 = vmul.f32 %v1347, %v1352
    %v1354 = vmul.f32 %v1348, %v1352
    %v1355 = vlaneseq
    %v1356 = vshrl.u32 %v1355, 7
    %v1357 = vsub.s32 1, %v1356
    %v1358 = vrot.slane %v1326, %v1357
    %v1359 = vadd.f32 %v1353, %v1358
    %v1360 = vadd.f32 %v1354, %v1358
    %v1361 = vld [vmem:[%s10] sm:$0xff]
    %v1362 = vld [vmem:[%s10 + $0x8] sm:$0xff]
    %v1363 = vld [vmem:[%s10 + $0x10] sm:$0xff]
    %v1364 = vld [vmem:[%s10 + $0x18] sm:$0xff]
    %v1365 = vld [vmem:[%s10 + $0x20] sm:$0xff]
    %v1366 = vld [vmem:[%s10 + $0x28] sm:$0xff]
    %v1367 = vld [vmem:[%s10 + $0x30] sm:$0xff]
    %v1368 = vld [vmem:[%s10 + $0x38] sm:$0xff]
    %v1369 = vld [vmem:[%s10 + $0x40] sm:$0xff]
    %v1370 = vld [vmem:[%s10 + $0x48] sm:$0xff]
    %v1371 = vld [vmem:[%s10 + $0x50] sm:$0xff]
    %v1372 = vld [vmem:[%s10 + $0x58] sm:$0xff]
    %v1373 = vld [vmem:[%s10 + $0x60] sm:$0xff]
    %v1374 = vld [vmem:[%s10 + $0x68] sm:$0xff]
    %v1375 = vld [vmem:[%s10 + $0x70] sm:$0xff]
    %v1376 = vld [vmem:[%s10 + $0x78] sm:$0xff]
    %v1377 = vld [vmem:[%s11] sm:$0x1]
    %v1379 = vlaneseq
    %v1380 = vshrl.u32 %v1379, 7
    %v1381 = vsub.s32 0, %v1380
    %v1382 = vrot.slane %v1377, %v1381
    %1384 = vmatprep.subr.mxu0 0.0
    %1385 = vmatpush1.msra.mxu0 %v1361
    %1386 = vmatprep.subr.mxu0 0.0
    %1387 = vmatpush1.msra.mxu0 %v1362
    %1388 = vmatprep.subr.mxu0 0.0
    %1389 = vmatpush1.msra.mxu0 %v1363
    %1390 = vmatprep.subr.mxu0 0.0
    %1391 = vmatpush1.msra.mxu0 %v1364
    %1392 = vmatprep.subr.mxu0 0.0
    %1393 = vmatpush1.msra.mxu0 %v1365
    %1394 = vmatprep.subr.mxu0 0.0
    %1395 = vmatpush1.msra.mxu0 %v1366
    %1396 = vmatprep.subr.mxu0 0.0
    %1397 = vmatpush1.msra.mxu0 %v1367
    %1398 = vmatprep.subr.mxu0 0.0
    %1399 = vmatpush1.msra.mxu0 %v1368
    %1400 = vmatprep.subr.mxu0 0.0
    %1401 = vmatpush1.msra.mxu0 %v1369
    %1402 = vmatprep.subr.mxu0 0.0
    %1403 = vmatpush1.msra.mxu0 %v1370
    %1404 = vmatprep.subr.mxu0 0.0
    %1405 = vmatpush1.msra.mxu0 %v1371
    %1406 = vmatprep.subr.mxu0 0.0
    %1407 = vmatpush1.msra.mxu0 %v1372
    %1408 = vmatprep.subr.mxu0 0.0
    %1409 = vmatpush1.msra.mxu0 %v1373
    %1410 = vmatprep.subr.mxu0 0.0
    %1411 = vmatpush1.msra.mxu0 %v1374
    %1412 = vmatprep.subr.mxu0 0.0
    %1413 = vmatpush1.msra.mxu0 %v1375
    %1414 = vmatprep.subr.mxu0 0.0
    %1415 = vmatpush1.msra.mxu0 %v1376
    %1416 = vmatprep.subr.mxu0 0.0
    %1417 = vmatpush1.msra.mxu0 0.0
    %1418 = vmatprep.subr.mxu0 0.0
    %1419 = vmatpush1.msra.mxu0 0.0
    %1420 = vmatprep.subr.mxu0 0.0
    %1421 = vmatpush1.msra.mxu0 0.0
    %1422 = vmatprep.subr.mxu0 0.0
    %1423 = vmatpush1.msra.mxu0 0.0
    %1424 = vmatprep.subr.mxu0 0.0
    %1425 = vmatpush1.msra.mxu0 0.0
    %1426 = vmatprep.subr.mxu0 0.0
    %1427 = vmatpush1.msra.mxu0 0.0
    %1428 = vmatprep.subr.mxu0 0.0
    %1429 = vmatpush1.msra.mxu0 0.0
    %1430 = vmatprep.subr.mxu0 0.0
    %1431 = vmatpush1.msra.mxu0 0.0
    %1432 = vmatprep.subr.mxu0 0.0
    %1433 = vmatpush1.msra.mxu0 0.0
    %1434 = vmatprep.subr.mxu0 0.0
    %1435 = vmatpush1.msra.mxu0 0.0
    %1436 = vmatprep.subr.mxu0 0.0
    %1437 = vmatpush1.msra.mxu0 0.0
    %1438 = vmatprep.subr.mxu0 0.0
    %1439 = vmatpush1.msra.mxu0 0.0
    %1440 = vmatprep.subr.mxu0 0.0
    %1441 = vmatpush1.msra.mxu0 0.0
    %1442 = vmatprep.subr.mxu0 0.0
    %1443 = vmatpush1.msra.mxu0 0.0
    %1444 = vmatprep.subr.mxu0 0.0
    %1445 = vmatpush1.msra.mxu0 0.0
    %1446 = vmatprep.subr.mxu0 0.0
    %1447 = vmatpush1.msra.mxu0 0.0
    %1448 = vmatprep.mubr.f32.mxu0 0.0
    %1449 = vmatmul.mubr.f32.gmra.mrb[0].mxu0 %v1359
    %v1450 = vpop.f32.mrb[0].mxu0
    %v1451 = vadd.f32 %v1382, %v1450
    %v1452 = vpop.f32.mrb[0].mxu0
    %1453 = vmatprep.mubr.f32.mxu0 0.0
    %1454 = vmatmul.mubr.f32.gmra.mrb[0].mxu0 %v1360
    %v1455 = vpop.f32.mrb[0].mxu0
    %v1456 = vadd.f32 %v1382, %v1455
    %v1457 = vpop.f32.mrb[0].mxu0
    %1458 = vdwg.mxu0
    %v1459 = vld [vmem:[#allocation5] sm:$0xff]
    %v1460 = vld [vmem:[#allocation5 + $0x8] sm:$0xff]
    %v1461 = vld [vmem:[#allocation5 + $0x10] sm:$0xff]
    %v1462 = vld [vmem:[#allocation5 + $0x18] sm:$0xff]
    %v1463 = vld [vmem:[#allocation5 + $0x20] sm:$0xff]
    %v1464 = vld [vmem:[#allocation5 + $0x28] sm:$0xff]
    %v1465 = vld [vmem:[#allocation5 + $0x30] sm:$0xff]
    %v1466 = vld [vmem:[#allocation5 + $0x38] sm:$0xff]
    %v1467 = vld [vmem:[#allocation5 + $0x40] sm:$0xff]
    %v1468 = vld [vmem:[#allocation5 + $0x48] sm:$0xff]
    %v1469 = vld [vmem:[#allocation5 + $0x50] sm:$0xff]
    %v1470 = vld [vmem:[#allocation5 + $0x58] sm:$0xff]
    %v1471 = vld [vmem:[#allocation5 + $0x60] sm:$0xff]
    %v1472 = vld [vmem:[#allocation5 + $0x68] sm:$0xff]
    %v1473 = vld [vmem:[#allocation5 + $0x70] sm:$0xff]
    %v1474 = vld [vmem:[#allocation5 + $0x78] sm:$0xff]
    %v1475 = vld [vmem:[%s13] sm:$0x3]
    %v1477 = vlaneseq
    %v1478 = vshrl.u32 %v1477, 7
    %v1479 = vsub.s32 0, %v1478
    %v1480 = vrot.slane %v1475, %v1479
    %v1481 = vlaneseq
    %v1482 = vshrl.u32 %v1481, 7
    %v1483 = vsub.s32 1, %v1482
    %v1484 = vrot.slane %v1475, %v1483
    %vm1487 = vcmask 523264
    %v1489 = vsel %vm1487, %v118, 0
    %v1492 = vsel %vm1487, %v119, 0
    %v1495 = vsel %vm1487, %v120, 0
    %v1498 = vsel %vm1487, %v121, 0
    %1500 = vmatprep.subr.mxu0 %v1460
    %1501 = vmatpush1.msra.mxu0 %v1459
    %1502 = vmatprep.subr.mxu0 %v1462
    %1503 = vmatpush1.msra.mxu0 %v1461
    %1504 = vmatprep.subr.mxu0 %v1464
    %1505 = vmatpush1.msra.mxu0 %v1463
    %1506 = vmatprep.subr.mxu0 %v1466
    %1507 = vmatpush1.msra.mxu0 %v1465
    %1508 = vmatprep.subr.mxu0 %v1468
    %1509 = vmatpush1.msra.mxu0 %v1467
    %1510 = vmatprep.subr.mxu0 %v1470
    %1511 = vmatpush1.msra.mxu0 %v1469
    %1512 = vmatprep.subr.mxu0 %v1472
    %1513 = vmatpush1.msra.mxu0 %v1471
    %1514 = vmatprep.subr.mxu0 %v1474
    %1515 = vmatpush1.msra.mxu0 %v1473
    %1516 = vmatprep.subr.mxu0 0.0
    %1517 = vmatpush1.msra.mxu0 0.0
    %1518 = vmatprep.subr.mxu0 0.0
    %1519 = vmatpush1.msra.mxu0 0.0
    %1520 = vmatprep.subr.mxu0 0.0
    %1521 = vmatpush1.msra.mxu0 0.0
    %1522 = vmatprep.subr.mxu0 0.0
    %1523 = vmatpush1.msra.mxu0 0.0
    %1524 = vmatprep.subr.mxu0 0.0
    %1525 = vmatpush1.msra.mxu0 0.0
    %1526 = vmatprep.subr.mxu0 0.0
    %1527 = vmatpush1.msra.mxu0 0.0
    %1528 = vmatprep.subr.mxu0 0.0
    %1529 = vmatpush1.msra.mxu0 0.0
    %1530 = vmatprep.subr.mxu0 0.0
    %1531 = vmatpush1.msra.mxu0 0.0
    %1532 = vmatprep.subr.mxu0 0.0
    %1533 = vmatpush1.msra.mxu0 0.0
    %1534 = vmatprep.subr.mxu0 0.0
    %1535 = vmatpush1.msra.mxu0 0.0
    %1536 = vmatprep.subr.mxu0 0.0
    %1537 = vmatpush1.msra.mxu0 0.0
    %1538 = vmatprep.subr.mxu0 0.0
    %1539 = vmatpush1.msra.mxu0 0.0
    %1540 = vmatprep.subr.mxu0 0.0
    %1541 = vmatpush1.msra.mxu0 0.0
    %1542 = vmatprep.subr.mxu0 0.0
    %1543 = vmatpush1.msra.mxu0 0.0
    %1544 = vmatprep.subr.mxu0 0.0
    %1545 = vmatpush1.msra.mxu0 0.0
    %1546 = vmatprep.subr.mxu0 0.0
    %1547 = vmatpush1.msra.mxu0 0.0
    %1548 = vmatprep.subr.mxu0 0.0
    %1549 = vmatpush1.msra.mxu0 0.0
    %1550 = vmatprep.subr.mxu0 0.0
    %1551 = vmatpush1.msra.mxu0 0.0
    %1552 = vmatprep.subr.mxu0 0.0
    %1553 = vmatpush1.msra.mxu0 0.0
    %1554 = vmatprep.subr.mxu0 0.0
    %1555 = vmatpush1.msra.mxu0 0.0
    %1556 = vmatprep.subr.mxu0 0.0
    %1557 = vmatpush1.msra.mxu0 0.0
    %1558 = vmatprep.subr.mxu0 0.0
    %1559 = vmatpush1.msra.mxu0 0.0
    %1560 = vmatprep.subr.mxu0 0.0
    %1561 = vmatpush1.msra.mxu0 0.0
    %1562 = vmatprep.subr.mxu0 0.0
    %1563 = vmatpush1.msra.mxu0 0.0
    %1564 = vmatprep.mubr.f32.mxu0 0.0
    %1565 = vmatmul.mubr.f32.gmra.mrb[0].mxu0 %v1489
    %v1566 = vpop.f32.mrb[0].mxu0
    %v1567 = vadd.f32 %v1480, %v1566
    %v1568 = vpop.f32.mrb[0].mxu0
    %v1569 = vadd.f32 %v1484, %v1568
    %1570 = vmatprep.mubr.f32.mxu0 0.0
    %1571 = vmatmul.mubr.f32.gmra.mrb[0].mxu0 %v1492
    %v1572 = vpop.f32.mrb[0].mxu0
    %v1573 = vadd.f32 %v1480, %v1572
    %v1574 = vpop.f32.mrb[0].mxu0
    %v1575 = vadd.f32 %v1484, %v1574
    %1576 = vmatprep.mubr.f32.mxu0 0.0
    %1577 = vmatmul.mubr.f32.gmra.mrb[0].mxu0 %v1495
    %v1578 = vpop.f32.mrb[0].mxu0
    %v1579 = vadd.f32 %v1480, %v1578
    %v1580 = vpop.f32.mrb[0].mxu0
    %v1581 = vadd.f32 %v1484, %v1580
    %1582 = vmatprep.mubr.f32.mxu0 0.0
    %1583 = vmatmul.mubr.f32.gmra.mrb[0].mxu0 %v1498
    %v1584 = vpop.f32.mrb[0].mxu0
    %v1585 = vadd.f32 %v1480, %v1584
    %v1586 = vpop.f32.mrb[0].mxu0
    %v1587 = vadd.f32 %v1484, %v1586
    %1588 = vdwg.mxu0
    %v1590 = vsel %vm379, %v1451, 0
    %v1593 = vsel %vm379, %v1456, 0
    %v1596 = vsel %vm379, %v1567, 0
    %v1599 = vsel %vm379, %v1573, 0
    %v1602 = vsel %vm379, %v1579, 0
    %v1605 = vsel %vm379, %v1585, 0
    %1607 = vmatprep.subr.mxu0 0.0
    %1608 = vmatpush1.xpose.msra.mxu0 %v1596
    %1609 = vmatprep.subr.mxu0 0.0
    %1610 = vmatpush1.xpose.msra.mxu0 %v1599
    %1611 = vmatprep.subr.mxu0 0.0
    %1612 = vmatpush1.xpose.msra.mxu0 %v1602
    %1613 = vmatprep.subr.mxu0 0.0
    %1614 = vmatpush1.xpose.msra.mxu0 %v1605
    %1615 = vmatprep.subr.mxu0 0.0
    %1616 = vmatpush1.xpose.msra.mxu0 0.0
    %1617 = vmatprep.subr.mxu0 0.0
    %1618 = vmatpush1.xpose.msra.mxu0 0.0
    %1619 = vmatprep.subr.mxu0 0.0
    %1620 = vmatpush1.xpose.msra.mxu0 0.0
    %1621 = vmatprep.subr.mxu0 0.0
    %1622 = vmatpush1.xpose.msra.mxu0 0.0
    %1623 = vmatprep.subr.mxu0 0.0
    %1624 = vmatpush1.xpose.msra.mxu0 0.0
    %1625 = vmatprep.subr.mxu0 0.0
    %1626 = vmatpush1.xpose.msra.mxu0 0.0
    %1627 = vmatprep.subr.mxu0 0.0
    %1628 = vmatpush1.xpose.msra.mxu0 0.0
    %1629 = vmatprep.subr.mxu0 0.0
    %1630 = vmatpush1.xpose.msra.mxu0 0.0
    %1631 = vmatprep.subr.mxu0 0.0
    %1632 = vmatpush1.xpose.msra.mxu0 0.0
    %1633 = vmatprep.subr.mxu0 0.0
    %1634 = vmatpush1.xpose.msra.mxu0 0.0
    %1635 = vmatprep.subr.mxu0 0.0
    %1636 = vmatpush1.xpose.msra.mxu0 0.0
    %1637 = vmatprep.subr.mxu0 0.0
    %1638 = vmatpush1.xpose.msra.mxu0 0.0
    %1639 = vmatprep.subr.mxu0 0.0
    %1640 = vmatpush1.xpose.msra.mxu0 0.0
    %1641 = vmatprep.subr.mxu0 0.0
    %1642 = vmatpush1.xpose.msra.mxu0 0.0
    %1643 = vmatprep.subr.mxu0 0.0
    %1644 = vmatpush1.xpose.msra.mxu0 0.0
    %1645 = vmatprep.subr.mxu0 0.0
    %1646 = vmatpush1.xpose.msra.mxu0 0.0
    %1647 = vmatprep.subr.mxu0 0.0
    %1648 = vmatpush1.xpose.msra.mxu0 0.0
    %1649 = vmatprep.subr.mxu0 0.0
    %1650 = vmatpush1.xpose.msra.mxu0 0.0
    %1651 = vmatprep.subr.mxu0 0.0
    %1652 = vmatpush1.xpose.msra.mxu0 0.0
    %1653 = vmatprep.subr.mxu0 0.0
    %1654 = vmatpush1.xpose.msra.mxu0 0.0
    %1655 = vmatprep.subr.mxu0 0.0
    %1656 = vmatpush1.xpose.msra.mxu0 0.0
    %1657 = vmatprep.subr.mxu0 0.0
    %1658 = vmatpush1.xpose.msra.mxu0 0.0
    %1659 = vmatprep.subr.mxu0 0.0
    %1660 = vmatpush1.xpose.msra.mxu0 0.0
    %1661 = vmatprep.subr.mxu0 0.0
    %1662 = vmatpush1.xpose.msra.mxu0 0.0
    %1663 = vmatprep.subr.mxu0 0.0
    %1664 = vmatpush1.xpose.msra.mxu0 0.0
    %1665 = vmatprep.subr.mxu0 0.0
    %1666 = vmatpush1.xpose.msra.mxu0 0.0
    %1667 = vmatprep.subr.mxu0 0.0
    %1668 = vmatpush1.xpose.msra.mxu0 0.0
    %1669 = vmatprep.subr.mxu0 0.0
    %1670 = vmatpush1.xpose.msra.mxu0 0.0
    %1671 = vmatprep.mubr.f32.mxu0 0.0
    %1672 = vmatmul.mubr.f32.gmra.mrb[0].mxu0 %v1590
    %v1673 = vpop.f32.mrb[0].mxu0
    %v1674 = vadd.f32 0.0, %v1673
    %v1675 = vpop.f32.mrb[0].mxu0
    %1676 = vmatprep.mubr.f32.mxu0 0.0
    %1677 = vmatmul.mubr.f32.gmra.mrb[0].mxu0 %v1593
    %v1678 = vpop.f32.mrb[0].mxu0
    %v1679 = vadd.f32 0.0, %v1678
    %v1680 = vpop.f32.mrb[0].mxu0
    %1681 = vdwg.mxu0
    %v1682 = vmul.f32 %v1674, 0.17677669
    %v1683 = vmul.f32 %v1679, 0.17677669
    %v1684 = vadd.f32 %v1682, %v124
    %v1685 = vadd.f32 %v1683, %v125
    %v1686 = vsel %vm379, %v1684, -inf
    %1687 = vmax.xlane.f32.xlu0 %v1686
    %v1688 = vpop.xlane.xlu0 %1687
    %v1689 = vsel %vm379, %v1685, -inf
    %1690 = vmax.xlane.f32.xlu0 %v1689
    %v1691 = vpop.xlane.xlu0 %1690
    %v1692 = vsub.f32 %v1684, %v1688
    %v1693 = vsub.f32 %v1685, %v1691
    %v1694 = vmul.f32 %v1692, 1.442695
    %v1695 = vpow.pop %v1694
    %v1696 = vmul.f32 %v1693, 1.442695
    %v1697 = vpow.pop %v1696
    %v1698 = vsel %vm379, %v1695, 0.0
    %1699 = vadd.xlane.f32.xlu0 %v1698
    %v1700 = vpop.xlane.xlu0 %1699
    %v1701 = vsel %vm379, %v1697, 0.0
    %1702 = vadd.xlane.f32.xlu0 %v1701
    %v1703 = vpop.xlane.xlu0 %1702
    %v1704 = vrcp.pop %v1700
    %v1705 = vrcp.pop %v1703
    %v1706 = vmul.f32 %v1695, %v1704
    %v1707 = vmul.f32 %v1697, %v1705
    %v1709 = vsel %vm379, %v1706, 0
    %v1712 = vsel %vm379, %v1707, 0
    %1714 = vmatprep.subr.mxu0 0.0
    %1715 = vmatpush1.msra.mxu0 %v1569
    %1716 = vmatprep.subr.mxu0 0.0
    %1717 = vmatpush1.msra.mxu0 %v1575
    %1718 = vmatprep.subr.mxu0 0.0
    %1719 = vmatpush1.msra.mxu0 %v1581
    %1720 = vmatprep.subr.mxu0 0.0
    %1721 = vmatpush1.msra.mxu0 %v1587
    %1722 = vmatprep.subr.mxu0 0.0
    %1723 = vmatpush1.msra.mxu0 0.0
    %1724 = vmatprep.subr.mxu0 0.0
    %1725 = vmatpush1.msra.mxu0 0.0
    %1726 = vmatprep.subr.mxu0 0.0
    %1727 = vmatpush1.msra.mxu0 0.0
    %1728 = vmatprep.subr.mxu0 0.0
    %1729 = vmatpush1.msra.mxu0 0.0
    %1730 = vmatprep.subr.mxu0 0.0
    %1731 = vmatpush1.msra.mxu0 0.0
    %1732 = vmatprep.subr.mxu0 0.0
    %1733 = vmatpush1.msra.mxu0 0.0
    %1734 = vmatprep.subr.mxu0 0.0
    %1735 = vmatpush1.msra.mxu0 0.0
    %1736 = vmatprep.subr.mxu0 0.0
    %1737 = vmatpush1.msra.mxu0 0.0
    %1738 = vmatprep.subr.mxu0 0.0
    %1739 = vmatpush1.msra.mxu0 0.0
    %1740 = vmatprep.subr.mxu0 0.0
    %1741 = vmatpush1.msra.mxu0 0.0
    %1742 = vmatprep.subr.mxu0 0.0
    %1743 = vmatpush1.msra.mxu0 0.0
    %1744 = vmatprep.subr.mxu0 0.0
    %1745 = vmatpush1.msra.mxu0 0.0
    %1746 = vmatprep.subr.mxu0 0.0
    %1747 = vmatpush1.msra.mxu0 0.0
    %1748 = vmatprep.subr.mxu0 0.0
    %1749 = vmatpush1.msra.mxu0 0.0
    %1750 = vmatprep.subr.mxu0 0.0
    %1751 = vmatpush1.msra.mxu0 0.0
    %1752 = vmatprep.subr.mxu0 0.0
    %1753 = vmatpush1.msra.mxu0 0.0
    %1754 = vmatprep.subr.mxu0 0.0
    %1755 = vmatpush1.msra.mxu0 0.0
    %1756 = vmatprep.subr.mxu0 0.0
    %1757 = vmatpush1.msra.mxu0 0.0
    %1758 = vmatprep.subr.mxu0 0.0
    %1759 = vmatpush1.msra.mxu0 0.0
    %1760 = vmatprep.subr.mxu0 0.0
    %1761 = vmatpush1.msra.mxu0 0.0
    %1762 = vmatprep.subr.mxu0 0.0
    %1763 = vmatpush1.msra.mxu0 0.0
    %1764 = vmatprep.subr.mxu0 0.0
    %1765 = vmatpush1.msra.mxu0 0.0
    %1766 = vmatprep.subr.mxu0 0.0
    %1767 = vmatpush1.msra.mxu0 0.0
    %1768 = vmatprep.subr.mxu0 0.0
    %1769 = vmatpush1.msra.mxu0 0.0
    %1770 = vmatprep.subr.mxu0 0.0
    %1771 = vmatpush1.msra.mxu0 0.0
    %1772 = vmatprep.subr.mxu0 0.0
    %1773 = vmatpush1.msra.mxu0 0.0
    %1774 = vmatprep.subr.mxu0 0.0
    %1775 = vmatpush1.msra.mxu0 0.0
    %1776 = vmatprep.subr.mxu0 0.0
    %1777 = vmatpush1.msra.mxu0 0.0
    %1778 = vmatprep.mubr.f32.mxu0 0.0
    %1779 = vmatmul.mubr.f32.gmra.mrb[0].mxu0 %v1709
    %v1780 = vpop.f32.mrb[0].mxu0
    %v1781 = vadd.f32 0.0, %v1780
    %v1782 = vpop.f32.mrb[0].mxu0
    %1783 = vmatprep.mubr.f32.mxu0 0.0
    %1784 = vmatmul.mubr.f32.gmra.mrb[0].mxu0 %v1712
    %v1785 = vpop.f32.mrb[0].mxu0
    %v1786 = vadd.f32 0.0, %v1785
    %v1787 = vpop.f32.mrb[0].mxu0
    %1788 = vdwg.mxu0
    %1789 = vst.msk [vmem:[#allocation2] sm:$0xff] %vm379, %v1781
    %1790 = vst.msk [vmem:[#allocation2 + $0x8] sm:$0xff] %vm379, %v1786
    %1791 = vrot.lane.b32.xlu0 %v1451, 96
    %v1792 = vpop.permute.xlu0 %1791
    %1793 = vrot.lane.b32.xlu0 %v1456, 96
    %v1794 = vpop.permute.xlu0 %1793
    %1795 = vrot.lane.b32.xlu0 %v1567, 96
    %v1796 = vpop.permute.xlu0 %1795
    %1797 = vrot.lane.b32.xlu0 %v1573, 96
    %v1798 = vpop.permute.xlu0 %1797
    %1799 = vrot.lane.b32.xlu0 %v1579, 96
    %v1800 = vpop.permute.xlu0 %1799
    %1801 = vrot.lane.b32.xlu0 %v1585, 96
    %v1802 = vpop.permute.xlu0 %1801
    %v1803 = vsel %vm379, %v1792, 0
    %v1805 = vsel %vm379, %v1794, 0
    %v1807 = vsel %vm379, %v1796, 0
    %v1809 = vsel %vm379, %v1798, 0
    %v1811 = vsel %vm379, %v1800, 0
    %v1813 = vsel %vm379, %v1802, 0
    %1815 = vmatprep.subr.mxu0 0.0
    %1816 = vmatpush1.xpose.msra.mxu0 %v1807
    %1817 = vmatprep.subr.mxu0 0.0
    %1818 = vmatpush1.xpose.msra.mxu0 %v1809
    %1819 = vmatprep.subr.mxu0 0.0
    %1820 = vmatpush1.xpose.msra.mxu0 %v1811
    %1821 = vmatprep.subr.mxu0 0.0
    %1822 = vmatpush1.xpose.msra.mxu0 %v1813
    %1823 = vmatprep.subr.mxu0 0.0
    %1824 = vmatpush1.xpose.msra.mxu0 0.0
    %1825 = vmatprep.subr.mxu0 0.0
    %1826 = vmatpush1.xpose.msra.mxu0 0.0
    %1827 = vmatprep.subr.mxu0 0.0
    %1828 = vmatpush1.xpose.msra.mxu0 0.0
    %1829 = vmatprep.subr.mxu0 0.0
    %1830 = vmatpush1.xpose.msra.mxu0 0.0
    %1831 = vmatprep.subr.mxu0 0.0
    %1832 = vmatpush1.xpose.msra.mxu0 0.0
    %1833 = vmatprep.subr.mxu0 0.0
    %1834 = vmatpush1.xpose.msra.mxu0 0.0
    %1835 = vmatprep.subr.mxu0 0.0
    %1836 = vmatpush1.xpose.msra.mxu0 0.0
    %1837 = vmatprep.subr.mxu0 0.0
    %1838 = vmatpush1.xpose.msra.mxu0 0.0
    %1839 = vmatprep.subr.mxu0 0.0
    %1840 = vmatpush1.xpose.msra.mxu0 0.0
    %1841 = vmatprep.subr.mxu0 0.0
    %1842 = vmatpush1.xpose.msra.mxu0 0.0
    %1843 = vmatprep.subr.mxu0 0.0
    %1844 = vmatpush1.xpose.msra.mxu0 0.0
    %1845 = vmatprep.subr.mxu0 0.0
    %1846 = vmatpush1.xpose.msra.mxu0 0.0
    %1847 = vmatprep.subr.mxu0 0.0
    %1848 = vmatpush1.xpose.msra.mxu0 0.0
    %1849 = vmatprep.subr.mxu0 0.0
    %1850 = vmatpush1.xpose.msra.mxu0 0.0
    %1851 = vmatprep.subr.mxu0 0.0
    %1852 = vmatpush1.xpose.msra.mxu0 0.0
    %1853 = vmatprep.subr.mxu0 0.0
    %1854 = vmatpush1.xpose.msra.mxu0 0.0
    %1855 = vmatprep.subr.mxu0 0.0
    %1856 = vmatpush1.xpose.msra.mxu0 0.0
    %1857 = vmatprep.subr.mxu0 0.0
    %1858 = vmatpush1.xpose.msra.mxu0 0.0
    %1859 = vmatprep.subr.mxu0 0.0
    %1860 = vmatpush1.xpose.msra.mxu0 0.0
    %1861 = vmatprep.subr.mxu0 0.0
    %1862 = vmatpush1.xpose.msra.mxu0 0.0
    %1863 = vmatprep.subr.mxu0 0.0
    %1864 = vmatpush1.xpose.msra.mxu0 0.0
    %1865 = vmatprep.subr.mxu0 0.0
    %1866 = vmatpush1.xpose.msra.mxu0 0.0
    %1867 = vmatprep.subr.mxu0 0.0
    %1868 = vmatpush1.xpose.msra.mxu0 0.0
    %1869 = vmatprep.subr.mxu0 0.0
    %1870 = vmatpush1.xpose.msra.mxu0 0.0
    %1871 = vmatprep.subr.mxu0 0.0
    %1872 = vmatpush1.xpose.msra.mxu0 0.0
    %1873 = vmatprep.subr.mxu0 0.0
    %1874 = vmatpush1.xpose.msra.mxu0 0.0
    %1875 = vmatprep.subr.mxu0 0.0
    %1876 = vmatpush1.xpose.msra.mxu0 0.0
    %1877 = vmatprep.subr.mxu0 0.0
    %1878 = vmatpush1.xpose.msra.mxu0 0.0
    %1879 = vmatprep.mubr.f32.mxu0 0.0
    %1880 = vmatmul.mubr.f32.gmra.mrb[0].mxu0 %v1803
    %v1881 = vpop.f32.mrb[0].mxu0
    %v1882 = vadd.f32 0.0, %v1881
    %v1883 = vpop.f32.mrb[0].mxu0
    %1884 = vmatprep.mubr.f32.mxu0 0.0
    %1885 = vmatmul.mubr.f32.gmra.mrb[0].mxu0 %v1805
    %v1886 = vpop.f32.mrb[0].mxu0
    %v1887 = vadd.f32 0.0, %v1886
    %v1888 = vpop.f32.mrb[0].mxu0
    %1889 = vdwg.mxu0
    %v1890 = vmul.f32 %v1882, 0.17677669
    %v1891 = vmul.f32 %v1887, 0.17677669
    %v1892 = vadd.f32 %v1890, %v124
    %v1893 = vadd.f32 %v1891, %v125
    %v1894 = vsel %vm379, %v1892, -inf
    %1895 = vmax.xlane.f32.xlu0 %v1894
    %v1896 = vpop.xlane.xlu0 %1895
    %v1897 = vsel %vm379, %v1893, -inf
    %1898 = vmax.xlane.f32.xlu0 %v1897
    %v1899 = vpop.xlane.xlu0 %1898
    %v1900 = vsub.f32 %v1892, %v1896
    %v1901 = vsub.f32 %v1893, %v1899
    %v1902 = vmul.f32 %v1900, 1.442695
    %v1903 = vpow.pop %v1902
    %v1904 = vmul.f32 %v1901, 1.442695
    %v1905 = vpow.pop %v1904
    %v1906 = vsel %vm379, %v1903, 0.0
    %1907 = vadd.xlane.f32.xlu0 %v1906
    %v1908 = vpop.xlane.xlu0 %1907
    %v1909 = vsel %vm379, %v1905, 0.0
    %1910 = vadd.xlane.f32.xlu0 %v1909
    %v1911 = vpop.xlane.xlu0 %1910
    %v1912 = vrcp.pop %v1908
    %v1913 = vrcp.pop %v1911
    %v1914 = vmul.f32 %v1903, %v1912
    %v1915 = vmul.f32 %v1905, %v1913
    %1920 = vrot.lane.b32.xlu0 %v1569, 96
    %v1921 = vpop.permute.xlu0 %1920
    %1922 = vrot.lane.b32.xlu0 %v1575, 96
    %v1923 = vpop.permute.xlu0 %1922
    %1924 = vrot.lane.b32.xlu0 %v1581, 96
    %v1925 = vpop.permute.xlu0 %1924
    %1926 = vrot.lane.b32.xlu0 %v1587, 96
    %v1927 = vpop.permute.xlu0 %1926
    %v1933 = vsel %vm379, %v1914, 0
    %v1936 = vsel %vm379, %v1915, 0
    %1938 = vmatprep.subr.mxu0 0.0
    %1939 = vmatpush1.msra.mxu0 %v1921
    %1940 = vmatprep.subr.mxu0 0.0
    %1941 = vmatpush1.msra.mxu0 %v1923
    %1942 = vmatprep.subr.mxu0 0.0
    %1943 = vmatpush1.msra.mxu0 %v1925
    %1944 = vmatprep.subr.mxu0 0.0
    %1945 = vmatpush1.msra.mxu0 %v1927
    %1946 = vmatprep.subr.mxu0 0.0
    %1947 = vmatpush1.msra.mxu0 0.0
    %1948 = vmatprep.subr.mxu0 0.0
    %1949 = vmatpush1.msra.mxu0 0.0
    %1950 = vmatprep.subr.mxu0 0.0
    %1951 = vmatpush1.msra.mxu0 0.0
    %1952 = vmatprep.subr.mxu0 0.0
    %1953 = vmatpush1.msra.mxu0 0.0
    %1954 = vmatprep.subr.mxu0 0.0
    %1955 = vmatpush1.msra.mxu0 0.0
    %1956 = vmatprep.subr.mxu0 0.0
    %1957 = vmatpush1.msra.mxu0 0.0
    %1958 = vmatprep.subr.mxu0 0.0
    %1959 = vmatpush1.msra.mxu0 0.0
    %1960 = vmatprep.subr.mxu0 0.0
    %1961 = vmatpush1.msra.mxu0 0.0
    %1962 = vmatprep.subr.mxu0 0.0
    %1963 = vmatpush1.msra.mxu0 0.0
    %1964 = vmatprep.subr.mxu0 0.0
    %1965 = vmatpush1.msra.mxu0 0.0
    %1966 = vmatprep.subr.mxu0 0.0
    %1967 = vmatpush1.msra.mxu0 0.0
    %1968 = vmatprep.subr.mxu0 0.0
    %1969 = vmatpush1.msra.mxu0 0.0
    %1970 = vmatprep.subr.mxu0 0.0
    %1971 = vmatpush1.msra.mxu0 0.0
    %1972 = vmatprep.subr.mxu0 0.0
    %1973 = vmatpush1.msra.mxu0 0.0
    %1974 = vmatprep.subr.mxu0 0.0
    %1975 = vmatpush1.msra.mxu0 0.0
    %1976 = vmatprep.subr.mxu0 0.0
    %1977 = vmatpush1.msra.mxu0 0.0
    %1978 = vmatprep.subr.mxu0 0.0
    %1979 = vmatpush1.msra.mxu0 0.0
    %1980 = vmatprep.subr.mxu0 0.0
    %1981 = vmatpush1.msra.mxu0 0.0
    %1982 = vmatprep.subr.mxu0 0.0
    %1983 = vmatpush1.msra.mxu0 0.0
    %1984 = vmatprep.subr.mxu0 0.0
    %1985 = vmatpush1.msra.mxu0 0.0
    %1986 = vmatprep.subr.mxu0 0.0
    %1987 = vmatpush1.msra.mxu0 0.0
    %1988 = vmatprep.subr.mxu0 0.0
    %1989 = vmatpush1.msra.mxu0 0.0
    %1990 = vmatprep.subr.mxu0 0.0
    %1991 = vmatpush1.msra.mxu0 0.0
    %1992 = vmatprep.subr.mxu0 0.0
    %1993 = vmatpush1.msra.mxu0 0.0
    %1994 = vmatprep.subr.mxu0 0.0
    %1995 = vmatpush1.msra.mxu0 0.0
    %1996 = vmatprep.subr.mxu0 0.0
    %1997 = vmatpush1.msra.mxu0 0.0
    %1998 = vmatprep.subr.mxu0 0.0
    %1999 = vmatpush1.msra.mxu0 0.0
    %2000 = vmatprep.subr.mxu0 0.0
    %2001 = vmatpush1.msra.mxu0 0.0
    %2002 = vmatprep.mubr.f32.mxu0 0.0
    %2003 = vmatmul.mubr.f32.gmra.mrb[0].mxu0 %v1933
    %v2004 = vpop.f32.mrb[0].mxu0
    %v2005 = vadd.f32 0.0, %v2004
    %v2006 = vpop.f32.mrb[0].mxu0
    %2007 = vmatprep.mubr.f32.mxu0 0.0
    %2008 = vmatmul.mubr.f32.gmra.mrb[0].mxu0 %v1936
    %v2009 = vpop.f32.mrb[0].mxu0
    %v2010 = vadd.f32 0.0, %v2009
    %v2011 = vpop.f32.mrb[0].mxu0
    %2012 = vdwg.mxu0
    %2015 = vrot.lane.b32.xlu0 %v2005, 32
    %v2016 = vpop.permute.xlu0 %2015
    %2017 = vrot.lane.b32.xlu0 %v2010, 32
    %v2018 = vpop.permute.xlu0 %2017
    %2021 = vst.msk [vmem:[#allocation2] sm:$0xff] %vm791, %v2016
    %2022 = vst.msk [vmem:[#allocation2 + $0x8] sm:$0xff] %vm791, %v2018
    %2023 = vrot.lane.b32.xlu0 %v1451, 64
    %v2024 = vpop.permute.xlu0 %2023
    %2025 = vrot.lane.b32.xlu0 %v1456, 64
    %v2026 = vpop.permute.xlu0 %2025
    %2027 = vrot.lane.b32.xlu0 %v1567, 64
    %v2028 = vpop.permute.xlu0 %2027
    %2029 = vrot.lane.b32.xlu0 %v1573, 64
    %v2030 = vpop.permute.xlu0 %2029
    %2031 = vrot.lane.b32.xlu0 %v1579, 64
    %v2032 = vpop.permute.xlu0 %2031
    %2033 = vrot.lane.b32.xlu0 %v1585, 64
    %v2034 = vpop.permute.xlu0 %2033
    %v2035 = vsel %vm379, %v2024, 0
    %v2037 = vsel %vm379, %v2026, 0
    %v2039 = vsel %vm379, %v2028, 0
    %v2041 = vsel %vm379, %v2030, 0
    %v2043 = vsel %vm379, %v2032, 0
    %v2045 = vsel %vm379, %v2034, 0
    %2047 = vmatprep.subr.mxu0 0.0
    %2048 = vmatpush1.xpose.msra.mxu0 %v2039
    %2049 = vmatprep.subr.mxu0 0.0
    %2050 = vmatpush1.xpose.msra.mxu0 %v2041
    %2051 = vmatprep.subr.mxu0 0.0
    %2052 = vmatpush1.xpose.msra.mxu0 %v2043
    %2053 = vmatprep.subr.mxu0 0.0
    %2054 = vmatpush1.xpose.msra.mxu0 %v2045
    %2055 = vmatprep.subr.mxu0 0.0
    %2056 = vmatpush1.xpose.msra.mxu0 0.0
    %2057 = vmatprep.subr.mxu0 0.0
    %2058 = vmatpush1.xpose.msra.mxu0 0.0
    %2059 = vmatprep.subr.mxu0 0.0
    %2060 = vmatpush1.xpose.msra.mxu0 0.0
    %2061 = vmatprep.subr.mxu0 0.0
    %2062 = vmatpush1.xpose.msra.mxu0 0.0
    %2063 = vmatprep.subr.mxu0 0.0
    %2064 = vmatpush1.xpose.msra.mxu0 0.0
    %2065 = vmatprep.subr.mxu0 0.0
    %2066 = vmatpush1.xpose.msra.mxu0 0.0
    %2067 = vmatprep.subr.mxu0 0.0
    %2068 = vmatpush1.xpose.msra.mxu0 0.0
    %2069 = vmatprep.subr.mxu0 0.0
    %2070 = vmatpush1.xpose.msra.mxu0 0.0
    %2071 = vmatprep.subr.mxu0 0.0
    %2072 = vmatpush1.xpose.msra.mxu0 0.0
    %2073 = vmatprep.subr.mxu0 0.0
    %2074 = vmatpush1.xpose.msra.mxu0 0.0
    %2075 = vmatprep.subr.mxu0 0.0
    %2076 = vmatpush1.xpose.msra.mxu0 0.0
    %2077 = vmatprep.subr.mxu0 0.0
    %2078 = vmatpush1.xpose.msra.mxu0 0.0
    %2079 = vmatprep.subr.mxu0 0.0
    %2080 = vmatpush1.xpose.msra.mxu0 0.0
    %2081 = vmatprep.subr.mxu0 0.0
    %2082 = vmatpush1.xpose.msra.mxu0 0.0
    %2083 = vmatprep.subr.mxu0 0.0
    %2084 = vmatpush1.xpose.msra.mxu0 0.0
    %2085 = vmatprep.subr.mxu0 0.0
    %2086 = vmatpush1.xpose.msra.mxu0 0.0
    %2087 = vmatprep.subr.mxu0 0.0
    %2088 = vmatpush1.xpose.msra.mxu0 0.0
    %2089 = vmatprep.subr.mxu0 0.0
    %2090 = vmatpush1.xpose.msra.mxu0 0.0
    %2091 = vmatprep.subr.mxu0 0.0
    %2092 = vmatpush1.xpose.msra.mxu0 0.0
    %2093 = vmatprep.subr.mxu0 0.0
    %2094 = vmatpush1.xpose.msra.mxu0 0.0
    %2095 = vmatprep.subr.mxu0 0.0
    %2096 = vmatpush1.xpose.msra.mxu0 0.0
    %2097 = vmatprep.subr.mxu0 0.0
    %2098 = vmatpush1.xpose.msra.mxu0 0.0
    %2099 = vmatprep.subr.mxu0 0.0
    %2100 = vmatpush1.xpose.msra.mxu0 0.0
    %2101 = vmatprep.subr.mxu0 0.0
    %2102 = vmatpush1.xpose.msra.mxu0 0.0
    %2103 = vmatprep.subr.mxu0 0.0
    %2104 = vmatpush1.xpose.msra.mxu0 0.0
    %2105 = vmatprep.subr.mxu0 0.0
    %2106 = vmatpush1.xpose.msra.mxu0 0.0
    %2107 = vmatprep.subr.mxu0 0.0
    %2108 = vmatpush1.xpose.msra.mxu0 0.0
    %2109 = vmatprep.subr.mxu0 0.0
    %2110 = vmatpush1.xpose.msra.mxu0 0.0
    %2111 = vmatprep.mubr.f32.mxu0 0.0
    %2112 = vmatmul.mubr.f32.gmra.mrb[0].mxu0 %v2035
    %v2113 = vpop.f32.mrb[0].mxu0
    %v2114 = vadd.f32 0.0, %v2113
    %v2115 = vpop.f32.mrb[0].mxu0
    %2116 = vmatprep.mubr.f32.mxu0 0.0
    %2117 = vmatmul.mubr.f32.gmra.mrb[0].mxu0 %v2037
    %v2118 = vpop.f32.mrb[0].mxu0
    %v2119 = vadd.f32 0.0, %v2118
    %v2120 = vpop.f32.mrb[0].mxu0
    %2121 = vdwg.mxu0
    %v2122 = vmul.f32 %v2114, 0.17677669
    %v2123 = vmul.f32 %v2119, 0.17677669
    %v2124 = vadd.f32 %v2122, %v124
    %v2125 = vadd.f32 %v2123, %v125
    %v2126 = vsel %vm379, %v2124, -inf
    %2127 = vmax.xlane.f32.xlu0 %v2126
    %v2128 = vpop.xlane.xlu0 %2127
    %v2129 = vsel %vm379, %v2125, -inf
    %2130 = vmax.xlane.f32.xlu0 %v2129
    %v2131 = vpop.xlane.xlu0 %2130
    %v2132 = vsub.f32 %v2124, %v2128
    %v2133 = vsub.f32 %v2125, %v2131
    %v2134 = vmul.f32 %v2132, 1.442695
    %v2135 = vpow.pop %v2134
    %v2136 = vmul.f32 %v2133, 1.442695
    %v2137 = vpow.pop %v2136
    %v2138 = vsel %vm379, %v2135, 0.0
    %2139 = vadd.xlane.f32.xlu0 %v2138
    %v2140 = vpop.xlane.xlu0 %2139
    %v2141 = vsel %vm379, %v2137, 0.0
    %2142 = vadd.xlane.f32.xlu0 %v2141
    %v2143 = vpop.xlane.xlu0 %2142
    %v2144 = vrcp.pop %v2140
    %v2145 = vrcp.pop %v2143
    %v2146 = vmul.f32 %v2135, %v2144
    %v2147 = vmul.f32 %v2137, %v2145
    %2148 = vrot.lane.b32.xlu0 %v1569, 64
    %v2149 = vpop.permute.xlu0 %2148
    %2150 = vrot.lane.b32.xlu0 %v1575, 64
    %v2151 = vpop.permute.xlu0 %2150
    %2152 = vrot.lane.b32.xlu0 %v1581, 64
    %v2153 = vpop.permute.xlu0 %2152
    %2154 = vrot.lane.b32.xlu0 %v1587, 64
    %v2155 = vpop.permute.xlu0 %2154
    %v2161 = vsel %vm379, %v2146, 0
    %v2164 = vsel %vm379, %v2147, 0
    %2166 = vmatprep.subr.mxu0 0.0
    %2167 = vmatpush1.msra.mxu0 %v2149
    %2168 = vmatprep.subr.mxu0 0.0
    %2169 = vmatpush1.msra.mxu0 %v2151
    %2170 = vmatprep.subr.mxu0 0.0
    %2171 = vmatpush1.msra.mxu0 %v2153
    %2172 = vmatprep.subr.mxu0 0.0
    %2173 = vmatpush1.msra.mxu0 %v2155
    %2174 = vmatprep.subr.mxu0 0.0
    %2175 = vmatpush1.msra.mxu0 0.0
    %2176 = vmatprep.subr.mxu0 0.0
    %2177 = vmatpush1.msra.mxu0 0.0
    %2178 = vmatprep.subr.mxu0 0.0
    %2179 = vmatpush1.msra.mxu0 0.0
    %2180 = vmatprep.subr.mxu0 0.0
    %2181 = vmatpush1.msra.mxu0 0.0
    %2182 = vmatprep.subr.mxu0 0.0
    %2183 = vmatpush1.msra.mxu0 0.0
    %2184 = vmatprep.subr.mxu0 0.0
    %2185 = vmatpush1.msra.mxu0 0.0
    %2186 = vmatprep.subr.mxu0 0.0
    %2187 = vmatpush1.msra.mxu0 0.0
    %2188 = vmatprep.subr.mxu0 0.0
    %2189 = vmatpush1.msra.mxu0 0.0
    %2190 = vmatprep.subr.mxu0 0.0
    %2191 = vmatpush1.msra.mxu0 0.0
    %2192 = vmatprep.subr.mxu0 0.0
    %2193 = vmatpush1.msra.mxu0 0.0
    %2194 = vmatprep.subr.mxu0 0.0
    %2195 = vmatpush1.msra.mxu0 0.0
    %2196 = vmatprep.subr.mxu0 0.0
    %2197 = vmatpush1.msra.mxu0 0.0
    %2198 = vmatprep.subr.mxu0 0.0
    %2199 = vmatpush1.msra.mxu0 0.0
    %2200 = vmatprep.subr.mxu0 0.0
    %2201 = vmatpush1.msra.mxu0 0.0
    %2202 = vmatprep.subr.mxu0 0.0
    %2203 = vmatpush1.msra.mxu0 0.0
    %2204 = vmatprep.subr.mxu0 0.0
    %2205 = vmatpush1.msra.mxu0 0.0
    %2206 = vmatprep.subr.mxu0 0.0
    %2207 = vmatpush1.msra.mxu0 0.0
    %2208 = vmatprep.subr.mxu0 0.0
    %2209 = vmatpush1.msra.mxu0 0.0
    %2210 = vmatprep.subr.mxu0 0.0
    %2211 = vmatpush1.msra.mxu0 0.0
    %2212 = vmatprep.subr.mxu0 0.0
    %2213 = vmatpush1.msra.mxu0 0.0
    %2214 = vmatprep.subr.mxu0 0.0
    %2215 = vmatpush1.msra.mxu0 0.0
    %2216 = vmatprep.subr.mxu0 0.0
    %2217 = vmatpush1.msra.mxu0 0.0
    %2218 = vmatprep.subr.mxu0 0.0
    %2219 = vmatpush1.msra.mxu0 0.0
    %2220 = vmatprep.subr.mxu0 0.0
    %2221 = vmatpush1.msra.mxu0 0.0
    %2222 = vmatprep.subr.mxu0 0.0
    %2223 = vmatpush1.msra.mxu0 0.0
    %2224 = vmatprep.subr.mxu0 0.0
    %2225 = vmatpush1.msra.mxu0 0.0
    %2226 = vmatprep.subr.mxu0 0.0
    %2227 = vmatpush1.msra.mxu0 0.0
    %2228 = vmatprep.subr.mxu0 0.0
    %2229 = vmatpush1.msra.mxu0 0.0
    %2230 = vmatprep.mubr.f32.mxu0 0.0
    %2231 = vmatmul.mubr.f32.gmra.mrb[0].mxu0 %v2161
    %v2232 = vpop.f32.mrb[0].mxu0
    %v2233 = vadd.f32 0.0, %v2232
    %v2234 = vpop.f32.mrb[0].mxu0
    %2235 = vmatprep.mubr.f32.mxu0 0.0
    %2236 = vmatmul.mubr.f32.gmra.mrb[0].mxu0 %v2164
    %v2237 = vpop.f32.mrb[0].mxu0
    %v2238 = vadd.f32 0.0, %v2237
    %v2239 = vpop.f32.mrb[0].mxu0
    %2240 = vdwg.mxu0
    %2243 = vrot.lane.b32.xlu0 %v2233, 64
    %v2244 = vpop.permute.xlu0 %2243
    %2245 = vrot.lane.b32.xlu0 %v2238, 64
    %v2246 = vpop.permute.xlu0 %2245
    %2249 = vst.msk [vmem:[#allocation2] sm:$0xff] %vm1006, %v2244
    %2250 = vst.msk [vmem:[#allocation2 + $0x8] sm:$0xff] %vm1006, %v2246
    %2251 = vrot.lane.b32.xlu0 %v1451, 32
    %v2252 = vpop.permute.xlu0 %2251
    %2253 = vrot.lane.b32.xlu0 %v1456, 32
    %v2254 = vpop.permute.xlu0 %2253
    %2255 = vrot.lane.b32.xlu0 %v1567, 32
    %v2256 = vpop.permute.xlu0 %2255
    %2257 = vrot.lane.b32.xlu0 %v1573, 32
    %v2258 = vpop.permute.xlu0 %2257
    %2259 = vrot.lane.b32.xlu0 %v1579, 32
    %v2260 = vpop.permute.xlu0 %2259
    %2261 = vrot.lane.b32.xlu0 %v1585, 32
    %v2262 = vpop.permute.xlu0 %2261
    %v2263 = vsel %vm379, %v2252, 0
    %v2265 = vsel %vm379, %v2254, 0
    %v2267 = vsel %vm379, %v2256, 0
    %v2269 = vsel %vm379, %v2258, 0
    %v2271 = vsel %vm379, %v2260, 0
    %v2273 = vsel %vm379, %v2262, 0
    %2275 = vmatprep.subr.mxu0 0.0
    %2276 = vmatpush1.xpose.msra.mxu0 %v2267
    %2277 = vmatprep.subr.mxu0 0.0
    %2278 = vmatpush1.xpose.msra.mxu0 %v2269
    %2279 = vmatprep.subr.mxu0 0.0
    %2280 = vmatpush1.xpose.msra.mxu0 %v2271
    %2281 = vmatprep.subr.mxu0 0.0
    %2282 = vmatpush1.xpose.msra.mxu0 %v2273
    %2283 = vmatprep.subr.mxu0 0.0
    %2284 = vmatpush1.xpose.msra.mxu0 0.0
    %2285 = vmatprep.subr.mxu0 0.0
    %2286 = vmatpush1.xpose.msra.mxu0 0.0
    %2287 = vmatprep.subr.mxu0 0.0
    %2288 = vmatpush1.xpose.msra.mxu0 0.0
    %2289 = vmatprep.subr.mxu0 0.0
    %2290 = vmatpush1.xpose.msra.mxu0 0.0
    %2291 = vmatprep.subr.mxu0 0.0
    %2292 = vmatpush1.xpose.msra.mxu0 0.0
    %2293 = vmatprep.subr.mxu0 0.0
    %2294 = vmatpush1.xpose.msra.mxu0 0.0
    %2295 = vmatprep.subr.mxu0 0.0
    %2296 = vmatpush1.xpose.msra.mxu0 0.0
    %2297 = vmatprep.subr.mxu0 0.0
    %2298 = vmatpush1.xpose.msra.mxu0 0.0
    %2299 = vmatprep.subr.mxu0 0.0
    %2300 = vmatpush1.xpose.msra.mxu0 0.0
    %2301 = vmatprep.subr.mxu0 0.0
    %2302 = vmatpush1.xpose.msra.mxu0 0.0
    %2303 = vmatprep.subr.mxu0 0.0
    %2304 = vmatpush1.xpose.msra.mxu0 0.0
    %2305 = vmatprep.subr.mxu0 0.0
    %2306 = vmatpush1.xpose.msra.mxu0 0.0
    %2307 = vmatprep.subr.mxu0 0.0
    %2308 = vmatpush1.xpose.msra.mxu0 0.0
    %2309 = vmatprep.subr.mxu0 0.0
    %2310 = vmatpush1.xpose.msra.mxu0 0.0
    %2311 = vmatprep.subr.mxu0 0.0
    %2312 = vmatpush1.xpose.msra.mxu0 0.0
    %2313 = vmatprep.subr.mxu0 0.0
    %2314 = vmatpush1.xpose.msra.mxu0 0.0
    %2315 = vmatprep.subr.mxu0 0.0
    %2316 = vmatpush1.xpose.msra.mxu0 0.0
    %2317 = vmatprep.subr.mxu0 0.0
    %2318 = vmatpush1.xpose.msra.mxu0 0.0
    %2319 = vmatprep.subr.mxu0 0.0
    %2320 = vmatpush1.xpose.msra.mxu0 0.0
    %2321 = vmatprep.subr.mxu0 0.0
    %2322 = vmatpush1.xpose.msra.mxu0 0.0
    %2323 = vmatprep.subr.mxu0 0.0
    %2324 = vmatpush1.xpose.msra.mxu0 0.0
    %2325 = vmatprep.subr.mxu0 0.0
    %2326 = vmatpush1.xpose.msra.mxu0 0.0
    %2327 = vmatprep.subr.mxu0 0.0
    %2328 = vmatpush1.xpose.msra.mxu0 0.0
    %2329 = vmatprep.subr.mxu0 0.0
    %2330 = vmatpush1.xpose.msra.mxu0 0.0
    %2331 = vmatprep.subr.mxu0 0.0
    %2332 = vmatpush1.xpose.msra.mxu0 0.0
    %2333 = vmatprep.subr.mxu0 0.0
    %2334 = vmatpush1.xpose.msra.mxu0 0.0
    %2335 = vmatprep.subr.mxu0 0.0
    %2336 = vmatpush1.xpose.msra.mxu0 0.0
    %2337 = vmatprep.subr.mxu0 0.0
    %2338 = vmatpush1.xpose.msra.mxu0 0.0
    %2339 = vmatprep.mubr.f32.mxu0 0.0
    %2340 = vmatmul.mubr.f32.gmra.mrb[0].mxu0 %v2263
    %v2341 = vpop.f32.mrb[0].mxu0
    %v2342 = vadd.f32 0.0, %v2341
    %v2343 = vpop.f32.mrb[0].mxu0
    %2344 = vmatprep.mubr.f32.mxu0 0.0
    %2345 = vmatmul.mubr.f32.gmra.mrb[0].mxu0 %v2265
    %v2346 = vpop.f32.mrb[0].mxu0
    %v2347 = vadd.f32 0.0, %v2346
    %v2348 = vpop.f32.mrb[0].mxu0
    %2349 = vdwg.mxu0
    %v2350 = vmul.f32 %v2342, 0.17677669
    %v2351 = vmul.f32 %v2347, 0.17677669
    %v2352 = vadd.f32 %v2350, %v124
    %v2353 = vadd.f32 %v2351, %v125
    %v2354 = vsel %vm379, %v2352, -inf
    %2355 = vmax.xlane.f32.xlu0 %v2354
    %v2356 = vpop.xlane.xlu0 %2355
    %v2357 = vsel %vm379, %v2353, -inf
    %2358 = vmax.xlane.f32.xlu0 %v2357
    %v2359 = vpop.xlane.xlu0 %2358
    %v2360 = vsub.f32 %v2352, %v2356
    %v2361 = vsub.f32 %v2353, %v2359
    %v2362 = vmul.f32 %v2360, 1.442695
    %v2363 = vpow.pop %v2362
    %v2364 = vmul.f32 %v2361, 1.442695
    %v2365 = vpow.pop %v2364
    %v2366 = vsel %vm379, %v2363, 0.0
    %2367 = vadd.xlane.f32.xlu0 %v2366
    %v2368 = vpop.xlane.xlu0 %2367
    %v2369 = vsel %vm379, %v2365, 0.0
    %2370 = vadd.xlane.f32.xlu0 %v2369
    %v2371 = vpop.xlane.xlu0 %2370
    %v2372 = vrcp.pop %v2368
    %v2373 = vrcp.pop %v2371
    %v2374 = vmul.f32 %v2363, %v2372
    %v2375 = vmul.f32 %v2365, %v2373
    %2376 = vrot.lane.b32.xlu0 %v1569, 32
    %v2377 = vpop.permute.xlu0 %2376
    %2378 = vrot.lane.b32.xlu0 %v1575, 32
    %v2379 = vpop.permute.xlu0 %2378
    %2380 = vrot.lane.b32.xlu0 %v1581, 32
    %v2381 = vpop.permute.xlu0 %2380
    %2382 = vrot.lane.b32.xlu0 %v1587, 32
    %v2383 = vpop.permute.xlu0 %2382
    %v2389 = vsel %vm379, %v2374, 0
    %v2392 = vsel %vm379, %v2375, 0
    %2394 = vmatprep.subr.mxu0 0.0
    %2395 = vmatpush1.msra.mxu0 %v2377
    %2396 = vmatprep.subr.mxu0 0.0
    %2397 = vmatpush1.msra.mxu0 %v2379
    %2398 = vmatprep.subr.mxu0 0.0
    %2399 = vmatpush1.msra.mxu0 %v2381
    %2400 = vmatprep.subr.mxu0 0.0
    %2401 = vmatpush1.msra.mxu0 %v2383
    %2402 = vmatprep.subr.mxu0 0.0
    %2403 = vmatpush1.msra.mxu0 0.0
    %2404 = vmatprep.subr.mxu0 0.0
    %2405 = vmatpush1.msra.mxu0 0.0
    %2406 = vmatprep.subr.mxu0 0.0
    %2407 = vmatpush1.msra.mxu0 0.0
    %2408 = vmatprep.subr.mxu0 0.0
    %2409 = vmatpush1.msra.mxu0 0.0
    %2410 = vmatprep.subr.mxu0 0.0
    %2411 = vmatpush1.msra.mxu0 0.0
    %2412 = vmatprep.subr.mxu0 0.0
    %2413 = vmatpush1.msra.mxu0 0.0
    %2414 = vmatprep.subr.mxu0 0.0
    %2415 = vmatpush1.msra.mxu0 0.0
    %2416 = vmatprep.subr.mxu0 0.0
    %2417 = vmatpush1.msra.mxu0 0.0
    %2418 = vmatprep.subr.mxu0 0.0
    %2419 = vmatpush1.msra.mxu0 0.0
    %2420 = vmatprep.subr.mxu0 0.0
    %2421 = vmatpush1.msra.mxu0 0.0
    %2422 = vmatprep.subr.mxu0 0.0
    %2423 = vmatpush1.msra.mxu0 0.0
    %2424 = vmatprep.subr.mxu0 0.0
    %2425 = vmatpush1.msra.mxu0 0.0
    %2426 = vmatprep.subr.mxu0 0.0
    %2427 = vmatpush1.msra.mxu0 0.0
    %2428 = vmatprep.subr.mxu0 0.0
    %2429 = vmatpush1.msra.mxu0 0.0
    %2430 = vmatprep.subr.mxu0 0.0
    %2431 = vmatpush1.msra.mxu0 0.0
    %2432 = vmatprep.subr.mxu0 0.0
    %2433 = vmatpush1.msra.mxu0 0.0
    %2434 = vmatprep.subr.mxu0 0.0
    %2435 = vmatpush1.msra.mxu0 0.0
    %2436 = vmatprep.subr.mxu0 0.0
    %2437 = vmatpush1.msra.mxu0 0.0
    %2438 = vmatprep.subr.mxu0 0.0
    %2439 = vmatpush1.msra.mxu0 0.0
    %2440 = vmatprep.subr.mxu0 0.0
    %2441 = vmatpush1.msra.mxu0 0.0
    %2442 = vmatprep.subr.mxu0 0.0
    %2443 = vmatpush1.msra.mxu0 0.0
    %2444 = vmatprep.subr.mxu0 0.0
    %2445 = vmatpush1.msra.mxu0 0.0
    %2446 = vmatprep.subr.mxu0 0.0
    %2447 = vmatpush1.msra.mxu0 0.0
    %2448 = vmatprep.subr.mxu0 0.0
    %2449 = vmatpush1.msra.mxu0 0.0
    %2450 = vmatprep.subr.mxu0 0.0
    %2451 = vmatpush1.msra.mxu0 0.0
    %2452 = vmatprep.subr.mxu0 0.0
    %2453 = vmatpush1.msra.mxu0 0.0
    %2454 = vmatprep.subr.mxu0 0.0
    %2455 = vmatpush1.msra.mxu0 0.0
    %2456 = vmatprep.subr.mxu0 0.0
    %2457 = vmatpush1.msra.mxu0 0.0
    %2458 = vmatprep.mubr.f32.mxu0 0.0
    %2459 = vmatmul.mubr.f32.gmra.mrb[0].mxu0 %v2389
    %v2460 = vpop.f32.mrb[0].mxu0
    %v2461 = vadd.f32 0.0, %v2460
    %v2462 = vpop.f32.mrb[0].mxu0
    %2463 = vmatprep.mubr.f32.mxu0 0.0
    %2464 = vmatmul.mubr.f32.gmra.mrb[0].mxu0 %v2392
    %v2465 = vpop.f32.mrb[0].mxu0
    %v2466 = vadd.f32 0.0, %v2465
    %v2467 = vpop.f32.mrb[0].mxu0
    %2468 = vdwg.mxu0
    %2471 = vrot.lane.b32.xlu0 %v2461, 96
    %v2472 = vpop.permute.xlu0 %2471
    %2473 = vrot.lane.b32.xlu0 %v2466, 96
    %v2474 = vpop.permute.xlu0 %2473
    %2477 = vst.msk [vmem:[#allocation2] sm:$0xff] %vm1221, %v2472
    %2478 = vst.msk [vmem:[#allocation2 + $0x8] sm:$0xff] %vm1221, %v2474
    %v2479 = vld [vmem:[#allocation2] sm:$0xff]
    %v2480 = vld [vmem:[#allocation2 + $0x8] sm:$0xff]
    %v2481 = vld [vmem:[#allocation7] sm:$0xff]
    %v2482 = vld [vmem:[#allocation7 + $0x8] sm:$0xff]
    %v2483 = vld [vmem:[#allocation7 + $0x10] sm:$0xff]
    %v2484 = vld [vmem:[#allocation7 + $0x18] sm:$0xff]
    %v2485 = vld [vmem:[#allocation7 + $0x20] sm:$0xff]
    %v2486 = vld [vmem:[#allocation7 + $0x28] sm:$0xff]
    %v2487 = vld [vmem:[#allocation7 + $0x30] sm:$0xff]
    %v2488 = vld [vmem:[#allocation7 + $0x38] sm:$0xff]
    %v2489 = vld [vmem:[#allocation7 + $0x40] sm:$0xff]
    %v2490 = vld [vmem:[#allocation7 + $0x48] sm:$0xff]
    %v2491 = vld [vmem:[#allocation7 + $0x50] sm:$0xff]
    %v2492 = vld [vmem:[#allocation7 + $0x58] sm:$0xff]
    %v2493 = vld [vmem:[#allocation7 + $0x60] sm:$0xff]
    %v2494 = vld [vmem:[#allocation7 + $0x68] sm:$0xff]
    %v2495 = vld [vmem:[#allocation7 + $0x70] sm:$0xff]
    %v2496 = vld [vmem:[#allocation7 + $0x78] sm:$0xff]
    %v2497 = vld [vmem:[%s15] sm:$0x1]
    %v2499 = vlaneseq
    %v2500 = vshrl.u32 %v2499, 7
    %v2501 = vsub.s32 0, %v2500
    %v2502 = vrot.slane %v2497, %v2501
    %2504 = vmatprep.subr.mxu0 0.0
    %2505 = vmatpush1.msra.mxu0 %v2481
    %2506 = vmatprep.subr.mxu0 0.0
    %2507 = vmatpush1.msra.mxu0 %v2482
    %2508 = vmatprep.subr.mxu0 0.0
    %2509 = vmatpush1.msra.mxu0 %v2483
    %2510 = vmatprep.subr.mxu0 0.0
    %2511 = vmatpush1.msra.mxu0 %v2484
    %2512 = vmatprep.subr.mxu0 0.0
    %2513 = vmatpush1.msra.mxu0 %v2485
    %2514 = vmatprep.subr.mxu0 0.0
    %2515 = vmatpush1.msra.mxu0 %v2486
    %2516 = vmatprep.subr.mxu0 0.0
    %2517 = vmatpush1.msra.mxu0 %v2487
    %2518 = vmatprep.subr.mxu0 0.0
    %2519 = vmatpush1.msra.mxu0 %v2488
    %2520 = vmatprep.subr.mxu0 0.0
    %2521 = vmatpush1.msra.mxu0 %v2489
    %2522 = vmatprep.subr.mxu0 0.0
    %2523 = vmatpush1.msra.mxu0 %v2490
    %2524 = vmatprep.subr.mxu0 0.0
    %2525 = vmatpush1.msra.mxu0 %v2491
    %2526 = vmatprep.subr.mxu0 0.0
    %2527 = vmatpush1.msra.mxu0 %v2492
    %2528 = vmatprep.subr.mxu0 0.0
    %2529 = vmatpush1.msra.mxu0 %v2493
    %2530 = vmatprep.subr.mxu0 0.0
    %2531 = vmatpush1.msra.mxu0 %v2494
    %2532 = vmatprep.subr.mxu0 0.0
    %2533 = vmatpush1.msra.mxu0 %v2495
    %2534 = vmatprep.subr.mxu0 0.0
    %2535 = vmatpush1.msra.mxu0 %v2496
    %2536 = vmatprep.subr.mxu0 0.0
    %2537 = vmatpush1.msra.mxu0 0.0
    %2538 = vmatprep.subr.mxu0 0.0
    %2539 = vmatpush1.msra.mxu0 0.0
    %2540 = vmatprep.subr.mxu0 0.0
    %2541 = vmatpush1.msra.mxu0 0.0
    %2542 = vmatprep.subr.mxu0 0.0
    %2543 = vmatpush1.msra.mxu0 0.0
    %2544 = vmatprep.subr.mxu0 0.0
    %2545 = vmatpush1.msra.mxu0 0.0
    %2546 = vmatprep.subr.mxu0 0.0
    %2547 = vmatpush1.msra.mxu0 0.0
    %2548 = vmatprep.subr.mxu0 0.0
    %2549 = vmatpush1.msra.mxu0 0.0
    %2550 = vmatprep.subr.mxu0 0.0
    %2551 = vmatpush1.msra.mxu0 0.0
    %2552 = vmatprep.subr.mxu0 0.0
    %2553 = vmatpush1.msra.mxu0 0.0
    %2554 = vmatprep.subr.mxu0 0.0
    %2555 = vmatpush1.msra.mxu0 0.0
    %2556 = vmatprep.subr.mxu0 0.0
    %2557 = vmatpush1.msra.mxu0 0.0
    %2558 = vmatprep.subr.mxu0 0.0
    %2559 = vmatpush1.msra.mxu0 0.0
    %2560 = vmatprep.subr.mxu0 0.0
    %2561 = vmatpush1.msra.mxu0 0.0
    %2562 = vmatprep.subr.mxu0 0.0
    %2563 = vmatpush1.msra.mxu0 0.0
    %2564 = vmatprep.subr.mxu0 0.0
    %2565 = vmatpush1.msra.mxu0 0.0
    %2566 = vmatprep.subr.mxu0 0.0
    %2567 = vmatpush1.msra.mxu0 0.0
    %2568 = vmatprep.mubr.f32.mxu0 0.0
    %2569 = vmatmul.mubr.f32.gmra.mrb[0].mxu0 %v2479
    %v2570 = vpop.f32.mrb[0].mxu0
    %v2571 = vadd.f32 %v2502, %v2570
    %v2572 = vpop.f32.mrb[0].mxu0
    %2573 = vmatprep.mubr.f32.mxu0 0.0
    %2574 = vmatmul.mubr.f32.gmra.mrb[0].mxu0 %v2480
    %v2575 = vpop.f32.mrb[0].mxu0
    %v2576 = vadd.f32 %v2502, %v2575
    %v2577 = vpop.f32.mrb[0].mxu0
    %2578 = vdwg.mxu0
    %v2579 = vadd.f32 %v1359, %v2571
    %v2580 = vadd.f32 %v1360, %v2576
    %s2581 = scalar_lea.vmem %s4, 2
    %v2582 = vld [vmem:[%s2581] sm:$0x3]
    %2583 = vadd.xlane.f32.xlu0 %v2579
    %v2584 = vpop.xlane.xlu0 %2583
    %2585 = vadd.xlane.f32.xlu0 %v2580
    %v2586 = vpop.xlane.xlu0 %2585
    %v2587 = vmul.f32 %v2584, %v131
    %v2588 = vmul.f32 %v2586, %v131
    %v2589 = vsub.f32 %v2579, %v2587
    %v2590 = vsub.f32 %v2580, %v2588
    %v2591 = vmul.f32 %v2589, %v2589
    %v2592 = vmul.f32 %v2590, %v2590
    %2593 = vadd.xlane.f32.xlu0 %v2591
    %v2594 = vpop.xlane.xlu0 %2593
    %2595 = vadd.xlane.f32.xlu0 %v2592
    %v2596 = vpop.xlane.xlu0 %2595
    %v2597 = vmul.f32 %v2594, %v131
    %v2598 = vmul.f32 %v2596, %v131
    %v2599 = vadd.f32 %v2597, 1e-05
    %v2600 = vadd.f32 %v2598, 1e-05
    %v2601 = vrsqrt.pop %v2599
    %v2602 = vrsqrt.pop %v2600
    %v2603 = vmul.f32 %v2589, %v2601
    %v2604 = vmul.f32 %v2590, %v2602
    %v2605 = vlaneseq
    %v2606 = vshrl.u32 %v2605, 7
    %v2607 = vsub.s32 0, %v2606
    %v2608 = vrot.slane %v2582, %v2607
    %v2609 = vmul.f32 %v2603, %v2608
    %v2610 = vmul.f32 %v2604, %v2608
    %v2611 = vlaneseq
    %v2612 = vshrl.u32 %v2611, 7
    %v2613 = vsub.s32 1, %v2612
    %v2614 = vrot.slane %v2582, %v2613
    %v2615 = vadd.f32 %v2609, %v2614
    %v2616 = vadd.f32 %v2610, %v2614
    %s2617 = scalar_lea.vmem [#allocation3], 384
    %v2618 = vld [vmem:[%s2617] sm:$0xff]
    %v2619 = vld [vmem:[%s2617 + $0x8] sm:$0xff]
    %v2620 = vld [vmem:[%s2617 + $0x10] sm:$0xff]
    %v2621 = vld [vmem:[%s2617 + $0x18] sm:$0xff]
    %v2622 = vld [vmem:[%s2617 + $0x20] sm:$0xff]
    %v2623 = vld [vmem:[%s2617 + $0x28] sm:$0xff]
    %v2624 = vld [vmem:[%s2617 + $0x30] sm:$0xff]
    %v2625 = vld [vmem:[%s2617 + $0x38] sm:$0xff]
    %v2626 = vld [vmem:[%s2617 + $0x40] sm:$0xff]
    %v2627 = vld [vmem:[%s2617 + $0x48] sm:$0xff]
    %v2628 = vld [vmem:[%s2617 + $0x50] sm:$0xff]
    %v2629 = vld [vmem:[%s2617 + $0x58] sm:$0xff]
    %v2630 = vld [vmem:[%s2617 + $0x60] sm:$0xff]
    %v2631 = vld [vmem:[%s2617 + $0x68] sm:$0xff]
    %v2632 = vld [vmem:[%s2617 + $0x70] sm:$0xff]
    %v2633 = vld [vmem:[%s2617 + $0x78] sm:$0xff]
    %v2634 = vld [vmem:[%s2617 + $0x80] sm:$0xff]
    %v2635 = vld [vmem:[%s2617 + $0x88] sm:$0xff]
    %v2636 = vld [vmem:[%s2617 + $0x90] sm:$0xff]
    %v2637 = vld [vmem:[%s2617 + $0x98] sm:$0xff]
    %v2638 = vld [vmem:[%s2617 + $0xa0] sm:$0xff]
    %v2639 = vld [vmem:[%s2617 + $0xa8] sm:$0xff]
    %v2640 = vld [vmem:[%s2617 + $0xb0] sm:$0xff]
    %v2641 = vld [vmem:[%s2617 + $0xb8] sm:$0xff]
    %v2642 = vld [vmem:[%s2617 + $0xc0] sm:$0xff]
    %v2643 = vld [vmem:[%s2617 + $0xc8] sm:$0xff]
    %v2644 = vld [vmem:[%s2617 + $0xd0] sm:$0xff]
    %v2645 = vld [vmem:[%s2617 + $0xd8] sm:$0xff]
    %v2646 = vld [vmem:[%s2617 + $0xe0] sm:$0xff]
    %v2647 = vld [vmem:[%s2617 + $0xe8] sm:$0xff]
    %v2648 = vld [vmem:[%s2617 + $0xf0] sm:$0xff]
    %v2649 = vld [vmem:[%s2617 + $0xf8] sm:$0xff]
    %v2650 = vld [vmem:[%s2617 + $0x100] sm:$0xff]
    %v2651 = vld [vmem:[%s2617 + $0x108] sm:$0xff]
    %v2652 = vld [vmem:[%s2617 + $0x110] sm:$0xff]
    %v2653 = vld [vmem:[%s2617 + $0x118] sm:$0xff]
    %v2654 = vld [vmem:[%s2617 + $0x120] sm:$0xff]
    %v2655 = vld [vmem:[%s2617 + $0x128] sm:$0xff]
    %v2656 = vld [vmem:[%s2617 + $0x130] sm:$0xff]
    %v2657 = vld [vmem:[%s2617 + $0x138] sm:$0xff]
    %v2658 = vld [vmem:[%s2617 + $0x140] sm:$0xff]
    %v2659 = vld [vmem:[%s2617 + $0x148] sm:$0xff]
    %v2660 = vld [vmem:[%s2617 + $0x150] sm:$0xff]
    %v2661 = vld [vmem:[%s2617 + $0x158] sm:$0xff]
    %v2662 = vld [vmem:[%s2617 + $0x160] sm:$0xff]
    %v2663 = vld [vmem:[%s2617 + $0x168] sm:$0xff]
    %v2664 = vld [vmem:[%s2617 + $0x170] sm:$0xff]
    %v2665 = vld [vmem:[%s2617 + $0x178] sm:$0xff]
    %s2666 = scalar_lea.vmem %s6, 3
    %v2667 = vld [vmem:[%s2666] sm:$0x7]
    %v2669 = vlaneseq
    %v2670 = vshrl.u32 %v2669, 7
    %v2671 = vsub.s32 0, %v2670
    %v2672 = vrot.slane %v2667, %v2671
    %v2673 = vlaneseq
    %v2674 = vshrl.u32 %v2673, 7
    %v2675 = vsub.s32 1, %v2674
    %v2676 = vrot.slane %v2667, %v2675
    %v2677 = vlaneseq
    %v2678 = vshrl.u32 %v2677, 7
    %v2679 = vsub.s32 2, %v2678
    %v2680 = vrot.slane %v2667, %v2679
    %2684 = vmatprep.subr.mxu0 %v2619
    %2685 = vmatpush1.msra.mxu0 %v2618
    %2686 = vmatprep.subr.mxu0 %v2622
    %2687 = vmatpush1.msra.mxu0 %v2621
    %2688 = vmatprep.subr.mxu0 %v2625
    %2689 = vmatpush1.msra.mxu0 %v2624
    %2690 = vmatprep.subr.mxu0 %v2628
    %2691 = vmatpush1.msra.mxu0 %v2627
    %2692 = vmatprep.subr.mxu0 %v2631
    %2693 = vmatpush1.msra.mxu0 %v2630
    %2694 = vmatprep.subr.mxu0 %v2634
    %2695 = vmatpush1.msra.mxu0 %v2633
    %2696 = vmatprep.subr.mxu0 %v2637
    %2697 = vmatpush1.msra.mxu0 %v2636
    %2698 = vmatprep.subr.mxu0 %v2640
    %2699 = vmatpush1.msra.mxu0 %v2639
    %2700 = vmatprep.subr.mxu0 %v2643
    %2701 = vmatpush1.msra.mxu0 %v2642
    %2702 = vmatprep.subr.mxu0 %v2646
    %2703 = vmatpush1.msra.mxu0 %v2645
    %2704 = vmatprep.subr.mxu0 %v2649
    %2705 = vmatpush1.msra.mxu0 %v2648
    %2706 = vmatprep.subr.mxu0 %v2652
    %2707 = vmatpush1.msra.mxu0 %v2651
    %2708 = vmatprep.subr.mxu0 %v2655
    %2709 = vmatpush1.msra.mxu0 %v2654
    %2710 = vmatprep.subr.mxu0 %v2658
    %2711 = vmatpush1.msra.mxu0 %v2657
    %2712 = vmatprep.subr.mxu0 %v2661
    %2713 = vmatpush1.msra.mxu0 %v2660
    %2714 = vmatprep.subr.mxu0 %v2664
    %2715 = vmatpush1.msra.mxu0 %v2663
    %2716 = vmatprep.subr.mxu0 0.0
    %2717 = vmatpush1.msra.mxu0 0.0
    %2718 = vmatprep.subr.mxu0 0.0
    %2719 = vmatpush1.msra.mxu0 0.0
    %2720 = vmatprep.subr.mxu0 0.0
    %2721 = vmatpush1.msra.mxu0 0.0
    %2722 = vmatprep.subr.mxu0 0.0
    %2723 = vmatpush1.msra.mxu0 0.0
    %2724 = vmatprep.subr.mxu0 0.0
    %2725 = vmatpush1.msra.mxu0 0.0
    %2726 = vmatprep.subr.mxu0 0.0
    %2727 = vmatpush1.msra.mxu0 0.0
    %2728 = vmatprep.subr.mxu0 0.0
    %2729 = vmatpush1.msra.mxu0 0.0
    %2730 = vmatprep.subr.mxu0 0.0
    %2731 = vmatpush1.msra.mxu0 0.0
    %2732 = vmatprep.subr.mxu0 0.0
    %2733 = vmatpush1.msra.mxu0 0.0
    %2734 = vmatprep.subr.mxu0 0.0
    %2735 = vmatpush1.msra.mxu0 0.0
    %2736 = vmatprep.subr.mxu0 0.0
    %2737 = vmatpush1.msra.mxu0 0.0
    %2738 = vmatprep.subr.mxu0 0.0
    %2739 = vmatpush1.msra.mxu0 0.0
    %2740 = vmatprep.subr.mxu0 0.0
    %2741 = vmatpush1.msra.mxu0 0.0
    %2742 = vmatprep.subr.mxu0 0.0
    %2743 = vmatpush1.msra.mxu0 0.0
    %2744 = vmatprep.subr.mxu0 0.0
    %2745 = vmatpush1.msra.mxu0 0.0
    %2746 = vmatprep.subr.mxu0 0.0
    %2747 = vmatpush1.msra.mxu0 0.0
    %2748 = vmatprep.mubr.f32.mxu0 0.0
    %2749 = vmatmul.mubr.f32.gmra.mrb[0].mxu0 %v2615
    %v2750 = vpop.f32.mrb[0].mxu0
    %v2751 = vadd.f32 %v2672, %v2750
    %v2752 = vpop.f32.mrb[0].mxu0
    %v2753 = vadd.f32 %v2676, %v2752
    %2754 = vmatprep.mubr.f32.mxu0 0.0
    %2755 = vmatmul.mubr.f32.gmra.mrb[0].mxu0 %v2616
    %v2756 = vpop.f32.mrb[0].mxu0
    %v2757 = vadd.f32 %v2672, %v2756
    %v2758 = vpop.f32.mrb[0].mxu0
    %v2759 = vadd.f32 %v2676, %v2758
    %2760 = vdwg.mxu0
    %2761 = vmatprep.subr.mxu0 0.0
    %2762 = vmatpush1.msra.mxu0 %v2620
    %2763 = vmatprep.subr.mxu0 0.0
    %2764 = vmatpush1.msra.mxu0 %v2623
    %2765 = vmatprep.subr.mxu0 0.0
    %2766 = vmatpush1.msra.mxu0 %v2626
    %2767 = vmatprep.subr.mxu0 0.0
    %2768 = vmatpush1.msra.mxu0 %v2629
    %2769 = vmatprep.subr.mxu0 0.0
    %2770 = vmatpush1.msra.mxu0 %v2632
    %2771 = vmatprep.subr.mxu0 0.0
    %2772 = vmatpush1.msra.mxu0 %v2635
    %2773 = vmatprep.subr.mxu0 0.0
    %2774 = vmatpush1.msra.mxu0 %v2638
    %2775 = vmatprep.subr.mxu0 0.0
    %2776 = vmatpush1.msra.mxu0 %v2641
    %2777 = vmatprep.subr.mxu0 0.0
    %2778 = vmatpush1.msra.mxu0 %v2644
    %2779 = vmatprep.subr.mxu0 0.0
    %2780 = vmatpush1.msra.mxu0 %v2647
    %2781 = vmatprep.subr.mxu0 0.0
    %2782 = vmatpush1.msra.mxu0 %v2650
    %2783 = vmatprep.subr.mxu0 0.0
    %2784 = vmatpush1.msra.mxu0 %v2653
    %2785 = vmatprep.subr.mxu0 0.0
    %2786 = vmatpush1.msra.mxu0 %v2656
    %2787 = vmatprep.subr.mxu0 0.0
    %2788 = vmatpush1.msra.mxu0 %v2659
    %2789 = vmatprep.subr.mxu0 0.0
    %2790 = vmatpush1.msra.mxu0 %v2662
    %2791 = vmatprep.subr.mxu0 0.0
    %2792 = vmatpush1.msra.mxu0 %v2665
    %2793 = vmatprep.subr.mxu0 0.0
    %2794 = vmatpush1.msra.mxu0 0.0
    %2795 = vmatprep.subr.mxu0 0.0
    %2796 = vmatpush1.msra.mxu0 0.0
    %2797 = vmatprep.subr.mxu0 0.0
    %2798 = vmatpush1.msra.mxu0 0.0
    %2799 = vmatprep.subr.mxu0 0.0
    %2800 = vmatpush1.msra.mxu0 0.0
    %2801 = vmatprep.subr.mxu0 0.0
    %2802 = vmatpush1.msra.mxu0 0.0
    %2803 = vmatprep.subr.mxu0 0.0
    %2804 = vmatpush1.msra.mxu0 0.0
    %2805 = vmatprep.subr.mxu0 0.0
    %2806 = vmatpush1.msra.mxu0 0.0
    %2807 = vmatprep.subr.mxu0 0.0
    %2808 = vmatpush1.msra.mxu0 0.0
    %2809 = vmatprep.subr.mxu0 0.0
    %2810 = vmatpush1.msra.mxu0 0.0
    %2811 = vmatprep.subr.mxu0 0.0
    %2812 = vmatpush1.msra.mxu0 0.0
    %2813 = vmatprep.subr.mxu0 0.0
    %2814 = vmatpush1.msra.mxu0 0.0
    %2815 = vmatprep.subr.mxu0 0.0
    %2816 = vmatpush1.msra.mxu0 0.0
    %2817 = vmatprep.subr.mxu0 0.0
    %2818 = vmatpush1.msra.mxu0 0.0
    %2819 = vmatprep.subr.mxu0 0.0
    %2820 = vmatpush1.msra.mxu0 0.0
    %2821 = vmatprep.subr.mxu0 0.0
    %2822 = vmatpush1.msra.mxu0 0.0
    %2823 = vmatprep.subr.mxu0 0.0
    %2824 = vmatpush1.msra.mxu0 0.0
    %2825 = vmatprep.mubr.f32.mxu0 0.0
    %2826 = vmatmul.mubr.f32.gmra.mrb[0].mxu0 %v2615
    %v2827 = vpop.f32.mrb[0].mxu0
    %v2828 = vadd.f32 %v2680, %v2827
    %v2829 = vpop.f32.mrb[0].mxu0
    %2830 = vmatprep.mubr.f32.mxu0 0.0
    %2831 = vmatmul.mubr.f32.gmra.mrb[0].mxu0 %v2616
    %v2832 = vpop.f32.mrb[0].mxu0
    %v2833 = vadd.f32 %v2680, %v2832
    %v2834 = vpop.f32.mrb[0].mxu0
    %2835 = vdwg.mxu0
    %v2837 = vsel %vm379, %v2751, 0
    %v2840 = vsel %vm379, %v2757, 0
    %v2843 = vsel %vm379, %v2753, 0
    %v2846 = vsel %vm379, %v2759, 0
    %2848 = vmatprep.subr.mxu0 0.0
    %2849 = vmatpush1.xpose.msra.mxu0 %v2843
    %2850 = vmatprep.subr.mxu0 0.0
    %2851 = vmatpush1.xpose.msra.mxu0 %v2846
    %2852 = vmatprep.subr.mxu0 0.0
    %2853 = vmatpush1.xpose.msra.mxu0 0.0
    %2854 = vmatprep.subr.mxu0 0.0
    %2855 = vmatpush1.xpose.msra.mxu0 0.0
    %2856 = vmatprep.subr.mxu0 0.0
    %2857 = vmatpush1.xpose.msra.mxu0 0.0
    %2858 = vmatprep.subr.mxu0 0.0
    %2859 = vmatpush1.xpose.msra.mxu0 0.0
    %2860 = vmatprep.subr.mxu0 0.0
    %2861 = vmatpush1.xpose.msra.mxu0 0.0
    %2862 = vmatprep.subr.mxu0 0.0
    %2863 = vmatpush1.xpose.msra.mxu0 0.0
    %2864 = vmatprep.subr.mxu0 0.0
    %2865 = vmatpush1.xpose.msra.mxu0 0.0
    %2866 = vmatprep.subr.mxu0 0.0
    %2867 = vmatpush1.xpose.msra.mxu0 0.0
    %2868 = vmatprep.subr.mxu0 0.0
    %2869 = vmatpush1.xpose.msra.mxu0 0.0
    %2870 = vmatprep.subr.mxu0 0.0
    %2871 = vmatpush1.xpose.msra.mxu0 0.0
    %2872 = vmatprep.subr.mxu0 0.0
    %2873 = vmatpush1.xpose.msra.mxu0 0.0
    %2874 = vmatprep.subr.mxu0 0.0
    %2875 = vmatpush1.xpose.msra.mxu0 0.0
    %2876 = vmatprep.subr.mxu0 0.0
    %2877 = vmatpush1.xpose.msra.mxu0 0.0
    %2878 = vmatprep.subr.mxu0 0.0
    %2879 = vmatpush1.xpose.msra.mxu0 0.0
    %2880 = vmatprep.subr.mxu0 0.0
    %2881 = vmatpush1.xpose.msra.mxu0 0.0
    %2882 = vmatprep.subr.mxu0 0.0
    %2883 = vmatpush1.xpose.msra.mxu0 0.0
    %2884 = vmatprep.subr.mxu0 0.0
    %2885 = vmatpush1.xpose.msra.mxu0 0.0
    %2886 = vmatprep.subr.mxu0 0.0
    %2887 = vmatpush1.xpose.msra.mxu0 0.0
    %2888 = vmatprep.subr.mxu0 0.0
    %2889 = vmatpush1.xpose.msra.mxu0 0.0
    %2890 = vmatprep.subr.mxu0 0.0
    %2891 = vmatpush1.xpose.msra.mxu0 0.0
    %2892 = vmatprep.subr.mxu0 0.0
    %2893 = vmatpush1.xpose.msra.mxu0 0.0
    %2894 = vmatprep.subr.mxu0 0.0
    %2895 = vmatpush1.xpose.msra.mxu0 0.0
    %2896 = vmatprep.subr.mxu0 0.0
    %2897 = vmatpush1.xpose.msra.mxu0 0.0
    %2898 = vmatprep.subr.mxu0 0.0
    %2899 = vmatpush1.xpose.msra.mxu0 0.0
    %2900 = vmatprep.subr.mxu0 0.0
    %2901 = vmatpush1.xpose.msra.mxu0 0.0
    %2902 = vmatprep.subr.mxu0 0.0
    %2903 = vmatpush1.xpose.msra.mxu0 0.0
    %2904 = vmatprep.subr.mxu0 0.0
    %2905 = vmatpush1.xpose.msra.mxu0 0.0
    %2906 = vmatprep.subr.mxu0 0.0
    %2907 = vmatpush1.xpose.msra.mxu0 0.0
    %2908 = vmatprep.subr.mxu0 0.0
    %2909 = vmatpush1.xpose.msra.mxu0 0.0
    %2910 = vmatprep.subr.mxu0 0.0
    %2911 = vmatpush1.xpose.msra.mxu0 0.0
    %2912 = vmatprep.mubr.f32.mxu0 0.0
    %2913 = vmatmul.mubr.f32.gmra.mrb[0].mxu0 %v2837
    %v2914 = vpop.f32.mrb[0].mxu0
    %v2915 = vadd.f32 0.0, %v2914
    %v2916 = vpop.f32.mrb[0].mxu0
    %2917 = vmatprep.mubr.f32.mxu0 0.0
    %2918 = vmatmul.mubr.f32.gmra.mrb[0].mxu0 %v2840
    %v2919 = vpop.f32.mrb[0].mxu0
    %v2920 = vadd.f32 0.0, %v2919
    %v2921 = vpop.f32.mrb[0].mxu0
    %2922 = vdwg.mxu0
    %v2923 = vmul.f32 %v2915, 0.17677669
    %v2924 = vmul.f32 %v2920, 0.17677669
    %v2925 = vadd.f32 %v2923, %v122
    %v2926 = vadd.f32 %v2924, %v123
    %v2927 = vsel %vm471, %v2925, -inf
    %2928 = vmax.xlane.f32.xlu0 %v2927
    %v2929 = vpop.xlane.xlu0 %2928
    %v2930 = vsel %vm471, %v2926, -inf
    %2931 = vmax.xlane.f32.xlu0 %v2930
    %v2932 = vpop.xlane.xlu0 %2931
    %v2933 = vsub.f32 %v2925, %v2929
    %v2934 = vsub.f32 %v2926, %v2932
    %v2935 = vmul.f32 %v2933, 1.442695
    %v2936 = vpow.pop %v2935
    %v2937 = vmul.f32 %v2934, 1.442695
    %v2938 = vpow.pop %v2937
    %v2939 = vsel %vm471, %v2936, 0.0
    %2940 = vadd.xlane.f32.xlu0 %v2939
    %v2941 = vpop.xlane.xlu0 %2940
    %v2942 = vsel %vm471, %v2938, 0.0
    %2943 = vadd.xlane.f32.xlu0 %v2942
    %v2944 = vpop.xlane.xlu0 %2943
    %v2945 = vrcp.pop %v2941
    %v2946 = vrcp.pop %v2944
    %v2947 = vmul.f32 %v2936, %v2945
    %v2948 = vmul.f32 %v2938, %v2946
    %v2950 = vsel %vm471, %v2947, 0
    %v2953 = vsel %vm471, %v2948, 0
    %2955 = vmatprep.subr.mxu0 0.0
    %2956 = vmatpush1.msra.mxu0 %v2828
    %2957 = vmatprep.subr.mxu0 0.0
    %2958 = vmatpush1.msra.mxu0 %v2833
    %2959 = vmatprep.subr.mxu0 0.0
    %2960 = vmatpush1.msra.mxu0 0.0
    %2961 = vmatprep.subr.mxu0 0.0
    %2962 = vmatpush1.msra.mxu0 0.0
    %2963 = vmatprep.subr.mxu0 0.0
    %2964 = vmatpush1.msra.mxu0 0.0
    %2965 = vmatprep.subr.mxu0 0.0
    %2966 = vmatpush1.msra.mxu0 0.0
    %2967 = vmatprep.subr.mxu0 0.0
    %2968 = vmatpush1.msra.mxu0 0.0
    %2969 = vmatprep.subr.mxu0 0.0
    %2970 = vmatpush1.msra.mxu0 0.0
    %2971 = vmatprep.subr.mxu0 0.0
    %2972 = vmatpush1.msra.mxu0 0.0
    %2973 = vmatprep.subr.mxu0 0.0
    %2974 = vmatpush1.msra.mxu0 0.0
    %2975 = vmatprep.subr.mxu0 0.0
    %2976 = vmatpush1.msra.mxu0 0.0
    %2977 = vmatprep.subr.mxu0 0.0
    %2978 = vmatpush1.msra.mxu0 0.0
    %2979 = vmatprep.subr.mxu0 0.0
    %2980 = vmatpush1.msra.mxu0 0.0
    %2981 = vmatprep.subr.mxu0 0.0
    %2982 = vmatpush1.msra.mxu0 0.0
    %2983 = vmatprep.subr.mxu0 0.0
    %2984 = vmatpush1.msra.mxu0 0.0
    %2985 = vmatprep.subr.mxu0 0.0
    %2986 = vmatpush1.msra.mxu0 0.0
    %2987 = vmatprep.subr.mxu0 0.0
    %2988 = vmatpush1.msra.mxu0 0.0
    %2989 = vmatprep.subr.mxu0 0.0
    %2990 = vmatpush1.msra.mxu0 0.0
    %2991 = vmatprep.subr.mxu0 0.0
    %2992 = vmatpush1.msra.mxu0 0.0
    %2993 = vmatprep.subr.mxu0 0.0
    %2994 = vmatpush1.msra.mxu0 0.0
    %2995 = vmatprep.subr.mxu0 0.0
    %2996 = vmatpush1.msra.mxu0 0.0
    %2997 = vmatprep.subr.mxu0 0.0
    %2998 = vmatpush1.msra.mxu0 0.0
    %2999 = vmatprep.subr.mxu0 0.0
    %3000 = vmatpush1.msra.mxu0 0.0
    %3001 = vmatprep.subr.mxu0 0.0
    %3002 = vmatpush1.msra.mxu0 0.0
    %3003 = vmatprep.subr.mxu0 0.0
    %3004 = vmatpush1.msra.mxu0 0.0
    %3005 = vmatprep.subr.mxu0 0.0
    %3006 = vmatpush1.msra.mxu0 0.0
    %3007 = vmatprep.subr.mxu0 0.0
    %3008 = vmatpush1.msra.mxu0 0.0
    %3009 = vmatprep.subr.mxu0 0.0
    %3010 = vmatpush1.msra.mxu0 0.0
    %3011 = vmatprep.subr.mxu0 0.0
    %3012 = vmatpush1.msra.mxu0 0.0
    %3013 = vmatprep.subr.mxu0 0.0
    %3014 = vmatpush1.msra.mxu0 0.0
    %3015 = vmatprep.subr.mxu0 0.0
    %3016 = vmatpush1.msra.mxu0 0.0
    %3017 = vmatprep.subr.mxu0 0.0
    %3018 = vmatpush1.msra.mxu0 0.0
    %3019 = vmatprep.mubr.f32.mxu0 0.0
    %3020 = vmatmul.mubr.f32.gmra.mrb[0].mxu0 %v2950
    %v3021 = vpop.f32.mrb[0].mxu0
    %v3022 = vadd.f32 0.0, %v3021
    %v3023 = vpop.f32.mrb[0].mxu0
    %3024 = vmatprep.mubr.f32.mxu0 0.0
    %3025 = vmatmul.mubr.f32.gmra.mrb[0].mxu0 %v2953
    %v3026 = vpop.f32.mrb[0].mxu0
    %v3027 = vadd.f32 0.0, %v3026
    %v3028 = vpop.f32.mrb[0].mxu0
    %3029 = vdwg.mxu0
    %3030 = vst.msk [vmem:[#allocation2] sm:$0xff] %vm379, %v3022
    %3031 = vst.msk [vmem:[#allocation2 + $0x8] sm:$0xff] %vm379, %v3027
    %3032 = vrot.lane.b32.xlu0 %v2751, 96
    %v3033 = vpop.permute.xlu0 %3032
    %3034 = vrot.lane.b32.xlu0 %v2757, 96
    %v3035 = vpop.permute.xlu0 %3034
    %3036 = vrot.lane.b32.xlu0 %v2753, 96
    %v3037 = vpop.permute.xlu0 %3036
    %3038 = vrot.lane.b32.xlu0 %v2759, 96
    %v3039 = vpop.permute.xlu0 %3038
    %v3040 = vsel %vm379, %v3033, 0
    %v3042 = vsel %vm379, %v3035, 0
    %v3044 = vsel %vm379, %v3037, 0
    %v3046 = vsel %vm379, %v3039, 0
    %3048 = vmatprep.subr.mxu0 0.0
    %3049 = vmatpush1.xpose.msra.mxu0 %v3044
    %3050 = vmatprep.subr.mxu0 0.0
    %3051 = vmatpush1.xpose.msra.mxu0 %v3046
    %3052 = vmatprep.subr.mxu0 0.0
    %3053 = vmatpush1.xpose.msra.mxu0 0.0
    %3054 = vmatprep.subr.mxu0 0.0
    %3055 = vmatpush1.xpose.msra.mxu0 0.0
    %3056 = vmatprep.subr.mxu0 0.0
    %3057 = vmatpush1.xpose.msra.mxu0 0.0
    %3058 = vmatprep.subr.mxu0 0.0
    %3059 = vmatpush1.xpose.msra.mxu0 0.0
    %3060 = vmatprep.subr.mxu0 0.0
    %3061 = vmatpush1.xpose.msra.mxu0 0.0
    %3062 = vmatprep.subr.mxu0 0.0
    %3063 = vmatpush1.xpose.msra.mxu0 0.0
    %3064 = vmatprep.subr.mxu0 0.0
    %3065 = vmatpush1.xpose.msra.mxu0 0.0
    %3066 = vmatprep.subr.mxu0 0.0
    %3067 = vmatpush1.xpose.msra.mxu0 0.0
    %3068 = vmatprep.subr.mxu0 0.0
    %3069 = vmatpush1.xpose.msra.mxu0 0.0
    %3070 = vmatprep.subr.mxu0 0.0
    %3071 = vmatpush1.xpose.msra.mxu0 0.0
    %3072 = vmatprep.subr.mxu0 0.0
    %3073 = vmatpush1.xpose.msra.mxu0 0.0
    %3074 = vmatprep.subr.mxu0 0.0
    %3075 = vmatpush1.xpose.msra.mxu0 0.0
    %3076 = vmatprep.subr.mxu0 0.0
    %3077 = vmatpush1.xpose.msra.mxu0 0.0
    %3078 = vmatprep.subr.mxu0 0.0
    %3079 = vmatpush1.xpose.msra.mxu0 0.0
    %3080 = vmatprep.subr.mxu0 0.0
    %3081 = vmatpush1.xpose.msra.mxu0 0.0
    %3082 = vmatprep.subr.mxu0 0.0
    %3083 = vmatpush1.xpose.msra.mxu0 0.0
    %3084 = vmatprep.subr.mxu0 0.0
    %3085 = vmatpush1.xpose.msra.mxu0 0.0
    %3086 = vmatprep.subr.mxu0 0.0
    %3087 = vmatpush1.xpose.msra.mxu0 0.0
    %3088 = vmatprep.subr.mxu0 0.0
    %3089 = vmatpush1.xpose.msra.mxu0 0.0
    %3090 = vmatprep.subr.mxu0 0.0
    %3091 = vmatpush1.xpose.msra.mxu0 0.0
    %3092 = vmatprep.subr.mxu0 0.0
    %3093 = vmatpush1.xpose.msra.mxu0 0.0
    %3094 = vmatprep.subr.mxu0 0.0
    %3095 = vmatpush1.xpose.msra.mxu0 0.0
    %3096 = vmatprep.subr.mxu0 0.0
    %3097 = vmatpush1.xpose.msra.mxu0 0.0
    %3098 = vmatprep.subr.mxu0 0.0
    %3099 = vmatpush1.xpose.msra.mxu0 0.0
    %3100 = vmatprep.subr.mxu0 0.0
    %3101 = vmatpush1.xpose.msra.mxu0 0.0
    %3102 = vmatprep.subr.mxu0 0.0
    %3103 = vmatpush1.xpose.msra.mxu0 0.0
    %3104 = vmatprep.subr.mxu0 0.0
    %3105 = vmatpush1.xpose.msra.mxu0 0.0
    %3106 = vmatprep.subr.mxu0 0.0
    %3107 = vmatpush1.xpose.msra.mxu0 0.0
    %3108 = vmatprep.subr.mxu0 0.0
    %3109 = vmatpush1.xpose.msra.mxu0 0.0
    %3110 = vmatprep.subr.mxu0 0.0
    %3111 = vmatpush1.xpose.msra.mxu0 0.0
    %3112 = vmatprep.mubr.f32.mxu0 0.0
    %3113 = vmatmul.mubr.f32.gmra.mrb[0].mxu0 %v3040
    %v3114 = vpop.f32.mrb[0].mxu0
    %v3115 = vadd.f32 0.0, %v3114
    %v3116 = vpop.f32.mrb[0].mxu0
    %3117 = vmatprep.mubr.f32.mxu0 0.0
    %3118 = vmatmul.mubr.f32.gmra.mrb[0].mxu0 %v3042
    %v3119 = vpop.f32.mrb[0].mxu0
    %v3120 = vadd.f32 0.0, %v3119
    %v3121 = vpop.f32.mrb[0].mxu0
    %3122 = vdwg.mxu0
    %v3123 = vmul.f32 %v3115, 0.17677669
    %v3124 = vmul.f32 %v3120, 0.17677669
    %v3125 = vadd.f32 %v3123, %v122
    %v3126 = vadd.f32 %v3124, %v123
    %v3127 = vsel %vm471, %v3125, -inf
    %3128 = vmax.xlane.f32.xlu0 %v3127
    %v3129 = vpop.xlane.xlu0 %3128
    %v3130 = vsel %vm471, %v3126, -inf
    %3131 = vmax.xlane.f32.xlu0 %v3130
    %v3132 = vpop.xlane.xlu0 %3131
    %v3133 = vsub.f32 %v3125, %v3129
    %v3134 = vsub.f32 %v3126, %v3132
    %v3135 = vmul.f32 %v3133, 1.442695
    %v3136 = vpow.pop %v3135
    %v3137 = vmul.f32 %v3134, 1.442695
    %v3138 = vpow.pop %v3137
    %v3139 = vsel %vm471, %v3136, 0.0
    %3140 = vadd.xlane.f32.xlu0 %v3139
    %v3141 = vpop.xlane.xlu0 %3140
    %v3142 = vsel %vm471, %v3138, 0.0
    %3143 = vadd.xlane.f32.xlu0 %v3142
    %v3144 = vpop.xlane.xlu0 %3143
    %v3145 = vrcp.pop %v3141
    %v3146 = vrcp.pop %v3144
    %v3147 = vmul.f32 %v3136, %v3145
    %v3148 = vmul.f32 %v3138, %v3146
    %3151 = vrot.lane.b32.xlu0 %v2828, 96
    %v3152 = vpop.permute.xlu0 %3151
    %3153 = vrot.lane.b32.xlu0 %v2833, 96
    %v3154 = vpop.permute.xlu0 %3153
    %v3158 = vsel %vm471, %v3147, 0
    %v3161 = vsel %vm471, %v3148, 0
    %3163 = vmatprep.subr.mxu0 0.0
    %3164 = vmatpush1.msra.mxu0 %v3152
    %3165 = vmatprep.subr.mxu0 0.0
    %3166 = vmatpush1.msra.mxu0 %v3154
    %3167 = vmatprep.subr.mxu0 0.0
    %3168 = vmatpush1.msra.mxu0 0.0
    %3169 = vmatprep.subr.mxu0 0.0
    %3170 = vmatpush1.msra.mxu0 0.0
    %3171 = vmatprep.subr.mxu0 0.0
    %3172 = vmatpush1.msra.mxu0 0.0
    %3173 = vmatprep.subr.mxu0 0.0
    %3174 = vmatpush1.msra.mxu0 0.0
    %3175 = vmatprep.subr.mxu0 0.0
    %3176 = vmatpush1.msra.mxu0 0.0
    %3177 = vmatprep.subr.mxu0 0.0
    %3178 = vmatpush1.msra.mxu0 0.0
    %3179 = vmatprep.subr.mxu0 0.0
    %3180 = vmatpush1.msra.mxu0 0.0
    %3181 = vmatprep.subr.mxu0 0.0
    %3182 = vmatpush1.msra.mxu0 0.0
    %3183 = vmatprep.subr.mxu0 0.0
    %3184 = vmatpush1.msra.mxu0 0.0
    %3185 = vmatprep.subr.mxu0 0.0
    %3186 = vmatpush1.msra.mxu0 0.0
    %3187 = vmatprep.subr.mxu0 0.0
    %3188 = vmatpush1.msra.mxu0 0.0
    %3189 = vmatprep.subr.mxu0 0.0
    %3190 = vmatpush1.msra.mxu0 0.0
    %3191 = vmatprep.subr.mxu0 0.0
    %3192 = vmatpush1.msra.mxu0 0.0
    %3193 = vmatprep.subr.mxu0 0.0
    %3194 = vmatpush1.msra.mxu0 0.0
    %3195 = vmatprep.subr.mxu0 0.0
    %3196 = vmatpush1.msra.mxu0 0.0
    %3197 = vmatprep.subr.mxu0 0.0
    %3198 = vmatpush1.msra.mxu0 0.0
    %3199 = vmatprep.subr.mxu0 0.0
    %3200 = vmatpush1.msra.mxu0 0.0
    %3201 = vmatprep.subr.mxu0 0.0
    %3202 = vmatpush1.msra.mxu0 0.0
    %3203 = vmatprep.subr.mxu0 0.0
    %3204 = vmatpush1.msra.mxu0 0.0
    %3205 = vmatprep.subr.mxu0 0.0
    %3206 = vmatpush1.msra.mxu0 0.0
    %3207 = vmatprep.subr.mxu0 0.0
    %3208 = vmatpush1.msra.mxu0 0.0
    %3209 = vmatprep.subr.mxu0 0.0
    %3210 = vmatpush1.msra.mxu0 0.0
    %3211 = vmatprep.subr.mxu0 0.0
    %3212 = vmatpush1.msra.mxu0 0.0
    %3213 = vmatprep.subr.mxu0 0.0
    %3214 = vmatpush1.msra.mxu0 0.0
    %3215 = vmatprep.subr.mxu0 0.0
    %3216 = vmatpush1.msra.mxu0 0.0
    %3217 = vmatprep.subr.mxu0 0.0
    %3218 = vmatpush1.msra.mxu0 0.0
    %3219 = vmatprep.subr.mxu0 0.0
    %3220 = vmatpush1.msra.mxu0 0.0
    %3221 = vmatprep.subr.mxu0 0.0
    %3222 = vmatpush1.msra.mxu0 0.0
    %3223 = vmatprep.subr.mxu0 0.0
    %3224 = vmatpush1.msra.mxu0 0.0
    %3225 = vmatprep.subr.mxu0 0.0
    %3226 = vmatpush1.msra.mxu0 0.0
    %3227 = vmatprep.mubr.f32.mxu0 0.0
    %3228 = vmatmul.mubr.f32.gmra.mrb[0].mxu0 %v3158
    %v3229 = vpop.f32.mrb[0].mxu0
    %v3230 = vadd.f32 0.0, %v3229
    %v3231 = vpop.f32.mrb[0].mxu0
    %3232 = vmatprep.mubr.f32.mxu0 0.0
    %3233 = vmatmul.mubr.f32.gmra.mrb[0].mxu0 %v3161
    %v3234 = vpop.f32.mrb[0].mxu0
    %v3235 = vadd.f32 0.0, %v3234
    %v3236 = vpop.f32.mrb[0].mxu0
    %3237 = vdwg.mxu0
    %3240 = vrot.lane.b32.xlu0 %v3230, 32
    %v3241 = vpop.permute.xlu0 %3240
    %3242 = vrot.lane.b32.xlu0 %v3235, 32
    %v3243 = vpop.permute.xlu0 %3242
    %3246 = vst.msk [vmem:[#allocation2] sm:$0xff] %vm791, %v3241
    %3247 = vst.msk [vmem:[#allocation2 + $0x8] sm:$0xff] %vm791, %v3243
    %3248 = vrot.lane.b32.xlu0 %v2751, 64
    %v3249 = vpop.permute.xlu0 %3248
    %3250 = vrot.lane.b32.xlu0 %v2757, 64
    %v3251 = vpop.permute.xlu0 %3250
    %3252 = vrot.lane.b32.xlu0 %v2753, 64
    %v3253 = vpop.permute.xlu0 %3252
    %3254 = vrot.lane.b32.xlu0 %v2759, 64
    %v3255 = vpop.permute.xlu0 %3254
    %v3256 = vsel %vm379, %v3249, 0
    %v3258 = vsel %vm379, %v3251, 0
    %v3260 = vsel %vm379, %v3253, 0
    %v3262 = vsel %vm379, %v3255, 0
    %3264 = vmatprep.subr.mxu0 0.0
    %3265 = vmatpush1.xpose.msra.mxu0 %v3260
    %3266 = vmatprep.subr.mxu0 0.0
    %3267 = vmatpush1.xpose.msra.mxu0 %v3262
    %3268 = vmatprep.subr.mxu0 0.0
    %3269 = vmatpush1.xpose.msra.mxu0 0.0
    %3270 = vmatprep.subr.mxu0 0.0
    %3271 = vmatpush1.xpose.msra.mxu0 0.0
    %3272 = vmatprep.subr.mxu0 0.0
    %3273 = vmatpush1.xpose.msra.mxu0 0.0
    %3274 = vmatprep.subr.mxu0 0.0
    %3275 = vmatpush1.xpose.msra.mxu0 0.0
    %3276 = vmatprep.subr.mxu0 0.0
    %3277 = vmatpush1.xpose.msra.mxu0 0.0
    %3278 = vmatprep.subr.mxu0 0.0
    %3279 = vmatpush1.xpose.msra.mxu0 0.0
    %3280 = vmatprep.subr.mxu0 0.0
    %3281 = vmatpush1.xpose.msra.mxu0 0.0
    %3282 = vmatprep.subr.mxu0 0.0
    %3283 = vmatpush1.xpose.msra.mxu0 0.0
    %3284 = vmatprep.subr.mxu0 0.0
    %3285 = vmatpush1.xpose.msra.mxu0 0.0
    %3286 = vmatprep.subr.mxu0 0.0
    %3287 = vmatpush1.xpose.msra.mxu0 0.0
    %3288 = vmatprep.subr.mxu0 0.0
    %3289 = vmatpush1.xpose.msra.mxu0 0.0
    %3290 = vmatprep.subr.mxu0 0.0
    %3291 = vmatpush1.xpose.msra.mxu0 0.0
    %3292 = vmatprep.subr.mxu0 0.0
    %3293 = vmatpush1.xpose.msra.mxu0 0.0
    %3294 = vmatprep.subr.mxu0 0.0
    %3295 = vmatpush1.xpose.msra.mxu0 0.0
    %3296 = vmatprep.subr.mxu0 0.0
    %3297 = vmatpush1.xpose.msra.mxu0 0.0
    %3298 = vmatprep.subr.mxu0 0.0
    %3299 = vmatpush1.xpose.msra.mxu0 0.0
    %3300 = vmatprep.subr.mxu0 0.0
    %3301 = vmatpush1.xpose.msra.mxu0 0.0
    %3302 = vmatprep.subr.mxu0 0.0
    %3303 = vmatpush1.xpose.msra.mxu0 0.0
    %3304 = vmatprep.subr.mxu0 0.0
    %3305 = vmatpush1.xpose.msra.mxu0 0.0
    %3306 = vmatprep.subr.mxu0 0.0
    %3307 = vmatpush1.xpose.msra.mxu0 0.0
    %3308 = vmatprep.subr.mxu0 0.0
    %3309 = vmatpush1.xpose.msra.mxu0 0.0
    %3310 = vmatprep.subr.mxu0 0.0
    %3311 = vmatpush1.xpose.msra.mxu0 0.0
    %3312 = vmatprep.subr.mxu0 0.0
    %3313 = vmatpush1.xpose.msra.mxu0 0.0
    %3314 = vmatprep.subr.mxu0 0.0
    %3315 = vmatpush1.xpose.msra.mxu0 0.0
    %3316 = vmatprep.subr.mxu0 0.0
    %3317 = vmatpush1.xpose.msra.mxu0 0.0
    %3318 = vmatprep.subr.mxu0 0.0
    %3319 = vmatpush1.xpose.msra.mxu0 0.0
    %3320 = vmatprep.subr.mxu0 0.0
    %3321 = vmatpush1.xpose.msra.mxu0 0.0
    %3322 = vmatprep.subr.mxu0 0.0
    %3323 = vmatpush1.xpose.msra.mxu0 0.0
    %3324 = vmatprep.subr.mxu0 0.0
    %3325 = vmatpush1.xpose.msra.mxu0 0.0
    %3326 = vmatprep.subr.mxu0 0.0
    %3327 = vmatpush1.xpose.msra.mxu0 0.0
    %3328 = vmatprep.mubr.f32.mxu0 0.0
    %3329 = vmatmul.mubr.f32.gmra.mrb[0].mxu0 %v3256
    %v3330 = vpop.f32.mrb[0].mxu0
    %v3331 = vadd.f32 0.0, %v3330
    %v3332 = vpop.f32.mrb[0].mxu0
    %3333 = vmatprep.mubr.f32.mxu0 0.0
    %3334 = vmatmul.mubr.f32.gmra.mrb[0].mxu0 %v3258
    %v3335 = vpop.f32.mrb[0].mxu0
    %v3336 = vadd.f32 0.0, %v3335
    %v3337 = vpop.f32.mrb[0].mxu0
    %3338 = vdwg.mxu0
    %v3339 = vmul.f32 %v3331, 0.17677669
    %v3340 = vmul.f32 %v3336, 0.17677669
    %v3341 = vadd.f32 %v3339, %v122
    %v3342 = vadd.f32 %v3340, %v123
    %v3343 = vsel %vm471, %v3341, -inf
    %3344 = vmax.xlane.f32.xlu0 %v3343
    %v3345 = vpop.xlane.xlu0 %3344
    %v3346 = vsel %vm471, %v3342, -inf
    %3347 = vmax.xlane.f32.xlu0 %v3346
    %v3348 = vpop.xlane.xlu0 %3347
    %v3349 = vsub.f32 %v3341, %v3345
    %v3350 = vsub.f32 %v3342, %v3348
    %v3351 = vmul.f32 %v3349, 1.442695
    %v3352 = vpow.pop %v3351
    %v3353 = vmul.f32 %v3350, 1.442695
    %v3354 = vpow.pop %v3353
    %v3355 = vsel %vm471, %v3352, 0.0
    %3356 = vadd.xlane.f32.xlu0 %v3355
    %v3357 = vpop.xlane.xlu0 %3356
    %v3358 = vsel %vm471, %v3354, 0.0
    %3359 = vadd.xlane.f32.xlu0 %v3358
    %v3360 = vpop.xlane.xlu0 %3359
    %v3361 = vrcp.pop %v3357
    %v3362 = vrcp.pop %v3360
    %v3363 = vmul.f32 %v3352, %v3361
    %v3364 = vmul.f32 %v3354, %v3362
    %3365 = vrot.lane.b32.xlu0 %v2828, 64
    %v3366 = vpop.permute.xlu0 %3365
    %3367 = vrot.lane.b32.xlu0 %v2833, 64
    %v3368 = vpop.permute.xlu0 %3367
    %v3372 = vsel %vm471, %v3363, 0
    %v3375 = vsel %vm471, %v3364, 0
    %3377 = vmatprep.subr.mxu0 0.0
    %3378 = vmatpush1.msra.mxu0 %v3366
    %3379 = vmatprep.subr.mxu0 0.0
    %3380 = vmatpush1.msra.mxu0 %v3368
    %3381 = vmatprep.subr.mxu0 0.0
    %3382 = vmatpush1.msra.mxu0 0.0
    %3383 = vmatprep.subr.mxu0 0.0
    %3384 = vmatpush1.msra.mxu0 0.0
    %3385 = vmatprep.subr.mxu0 0.0
    %3386 = vmatpush1.msra.mxu0 0.0
    %3387 = vmatprep.subr.mxu0 0.0
    %3388 = vmatpush1.msra.mxu0 0.0
    %3389 = vmatprep.subr.mxu0 0.0
    %3390 = vmatpush1.msra.mxu0 0.0
    %3391 = vmatprep.subr.mxu0 0.0
    %3392 = vmatpush1.msra.mxu0 0.0
    %3393 = vmatprep.subr.mxu0 0.0
    %3394 = vmatpush1.msra.mxu0 0.0
    %3395 = vmatprep.subr.mxu0 0.0
    %3396 = vmatpush1.msra.mxu0 0.0
    %3397 = vmatprep.subr.mxu0 0.0
    %3398 = vmatpush1.msra.mxu0 0.0
    %3399 = vmatprep.subr.mxu0 0.0
    %3400 = vmatpush1.msra.mxu0 0.0
    %3401 = vmatprep.subr.mxu0 0.0
    %3402 = vmatpush1.msra.mxu0 0.0
    %3403 = vmatprep.subr.mxu0 0.0
    %3404 = vmatpush1.msra.mxu0 0.0
    %3405 = vmatprep.subr.mxu0 0.0
    %3406 = vmatpush1.msra.mxu0 0.0
    %3407 = vmatprep.subr.mxu0 0.0
    %3408 = vmatpush1.msra.mxu0 0.0
    %3409 = vmatprep.subr.mxu0 0.0
    %3410 = vmatpush1.msra.mxu0 0.0
    %3411 = vmatprep.subr.mxu0 0.0
    %3412 = vmatpush1.msra.mxu0 0.0
    %3413 = vmatprep.subr.mxu0 0.0
    %3414 = vmatpush1.msra.mxu0 0.0
    %3415 = vmatprep.subr.mxu0 0.0
    %3416 = vmatpush1.msra.mxu0 0.0
    %3417 = vmatprep.subr.mxu0 0.0
    %3418 = vmatpush1.msra.mxu0 0.0
    %3419 = vmatprep.subr.mxu0 0.0
    %3420 = vmatpush1.msra.mxu0 0.0
    %3421 = vmatprep.subr.mxu0 0.0
    %3422 = vmatpush1.msra.mxu0 0.0
    %3423 = vmatprep.subr.mxu0 0.0
    %3424 = vmatpush1.msra.mxu0 0.0
    %3425 = vmatprep.subr.mxu0 0.0
    %3426 = vmatpush1.msra.mxu0 0.0
    %3427 = vmatprep.subr.mxu0 0.0
    %3428 = vmatpush1.msra.mxu0 0.0
    %3429 = vmatprep.subr.mxu0 0.0
    %3430 = vmatpush1.msra.mxu0 0.0
    %3431 = vmatprep.subr.mxu0 0.0
    %3432 = vmatpush1.msra.mxu0 0.0
    %3433 = vmatprep.subr.mxu0 0.0
    %3434 = vmatpush1.msra.mxu0 0.0
    %3435 = vmatprep.subr.mxu0 0.0
    %3436 = vmatpush1.msra.mxu0 0.0
    %3437 = vmatprep.subr.mxu0 0.0
    %3438 = vmatpush1.msra.mxu0 0.0
    %3439 = vmatprep.subr.mxu0 0.0
    %3440 = vmatpush1.msra.mxu0 0.0
    %3441 = vmatprep.mubr.f32.mxu0 0.0
    %3442 = vmatmul.mubr.f32.gmra.mrb[0].mxu0 %v3372
    %v3443 = vpop.f32.mrb[0].mxu0
    %v3444 = vadd.f32 0.0, %v3443
    %v3445 = vpop.f32.mrb[0].mxu0
    %3446 = vmatprep.mubr.f32.mxu0 0.0
    %3447 = vmatmul.mubr.f32.gmra.mrb[0].mxu0 %v3375
    %v3448 = vpop.f32.mrb[0].mxu0
    %v3449 = vadd.f32 0.0, %v3448
    %v3450 = vpop.f32.mrb[0].mxu0
    %3451 = vdwg.mxu0
    %3454 = vrot.lane.b32.xlu0 %v3444, 64
    %v3455 = vpop.permute.xlu0 %3454
    %3456 = vrot.lane.b32.xlu0 %v3449, 64
    %v3457 = vpop.permute.xlu0 %3456
    %3460 = vst.msk [vmem:[#allocation2] sm:$0xff] %vm1006, %v3455
    %3461 = vst.msk [vmem:[#allocation2 + $0x8] sm:$0xff] %vm1006, %v3457
    %3462 = vrot.lane.b32.xlu0 %v2751, 32
    %v3463 = vpop.permute.xlu0 %3462
    %3464 = vrot.lane.b32.xlu0 %v2757, 32
    %v3465 = vpop.permute.xlu0 %3464
    %3466 = vrot.lane.b32.xlu0 %v2753, 32
    %v3467 = vpop.permute.xlu0 %3466
    %3468 = vrot.lane.b32.xlu0 %v2759, 32
    %v3469 = vpop.permute.xlu0 %3468
    %v3470 = vsel %vm379, %v3463, 0
    %v3472 = vsel %vm379, %v3465, 0
    %v3474 = vsel %vm379, %v3467, 0
    %v3476 = vsel %vm379, %v3469, 0
    %3478 = vmatprep.subr.mxu0 0.0
    %3479 = vmatpush1.xpose.msra.mxu0 %v3474
    %3480 = vmatprep.subr.mxu0 0.0
    %3481 = vmatpush1.xpose.msra.mxu0 %v3476
    %3482 = vmatprep.subr.mxu0 0.0
    %3483 = vmatpush1.xpose.msra.mxu0 0.0
    %3484 = vmatprep.subr.mxu0 0.0
    %3485 = vmatpush1.xpose.msra.mxu0 0.0
    %3486 = vmatprep.subr.mxu0 0.0
    %3487 = vmatpush1.xpose.msra.mxu0 0.0
    %3488 = vmatprep.subr.mxu0 0.0
    %3489 = vmatpush1.xpose.msra.mxu0 0.0
    %3490 = vmatprep.subr.mxu0 0.0
    %3491 = vmatpush1.xpose.msra.mxu0 0.0
    %3492 = vmatprep.subr.mxu0 0.0
    %3493 = vmatpush1.xpose.msra.mxu0 0.0
    %3494 = vmatprep.subr.mxu0 0.0
    %3495 = vmatpush1.xpose.msra.mxu0 0.0
    %3496 = vmatprep.subr.mxu0 0.0
    %3497 = vmatpush1.xpose.msra.mxu0 0.0
    %3498 = vmatprep.subr.mxu0 0.0
    %3499 = vmatpush1.xpose.msra.mxu0 0.0
    %3500 = vmatprep.subr.mxu0 0.0
    %3501 = vmatpush1.xpose.msra.mxu0 0.0
    %3502 = vmatprep.subr.mxu0 0.0
    %3503 = vmatpush1.xpose.msra.mxu0 0.0
    %3504 = vmatprep.subr.mxu0 0.0
    %3505 = vmatpush1.xpose.msra.mxu0 0.0
    %3506 = vmatprep.subr.mxu0 0.0
    %3507 = vmatpush1.xpose.msra.mxu0 0.0
    %3508 = vmatprep.subr.mxu0 0.0
    %3509 = vmatpush1.xpose.msra.mxu0 0.0
    %3510 = vmatprep.subr.mxu0 0.0
    %3511 = vmatpush1.xpose.msra.mxu0 0.0
    %3512 = vmatprep.subr.mxu0 0.0
    %3513 = vmatpush1.xpose.msra.mxu0 0.0
    %3514 = vmatprep.subr.mxu0 0.0
    %3515 = vmatpush1.xpose.msra.mxu0 0.0
    %3516 = vmatprep.subr.mxu0 0.0
    %3517 = vmatpush1.xpose.msra.mxu0 0.0
    %3518 = vmatprep.subr.mxu0 0.0
    %3519 = vmatpush1.xpose.msra.mxu0 0.0
    %3520 = vmatprep.subr.mxu0 0.0
    %3521 = vmatpush1.xpose.msra.mxu0 0.0
    %3522 = vmatprep.subr.mxu0 0.0
    %3523 = vmatpush1.xpose.msra.mxu0 0.0
    %3524 = vmatprep.subr.mxu0 0.0
    %3525 = vmatpush1.xpose.msra.mxu0 0.0
    %3526 = vmatprep.subr.mxu0 0.0
    %3527 = vmatpush1.xpose.msra.mxu0 0.0
    %3528 = vmatprep.subr.mxu0 0.0
    %3529 = vmatpush1.xpose.msra.mxu0 0.0
    %3530 = vmatprep.subr.mxu0 0.0
    %3531 = vmatpush1.xpose.msra.mxu0 0.0
    %3532 = vmatprep.subr.mxu0 0.0
    %3533 = vmatpush1.xpose.msra.mxu0 0.0
    %3534 = vmatprep.subr.mxu0 0.0
    %3535 = vmatpush1.xpose.msra.mxu0 0.0
    %3536 = vmatprep.subr.mxu0 0.0
    %3537 = vmatpush1.xpose.msra.mxu0 0.0
    %3538 = vmatprep.subr.mxu0 0.0
    %3539 = vmatpush1.xpose.msra.mxu0 0.0
    %3540 = vmatprep.subr.mxu0 0.0
    %3541 = vmatpush1.xpose.msra.mxu0 0.0
    %3542 = vmatprep.mubr.f32.mxu0 0.0
    %3543 = vmatmul.mubr.f32.gmra.mrb[0].mxu0 %v3470
    %v3544 = vpop.f32.mrb[0].mxu0
    %v3545 = vadd.f32 0.0, %v3544
    %v3546 = vpop.f32.mrb[0].mxu0
    %3547 = vmatprep.mubr.f32.mxu0 0.0
    %3548 = vmatmul.mubr.f32.gmra.mrb[0].mxu0 %v3472
    %v3549 = vpop.f32.mrb[0].mxu0
    %v3550 = vadd.f32 0.0, %v3549
    %v3551 = vpop.f32.mrb[0].mxu0
    %3552 = vdwg.mxu0
    %v3553 = vmul.f32 %v3545, 0.17677669
    %v3554 = vmul.f32 %v3550, 0.17677669
    %v3555 = vadd.f32 %v3553, %v122
    %v3556 = vadd.f32 %v3554, %v123
    %v3557 = vsel %vm471, %v3555, -inf
    %3558 = vmax.xlane.f32.xlu0 %v3557
    %v3559 = vpop.xlane.xlu0 %3558
    %v3560 = vsel %vm471, %v3556, -inf
    %3561 = vmax.xlane.f32.xlu0 %v3560
    %v3562 = vpop.xlane.xlu0 %3561
    %v3563 = vsub.f32 %v3555, %v3559
    %v3564 = vsub.f32 %v3556, %v3562
    %v3565 = vmul.f32 %v3563, 1.442695
    %v3566 = vpow.pop %v3565
    %v3567 = vmul.f32 %v3564, 1.442695
    %v3568 = vpow.pop %v3567
    %v3569 = vsel %vm471, %v3566, 0.0
    %3570 = vadd.xlane.f32.xlu0 %v3569
    %v3571 = vpop.xlane.xlu0 %3570
    %v3572 = vsel %vm471, %v3568, 0.0
    %3573 = vadd.xlane.f32.xlu0 %v3572
    %v3574 = vpop.xlane.xlu0 %3573
    %v3575 = vrcp.pop %v3571
    %v3576 = vrcp.pop %v3574
    %v3577 = vmul.f32 %v3566, %v3575
    %v3578 = vmul.f32 %v3568, %v3576
    %3579 = vrot.lane.b32.xlu0 %v2828, 32
    %v3580 = vpop.permute.xlu0 %3579
    %3581 = vrot.lane.b32.xlu0 %v2833, 32
    %v3582 = vpop.permute.xlu0 %3581
    %v3586 = vsel %vm471, %v3577, 0
    %v3589 = vsel %vm471, %v3578, 0
    %3591 = vmatprep.subr.mxu0 0.0
    %3592 = vmatpush1.msra.mxu0 %v3580
    %3593 = vmatprep.subr.mxu0 0.0
    %3594 = vmatpush1.msra.mxu0 %v3582
    %3595 = vmatprep.subr.mxu0 0.0
    %3596 = vmatpush1.msra.mxu0 0.0
    %3597 = vmatprep.subr.mxu0 0.0
    %3598 = vmatpush1.msra.mxu0 0.0
    %3599 = vmatprep.subr.mxu0 0.0
    %3600 = vmatpush1.msra.mxu0 0.0
    %3601 = vmatprep.subr.mxu0 0.0
    %3602 = vmatpush1.msra.mxu0 0.0
    %3603 = vmatprep.subr.mxu0 0.0
    %3604 = vmatpush1.msra.mxu0 0.0
    %3605 = vmatprep.subr.mxu0 0.0
    %3606 = vmatpush1.msra.mxu0 0.0
    %3607 = vmatprep.subr.mxu0 0.0
    %3608 = vmatpush1.msra.mxu0 0.0
    %3609 = vmatprep.subr.mxu0 0.0
    %3610 = vmatpush1.msra.mxu0 0.0
    %3611 = vmatprep.subr.mxu0 0.0
    %3612 = vmatpush1.msra.mxu0 0.0
    %3613 = vmatprep.subr.mxu0 0.0
    %3614 = vmatpush1.msra.mxu0 0.0
    %3615 = vmatprep.subr.mxu0 0.0
    %3616 = vmatpush1.msra.mxu0 0.0
    %3617 = vmatprep.subr.mxu0 0.0
    %3618 = vmatpush1.msra.mxu0 0.0
    %3619 = vmatprep.subr.mxu0 0.0
    %3620 = vmatpush1.msra.mxu0 0.0
    %3621 = vmatprep.subr.mxu0 0.0
    %3622 = vmatpush1.msra.mxu0 0.0
    %3623 = vmatprep.subr.mxu0 0.0
    %3624 = vmatpush1.msra.mxu0 0.0
    %3625 = vmatprep.subr.mxu0 0.0
    %3626 = vmatpush1.msra.mxu0 0.0
    %3627 = vmatprep.subr.mxu0 0.0
    %3628 = vmatpush1.msra.mxu0 0.0
    %3629 = vmatprep.subr.mxu0 0.0
    %3630 = vmatpush1.msra.mxu0 0.0
    %3631 = vmatprep.subr.mxu0 0.0
    %3632 = vmatpush1.msra.mxu0 0.0
    %3633 = vmatprep.subr.mxu0 0.0
    %3634 = vmatpush1.msra.mxu0 0.0
    %3635 = vmatprep.subr.mxu0 0.0
    %3636 = vmatpush1.msra.mxu0 0.0
    %3637 = vmatprep.subr.mxu0 0.0
    %3638 = vmatpush1.msra.mxu0 0.0
    %3639 = vmatprep.subr.mxu0 0.0
    %3640 = vmatpush1.msra.mxu0 0.0
    %3641 = vmatprep.subr.mxu0 0.0
    %3642 = vmatpush1.msra.mxu0 0.0
    %3643 = vmatprep.subr.mxu0 0.0
    %3644 = vmatpush1.msra.mxu0 0.0
    %3645 = vmatprep.subr.mxu0 0.0
    %3646 = vmatpush1.msra.mxu0 0.0
    %3647 = vmatprep.subr.mxu0 0.0
    %3648 = vmatpush1.msra.mxu0 0.0
    %3649 = vmatprep.subr.mxu0 0.0
    %3650 = vmatpush1.msra.mxu0 0.0
    %3651 = vmatprep.subr.mxu0 0.0
    %3652 = vmatpush1.msra.mxu0 0.0
    %3653 = vmatprep.subr.mxu0 0.0
    %3654 = vmatpush1.msra.mxu0 0.0
    %3655 = vmatprep.mubr.f32.mxu0 0.0
    %3656 = vmatmul.mubr.f32.gmra.mrb[0].mxu0 %v3586
    %v3657 = vpop.f32.mrb[0].mxu0
    %v3658 = vadd.f32 0.0, %v3657
    %v3659 = vpop.f32.mrb[0].mxu0
    %3660 = vmatprep.mubr.f32.mxu0 0.0
    %3661 = vmatmul.mubr.f32.gmra.mrb[0].mxu0 %v3589
    %v3662 = vpop.f32.mrb[0].mxu0
    %v3663 = vadd.f32 0.0, %v3662
    %v3664 = vpop.f32.mrb[0].mxu0
    %3665 = vdwg.mxu0
    %3668 = vrot.lane.b32.xlu0 %v3658, 96
    %v3669 = vpop.permute.xlu0 %3668
    %3670 = vrot.lane.b32.xlu0 %v3663, 96
    %v3671 = vpop.permute.xlu0 %3670
    %3674 = vst.msk [vmem:[#allocation2] sm:$0xff] %vm1221, %v3669
    %3675 = vst.msk [vmem:[#allocation2 + $0x8] sm:$0xff] %vm1221, %v3671
    %v3676 = vld [vmem:[#allocation2] sm:$0xff]
    %v3677 = vld [vmem:[#allocation2 + $0x8] sm:$0xff]
    %s3678 = scalar_lea.vmem %s7, 128
    %v3679 = vld [vmem:[%s3678] sm:$0xff]
    %v3680 = vld [vmem:[%s3678 + $0x8] sm:$0xff]
    %v3681 = vld [vmem:[%s3678 + $0x10] sm:$0xff]
    %v3682 = vld [vmem:[%s3678 + $0x18] sm:$0xff]
    %v3683 = vld [vmem:[%s3678 + $0x20] sm:$0xff]
    %v3684 = vld [vmem:[%s3678 + $0x28] sm:$0xff]
    %v3685 = vld [vmem:[%s3678 + $0x30] sm:$0xff]
    %v3686 = vld [vmem:[%s3678 + $0x38] sm:$0xff]
    %v3687 = vld [vmem:[%s3678 + $0x40] sm:$0xff]
    %v3688 = vld [vmem:[%s3678 + $0x48] sm:$0xff]
    %v3689 = vld [vmem:[%s3678 + $0x50] sm:$0xff]
    %v3690 = vld [vmem:[%s3678 + $0x58] sm:$0xff]
    %v3691 = vld [vmem:[%s3678 + $0x60] sm:$0xff]
    %v3692 = vld [vmem:[%s3678 + $0x68] sm:$0xff]
    %v3693 = vld [vmem:[%s3678 + $0x70] sm:$0xff]
    %v3694 = vld [vmem:[%s3678 + $0x78] sm:$0xff]
    %s3695 = scalar_lea.vmem %s8, 1
    %v3696 = vld [vmem:[%s3695] sm:$0x1]
    %v3698 = vlaneseq
    %v3699 = vshrl.u32 %v3698, 7
    %v3700 = vsub.s32 0, %v3699
    %v3701 = vrot.slane %v3696, %v3700
    %3703 = vmatprep.subr.mxu0 0.0
    %3704 = vmatpush1.msra.mxu0 %v3679
    %3705 = vmatprep.subr.mxu0 0.0
    %3706 = vmatpush1.msra.mxu0 %v3680
    %3707 = vmatprep.subr.mxu0 0.0
    %3708 = vmatpush1.msra.mxu0 %v3681
    %3709 = vmatprep.subr.mxu0 0.0
    %3710 = vmatpush1.msra.mxu0 %v3682
    %3711 = vmatprep.subr.mxu0 0.0
    %3712 = vmatpush1.msra.mxu0 %v3683
    %3713 = vmatprep.subr.mxu0 0.0
    %3714 = vmatpush1.msra.mxu0 %v3684
    %3715 = vmatprep.subr.mxu0 0.0
    %3716 = vmatpush1.msra.mxu0 %v3685
    %3717 = vmatprep.subr.mxu0 0.0
    %3718 = vmatpush1.msra.mxu0 %v3686
    %3719 = vmatprep.subr.mxu0 0.0
    %3720 = vmatpush1.msra.mxu0 %v3687
    %3721 = vmatprep.subr.mxu0 0.0
    %3722 = vmatpush1.msra.mxu0 %v3688
    %3723 = vmatprep.subr.mxu0 0.0
    %3724 = vmatpush1.msra.mxu0 %v3689
    %3725 = vmatprep.subr.mxu0 0.0
    %3726 = vmatpush1.msra.mxu0 %v3690
    %3727 = vmatprep.subr.mxu0 0.0
    %3728 = vmatpush1.msra.mxu0 %v3691
    %3729 = vmatprep.subr.mxu0 0.0
    %3730 = vmatpush1.msra.mxu0 %v3692
    %3731 = vmatprep.subr.mxu0 0.0
    %3732 = vmatpush1.msra.mxu0 %v3693
    %3733 = vmatprep.subr.mxu0 0.0
    %3734 = vmatpush1.msra.mxu0 %v3694
    %3735 = vmatprep.subr.mxu0 0.0
    %3736 = vmatpush1.msra.mxu0 0.0
    %3737 = vmatprep.subr.mxu0 0.0
    %3738 = vmatpush1.msra.mxu0 0.0
    %3739 = vmatprep.subr.mxu0 0.0
    %3740 = vmatpush1.msra.mxu0 0.0
    %3741 = vmatprep.subr.mxu0 0.0
    %3742 = vmatpush1.msra.mxu0 0.0
    %3743 = vmatprep.subr.mxu0 0.0
    %3744 = vmatpush1.msra.mxu0 0.0
    %3745 = vmatprep.subr.mxu0 0.0
    %3746 = vmatpush1.msra.mxu0 0.0
    %3747 = vmatprep.subr.mxu0 0.0
    %3748 = vmatpush1.msra.mxu0 0.0
    %3749 = vmatprep.subr.mxu0 0.0
    %3750 = vmatpush1.msra.mxu0 0.0
    %3751 = vmatprep.subr.mxu0 0.0
    %3752 = vmatpush1.msra.mxu0 0.0
    %3753 = vmatprep.subr.mxu0 0.0
    %3754 = vmatpush1.msra.mxu0 0.0
    %3755 = vmatprep.subr.mxu0 0.0
    %3756 = vmatpush1.msra.mxu0 0.0
    %3757 = vmatprep.subr.mxu0 0.0
    %3758 = vmatpush1.msra.mxu0 0.0
    %3759 = vmatprep.subr.mxu0 0.0
    %3760 = vmatpush1.msra.mxu0 0.0
    %3761 = vmatprep.subr.mxu0 0.0
    %3762 = vmatpush1.msra.mxu0 0.0
    %3763 = vmatprep.subr.mxu0 0.0
    %3764 = vmatpush1.msra.mxu0 0.0
    %3765 = vmatprep.subr.mxu0 0.0
    %3766 = vmatpush1.msra.mxu0 0.0
    %3767 = vmatprep.mubr.f32.mxu0 0.0
    %3768 = vmatmul.mubr.f32.gmra.mrb[0].mxu0 %v3676
    %v3769 = vpop.f32.mrb[0].mxu0
    %v3770 = vadd.f32 %v3701, %v3769
    %v3771 = vpop.f32.mrb[0].mxu0
    %3772 = vmatprep.mubr.f32.mxu0 0.0
    %3773 = vmatmul.mubr.f32.gmra.mrb[0].mxu0 %v3677
    %v3774 = vpop.f32.mrb[0].mxu0
    %v3775 = vadd.f32 %v3701, %v3774
    %v3776 = vpop.f32.mrb[0].mxu0
    %3777 = vdwg.mxu0
    %v3778 = vadd.f32 %v2615, %v3770
    %v3779 = vadd.f32 %v2616, %v3775
    %s3780 = scalar_lea.vmem %s9, 2
    %v3781 = vld [vmem:[%s3780] sm:$0x3]
    %3782 = vadd.xlane.f32.xlu0 %v3778
    %v3783 = vpop.xlane.xlu0 %3782
    %3784 = vadd.xlane.f32.xlu0 %v3779
    %v3785 = vpop.xlane.xlu0 %3784
    %v3786 = vmul.f32 %v3783, %v131
    %v3787 = vmul.f32 %v3785, %v131
    %v3788 = vsub.f32 %v3778, %v3786
    %v3789 = vsub.f32 %v3779, %v3787
    %v3790 = vmul.f32 %v3788, %v3788
    %v3791 = vmul.f32 %v3789, %v3789
    %3792 = vadd.xlane.f32.xlu0 %v3790
    %v3793 = vpop.xlane.xlu0 %3792
    %3794 = vadd.xlane.f32.xlu0 %v3791
    %v3795 = vpop.xlane.xlu0 %3794
    %v3796 = vmul.f32 %v3793, %v131
    %v3797 = vmul.f32 %v3795, %v131
    %v3798 = vadd.f32 %v3796, 1e-05
    %v3799 = vadd.f32 %v3797, 1e-05
    %v3800 = vrsqrt.pop %v3798
    %v3801 = vrsqrt.pop %v3799
    %v3802 = vmul.f32 %v3788, %v3800
    %v3803 = vmul.f32 %v3789, %v3801
    %v3804 = vlaneseq
    %v3805 = vshrl.u32 %v3804, 7
    %v3806 = vsub.s32 0, %v3805
    %v3807 = vrot.slane %v3781, %v3806
    %v3808 = vmul.f32 %v3802, %v3807
    %v3809 = vmul.f32 %v3803, %v3807
    %v3810 = vlaneseq
    %v3811 = vshrl.u32 %v3810, 7
    %v3812 = vsub.s32 1, %v3811
    %v3813 = vrot.slane %v3781, %v3812
    %v3814 = vadd.f32 %v3808, %v3813
    %v3815 = vadd.f32 %v3809, %v3813
    %s3816 = scalar_lea.vmem %s10, 128
    %v3817 = vld [vmem:[%s3816] sm:$0xff]
    %v3818 = vld [vmem:[%s3816 + $0x8] sm:$0xff]
    %v3819 = vld [vmem:[%s3816 + $0x10] sm:$0xff]
    %v3820 = vld [vmem:[%s3816 + $0x18] sm:$0xff]
    %v3821 = vld [vmem:[%s3816 + $0x20] sm:$0xff]
    %v3822 = vld [vmem:[%s3816 + $0x28] sm:$0xff]
    %v3823 = vld [vmem:[%s3816 + $0x30] sm:$0xff]
    %v3824 = vld [vmem:[%s3816 + $0x38] sm:$0xff]
    %v3825 = vld [vmem:[%s3816 + $0x40] sm:$0xff]
    %v3826 = vld [vmem:[%s3816 + $0x48] sm:$0xff]
    %v3827 = vld [vmem:[%s3816 + $0x50] sm:$0xff]
    %v3828 = vld [vmem:[%s3816 + $0x58] sm:$0xff]
    %v3829 = vld [vmem:[%s3816 + $0x60] sm:$0xff]
    %v3830 = vld [vmem:[%s3816 + $0x68] sm:$0xff]
    %v3831 = vld [vmem:[%s3816 + $0x70] sm:$0xff]
    %v3832 = vld [vmem:[%s3816 + $0x78] sm:$0xff]
    %s3833 = scalar_lea.vmem %s11, 1
    %v3834 = vld [vmem:[%s3833] sm:$0x1]
    %v3836 = vlaneseq
    %v3837 = vshrl.u32 %v3836, 7
    %v3838 = vsub.s32 0, %v3837
    %v3839 = vrot.slane %v3834, %v3838
    %3841 = vmatprep.subr.mxu0 0.0
    %3842 = vmatpush1.msra.mxu0 %v3817
    %3843 = vmatprep.subr.mxu0 0.0
    %3844 = vmatpush1.msra.mxu0 %v3818
    %3845 = vmatprep.subr.mxu0 0.0
    %3846 = vmatpush1.msra.mxu0 %v3819
    %3847 = vmatprep.subr.mxu0 0.0
    %3848 = vmatpush1.msra.mxu0 %v3820
    %3849 = vmatprep.subr.mxu0 0.0
    %3850 = vmatpush1.msra.mxu0 %v3821
    %3851 = vmatprep.subr.mxu0 0.0
    %3852 = vmatpush1.msra.mxu0 %v3822
    %3853 = vmatprep.subr.mxu0 0.0
    %3854 = vmatpush1.msra.mxu0 %v3823
    %3855 = vmatprep.subr.mxu0 0.0
    %3856 = vmatpush1.msra.mxu0 %v3824
    %3857 = vmatprep.subr.mxu0 0.0
    %3858 = vmatpush1.msra.mxu0 %v3825
    %3859 = vmatprep.subr.mxu0 0.0
    %3860 = vmatpush1.msra.mxu0 %v3826
    %3861 = vmatprep.subr.mxu0 0.0
    %3862 = vmatpush1.msra.mxu0 %v3827
    %3863 = vmatprep.subr.mxu0 0.0
    %3864 = vmatpush1.msra.mxu0 %v3828
    %3865 = vmatprep.subr.mxu0 0.0
    %3866 = vmatpush1.msra.mxu0 %v3829
    %3867 = vmatprep.subr.mxu0 0.0
    %3868 = vmatpush1.msra.mxu0 %v3830
    %3869 = vmatprep.subr.mxu0 0.0
    %3870 = vmatpush1.msra.mxu0 %v3831
    %3871 = vmatprep.subr.mxu0 0.0
    %3872 = vmatpush1.msra.mxu0 %v3832
    %3873 = vmatprep.subr.mxu0 0.0
    %3874 = vmatpush1.msra.mxu0 0.0
    %3875 = vmatprep.subr.mxu0 0.0
    %3876 = vmatpush1.msra.mxu0 0.0
    %3877 = vmatprep.subr.mxu0 0.0
    %3878 = vmatpush1.msra.mxu0 0.0
    %3879 = vmatprep.subr.mxu0 0.0
    %3880 = vmatpush1.msra.mxu0 0.0
    %3881 = vmatprep.subr.mxu0 0.0
    %3882 = vmatpush1.msra.mxu0 0.0
    %3883 = vmatprep.subr.mxu0 0.0
    %3884 = vmatpush1.msra.mxu0 0.0
    %3885 = vmatprep.subr.mxu0 0.0
    %3886 = vmatpush1.msra.mxu0 0.0
    %3887 = vmatprep.subr.mxu0 0.0
    %3888 = vmatpush1.msra.mxu0 0.0
    %3889 = vmatprep.subr.mxu0 0.0
    %3890 = vmatpush1.msra.mxu0 0.0
    %3891 = vmatprep.subr.mxu0 0.0
    %3892 = vmatpush1.msra.mxu0 0.0
    %3893 = vmatprep.subr.mxu0 0.0
    %3894 = vmatpush1.msra.mxu0 0.0
    %3895 = vmatprep.subr.mxu0 0.0
    %3896 = vmatpush1.msra.mxu0 0.0
    %3897 = vmatprep.subr.mxu0 0.0
    %3898 = vmatpush1.msra.mxu0 0.0
    %3899 = vmatprep.subr.mxu0 0.0
    %3900 = vmatpush1.msra.mxu0 0.0
    %3901 = vmatprep.subr.mxu0 0.0
    %3902 = vmatpush1.msra.mxu0 0.0
    %3903 = vmatprep.subr.mxu0 0.0
    %3904 = vmatpush1.msra.mxu0 0.0
    %3905 = vmatprep.mubr.f32.mxu0 0.0
    %3906 = vmatmul.mubr.f32.gmra.mrb[0].mxu0 %v3814
    %v3907 = vpop.f32.mrb[0].mxu0
    %v3908 = vadd.f32 %v3839, %v3907
    %v3909 = vpop.f32.mrb[0].mxu0
    %3910 = vmatprep.mubr.f32.mxu0 0.0
    %3911 = vmatmul.mubr.f32.gmra.mrb[0].mxu0 %v3815
    %v3912 = vpop.f32.mrb[0].mxu0
    %v3913 = vadd.f32 %v3839, %v3912
    %v3914 = vpop.f32.mrb[0].mxu0
    %3915 = vdwg.mxu0
    %s3916 = scalar_lea.vmem [#allocation5], 128
    %v3917 = vld [vmem:[%s3916] sm:$0xff]
    %v3918 = vld [vmem:[%s3916 + $0x8] sm:$0xff]
    %v3919 = vld [vmem:[%s3916 + $0x10] sm:$0xff]
    %v3920 = vld [vmem:[%s3916 + $0x18] sm:$0xff]
    %v3921 = vld [vmem:[%s3916 + $0x20] sm:$0xff]
    %v3922 = vld [vmem:[%s3916 + $0x28] sm:$0xff]
    %v3923 = vld [vmem:[%s3916 + $0x30] sm:$0xff]
    %v3924 = vld [vmem:[%s3916 + $0x38] sm:$0xff]
    %v3925 = vld [vmem:[%s3916 + $0x40] sm:$0xff]
    %v3926 = vld [vmem:[%s3916 + $0x48] sm:$0xff]
    %v3927 = vld [vmem:[%s3916 + $0x50] sm:$0xff]
    %v3928 = vld [vmem:[%s3916 + $0x58] sm:$0xff]
    %v3929 = vld [vmem:[%s3916 + $0x60] sm:$0xff]
    %v3930 = vld [vmem:[%s3916 + $0x68] sm:$0xff]
    %v3931 = vld [vmem:[%s3916 + $0x70] sm:$0xff]
    %v3932 = vld [vmem:[%s3916 + $0x78] sm:$0xff]
    %s3933 = scalar_lea.vmem %s13, 2
    %v3934 = vld [vmem:[%s3933] sm:$0x3]
    %v3936 = vlaneseq
    %v3937 = vshrl.u32 %v3936, 7
    %v3938 = vsub.s32 0, %v3937
    %v3939 = vrot.slane %v3934, %v3938
    %v3940 = vlaneseq
    %v3941 = vshrl.u32 %v3940, 7
    %v3942 = vsub.s32 1, %v3941
    %v3943 = vrot.slane %v3934, %v3942
    %3946 = vmatprep.subr.mxu0 %v3918
    %3947 = vmatpush1.msra.mxu0 %v3917
    %3948 = vmatprep.subr.mxu0 %v3920
    %3949 = vmatpush1.msra.mxu0 %v3919
    %3950 = vmatprep.subr.mxu0 %v3922
    %3951 = vmatpush1.msra.mxu0 %v3921
    %3952 = vmatprep.subr.mxu0 %v3924
    %3953 = vmatpush1.msra.mxu0 %v3923
    %3954 = vmatprep.subr.mxu0 %v3926
    %3955 = vmatpush1.msra.mxu0 %v3925
    %3956 = vmatprep.subr.mxu0 %v3928
    %3957 = vmatpush1.msra.mxu0 %v3927
    %3958 = vmatprep.subr.mxu0 %v3930
    %3959 = vmatpush1.msra.mxu0 %v3929
    %3960 = vmatprep.subr.mxu0 %v3932
    %3961 = vmatpush1.msra.mxu0 %v3931
    %3962 = vmatprep.subr.mxu0 0.0
    %3963 = vmatpush1.msra.mxu0 0.0
    %3964 = vmatprep.subr.mxu0 0.0
    %3965 = vmatpush1.msra.mxu0 0.0
    %3966 = vmatprep.subr.mxu0 0.0
    %3967 = vmatpush1.msra.mxu0 0.0
    %3968 = vmatprep.subr.mxu0 0.0
    %3969 = vmatpush1.msra.mxu0 0.0
    %3970 = vmatprep.subr.mxu0 0.0
    %3971 = vmatpush1.msra.mxu0 0.0
    %3972 = vmatprep.subr.mxu0 0.0
    %3973 = vmatpush1.msra.mxu0 0.0
    %3974 = vmatprep.subr.mxu0 0.0
    %3975 = vmatpush1.msra.mxu0 0.0
    %3976 = vmatprep.subr.mxu0 0.0
    %3977 = vmatpush1.msra.mxu0 0.0
    %3978 = vmatprep.subr.mxu0 0.0
    %3979 = vmatpush1.msra.mxu0 0.0
    %3980 = vmatprep.subr.mxu0 0.0
    %3981 = vmatpush1.msra.mxu0 0.0
    %3982 = vmatprep.subr.mxu0 0.0
    %3983 = vmatpush1.msra.mxu0 0.0
    %3984 = vmatprep.subr.mxu0 0.0
    %3985 = vmatpush1.msra.mxu0 0.0
    %3986 = vmatprep.subr.mxu0 0.0
    %3987 = vmatpush1.msra.mxu0 0.0
    %3988 = vmatprep.subr.mxu0 0.0
    %3989 = vmatpush1.msra.mxu0 0.0
    %3990 = vmatprep.subr.mxu0 0.0
    %3991 = vmatpush1.msra.mxu0 0.0
    %3992 = vmatprep.subr.mxu0 0.0
    %3993 = vmatpush1.msra.mxu0 0.0
    %3994 = vmatprep.subr.mxu0 0.0
    %3995 = vmatpush1.msra.mxu0 0.0
    %3996 = vmatprep.subr.mxu0 0.0
    %3997 = vmatpush1.msra.mxu0 0.0
    %3998 = vmatprep.subr.mxu0 0.0
    %3999 = vmatpush1.msra.mxu0 0.0
    %4000 = vmatprep.subr.mxu0 0.0
    %4001 = vmatpush1.msra.mxu0 0.0
    %4002 = vmatprep.subr.mxu0 0.0
    %4003 = vmatpush1.msra.mxu0 0.0
    %4004 = vmatprep.subr.mxu0 0.0
    %4005 = vmatpush1.msra.mxu0 0.0
    %4006 = vmatprep.subr.mxu0 0.0
    %4007 = vmatpush1.msra.mxu0 0.0
    %4008 = vmatprep.subr.mxu0 0.0
    %4009 = vmatpush1.msra.mxu0 0.0
    %4010 = vmatprep.mubr.f32.mxu0 0.0
    %4011 = vmatmul.mubr.f32.gmra.mrb[0].mxu0 %v1489
    %v4012 = vpop.f32.mrb[0].mxu0
    %v4013 = vadd.f32 %v3939, %v4012
    %v4014 = vpop.f32.mrb[0].mxu0
    %v4015 = vadd.f32 %v3943, %v4014
    %4016 = vmatprep.mubr.f32.mxu0 0.0
    %4017 = vmatmul.mubr.f32.gmra.mrb[0].mxu0 %v1492
    %v4018 = vpop.f32.mrb[0].mxu0
    %v4019 = vadd.f32 %v3939, %v4018
    %v4020 = vpop.f32.mrb[0].mxu0
    %v4021 = vadd.f32 %v3943, %v4020
    %4022 = vmatprep.mubr.f32.mxu0 0.0
    %4023 = vmatmul.mubr.f32.gmra.mrb[0].mxu0 %v1495
    %v4024 = vpop.f32.mrb[0].mxu0
    %v4025 = vadd.f32 %v3939, %v4024
    %v4026 = vpop.f32.mrb[0].mxu0
    %v4027 = vadd.f32 %v3943, %v4026
    %4028 = vmatprep.mubr.f32.mxu0 0.0
    %4029 = vmatmul.mubr.f32.gmra.mrb[0].mxu0 %v1498
    %v4030 = vpop.f32.mrb[0].mxu0
    %v4031 = vadd.f32 %v3939, %v4030
    %v4032 = vpop.f32.mrb[0].mxu0
    %v4033 = vadd.f32 %v3943, %v4032
    %4034 = vdwg.mxu0
    %v4036 = vsel %vm379, %v3908, 0
    %v4039 = vsel %vm379, %v3913, 0
    %v4042 = vsel %vm379, %v4013, 0
    %v4045 = vsel %vm379, %v4019, 0
    %v4048 = vsel %vm379, %v4025, 0
    %v4051 = vsel %vm379, %v4031, 0
    %4053 = vmatprep.subr.mxu0 0.0
    %4054 = vmatpush1.xpose.msra.mxu0 %v4042
    %4055 = vmatprep.subr.mxu0 0.0
    %4056 = vmatpush1.xpose.msra.mxu0 %v4045
    %4057 = vmatprep.subr.mxu0 0.0
    %4058 = vmatpush1.xpose.msra.mxu0 %v4048
    %4059 = vmatprep.subr.mxu0 0.0
    %4060 = vmatpush1.xpose.msra.mxu0 %v4051
    %4061 = vmatprep.subr.mxu0 0.0
    %4062 = vmatpush1.xpose.msra.mxu0 0.0
    %4063 = vmatprep.subr.mxu0 0.0
    %4064 = vmatpush1.xpose.msra.mxu0 0.0
    %4065 = vmatprep.subr.mxu0 0.0
    %4066 = vmatpush1.xpose.msra.mxu0 0.0
    %4067 = vmatprep.subr.mxu0 0.0
    %4068 = vmatpush1.xpose.msra.mxu0 0.0
    %4069 = vmatprep.subr.mxu0 0.0
    %4070 = vmatpush1.xpose.msra.mxu0 0.0
    %4071 = vmatprep.subr.mxu0 0.0
    %4072 = vmatpush1.xpose.msra.mxu0 0.0
    %4073 = vmatprep.subr.mxu0 0.0
    %4074 = vmatpush1.xpose.msra.mxu0 0.0
    %4075 = vmatprep.subr.mxu0 0.0
    %4076 = vmatpush1.xpose.msra.mxu0 0.0
    %4077 = vmatprep.subr.mxu0 0.0
    %4078 = vmatpush1.xpose.msra.mxu0 0.0
    %4079 = vmatprep.subr.mxu0 0.0
    %4080 = vmatpush1.xpose.msra.mxu0 0.0
    %4081 = vmatprep.subr.mxu0 0.0
    %4082 = vmatpush1.xpose.msra.mxu0 0.0
    %4083 = vmatprep.subr.mxu0 0.0
    %4084 = vmatpush1.xpose.msra.mxu0 0.0
    %4085 = vmatprep.subr.mxu0 0.0
    %4086 = vmatpush1.xpose.msra.mxu0 0.0
    %4087 = vmatprep.subr.mxu0 0.0
    %4088 = vmatpush1.xpose.msra.mxu0 0.0
    %4089 = vmatprep.subr.mxu0 0.0
    %4090 = vmatpush1.xpose.msra.mxu0 0.0
    %4091 = vmatprep.subr.mxu0 0.0
    %4092 = vmatpush1.xpose.msra.mxu0 0.0
    %4093 = vmatprep.subr.mxu0 0.0
    %4094 = vmatpush1.xpose.msra.mxu0 0.0
    %4095 = vmatprep.subr.mxu0 0.0
    %4096 = vmatpush1.xpose.msra.mxu0 0.0
    %4097 = vmatprep.subr.mxu0 0.0
    %4098 = vmatpush1.xpose.msra.mxu0 0.0
    %4099 = vmatprep.subr.mxu0 0.0
    %4100 = vmatpush1.xpose.msra.mxu0 0.0
    %4101 = vmatprep.subr.mxu0 0.0
    %4102 = vmatpush1.xpose.msra.mxu0 0.0
    %4103 = vmatprep.subr.mxu0 0.0
    %4104 = vmatpush1.xpose.msra.mxu0 0.0
    %4105 = vmatprep.subr.mxu0 0.0
    %4106 = vmatpush1.xpose.msra.mxu0 0.0
    %4107 = vmatprep.subr.mxu0 0.0
    %4108 = vmatpush1.xpose.msra.mxu0 0.0
    %4109 = vmatprep.subr.mxu0 0.0
    %4110 = vmatpush1.xpose.msra.mxu0 0.0
    %4111 = vmatprep.subr.mxu0 0.0
    %4112 = vmatpush1.xpose.msra.mxu0 0.0
    %4113 = vmatprep.subr.mxu0 0.0
    %4114 = vmatpush1.xpose.msra.mxu0 0.0
    %4115 = vmatprep.subr.mxu0 0.0
    %4116 = vmatpush1.xpose.msra.mxu0 0.0
    %4117 = vmatprep.mubr.f32.mxu0 0.0
    %4118 = vmatmul.mubr.f32.gmra.mrb[0].mxu0 %v4036
    %v4119 = vpop.f32.mrb[0].mxu0
    %v4120 = vadd.f32 0.0, %v4119
    %v4121 = vpop.f32.mrb[0].mxu0
    %4122 = vmatprep.mubr.f32.mxu0 0.0
    %4123 = vmatmul.mubr.f32.gmra.mrb[0].mxu0 %v4039
    %v4124 = vpop.f32.mrb[0].mxu0
    %v4125 = vadd.f32 0.0, %v4124
    %v4126 = vpop.f32.mrb[0].mxu0
    %4127 = vdwg.mxu0
    %v4128 = vmul.f32 %v4120, 0.17677669
    %v4129 = vmul.f32 %v4125, 0.17677669
    %v4130 = vadd.f32 %v4128, %v124
    %v4131 = vadd.f32 %v4129, %v125
    %v4132 = vsel %vm379, %v4130, -inf
    %4133 = vmax.xlane.f32.xlu0 %v4132
    %v4134 = vpop.xlane.xlu0 %4133
    %v4135 = vsel %vm379, %v4131, -inf
    %4136 = vmax.xlane.f32.xlu0 %v4135
    %v4137 = vpop.xlane.xlu0 %4136
    %v4138 = vsub.f32 %v4130, %v4134
    %v4139 = vsub.f32 %v4131, %v4137
    %v4140 = vmul.f32 %v4138, 1.442695
    %v4141 = vpow.pop %v4140
    %v4142 = vmul.f32 %v4139, 1.442695
    %v4143 = vpow.pop %v4142
    %v4144 = vsel %vm379, %v4141, 0.0
    %4145 = vadd.xlane.f32.xlu0 %v4144
    %v4146 = vpop.xlane.xlu0 %4145
    %v4147 = vsel %vm379, %v4143, 0.0
    %4148 = vadd.xlane.f32.xlu0 %v4147
    %v4149 = vpop.xlane.xlu0 %4148
    %v4150 = vrcp.pop %v4146
    %v4151 = vrcp.pop %v4149
    %v4152 = vmul.f32 %v4141, %v4150
    %v4153 = vmul.f32 %v4143, %v4151
    %v4155 = vsel %vm379, %v4152, 0
    %v4158 = vsel %vm379, %v4153, 0
    %4160 = vmatprep.subr.mxu0 0.0
    %4161 = vmatpush1.msra.mxu0 %v4015
    %4162 = vmatprep.subr.mxu0 0.0
    %4163 = vmatpush1.msra.mxu0 %v4021
    %4164 = vmatprep.subr.mxu0 0.0
    %4165 = vmatpush1.msra.mxu0 %v4027
    %4166 = vmatprep.subr.mxu0 0.0
    %4167 = vmatpush1.msra.mxu0 %v4033
    %4168 = vmatprep.subr.mxu0 0.0
    %4169 = vmatpush1.msra.mxu0 0.0
    %4170 = vmatprep.subr.mxu0 0.0
    %4171 = vmatpush1.msra.mxu0 0.0
    %4172 = vmatprep.subr.mxu0 0.0
    %4173 = vmatpush1.msra.mxu0 0.0
    %4174 = vmatprep.subr.mxu0 0.0
    %4175 = vmatpush1.msra.mxu0 0.0
    %4176 = vmatprep.subr.mxu0 0.0
    %4177 = vmatpush1.msra.mxu0 0.0
    %4178 = vmatprep.subr.mxu0 0.0
    %4179 = vmatpush1.msra.mxu0 0.0
    %4180 = vmatprep.subr.mxu0 0.0
    %4181 = vmatpush1.msra.mxu0 0.0
    %4182 = vmatprep.subr.mxu0 0.0
    %4183 = vmatpush1.msra.mxu0 0.0
    %4184 = vmatprep.subr.mxu0 0.0
    %4185 = vmatpush1.msra.mxu0 0.0
    %4186 = vmatprep.subr.mxu0 0.0
    %4187 = vmatpush1.msra.mxu0 0.0
    %4188 = vmatprep.subr.mxu0 0.0
    %4189 = vmatpush1.msra.mxu0 0.0
    %4190 = vmatprep.subr.mxu0 0.0
    %4191 = vmatpush1.msra.mxu0 0.0
    %4192 = vmatprep.subr.mxu0 0.0
    %4193 = vmatpush1.msra.mxu0 0.0
    %4194 = vmatprep.subr.mxu0 0.0
    %4195 = vmatpush1.msra.mxu0 0.0
    %4196 = vmatprep.subr.mxu0 0.0
    %4197 = vmatpush1.msra.mxu0 0.0
    %4198 = vmatprep.subr.mxu0 0.0
    %4199 = vmatpush1.msra.mxu0 0.0
    %4200 = vmatprep.subr.mxu0 0.0
    %4201 = vmatpush1.msra.mxu0 0.0
    %4202 = vmatprep.subr.mxu0 0.0
    %4203 = vmatpush1.msra.mxu0 0.0
    %4204 = vmatprep.subr.mxu0 0.0
    %4205 = vmatpush1.msra.mxu0 0.0
    %4206 = vmatprep.subr.mxu0 0.0
    %4207 = vmatpush1.msra.mxu0 0.0
    %4208 = vmatprep.subr.mxu0 0.0
    %4209 = vmatpush1.msra.mxu0 0.0
    %4210 = vmatprep.subr.mxu0 0.0
    %4211 = vmatpush1.msra.mxu0 0.0
    %4212 = vmatprep.subr.mxu0 0.0
    %4213 = vmatpush1.msra.mxu0 0.0
    %4214 = vmatprep.subr.mxu0 0.0
    %4215 = vmatpush1.msra.mxu0 0.0
    %4216 = vmatprep.subr.mxu0 0.0
    %4217 = vmatpush1.msra.mxu0 0.0
    %4218 = vmatprep.subr.mxu0 0.0
    %4219 = vmatpush1.msra.mxu0 0.0
    %4220 = vmatprep.subr.mxu0 0.0
    %4221 = vmatpush1.msra.mxu0 0.0
    %4222 = vmatprep.subr.mxu0 0.0
    %4223 = vmatpush1.msra.mxu0 0.0
    %4224 = vmatprep.mubr.f32.mxu0 0.0
    %4225 = vmatmul.mubr.f32.gmra.mrb[0].mxu0 %v4155
    %v4226 = vpop.f32.mrb[0].mxu0
    %v4227 = vadd.f32 0.0, %v4226
    %v4228 = vpop.f32.mrb[0].mxu0
    %4229 = vmatprep.mubr.f32.mxu0 0.0
    %4230 = vmatmul.mubr.f32.gmra.mrb[0].mxu0 %v4158
    %v4231 = vpop.f32.mrb[0].mxu0
    %v4232 = vadd.f32 0.0, %v4231
    %v4233 = vpop.f32.mrb[0].mxu0
    %4234 = vdwg.mxu0
    %4235 = vst.msk [vmem:[#allocation2] sm:$0xff] %vm379, %v4227
    %4236 = vst.msk [vmem:[#allocation2 + $0x8] sm:$0xff] %vm379, %v4232
    %4237 = vrot.lane.b32.xlu0 %v3908, 96
    %v4238 = vpop.permute.xlu0 %4237
    %4239 = vrot.lane.b32.xlu0 %v3913, 96
    %v4240 = vpop.permute.xlu0 %4239
    %4241 = vrot.lane.b32.xlu0 %v4013, 96
    %v4242 = vpop.permute.xlu0 %4241
    %4243 = vrot.lane.b32.xlu0 %v4019, 96
    %v4244 = vpop.permute.xlu0 %4243
    %4245 = vrot.lane.b32.xlu0 %v4025, 96
    %v4246 = vpop.permute.xlu0 %4245
    %4247 = vrot.lane.b32.xlu0 %v4031, 96
    %v4248 = vpop.permute.xlu0 %4247
    %v4249 = vsel %vm379, %v4238, 0
    %v4251 = vsel %vm379, %v4240, 0
    %v4253 = vsel %vm379, %v4242, 0
    %v4255 = vsel %vm379, %v4244, 0
    %v4257 = vsel %vm379, %v4246, 0
    %v4259 = vsel %vm379, %v4248, 0
    %4261 = vmatprep.subr.mxu0 0.0
    %4262 = vmatpush1.xpose.msra.mxu0 %v4253
    %4263 = vmatprep.subr.mxu0 0.0
    %4264 = vmatpush1.xpose.msra.mxu0 %v4255
    %4265 = vmatprep.subr.mxu0 0.0
    %4266 = vmatpush1.xpose.msra.mxu0 %v4257
    %4267 = vmatprep.subr.mxu0 0.0
    %4268 = vmatpush1.xpose.msra.mxu0 %v4259
    %4269 = vmatprep.subr.mxu0 0.0
    %4270 = vmatpush1.xpose.msra.mxu0 0.0
    %4271 = vmatprep.subr.mxu0 0.0
    %4272 = vmatpush1.xpose.msra.mxu0 0.0
    %4273 = vmatprep.subr.mxu0 0.0
    %4274 = vmatpush1.xpose.msra.mxu0 0.0
    %4275 = vmatprep.subr.mxu0 0.0
    %4276 = vmatpush1.xpose.msra.mxu0 0.0
    %4277 = vmatprep.subr.mxu0 0.0
    %4278 = vmatpush1.xpose.msra.mxu0 0.0
    %4279 = vmatprep.subr.mxu0 0.0
    %4280 = vmatpush1.xpose.msra.mxu0 0.0
    %4281 = vmatprep.subr.mxu0 0.0
    %4282 = vmatpush1.xpose.msra.mxu0 0.0
    %4283 = vmatprep.subr.mxu0 0.0
    %4284 = vmatpush1.xpose.msra.mxu0 0.0
    %4285 = vmatprep.subr.mxu0 0.0
    %4286 = vmatpush1.xpose.msra.mxu0 0.0
    %4287 = vmatprep.subr.mxu0 0.0
    %4288 = vmatpush1.xpose.msra.mxu0 0.0
    %4289 = vmatprep.subr.mxu0 0.0
    %4290 = vmatpush1.xpose.msra.mxu0 0.0
    %4291 = vmatprep.subr.mxu0 0.0
    %4292 = vmatpush1.xpose.msra.mxu0 0.0
    %4293 = vmatprep.subr.mxu0 0.0
    %4294 = vmatpush1.xpose.msra.mxu0 0.0
    %4295 = vmatprep.subr.mxu0 0.0
    %4296 = vmatpush1.xpose.msra.mxu0 0.0
    %4297 = vmatprep.subr.mxu0 0.0
    %4298 = vmatpush1.xpose.msra.mxu0 0.0
    %4299 = vmatprep.subr.mxu0 0.0
    %4300 = vmatpush1.xpose.msra.mxu0 0.0
    %4301 = vmatprep.subr.mxu0 0.0
    %4302 = vmatpush1.xpose.msra.mxu0 0.0
    %4303 = vmatprep.subr.mxu0 0.0
    %4304 = vmatpush1.xpose.msra.mxu0 0.0
    %4305 = vmatprep.subr.mxu0 0.0
    %4306 = vmatpush1.xpose.msra.mxu0 0.0
    %4307 = vmatprep.subr.mxu0 0.0
    %4308 = vmatpush1.xpose.msra.mxu0 0.0
    %4309 = vmatprep.subr.mxu0 0.0
    %4310 = vmatpush1.xpose.msra.mxu0 0.0
    %4311 = vmatprep.subr.mxu0 0.0
    %4312 = vmatpush1.xpose.msra.mxu0 0.0
    %4313 = vmatprep.subr.mxu0 0.0
    %4314 = vmatpush1.xpose.msra.mxu0 0.0
    %4315 = vmatprep.subr.mxu0 0.0
    %4316 = vmatpush1.xpose.msra.mxu0 0.0
    %4317 = vmatprep.subr.mxu0 0.0
    %4318 = vmatpush1.xpose.msra.mxu0 0.0
    %4319 = vmatprep.subr.mxu0 0.0
    %4320 = vmatpush1.xpose.msra.mxu0 0.0
    %4321 = vmatprep.subr.mxu0 0.0
    %4322 = vmatpush1.xpose.msra.mxu0 0.0
    %4323 = vmatprep.subr.mxu0 0.0
    %4324 = vmatpush1.xpose.msra.mxu0 0.0
    %4325 = vmatprep.mubr.f32.mxu0 0.0
    %4326 = vmatmul.mubr.f32.gmra.mrb[0].mxu0 %v4249
    %v4327 = vpop.f32.mrb[0].mxu0
    %v4328 = vadd.f32 0.0, %v4327
    %v4329 = vpop.f32.mrb[0].mxu0
    %4330 = vmatprep.mubr.f32.mxu0 0.0
    %4331 = vmatmul.mubr.f32.gmra.mrb[0].mxu0 %v4251
    %v4332 = vpop.f32.mrb[0].mxu0
    %v4333 = vadd.f32 0.0, %v4332
    %v4334 = vpop.f32.mrb[0].mxu0
    %4335 = vdwg.mxu0
    %v4336 = vmul.f32 %v4328, 0.17677669
    %v4337 = vmul.f32 %v4333, 0.17677669
    %v4338 = vadd.f32 %v4336, %v124
    %v4339 = vadd.f32 %v4337, %v125
    %v4340 = vsel %vm379, %v4338, -inf
    %4341 = vmax.xlane.f32.xlu0 %v4340
    %v4342 = vpop.xlane.xlu0 %4341
    %v4343 = vsel %vm379, %v4339, -inf
    %4344 = vmax.xlane.f32.xlu0 %v4343
    %v4345 = vpop.xlane.xlu0 %4344
    %v4346 = vsub.f32 %v4338, %v4342
    %v4347 = vsub.f32 %v4339, %v4345
    %v4348 = vmul.f32 %v4346, 1.442695
    %v4349 = vpow.pop %v4348
    %v4350 = vmul.f32 %v4347, 1.442695
    %v4351 = vpow.pop %v4350
    %v4352 = vsel %vm379, %v4349, 0.0
    %4353 = vadd.xlane.f32.xlu0 %v4352
    %v4354 = vpop.xlane.xlu0 %4353
    %v4355 = vsel %vm379, %v4351, 0.0
    %4356 = vadd.xlane.f32.xlu0 %v4355
    %v4357 = vpop.xlane.xlu0 %4356
    %v4358 = vrcp.pop %v4354
    %v4359 = vrcp.pop %v4357
    %v4360 = vmul.f32 %v4349, %v4358
    %v4361 = vmul.f32 %v4351, %v4359
    %4366 = vrot.lane.b32.xlu0 %v4015, 96
    %v4367 = vpop.permute.xlu0 %4366
    %4368 = vrot.lane.b32.xlu0 %v4021, 96
    %v4369 = vpop.permute.xlu0 %4368
    %4370 = vrot.lane.b32.xlu0 %v4027, 96
    %v4371 = vpop.permute.xlu0 %4370
    %4372 = vrot.lane.b32.xlu0 %v4033, 96
    %v4373 = vpop.permute.xlu0 %4372
    %v4379 = vsel %vm379, %v4360, 0
    %v4382 = vsel %vm379, %v4361, 0
    %4384 = vmatprep.subr.mxu0 0.0
    %4385 = vmatpush1.msra.mxu0 %v4367
    %4386 = vmatprep.subr.mxu0 0.0
    %4387 = vmatpush1.msra.mxu0 %v4369
    %4388 = vmatprep.subr.mxu0 0.0
    %4389 = vmatpush1.msra.mxu0 %v4371
    %4390 = vmatprep.subr.mxu0 0.0
    %4391 = vmatpush1.msra.mxu0 %v4373
    %4392 = vmatprep.subr.mxu0 0.0
    %4393 = vmatpush1.msra.mxu0 0.0
    %4394 = vmatprep.subr.mxu0 0.0
    %4395 = vmatpush1.msra.mxu0 0.0
    %4396 = vmatprep.subr.mxu0 0.0
    %4397 = vmatpush1.msra.mxu0 0.0
    %4398 = vmatprep.subr.mxu0 0.0
    %4399 = vmatpush1.msra.mxu0 0.0
    %4400 = vmatprep.subr.mxu0 0.0
    %4401 = vmatpush1.msra.mxu0 0.0
    %4402 = vmatprep.subr.mxu0 0.0
    %4403 = vmatpush1.msra.mxu0 0.0
    %4404 = vmatprep.subr.mxu0 0.0
    %4405 = vmatpush1.msra.mxu0 0.0
    %4406 = vmatprep.subr.mxu0 0.0
    %4407 = vmatpush1.msra.mxu0 0.0
    %4408 = vmatprep.subr.mxu0 0.0
    %4409 = vmatpush1.msra.mxu0 0.0
    %4410 = vmatprep.subr.mxu0 0.0
    %4411 = vmatpush1.msra.mxu0 0.0
    %4412 = vmatprep.subr.mxu0 0.0
    %4413 = vmatpush1.msra.mxu0 0.0
    %4414 = vmatprep.subr.mxu0 0.0
    %4415 = vmatpush1.msra.mxu0 0.0
    %4416 = vmatprep.subr.mxu0 0.0
    %4417 = vmatpush1.msra.mxu0 0.0
    %4418 = vmatprep.subr.mxu0 0.0
    %4419 = vmatpush1.msra.mxu0 0.0
    %4420 = vmatprep.subr.mxu0 0.0
    %4421 = vmatpush1.msra.mxu0 0.0
    %4422 = vmatprep.subr.mxu0 0.0
    %4423 = vmatpush1.msra.mxu0 0.0
    %4424 = vmatprep.subr.mxu0 0.0
    %4425 = vmatpush1.msra.mxu0 0.0
    %4426 = vmatprep.subr.mxu0 0.0
    %4427 = vmatpush1.msra.mxu0 0.0
    %4428 = vmatprep.subr.mxu0 0.0
    %4429 = vmatpush1.msra.mxu0 0.0
    %4430 = vmatprep.subr.mxu0 0.0
    %4431 = vmatpush1.msra.mxu0 0.0
    %4432 = vmatprep.subr.mxu0 0.0
    %4433 = vmatpush1.msra.mxu0 0.0
    %4434 = vmatprep.subr.mxu0 0.0
    %4435 = vmatpush1.msra.mxu0 0.0
    %4436 = vmatprep.subr.mxu0 0.0
    %4437 = vmatpush1.msra.mxu0 0.0
    %4438 = vmatprep.subr.mxu0 0.0
    %4439 = vmatpush1.msra.mxu0 0.0
    %4440 = vmatprep.subr.mxu0 0.0
    %4441 = vmatpush1.msra.mxu0 0.0
    %4442 = vmatprep.subr.mxu0 0.0
    %4443 = vmatpush1.msra.mxu0 0.0
    %4444 = vmatprep.subr.mxu0 0.0
    %4445 = vmatpush1.msra.mxu0 0.0
    %4446 = vmatprep.subr.mxu0 0.0
    %4447 = vmatpush1.msra.mxu0 0.0
    %4448 = vmatprep.mubr.f32.mxu0 0.0
    %4449 = vmatmul.mubr.f32.gmra.mrb[0].mxu0 %v4379
    %v4450 = vpop.f32.mrb[0].mxu0
    %v4451 = vadd.f32 0.0, %v4450
    %v4452 = vpop.f32.mrb[0].mxu0
    %4453 = vmatprep.mubr.f32.mxu0 0.0
    %4454 = vmatmul.mubr.f32.gmra.mrb[0].mxu0 %v4382
    %v4455 = vpop.f32.mrb[0].mxu0
    %v4456 = vadd.f32 0.0, %v4455
    %v4457 = vpop.f32.mrb[0].mxu0
    %4458 = vdwg.mxu0
    %4461 = vrot.lane.b32.xlu0 %v4451, 32
    %v4462 = vpop.permute.xlu0 %4461
    %4463 = vrot.lane.b32.xlu0 %v4456, 32
    %v4464 = vpop.permute.xlu0 %4463
    %4467 = vst.msk [vmem:[#allocation2] sm:$0xff] %vm791, %v4462
    %4468 = vst.msk [vmem:[#allocation2 + $0x8] sm:$0xff] %vm791, %v4464
    %4469 = vrot.lane.b32.xlu0 %v3908, 64
    %v4470 = vpop.permute.xlu0 %4469
    %4471 = vrot.lane.b32.xlu0 %v3913, 64
    %v4472 = vpop.permute.xlu0 %4471
    %4473 = vrot.lane.b32.xlu0 %v4013, 64
    %v4474 = vpop.permute.xlu0 %4473
    %4475 = vrot.lane.b32.xlu0 %v4019, 64
    %v4476 = vpop.permute.xlu0 %4475
    %4477 = vrot.lane.b32.xlu0 %v4025, 64
    %v4478 = vpop.permute.xlu0 %4477
    %4479 = vrot.lane.b32.xlu0 %v4031, 64
    %v4480 = vpop.permute.xlu0 %4479
    %v4481 = vsel %vm379, %v4470, 0
    %v4483 = vsel %vm379, %v4472, 0
    %v4485 = vsel %vm379, %v4474, 0
    %v4487 = vsel %vm379, %v4476, 0
    %v4489 = vsel %vm379, %v4478, 0
    %v4491 = vsel %vm379, %v4480, 0
    %4493 = vmatprep.subr.mxu0 0.0
    %4494 = vmatpush1.xpose.msra.mxu0 %v4485
    %4495 = vmatprep.subr.mxu0 0.0
    %4496 = vmatpush1.xpose.msra.mxu0 %v4487
    %4497 = vmatprep.subr.mxu0 0.0
    %4498 = vmatpush1.xpose.msra.mxu0 %v4489
    %4499 = vmatprep.subr.mxu0 0.0
    %4500 = vmatpush1.xpose.msra.mxu0 %v4491
    %4501 = vmatprep.subr.mxu0 0.0
    %4502 = vmatpush1.xpose.msra.mxu0 0.0
    %4503 = vmatprep.subr.mxu0 0.0
    %4504 = vmatpush1.xpose.msra.mxu0 0.0
    %4505 = vmatprep.subr.mxu0 0.0
    %4506 = vmatpush1.xpose.msra.mxu0 0.0
    %4507 = vmatprep.subr.mxu0 0.0
    %4508 = vmatpush1.xpose.msra.mxu0 0.0
    %4509 = vmatprep.subr.mxu0 0.0
    %4510 = vmatpush1.xpose.msra.mxu0 0.0
    %4511 = vmatprep.subr.mxu0 0.0
    %4512 = vmatpush1.xpose.msra.mxu0 0.0
    %4513 = vmatprep.subr.mxu0 0.0
    %4514 = vmatpush1.xpose.msra.mxu0 0.0
    %4515 = vmatprep.subr.mxu0 0.0
    %4516 = vmatpush1.xpose.msra.mxu0 0.0
    %4517 = vmatprep.subr.mxu0 0.0
    %4518 = vmatpush1.xpose.msra.mxu0 0.0
    %4519 = vmatprep.subr.mxu0 0.0
    %4520 = vmatpush1.xpose.msra.mxu0 0.0
    %4521 = vmatprep.subr.mxu0 0.0
    %4522 = vmatpush1.xpose.msra.mxu0 0.0
    %4523 = vmatprep.subr.mxu0 0.0
    %4524 = vmatpush1.xpose.msra.mxu0 0.0
    %4525 = vmatprep.subr.mxu0 0.0
    %4526 = vmatpush1.xpose.msra.mxu0 0.0
    %4527 = vmatprep.subr.mxu0 0.0
    %4528 = vmatpush1.xpose.msra.mxu0 0.0
    %4529 = vmatprep.subr.mxu0 0.0
    %4530 = vmatpush1.xpose.msra.mxu0 0.0
    %4531 = vmatprep.subr.mxu0 0.0
    %4532 = vmatpush1.xpose.msra.mxu0 0.0
    %4533 = vmatprep.subr.mxu0 0.0
    %4534 = vmatpush1.xpose.msra.mxu0 0.0
    %4535 = vmatprep.subr.mxu0 0.0
    %4536 = vmatpush1.xpose.msra.mxu0 0.0
    %4537 = vmatprep.subr.mxu0 0.0
    %4538 = vmatpush1.xpose.msra.mxu0 0.0
    %4539 = vmatprep.subr.mxu0 0.0
    %4540 = vmatpush1.xpose.msra.mxu0 0.0
    %4541 = vmatprep.subr.mxu0 0.0
    %4542 = vmatpush1.xpose.msra.mxu0 0.0
    %4543 = vmatprep.subr.mxu0 0.0
    %4544 = vmatpush1.xpose.msra.mxu0 0.0
    %4545 = vmatprep.subr.mxu0 0.0
    %4546 = vmatpush1.xpose.msra.mxu0 0.0
    %4547 = vmatprep.subr.mxu0 0.0
    %4548 = vmatpush1.xpose.msra.mxu0 0.0
    %4549 = vmatprep.subr.mxu0 0.0
    %4550 = vmatpush1.xpose.msra.mxu0 0.0
    %4551 = vmatprep.subr.mxu0 0.0
    %4552 = vmatpush1.xpose.msra.mxu0 0.0
    %4553 = vmatprep.subr.mxu0 0.0
    %4554 = vmatpush1.xpose.msra.mxu0 0.0
    %4555 = vmatprep.subr.mxu0 0.0
    %4556 = vmatpush1.xpose.msra.mxu0 0.0
    %4557 = vmatprep.mubr.f32.mxu0 0.0
    %4558 = vmatmul.mubr.f32.gmra.mrb[0].mxu0 %v4481
    %v4559 = vpop.f32.mrb[0].mxu0
    %v4560 = vadd.f32 0.0, %v4559
    %v4561 = vpop.f32.mrb[0].mxu0
    %4562 = vmatprep.mubr.f32.mxu0 0.0
    %4563 = vmatmul.mubr.f32.gmra.mrb[0].mxu0 %v4483
    %v4564 = vpop.f32.mrb[0].mxu0
    %v4565 = vadd.f32 0.0, %v4564
    %v4566 = vpop.f32.mrb[0].mxu0
    %4567 = vdwg.mxu0
    %v4568 = vmul.f32 %v4560, 0.17677669
    %v4569 = vmul.f32 %v4565, 0.17677669
    %v4570 = vadd.f32 %v4568, %v124
    %v4571 = vadd.f32 %v4569, %v125
    %v4572 = vsel %vm379, %v4570, -inf
    %4573 = vmax.xlane.f32.xlu0 %v4572
    %v4574 = vpop.xlane.xlu0 %4573
    %v4575 = vsel %vm379, %v4571, -inf
    %4576 = vmax.xlane.f32.xlu0 %v4575
    %v4577 = vpop.xlane.xlu0 %4576
    %v4578 = vsub.f32 %v4570, %v4574
    %v4579 = vsub.f32 %v4571, %v4577
    %v4580 = vmul.f32 %v4578, 1.442695
    %v4581 = vpow.pop %v4580
    %v4582 = vmul.f32 %v4579, 1.442695
    %v4583 = vpow.pop %v4582
    %v4584 = vsel %vm379, %v4581, 0.0
    %4585 = vadd.xlane.f32.xlu0 %v4584
    %v4586 = vpop.xlane.xlu0 %4585
    %v4587 = vsel %vm379, %v4583, 0.0
    %4588 = vadd.xlane.f32.xlu0 %v4587
    %v4589 = vpop.xlane.xlu0 %4588
    %v4590 = vrcp.pop %v4586
    %v4591 = vrcp.pop %v4589
    %v4592 = vmul.f32 %v4581, %v4590
    %v4593 = vmul.f32 %v4583, %v4591
    %4594 = vrot.lane.b32.xlu0 %v4015, 64
    %v4595 = vpop.permute.xlu0 %4594
    %4596 = vrot.lane.b32.xlu0 %v4021, 64
    %v4597 = vpop.permute.xlu0 %4596
    %4598 = vrot.lane.b32.xlu0 %v4027, 64
    %v4599 = vpop.permute.xlu0 %4598
    %4600 = vrot.lane.b32.xlu0 %v4033, 64
    %v4601 = vpop.permute.xlu0 %4600
    %v4607 = vsel %vm379, %v4592, 0
    %v4610 = vsel %vm379, %v4593, 0
    %4612 = vmatprep.subr.mxu0 0.0
    %4613 = vmatpush1.msra.mxu0 %v4595
    %4614 = vmatprep.subr.mxu0 0.0
    %4615 = vmatpush1.msra.mxu0 %v4597
    %4616 = vmatprep.subr.mxu0 0.0
    %4617 = vmatpush1.msra.mxu0 %v4599
    %4618 = vmatprep.subr.mxu0 0.0
    %4619 = vmatpush1.msra.mxu0 %v4601
    %4620 = vmatprep.subr.mxu0 0.0
    %4621 = vmatpush1.msra.mxu0 0.0
    %4622 = vmatprep.subr.mxu0 0.0
    %4623 = vmatpush1.msra.mxu0 0.0
    %4624 = vmatprep.subr.mxu0 0.0
    %4625 = vmatpush1.msra.mxu0 0.0
    %4626 = vmatprep.subr.mxu0 0.0
    %4627 = vmatpush1.msra.mxu0 0.0
    %4628 = vmatprep.subr.mxu0 0.0
    %4629 = vmatpush1.msra.mxu0 0.0
    %4630 = vmatprep.subr.mxu0 0.0
    %4631 = vmatpush1.msra.mxu0 0.0
    %4632 = vmatprep.subr.mxu0 0.0
    %4633 = vmatpush1.msra.mxu0 0.0
    %4634 = vmatprep.subr.mxu0 0.0
    %4635 = vmatpush1.msra.mxu0 0.0
    %4636 = vmatprep.subr.mxu0 0.0
    %4637 = vmatpush1.msra.mxu0 0.0
    %4638 = vmatprep.subr.mxu0 0.0
    %4639 = vmatpush1.msra.mxu0 0.0
    %4640 = vmatprep.subr.mxu0 0.0
    %4641 = vmatpush1.msra.mxu0 0.0
    %4642 = vmatprep.subr.mxu0 0.0
    %4643 = vmatpush1.msra.mxu0 0.0
    %4644 = vmatprep.subr.mxu0 0.0
    %4645 = vmatpush1.msra.mxu0 0.0
    %4646 = vmatprep.subr.mxu0 0.0
    %4647 = vmatpush1.msra.mxu0 0.0
    %4648 = vmatprep.subr.mxu0 0.0
    %4649 = vmatpush1.msra.mxu0 0.0
    %4650 = vmatprep.subr.mxu0 0.0
    %4651 = vmatpush1.msra.mxu0 0.0
    %4652 = vmatprep.subr.mxu0 0.0
    %4653 = vmatpush1.msra.mxu0 0.0
    %4654 = vmatprep.subr.mxu0 0.0
    %4655 = vmatpush1.msra.mxu0 0.0
    %4656 = vmatprep.subr.mxu0 0.0
    %4657 = vmatpush1.msra.mxu0 0.0
    %4658 = vmatprep.subr.mxu0 0.0
    %4659 = vmatpush1.msra.mxu0 0.0
    %4660 = vmatprep.subr.mxu0 0.0
    %4661 = vmatpush1.msra.mxu0 0.0
    %4662 = vmatprep.subr.mxu0 0.0
    %4663 = vmatpush1.msra.mxu0 0.0
    %4664 = vmatprep.subr.mxu0 0.0
    %4665 = vmatpush1.msra.mxu0 0.0
    %4666 = vmatprep.subr.mxu0 0.0
    %4667 = vmatpush1.msra.mxu0 0.0
    %4668 = vmatprep.subr.mxu0 0.0
    %4669 = vmatpush1.msra.mxu0 0.0
    %4670 = vmatprep.subr.mxu0 0.0
    %4671 = vmatpush1.msra.mxu0 0.0
    %4672 = vmatprep.subr.mxu0 0.0
    %4673 = vmatpush1.msra.mxu0 0.0
    %4674 = vmatprep.subr.mxu0 0.0
    %4675 = vmatpush1.msra.mxu0 0.0
    %4676 = vmatprep.mubr.f32.mxu0 0.0
    %4677 = vmatmul.mubr.f32.gmra.mrb[0].mxu0 %v4607
    %v4678 = vpop.f32.mrb[0].mxu0
    %v4679 = vadd.f32 0.0, %v4678
    %v4680 = vpop.f32.mrb[0].mxu0
    %4681 = vmatprep.mubr.f32.mxu0 0.0
    %4682 = vmatmul.mubr.f32.gmra.mrb[0].mxu0 %v4610
    %v4683 = vpop.f32.mrb[0].mxu0
    %v4684 = vadd.f32 0.0, %v4683
    %v4685 = vpop.f32.mrb[0].mxu0
    %4686 = vdwg.mxu0
    %4689 = vrot.lane.b32.xlu0 %v4679, 64
    %v4690 = vpop.permute.xlu0 %4689
    %4691 = vrot.lane.b32.xlu0 %v4684, 64
    %v4692 = vpop.permute.xlu0 %4691
    %4695 = vst.msk [vmem:[#allocation2] sm:$0xff] %vm1006, %v4690
    %4696 = vst.msk [vmem:[#allocation2 + $0x8] sm:$0xff] %vm1006, %v4692
    %4697 = vrot.lane.b32.xlu0 %v3908, 32
    %v4698 = vpop.permute.xlu0 %4697
    %4699 = vrot.lane.b32.xlu0 %v3913, 32
    %v4700 = vpop.permute.xlu0 %4699
    %4701 = vrot.lane.b32.xlu0 %v4013, 32
    %v4702 = vpop.permute.xlu0 %4701
    %4703 = vrot.lane.b32.xlu0 %v4019, 32
    %v4704 = vpop.permute.xlu0 %4703
    %4705 = vrot.lane.b32.xlu0 %v4025, 32
    %v4706 = vpop.permute.xlu0 %4705
    %4707 = vrot.lane.b32.xlu0 %v4031, 32
    %v4708 = vpop.permute.xlu0 %4707
    %v4709 = vsel %vm379, %v4698, 0
    %v4711 = vsel %vm379, %v4700, 0
    %v4713 = vsel %vm379, %v4702, 0
    %v4715 = vsel %vm379, %v4704, 0
    %v4717 = vsel %vm379, %v4706, 0
    %v4719 = vsel %vm379, %v4708, 0
    %4721 = vmatprep.subr.mxu0 0.0
    %4722 = vmatpush1.xpose.msra.mxu0 %v4713
    %4723 = vmatprep.subr.mxu0 0.0
    %4724 = vmatpush1.xpose.msra.mxu0 %v4715
    %4725 = vmatprep.subr.mxu0 0.0
    %4726 = vmatpush1.xpose.msra.mxu0 %v4717
    %4727 = vmatprep.subr.mxu0 0.0
    %4728 = vmatpush1.xpose.msra.mxu0 %v4719
    %4729 = vmatprep.subr.mxu0 0.0
    %4730 = vmatpush1.xpose.msra.mxu0 0.0
    %4731 = vmatprep.subr.mxu0 0.0
    %4732 = vmatpush1.xpose.msra.mxu0 0.0
    %4733 = vmatprep.subr.mxu0 0.0
    %4734 = vmatpush1.xpose.msra.mxu0 0.0
    %4735 = vmatprep.subr.mxu0 0.0
    %4736 = vmatpush1.xpose.msra.mxu0 0.0
    %4737 = vmatprep.subr.mxu0 0.0
    %4738 = vmatpush1.xpose.msra.mxu0 0.0
    %4739 = vmatprep.subr.mxu0 0.0
    %4740 = vmatpush1.xpose.msra.mxu0 0.0
    %4741 = vmatprep.subr.mxu0 0.0
    %4742 = vmatpush1.xpose.msra.mxu0 0.0
    %4743 = vmatprep.subr.mxu0 0.0
    %4744 = vmatpush1.xpose.msra.mxu0 0.0
    %4745 = vmatprep.subr.mxu0 0.0
    %4746 = vmatpush1.xpose.msra.mxu0 0.0
    %4747 = vmatprep.subr.mxu0 0.0
    %4748 = vmatpush1.xpose.msra.mxu0 0.0
    %4749 = vmatprep.subr.mxu0 0.0
    %4750 = vmatpush1.xpose.msra.mxu0 0.0
    %4751 = vmatprep.subr.mxu0 0.0
    %4752 = vmatpush1.xpose.msra.mxu0 0.0
    %4753 = vmatprep.subr.mxu0 0.0
    %4754 = vmatpush1.xpose.msra.mxu0 0.0
    %4755 = vmatprep.subr.mxu0 0.0
    %4756 = vmatpush1.xpose.msra.mxu0 0.0
    %4757 = vmatprep.subr.mxu0 0.0
    %4758 = vmatpush1.xpose.msra.mxu0 0.0
    %4759 = vmatprep.subr.mxu0 0.0
    %4760 = vmatpush1.xpose.msra.mxu0 0.0
    %4761 = vmatprep.subr.mxu0 0.0
    %4762 = vmatpush1.xpose.msra.mxu0 0.0
    %4763 = vmatprep.subr.mxu0 0.0
    %4764 = vmatpush1.xpose.msra.mxu0 0.0
    %4765 = vmatprep.subr.mxu0 0.0
    %4766 = vmatpush1.xpose.msra.mxu0 0.0
    %4767 = vmatprep.subr.mxu0 0.0
    %4768 = vmatpush1.xpose.msra.mxu0 0.0
    %4769 = vmatprep.subr.mxu0 0.0
    %4770 = vmatpush1.xpose.msra.mxu0 0.0
    %4771 = vmatprep.subr.mxu0 0.0
    %4772 = vmatpush1.xpose.msra.mxu0 0.0
    %4773 = vmatprep.subr.mxu0 0.0
    %4774 = vmatpush1.xpose.msra.mxu0 0.0
    %4775 = vmatprep.subr.mxu0 0.0
    %4776 = vmatpush1.xpose.msra.mxu0 0.0
    %4777 = vmatprep.subr.mxu0 0.0
    %4778 = vmatpush1.xpose.msra.mxu0 0.0
    %4779 = vmatprep.subr.mxu0 0.0
    %4780 = vmatpush1.xpose.msra.mxu0 0.0
    %4781 = vmatprep.subr.mxu0 0.0
    %4782 = vmatpush1.xpose.msra.mxu0 0.0
    %4783 = vmatprep.subr.mxu0 0.0
    %4784 = vmatpush1.xpose.msra.mxu0 0.0
    %4785 = vmatprep.mubr.f32.mxu0 0.0
    %4786 = vmatmul.mubr.f32.gmra.mrb[0].mxu0 %v4709
    %v4787 = vpop.f32.mrb[0].mxu0
    %v4788 = vadd.f32 0.0, %v4787
    %v4789 = vpop.f32.mrb[0].mxu0
    %4790 = vmatprep.mubr.f32.mxu0 0.0
    %4791 = vmatmul.mubr.f32.gmra.mrb[0].mxu0 %v4711
    %v4792 = vpop.f32.mrb[0].mxu0
    %v4793 = vadd.f32 0.0, %v4792
    %v4794 = vpop.f32.mrb[0].mxu0
    %4795 = vdwg.mxu0
    %v4796 = vmul.f32 %v4788, 0.17677669
    %v4797 = vmul.f32 %v4793, 0.17677669
    %v4798 = vadd.f32 %v4796, %v124
    %v4799 = vadd.f32 %v4797, %v125
    %v4800 = vsel %vm379, %v4798, -inf
    %4801 = vmax.xlane.f32.xlu0 %v4800
    %v4802 = vpop.xlane.xlu0 %4801
    %v4803 = vsel %vm379, %v4799, -inf
    %4804 = vmax.xlane.f32.xlu0 %v4803
    %v4805 = vpop.xlane.xlu0 %4804
    %v4806 = vsub.f32 %v4798, %v4802
    %v4807 = vsub.f32 %v4799, %v4805
    %v4808 = vmul.f32 %v4806, 1.442695
    %v4809 = vpow.pop %v4808
    %v4810 = vmul.f32 %v4807, 1.442695
    %v4811 = vpow.pop %v4810
    %v4812 = vsel %vm379, %v4809, 0.0
    %4813 = vadd.xlane.f32.xlu0 %v4812
    %v4814 = vpop.xlane.xlu0 %4813
    %v4815 = vsel %vm379, %v4811, 0.0
    %4816 = vadd.xlane.f32.xlu0 %v4815
    %v4817 = vpop.xlane.xlu0 %4816
    %v4818 = vrcp.pop %v4814
    %v4819 = vrcp.pop %v4817
    %v4820 = vmul.f32 %v4809, %v4818
    %v4821 = vmul.f32 %v4811, %v4819
    %4822 = vrot.lane.b32.xlu0 %v4015, 32
    %v4823 = vpop.permute.xlu0 %4822
    %4824 = vrot.lane.b32.xlu0 %v4021, 32
    %v4825 = vpop.permute.xlu0 %4824
    %4826 = vrot.lane.b32.xlu0 %v4027, 32
    %v4827 = vpop.permute.xlu0 %4826
    %4828 = vrot.lane.b32.xlu0 %v4033, 32
    %v4829 = vpop.permute.xlu0 %4828
    %v4835 = vsel %vm379, %v4820, 0
    %v4838 = vsel %vm379, %v4821, 0
    %4840 = vmatprep.subr.mxu0 0.0
    %4841 = vmatpush1.msra.mxu0 %v4823
    %4842 = vmatprep.subr.mxu0 0.0
    %4843 = vmatpush1.msra.mxu0 %v4825
    %4844 = vmatprep.subr.mxu0 0.0
    %4845 = vmatpush1.msra.mxu0 %v4827
    %4846 = vmatprep.subr.mxu0 0.0
    %4847 = vmatpush1.msra.mxu0 %v4829
    %4848 = vmatprep.subr.mxu0 0.0
    %4849 = vmatpush1.msra.mxu0 0.0
    %4850 = vmatprep.subr.mxu0 0.0
    %4851 = vmatpush1.msra.mxu0 0.0
    %4852 = vmatprep.subr.mxu0 0.0
    %4853 = vmatpush1.msra.mxu0 0.0
    %4854 = vmatprep.subr.mxu0 0.0
    %4855 = vmatpush1.msra.mxu0 0.0
    %4856 = vmatprep.subr.mxu0 0.0
    %4857 = vmatpush1.msra.mxu0 0.0
    %4858 = vmatprep.subr.mxu0 0.0
    %4859 = vmatpush1.msra.mxu0 0.0
    %4860 = vmatprep.subr.mxu0 0.0
    %4861 = vmatpush1.msra.mxu0 0.0
    %4862 = vmatprep.subr.mxu0 0.0
    %4863 = vmatpush1.msra.mxu0 0.0
    %4864 = vmatprep.subr.mxu0 0.0
    %4865 = vmatpush1.msra.mxu0 0.0
    %4866 = vmatprep.subr.mxu0 0.0
    %4867 = vmatpush1.msra.mxu0 0.0
    %4868 = vmatprep.subr.mxu0 0.0
    %4869 = vmatpush1.msra.mxu0 0.0
    %4870 = vmatprep.subr.mxu0 0.0
    %4871 = vmatpush1.msra.mxu0 0.0
    %4872 = vmatprep.subr.mxu0 0.0
    %4873 = vmatpush1.msra.mxu0 0.0
    %4874 = vmatprep.subr.mxu0 0.0
    %4875 = vmatpush1.msra.mxu0 0.0
    %4876 = vmatprep.subr.mxu0 0.0
    %4877 = vmatpush1.msra.mxu0 0.0
    %4878 = vmatprep.subr.mxu0 0.0
    %4879 = vmatpush1.msra.mxu0 0.0
    %4880 = vmatprep.subr.mxu0 0.0
    %4881 = vmatpush1.msra.mxu0 0.0
    %4882 = vmatprep.subr.mxu0 0.0
    %4883 = vmatpush1.msra.mxu0 0.0
    %4884 = vmatprep.subr.mxu0 0.0
    %4885 = vmatpush1.msra.mxu0 0.0
    %4886 = vmatprep.subr.mxu0 0.0
    %4887 = vmatpush1.msra.mxu0 0.0
    %4888 = vmatprep.subr.mxu0 0.0
    %4889 = vmatpush1.msra.mxu0 0.0
    %4890 = vmatprep.subr.mxu0 0.0
    %4891 = vmatpush1.msra.mxu0 0.0
    %4892 = vmatprep.subr.mxu0 0.0
    %4893 = vmatpush1.msra.mxu0 0.0
    %4894 = vmatprep.subr.mxu0 0.0
    %4895 = vmatpush1.msra.mxu0 0.0
    %4896 = vmatprep.subr.mxu0 0.0
    %4897 = vmatpush1.msra.mxu0 0.0
    %4898 = vmatprep.subr.mxu0 0.0
    %4899 = vmatpush1.msra.mxu0 0.0
    %4900 = vmatprep.subr.mxu0 0.0
    %4901 = vmatpush1.msra.mxu0 0.0
    %4902 = vmatprep.subr.mxu0 0.0
    %4903 = vmatpush1.msra.mxu0 0.0
    %4904 = vmatprep.mubr.f32.mxu0 0.0
    %4905 = vmatmul.mubr.f32.gmra.mrb[0].mxu0 %v4835
    %v4906 = vpop.f32.mrb[0].mxu0
    %v4907 = vadd.f32 0.0, %v4906
    %v4908 = vpop.f32.mrb[0].mxu0
    %4909 = vmatprep.mubr.f32.mxu0 0.0
    %4910 = vmatmul.mubr.f32.gmra.mrb[0].mxu0 %v4838
    %v4911 = vpop.f32.mrb[0].mxu0
    %v4912 = vadd.f32 0.0, %v4911
    %v4913 = vpop.f32.mrb[0].mxu0
    %4914 = vdwg.mxu0
    %4917 = vrot.lane.b32.xlu0 %v4907, 96
    %v4918 = vpop.permute.xlu0 %4917
    %4919 = vrot.lane.b32.xlu0 %v4912, 96
    %v4920 = vpop.permute.xlu0 %4919
    %4923 = vst.msk [vmem:[#allocation2] sm:$0xff] %vm1221, %v4918
    %4924 = vst.msk [vmem:[#allocation2 + $0x8] sm:$0xff] %vm1221, %v4920
    %v4925 = vld [vmem:[#allocation2] sm:$0xff]
    %v4926 = vld [vmem:[#allocation2 + $0x8] sm:$0xff]
    %s4927 = scalar_lea.vmem [#allocation7], 128
    %v4928 = vld [vmem:[%s4927] sm:$0xff]
    %v4929 = vld [vmem:[%s4927 + $0x8] sm:$0xff]
    %v4930 = vld [vmem:[%s4927 + $0x10] sm:$0xff]
    %v4931 = vld [vmem:[%s4927 + $0x18] sm:$0xff]
    %v4932 = vld [vmem:[%s4927 + $0x20] sm:$0xff]
    %v4933 = vld [vmem:[%s4927 + $0x28] sm:$0xff]
    %v4934 = vld [vmem:[%s4927 + $0x30] sm:$0xff]
    %v4935 = vld [vmem:[%s4927 + $0x38] sm:$0xff]
    %v4936 = vld [vmem:[%s4927 + $0x40] sm:$0xff]
    %v4937 = vld [vmem:[%s4927 + $0x48] sm:$0xff]
    %v4938 = vld [vmem:[%s4927 + $0x50] sm:$0xff]
    %v4939 = vld [vmem:[%s4927 + $0x58] sm:$0xff]
    %v4940 = vld [vmem:[%s4927 + $0x60] sm:$0xff]
    %v4941 = vld [vmem:[%s4927 + $0x68] sm:$0xff]
    %v4942 = vld [vmem:[%s4927 + $0x70] sm:$0xff]
    %v4943 = vld [vmem:[%s4927 + $0x78] sm:$0xff]
    %s4944 = scalar_lea.vmem %s15, 1
    %v4945 = vld [vmem:[%s4944] sm:$0x1]
    %v4947 = vlaneseq
    %v4948 = vshrl.u32 %v4947, 7
    %v4949 = vsub.s32 0, %v4948
    %v4950 = vrot.slane %v4945, %v4949
    %4952 = vmatprep.subr.mxu0 0.0
    %4953 = vmatpush1.msra.mxu0 %v4928
    %4954 = vmatprep.subr.mxu0 0.0
    %4955 = vmatpush1.msra.mxu0 %v4929
    %4956 = vmatprep.subr.mxu0 0.0
    %4957 = vmatpush1.msra.mxu0 %v4930
    %4958 = vmatprep.subr.mxu0 0.0
    %4959 = vmatpush1.msra.mxu0 %v4931
    %4960 = vmatprep.subr.mxu0 0.0
    %4961 = vmatpush1.msra.mxu0 %v4932
    %4962 = vmatprep.subr.mxu0 0.0
    %4963 = vmatpush1.msra.mxu0 %v4933
    %4964 = vmatprep.subr.mxu0 0.0
    %4965 = vmatpush1.msra.mxu0 %v4934
    %4966 = vmatprep.subr.mxu0 0.0
    %4967 = vmatpush1.msra.mxu0 %v4935
    %4968 = vmatprep.subr.mxu0 0.0
    %4969 = vmatpush1.msra.mxu0 %v4936
    %4970 = vmatprep.subr.mxu0 0.0
    %4971 = vmatpush1.msra.mxu0 %v4937
    %4972 = vmatprep.subr.mxu0 0.0
    %4973 = vmatpush1.msra.mxu0 %v4938
    %4974 = vmatprep.subr.mxu0 0.0
    %4975 = vmatpush1.msra.mxu0 %v4939
    %4976 = vmatprep.subr.mxu0 0.0
    %4977 = vmatpush1.msra.mxu0 %v4940
    %4978 = vmatprep.subr.mxu0 0.0
    %4979 = vmatpush1.msra.mxu0 %v4941
    %4980 = vmatprep.subr.mxu0 0.0
    %4981 = vmatpush1.msra.mxu0 %v4942
    %4982 = vmatprep.subr.mxu0 0.0
    %4983 = vmatpush1.msra.mxu0 %v4943
    %4984 = vmatprep.subr.mxu0 0.0
    %4985 = vmatpush1.msra.mxu0 0.0
    %4986 = vmatprep.subr.mxu0 0.0
    %4987 = vmatpush1.msra.mxu0 0.0
    %4988 = vmatprep.subr.mxu0 0.0
    %4989 = vmatpush1.msra.mxu0 0.0
    %4990 = vmatprep.subr.mxu0 0.0
    %4991 = vmatpush1.msra.mxu0 0.0
    %4992 = vmatprep.subr.mxu0 0.0
    %4993 = vmatpush1.msra.mxu0 0.0
    %4994 = vmatprep.subr.mxu0 0.0
    %4995 = vmatpush1.msra.mxu0 0.0
    %4996 = vmatprep.subr.mxu0 0.0
    %4997 = vmatpush1.msra.mxu0 0.0
    %4998 = vmatprep.subr.mxu0 0.0
    %4999 = vmatpush1.msra.mxu0 0.0
    %5000 = vmatprep.subr.mxu0 0.0
    %5001 = vmatpush1.msra.mxu0 0.0
    %5002 = vmatprep.subr.mxu0 0.0
    %5003 = vmatpush1.msra.mxu0 0.0
    %5004 = vmatprep.subr.mxu0 0.0
    %5005 = vmatpush1.msra.mxu0 0.0
    %5006 = vmatprep.subr.mxu0 0.0
    %5007 = vmatpush1.msra.mxu0 0.0
    %5008 = vmatprep.subr.mxu0 0.0
    %5009 = vmatpush1.msra.mxu0 0.0
    %5010 = vmatprep.subr.mxu0 0.0
    %5011 = vmatpush1.msra.mxu0 0.0
    %5012 = vmatprep.subr.mxu0 0.0
    %5013 = vmatpush1.msra.mxu0 0.0
    %5014 = vmatprep.subr.mxu0 0.0
    %5015 = vmatpush1.msra.mxu0 0.0
    %5016 = vmatprep.mubr.f32.mxu0 0.0
    %5017 = vmatmul.mubr.f32.gmra.mrb[0].mxu0 %v4925
    %v5018 = vpop.f32.mrb[0].mxu0
    %v5019 = vadd.f32 %v4950, %v5018
    %v5020 = vpop.f32.mrb[0].mxu0
    %5021 = vmatprep.mubr.f32.mxu0 0.0
    %5022 = vmatmul.mubr.f32.gmra.mrb[0].mxu0 %v4926
    %v5023 = vpop.f32.mrb[0].mxu0
    %v5024 = vadd.f32 %v4950, %v5023
    %v5025 = vpop.f32.mrb[0].mxu0
    %5026 = vdwg.mxu0
    %v5027 = vadd.f32 %v3814, %v5019
    %v5028 = vadd.f32 %v3815, %v5024
    %5029 = vst [vmem:[%s19] sm:$0xff] %v5027
    %5030 = vst [vmem:[%s19 + $0x8] sm:$0xff] %v5028
    %v5031 = vmax.f32 %v5027, 0.0
    %v5032 = vmax.f32 %v5028, 0.0
    %v5033 = vld [vmem:[#allocation8] sm:$0xff]
    %v5034 = vld [vmem:[#allocation8 + $0x8] sm:$0xff]
    %v5035 = vld [vmem:[#allocation8 + $0x10] sm:$0xff]
    %v5036 = vld [vmem:[#allocation8 + $0x18] sm:$0xff]
    %v5037 = vld [vmem:[#allocation8 + $0x20] sm:$0xff]
    %v5038 = vld [vmem:[#allocation8 + $0x28] sm:$0xff]
    %v5039 = vld [vmem:[#allocation8 + $0x30] sm:$0xff]
    %v5040 = vld [vmem:[#allocation8 + $0x38] sm:$0xff]
    %v5041 = vld [vmem:[#allocation8 + $0x40] sm:$0xff]
    %v5042 = vld [vmem:[#allocation8 + $0x48] sm:$0xff]
    %v5043 = vld [vmem:[#allocation8 + $0x50] sm:$0xff]
    %v5044 = vld [vmem:[#allocation8 + $0x58] sm:$0xff]
    %v5045 = vld [vmem:[#allocation8 + $0x60] sm:$0xff]
    %v5046 = vld [vmem:[#allocation8 + $0x68] sm:$0xff]
    %v5047 = vld [vmem:[#allocation8 + $0x70] sm:$0xff]
    %v5048 = vld [vmem:[#allocation8 + $0x78] sm:$0xff]
    %v5049 = vld [vmem:[%s17] sm:$0x1]
    %v5051 = vlaneseq
    %v5052 = vshrl.u32 %v5051, 7
    %v5053 = vsub.s32 0, %v5052
    %v5054 = vrot.slane %v5049, %v5053
    %5056 = vmatprep.subr.mxu0 0.0
    %5057 = vmatpush1.msra.mxu0 %v5033
    %5058 = vmatprep.subr.mxu0 0.0
    %5059 = vmatpush1.msra.mxu0 %v5034
    %5060 = vmatprep.subr.mxu0 0.0
    %5061 = vmatpush1.msra.mxu0 %v5035
    %5062 = vmatprep.subr.mxu0 0.0
    %5063 = vmatpush1.msra.mxu0 %v5036
    %5064 = vmatprep.subr.mxu0 0.0
    %5065 = vmatpush1.msra.mxu0 %v5037
    %5066 = vmatprep.subr.mxu0 0.0
    %5067 = vmatpush1.msra.mxu0 %v5038
    %5068 = vmatprep.subr.mxu0 0.0
    %5069 = vmatpush1.msra.mxu0 %v5039
    %5070 = vmatprep.subr.mxu0 0.0
    %5071 = vmatpush1.msra.mxu0 %v5040
    %5072 = vmatprep.subr.mxu0 0.0
    %5073 = vmatpush1.msra.mxu0 %v5041
    %5074 = vmatprep.subr.mxu0 0.0
    %5075 = vmatpush1.msra.mxu0 %v5042
    %5076 = vmatprep.subr.mxu0 0.0
    %5077 = vmatpush1.msra.mxu0 %v5043
    %5078 = vmatprep.subr.mxu0 0.0
    %5079 = vmatpush1.msra.mxu0 %v5044
    %5080 = vmatprep.subr.mxu0 0.0
    %5081 = vmatpush1.msra.mxu0 %v5045
    %5082 = vmatprep.subr.mxu0 0.0
    %5083 = vmatpush1.msra.mxu0 %v5046
    %5084 = vmatprep.subr.mxu0 0.0
    %5085 = vmatpush1.msra.mxu0 %v5047
    %5086 = vmatprep.subr.mxu0 0.0
    %5087 = vmatpush1.msra.mxu0 %v5048
    %5088 = vmatprep.subr.mxu0 0.0
    %5089 = vmatpush1.msra.mxu0 0.0
    %5090 = vmatprep.subr.mxu0 0.0
    %5091 = vmatpush1.msra.mxu0 0.0
    %5092 = vmatprep.subr.mxu0 0.0
    %5093 = vmatpush1.msra.mxu0 0.0
    %5094 = vmatprep.subr.mxu0 0.0
    %5095 = vmatpush1.msra.mxu0 0.0
    %5096 = vmatprep.subr.mxu0 0.0
    %5097 = vmatpush1.msra.mxu0 0.0
    %5098 = vmatprep.subr.mxu0 0.0
    %5099 = vmatpush1.msra.mxu0 0.0
    %5100 = vmatprep.subr.mxu0 0.0
    %5101 = vmatpush1.msra.mxu0 0.0
    %5102 = vmatprep.subr.mxu0 0.0
    %5103 = vmatpush1.msra.mxu0 0.0
    %5104 = vmatprep.subr.mxu0 0.0
    %5105 = vmatpush1.msra.mxu0 0.0
    %5106 = vmatprep.subr.mxu0 0.0
    %5107 = vmatpush1.msra.mxu0 0.0
    %5108 = vmatprep.subr.mxu0 0.0
    %5109 = vmatpush1.msra.mxu0 0.0
    %5110 = vmatprep.subr.mxu0 0.0
    %5111 = vmatpush1.msra.mxu0 0.0
    %5112 = vmatprep.subr.mxu0 0.0
    %5113 = vmatpush1.msra.mxu0 0.0
    %5114 = vmatprep.subr.mxu0 0.0
    %5115 = vmatpush1.msra.mxu0 0.0
    %5116 = vmatprep.subr.mxu0 0.0
    %5117 = vmatpush1.msra.mxu0 0.0
    %5118 = vmatprep.subr.mxu0 0.0
    %5119 = vmatpush1.msra.mxu0 0.0
    %5120 = vmatprep.mubr.f32.mxu0 0.0
    %5121 = vmatmul.mubr.f32.gmra.mrb[0].mxu0 %v5031
    %v5122 = vpop.f32.mrb[0].mxu0
    %v5123 = vadd.f32 %v5054, %v5122
    %v5124 = vpop.f32.mrb[0].mxu0
    %5125 = vmatprep.mubr.f32.mxu0 0.0
    %5126 = vmatmul.mubr.f32.gmra.mrb[0].mxu0 %v5032
    %v5127 = vpop.f32.mrb[0].mxu0
    %v5128 = vadd.f32 %v5054, %v5127
    %v5129 = vpop.f32.mrb[0].mxu0
    %5130 = vdwg.mxu0
    %5131 = vst [vmem:[%s18] sm:$0xff] %v5123
    %5132 = vst [vmem:[%s18 + $0x8] sm:$0xff] %v5128
    // Predicated region
    $region90: #{policy_head_train_forward.1} parent=1 // pred_check
      _
    $region91: #{policy_head_train_forward.1} parent=1 // pred_check_branch
      %5134 = sbr.rel (0) target = $region93
    $region92: #{policy_head_train_forward.1} parent=1 // pred_region
      _
    $region93: #{policy_head_train_forward.1} parent=1 // pred_fallthru
      _
    // Predicated region
    $region94: #{policy_head_train_forward.1} parent=1 // pred_check
      _
    $region95: #{policy_head_train_forward.1} parent=1 // pred_check_branch
      %5136 = sbr.rel (0) target = $region97
    $region96: #{policy_head_train_forward.1} parent=1 // pred_region
      _
    $region97: #{policy_head_train_forward.1} parent=1 // pred_fallthru
      _
    // Predicated region
    $region98: #{policy_head_train_forward.1} parent=1 // pred_check
      _
    $region99: #{policy_head_train_forward.1} parent=1 // pred_check_branch
      %5138 = sbr.rel (0) target = $region101
    $region100: #{policy_head_train_forward.1} parent=1 // pred_region
      _
    $region101: #{policy_head_train_forward.1} parent=1 // pred_fallthru
      _
    // Predicated region
    $region102: #{policy_head_train_forward.1} parent=1 // pred_check
      _
    $region103: #{policy_head_train_forward.1} parent=1 // pred_check_branch
      %5140 = sbr.rel (0) target = $region105
    $region104: #{policy_head_train_forward.1} parent=1 // pred_region
      _
    $region105: #{policy_head_train_forward.1} parent=1 // pred_fallthru
      _
    %5141 = vsyncpa [#allocation4], 1
    %5142 = vsyncpa [#allocation6], 1
    %5143 = vsyncpa [#allocation9], 1

</llo_original>
